<compile_context>
chip_gen: v7x
topology: tpu7x:2x2x1
jax: 0.10.0
libtpu: 0.0.40
codegen_flags: <defaults>
</compile_context>

<pallas_src>
import jax
import jax.numpy as jnp
from jax.experimental import pallas as pl
from jax.experimental.pallas import tpu as pltpu


_CONV_CFG = [(1, 64), (64, 128), (128, 256), (256, 512), (512, 1024)]
_FC_CFG = [(1024, 512), (512, 128), (128, 2)]
_L_IN = 17                  # spatial sizes through the stack: 17 -> 8 -> 4 -> 2 -> 1
_OUT_PAD = 128              # logits padded to 128 lanes for a dense output store

_PARAM_ORDER = [
    "conv0_w", "conv0_b", "conv1_w", "conv1_b", "conv2_w", "conv2_b",
    "conv3_w", "conv3_b", "conv4_w", "conv4_b",
    "fc0_w", "fc0_b", "fc1_w", "fc1_b", "fc2_w", "fc2_b",
]


# ---------------------------------------------------------------------------
# Fused kernel: one batch tile per grid step, everything stays in VMEM.
# ---------------------------------------------------------------------------
def _fused_forward_kernel(
    x_ref,                                    # (Bt, 19) f32, cols 0/18 zero pad
    w0_ref, b0_ref,                           # (3, 64) f32, (1, 64) f32
    w1_ref, b1_ref,                           # (3, 64, 128) bf16, (1, 128) f32
    w2_ref, b2_ref,                           # (3, 128, 256) bf16, (1, 256) f32
    w3_ref, b3_ref,                           # (3, 256, 512) bf16, (1, 512) f32
    w4_ref, b4_ref,                           # (512, 1024) bf16 (middle tap), (1, 1024) f32
    fw0_ref, fb0_ref,                         # (1024, 512) bf16, (1, 512) f32
    fw1_ref, fb1_ref,                         # (512, 128) bf16, (1, 128) f32
    fw2_ref, fb2_ref,                         # (128, 128) bf16 (cols>=2 zero), (1, 128) f32
    o_ref,                                    # (Bt, 128) f32
    a1_s, a2_s, a3_s,                         # spatial-major padded bf16 conv inputs
):
    Bt = x_ref.shape[0]
    bf16 = jnp.bfloat16

    # Zero only the two pad slabs of each persistent scratch (interior rows are
    # fully overwritten below).  Done every step so each core's private scratch
    # is valid even when the "parallel" grid is sharded across TensorCores.
    a1_s[0, :, :] = jnp.zeros((Bt, 64), bf16)
    a1_s[9, :, :] = jnp.zeros((Bt, 64), bf16)
    a2_s[0, :, :] = jnp.zeros((Bt, 128), bf16)
    a2_s[5, :, :] = jnp.zeros((Bt, 128), bf16)
    a3_s[0, :, :] = jnp.zeros((Bt, 256), bf16)
    a3_s[3, :, :] = jnp.zeros((Bt, 256), bf16)

    # ---- conv0 (Cin=1, VPU broadcast FMAs) fused with MaxPool(2): 17 -> 8 ----
    xb = x_ref[...]                            # (Bt, 19) f32
    w0 = w0_ref[...]                           # (3, 64) f32
    b0 = b0_ref[...]                           # (1, 64) f32
    w00, w01, w02 = w0[0:1], w0[1:2], w0[2:3]

    def conv0_at(l):                           # conv0 output at position l: (Bt, 64)
        return jnp.tanh(xb[:, l:l + 1] * w00
                        + xb[:, l + 1:l + 2] * w01
                        + xb[:, l + 2:l + 3] * w02 + b0)

    for lp in range(8):                        # pooled pairs (pos 16 dropped, floor mode)
        a1_s[lp + 1, :, :] = jnp.maximum(conv0_at(2 * lp),
                                         conv0_at(2 * lp + 1)).astype(bf16)

    # ---- conv1..conv3: 3 shifted (L*Bt, Cin) @ (Cin, Cout) MXU matmuls -------
    def conv_tanh(a_ref, w_ref, b_ref, L):
        cin = w_ref.shape[1]
        acc = jnp.dot(a_ref[pl.ds(0, L), :, :].reshape(L * Bt, cin), w_ref[0],
                      preferred_element_type=jnp.float32)
        acc = acc + jnp.dot(a_ref[pl.ds(1, L), :, :].reshape(L * Bt, cin), w_ref[1],
                            preferred_element_type=jnp.float32)
        acc = acc + jnp.dot(a_ref[pl.ds(2, L), :, :].reshape(L * Bt, cin), w_ref[2],
                            preferred_element_type=jnp.float32)
        return jnp.tanh(acc + b_ref[...])      # (L*Bt, Cout) f32

    def pool2(h_flat, lo):
        # MaxPool1d(2) over the spatial axis of a flat (L*Bt, C) activation.
        c = h_flat.shape[1]
        hr = h_flat[:lo * 2 * Bt].reshape(lo, 2 * Bt, c)
        return jnp.maximum(hr[:, :Bt, :], hr[:, Bt:, :])     # (lo, Bt, C)

    h1 = conv_tanh(a1_s, w1_ref, b1_ref, 8)                  # (8*Bt, 128)
    a2_s[pl.ds(1, 4), :, :] = pool2(h1, 4).astype(bf16)      # 8 -> 4
    h2 = conv_tanh(a2_s, w2_ref, b2_ref, 4)                  # (4*Bt, 256)
    a3_s[pl.ds(1, 2), :, :] = pool2(h2, 2).astype(bf16)      # 4 -> 2
    h3 = conv_tanh(a3_s, w3_ref, b3_ref, 2)                  # (2*Bt, 512)
    p4 = jnp.maximum(h3[:Bt, :], h3[Bt:, :])                 # 2 -> 1, (Bt, 512)

    # ---- conv4: only the middle tap (the other two hit pure zero padding) ----
    h4 = jnp.tanh(jnp.dot(p4.astype(bf16), w4_ref[...],
                          preferred_element_type=jnp.float32) + b4_ref[...])

    # ---- FC head (flatten is trivial: L == 1) --------------------------------
    z = jnp.tanh(jnp.dot(h4.astype(bf16), fw0_ref[...],
                         preferred_element_type=jnp.float32) + fb0_ref[...])
    z = jnp.tanh(jnp.dot(z.astype(bf16), fw1_ref[...],
                         preferred_element_type=jnp.float32) + fb1_ref[...])
    o_ref[...] = jnp.dot(z.astype(bf16), fw2_ref[...],
                         preferred_element_type=jnp.float32) + fb2_ref[...]


# ---------------------------------------------------------------------------
# Wrapper
# ---------------------------------------------------------------------------
def _pick_batch_tile(batch):
    # M per matmul = B_tile * L (L in {8,4,2,1}); 128 fills the v5e MXU, 256 the
    # v6e/v7x MXU even for the deepest layers.  Small batches are padded up to a
    # multiple of 16 so bf16 (16,128) sublane tiling stays aligned.
    if batch >= 256:
        return 256
    if batch >= 128:
        return 128
    return max(16, -(-batch // 16) * 16)


def forward(prep, x):
    """x: (B, 17) f32 (or anything reshapeable to it) -> logits (B, 2) f32."""
    batch = x.shape[0]
    x = x.reshape(batch, _L_IN).astype(jnp.float32)
    bt = _pick_batch_tile(batch)
    grid_n = -(-batch // bt)
    bp = grid_n * bt
    # Only input glue: pad batch up to the tile and add the two spatial pad cols.
    xpad = jnp.pad(x, ((0, bp - batch), (1, 1)))              # (bp, 19)

    def const_spec(shape):
        return pl.BlockSpec(shape, lambda g, _n=len(shape): (0,) * _n)

    in_specs = [pl.BlockSpec((bt, _L_IN + 2), lambda g: (g, 0))]
    args = [xpad]
    for name in _PARAM_ORDER:
        in_specs.append(const_spec(prep[name].shape))
        args.append(prep[name])

    out = pl.pallas_call(
        _fused_forward_kernel,
        out_shape=jax.ShapeDtypeStruct((bp, _OUT_PAD), jnp.float32),
        grid=(grid_n,),
        in_specs=in_specs,
        out_specs=pl.BlockSpec((bt, _OUT_PAD), lambda g: (g, 0)),
        scratch_shapes=[
            pltpu.VMEM((10, bt, 64), jnp.bfloat16),    # padded conv1 input (L=8)
            pltpu.VMEM((6, bt, 128), jnp.bfloat16),    # padded conv2 input (L=4)
            pltpu.VMEM((4, bt, 256), jnp.bfloat16),    # padded conv3 input (L=2)
        ],
        compiler_params=pltpu.CompilerParams(
            dimension_semantics=("parallel",),
            vmem_limit_bytes=32 * 1024 * 1024,
        ),
    )(*args)
    return out[:batch, :_FC_CFG[-1][1]]


# ---------------------------------------------------------------------------
# Parameters (deterministic, PyTorch-default-style uniform init) + one-time prep
# ---------------------------------------------------------------------------
def _uniform(key, shape, fan_in):
    bound = 1.0 / float(fan_in) ** 0.5
    return jax.random.uniform(key, shape, jnp.float32, -bound, bound)


def init_params(key):
    keys = jax.random.split(key, 2 * (len(_CONV_CFG) + len(_FC_CFG)))
    params, ki = {}, 0
    for i, (cin, cout) in enumerate(_CONV_CFG):
        fan_in = cin * 3
        params[f"conv{i}_w"] = _uniform(keys[ki], (cout, cin, 3), fan_in); ki += 1
        params[f"conv{i}_b"] = _uniform(keys[ki], (cout,), fan_in); ki += 1
    for i, (fin, fout) in enumerate(_FC_CFG):
        params[f"fc{i}_w"] = _uniform(keys[ki], (fin, fout), fin); ki += 1
        params[f"fc{i}_b"] = _uniform(keys[ki], (fout,), fin); ki += 1
    return params


def prepare_params(params):
    """One-time, hoisted weight preprocessing (kernel layouts + bf16 cast)."""
    prep = {}
    for i, (cin, cout) in enumerate(_CONV_CFG):
        w = jnp.transpose(params[f"conv{i}_w"], (2, 1, 0))     # (3, Cin, Cout)
        if i == 0:
            prep["conv0_w"] = w.reshape(3, cout).astype(jnp.float32)   # VPU path
        elif i == len(_CONV_CFG) - 1:
            # conv4 runs at L=1 with pad=1: taps 0 and 2 only multiply zero
            # padding, so keep just the middle tap.
            prep[f"conv{i}_w"] = w[1].astype(jnp.bfloat16)              # (512, 1024)
        else:
            prep[f"conv{i}_w"] = w.astype(jnp.bfloat16)
        prep[f"conv{i}_b"] = params[f"conv{i}_b"].reshape(1, cout).astype(jnp.float32)
    for i, (fin, fout) in enumerate(_FC_CFG):
        w = params[f"fc{i}_w"].astype(jnp.bfloat16)
        b = params[f"fc{i}_b"].reshape(1, fout).astype(jnp.float32)
        if i == len(_FC_CFG) - 1:
            # Pad the 2-wide logits layer to 128 outputs for a lane-dense store.
            w = jnp.pad(w, ((0, 0), (0, _OUT_PAD - fout)))
            b = jnp.pad(b, ((0, 0), (0, _OUT_PAD - fout)))
        prep[f"fc{i}_w"] = w
        prep[f"fc{i}_b"] = b
    return prep


# ---------------------------------------------------------------------------
# Plain-JAX reference (same bf16 matmul numerics / tap pruning) for self-check
# ---------------------------------------------------------------------------
def reference_forward(prep, x):
    B = x.shape[0]
    x = x.reshape(B, _L_IN).astype(jnp.float32)
    # conv0 (f32) + pool
    xpad = jnp.pad(x, ((0, 0), (1, 1)))[..., None]             # (B, 19, 1)
    w0 = prep["conv0_w"]                                       # (3, 64)
    acc = sum(xpad[:, k:k + _L_IN, :] * w0[k][None, None, :] for k in range(3))
    h = jnp.tanh(acc + prep["conv0_b"][None])                  # (B, 17, 64)
    lo = _L_IN // 2
    h = jnp.maximum(h[:, 0:2 * lo:2], h[:, 1:2 * lo:2])        # (B, 8, 64)
    # conv1..conv3 (bf16 matmul numerics) + pool
    for i in (1, 2, 3):
        w, b = prep[f"conv{i}_w"], prep[f"conv{i}_b"]
        L = h.shape[1]
        hp = jnp.pad(h, ((0, 0), (1, 1), (0, 0))).astype(jnp.bfloat16)
        acc = sum(jnp.einsum("blc,cd->bld", hp[:, k:k + L], w[k],
                             preferred_element_type=jnp.float32) for k in range(3))
        h = jnp.tanh(acc + b[None])
        lo = L // 2
        h = jnp.maximum(h[:, 0:2 * lo:2], h[:, 1:2 * lo:2])
    # conv4: middle tap only (other taps hit pure zero padding at L=1)
    h4 = jnp.tanh(jnp.dot(h[:, 0].astype(jnp.bfloat16), prep["conv4_w"],
                          preferred_element_type=jnp.float32) + prep["conv4_b"])
    z = h4
    for i in range(len(_FC_CFG)):
        z = jnp.dot(z.astype(jnp.bfloat16), prep[f"fc{i}_w"],
                    preferred_element_type=jnp.float32) + prep[f"fc{i}_b"]
        if i < len(_FC_CFG) - 1:
            z = jnp.tanh(z)
    return z[:, :_FC_CFG[-1][1]]


if __name__ == "__main__":
    key = jax.random.PRNGKey(0)
    pkey, xkey = jax.random.split(key)
    params = init_params(pkey)
    prep = prepare_params(params)                 # hoisted, done once
    x = jax.random.normal(xkey, (2, _L_IN), jnp.float32)

    out = jax.jit(forward)(prep, x)
    jax.block_until_ready(out)

    assert out.shape == (2, 2), out.shape
    assert bool(jnp.all(jnp.isfinite(out)))

    ref = reference_forward(prep, x)
    assert bool(jnp.allclose(out, ref, atol=2e-2, rtol=2e-2)), (out, ref)

    print("KERNEL_OK")
</pallas_src>

<mosaic_0001>
module attributes {stable_mosaic.version = 11 : i64} {
  func.func @_fused_forward_kernel(%arg0: i32, %arg1: memref<16x19xf32, #tpu.memory_space<vmem>>, %arg2: memref<3x64xf32, #tpu.memory_space<vmem>>, %arg3: memref<1x64xf32, #tpu.memory_space<vmem>>, %arg4: memref<3x64x128xbf16, #tpu.memory_space<vmem>>, %arg5: memref<1x128xf32, #tpu.memory_space<vmem>>, %arg6: memref<3x128x256xbf16, #tpu.memory_space<vmem>>, %arg7: memref<1x256xf32, #tpu.memory_space<vmem>>, %arg8: memref<3x256x512xbf16, #tpu.memory_space<vmem>>, %arg9: memref<1x512xf32, #tpu.memory_space<vmem>>, %arg10: memref<512x1024xbf16, #tpu.memory_space<vmem>>, %arg11: memref<1x1024xf32, #tpu.memory_space<vmem>>, %arg12: memref<1024x512xbf16, #tpu.memory_space<vmem>>, %arg13: memref<1x512xf32, #tpu.memory_space<vmem>>, %arg14: memref<512x128xbf16, #tpu.memory_space<vmem>>, %arg15: memref<1x128xf32, #tpu.memory_space<vmem>>, %arg16: memref<128x128xbf16, #tpu.memory_space<vmem>>, %arg17: memref<1x128xf32, #tpu.memory_space<vmem>>, %arg18: memref<16x128xf32, #tpu.memory_space<vmem>>, %arg19: memref<10x16x64xbf16, #tpu.memory_space<vmem>>, %arg20: memref<6x16x128xbf16, #tpu.memory_space<vmem>>, %arg21: memref<4x16x256xbf16, #tpu.memory_space<vmem>>) attributes {dimension_semantics = [#tpu.dimension_semantics<parallel>], iteration_bounds = array<i64: 1>, scalar_prefetch = 0 : i64, scratch_operands = 3 : i64, tpu.core_type = #tpu.core_type<tc>, window_params = [{transform_indices = @transform_0, window_bounds = array<i64: 16, 19>}, {pipeline_mode = #tpu.pipeline_mode<synchronous>, transform_indices = @transform_1, window_bounds = array<i64: 3, 64>}, {pipeline_mode = #tpu.pipeline_mode<synchronous>, transform_indices = @transform_2, window_bounds = array<i64: 1, 64>}, {pipeline_mode = #tpu.pipeline_mode<synchronous>, transform_indices = @transform_3, window_bounds = array<i64: 3, 64, 128>}, {pipeline_mode = #tpu.pipeline_mode<synchronous>, transform_indices = @transform_4, window_bounds = array<i64: 1, 128>}, {pipeline_mode = #tpu.pipeline_mode<synchronous>, transform_indices = @transform_5, window_bounds = array<i64: 3, 128, 256>}, {pipeline_mode = #tpu.pipeline_mode<synchronous>, transform_indices = @transform_6, window_bounds = array<i64: 1, 256>}, {pipeline_mode = #tpu.pipeline_mode<synchronous>, transform_indices = @transform_7, window_bounds = array<i64: 3, 256, 512>}, {pipeline_mode = #tpu.pipeline_mode<synchronous>, transform_indices = @transform_8, window_bounds = array<i64: 1, 512>}, {pipeline_mode = #tpu.pipeline_mode<synchronous>, transform_indices = @transform_9, window_bounds = array<i64: 512, 1024>}, {pipeline_mode = #tpu.pipeline_mode<synchronous>, transform_indices = @transform_10, window_bounds = array<i64: 1, 1024>}, {pipeline_mode = #tpu.pipeline_mode<synchronous>, transform_indices = @transform_11, window_bounds = array<i64: 1024, 512>}, {pipeline_mode = #tpu.pipeline_mode<synchronous>, transform_indices = @transform_12, window_bounds = array<i64: 1, 512>}, {pipeline_mode = #tpu.pipeline_mode<synchronous>, transform_indices = @transform_13, window_bounds = array<i64: 512, 128>}, {pipeline_mode = #tpu.pipeline_mode<synchronous>, transform_indices = @transform_14, window_bounds = array<i64: 1, 128>}, {pipeline_mode = #tpu.pipeline_mode<synchronous>, transform_indices = @transform_15, window_bounds = array<i64: 128, 128>}, {pipeline_mode = #tpu.pipeline_mode<synchronous>, transform_indices = @transform_16, window_bounds = array<i64: 1, 128>}, {transform_indices = @transform_17, window_bounds = array<i64: 16, 128>}]} {
    %cst = arith.constant 0.000000e+00 : bf16
    %0 = vector.broadcast %cst : bf16 to vector<16x64xbf16>
    %c0 = arith.constant 0 : index
    %c0_0 = arith.constant 0 : index
    %c0_1 = arith.constant 0 : index
    %1 = vector.load %arg19[%c0, %c0_0, %c0_1] : memref<10x16x64xbf16, #tpu.memory_space<vmem>>, vector<1x16x64xbf16>
    %2 = vector.shape_cast %1 : vector<1x16x64xbf16> to vector<16x64xbf16>
    %3 = vector.shape_cast %0 : vector<16x64xbf16> to vector<1x16x64xbf16>
    tpu.vector_store %arg19[%c0, %c0_0, %c0_1], %3 {strides = array<i32>} : memref<10x16x64xbf16, #tpu.memory_space<vmem>>, vector<1x16x64xbf16>,
    %cst_2 = arith.constant 0.000000e+00 : bf16
    %4 = vector.broadcast %cst_2 : bf16 to vector<16x64xbf16>
    %c9 = arith.constant 9 : index
    %c0_3 = arith.constant 0 : index
    %c0_4 = arith.constant 0 : index
    %5 = vector.load %arg19[%c9, %c0_3, %c0_4] : memref<10x16x64xbf16, #tpu.memory_space<vmem>>, vector<1x16x64xbf16>
    %6 = vector.shape_cast %5 : vector<1x16x64xbf16> to vector<16x64xbf16>
    %7 = vector.shape_cast %4 : vector<16x64xbf16> to vector<1x16x64xbf16>
    tpu.vector_store %arg19[%c9, %c0_3, %c0_4], %7 {strides = array<i32>} : memref<10x16x64xbf16, #tpu.memory_space<vmem>>, vector<1x16x64xbf16>,
    %cst_5 = arith.constant 0.000000e+00 : bf16
    %8 = vector.broadcast %cst_5 : bf16 to vector<16x128xbf16>
    %c0_6 = arith.constant 0 : index
    %c0_7 = arith.constant 0 : index
    %c0_8 = arith.constant 0 : index
    %9 = vector.load %arg20[%c0_6, %c0_7, %c0_8] : memref<6x16x128xbf16, #tpu.memory_space<vmem>>, vector<1x16x128xbf16>
    %10 = vector.shape_cast %9 : vector<1x16x128xbf16> to vector<16x128xbf16>
    %11 = vector.shape_cast %8 : vector<16x128xbf16> to vector<1x16x128xbf16>
    tpu.vector_store %arg20[%c0_6, %c0_7, %c0_8], %11 {strides = array<i32>} : memref<6x16x128xbf16, #tpu.memory_space<vmem>>, vector<1x16x128xbf16>,
    %cst_9 = arith.constant 0.000000e+00 : bf16
    %12 = vector.broadcast %cst_9 : bf16 to vector<16x128xbf16>
    %c5 = arith.constant 5 : index
    %c0_10 = arith.constant 0 : index
    %c0_11 = arith.constant 0 : index
    %13 = vector.load %arg20[%c5, %c0_10, %c0_11] : memref<6x16x128xbf16, #tpu.memory_space<vmem>>, vector<1x16x128xbf16>
    %14 = vector.shape_cast %13 : vector<1x16x128xbf16> to vector<16x128xbf16>
    %15 = vector.shape_cast %12 : vector<16x128xbf16> to vector<1x16x128xbf16>
    tpu.vector_store %arg20[%c5, %c0_10, %c0_11], %15 {strides = array<i32>} : memref<6x16x128xbf16, #tpu.memory_space<vmem>>, vector<1x16x128xbf16>,
    %cst_12 = arith.constant 0.000000e+00 : bf16
    %16 = vector.broadcast %cst_12 : bf16 to vector<16x256xbf16>
    %c0_13 = arith.constant 0 : index
    %c0_14 = arith.constant 0 : index
    %c0_15 = arith.constant 0 : index
    %17 = vector.load %arg21[%c0_13, %c0_14, %c0_15] : memref<4x16x256xbf16, #tpu.memory_space<vmem>>, vector<1x16x256xbf16>
    %18 = vector.shape_cast %17 : vector<1x16x256xbf16> to vector<16x256xbf16>
    %19 = vector.shape_cast %16 : vector<16x256xbf16> to vector<1x16x256xbf16>
    tpu.vector_store %arg21[%c0_13, %c0_14, %c0_15], %19 {strides = array<i32>} : memref<4x16x256xbf16, #tpu.memory_space<vmem>>, vector<1x16x256xbf16>,
    %cst_16 = arith.constant 0.000000e+00 : bf16
    %20 = vector.broadcast %cst_16 : bf16 to vector<16x256xbf16>
    %c3 = arith.constant 3 : index
    %c0_17 = arith.constant 0 : index
    %c0_18 = arith.constant 0 : index
    %21 = vector.load %arg21[%c3, %c0_17, %c0_18] : memref<4x16x256xbf16, #tpu.memory_space<vmem>>, vector<1x16x256xbf16>
    %22 = vector.shape_cast %21 : vector<1x16x256xbf16> to vector<16x256xbf16>
    %23 = vector.shape_cast %20 : vector<16x256xbf16> to vector<1x16x256xbf16>
    tpu.vector_store %arg21[%c3, %c0_17, %c0_18], %23 {strides = array<i32>} : memref<4x16x256xbf16, #tpu.memory_space<vmem>>, vector<1x16x256xbf16>,
    %c0_19 = arith.constant 0 : index
    %c0_20 = arith.constant 0 : index
    %24 = vector.load %arg1[%c0_19, %c0_20] : memref<16x19xf32, #tpu.memory_space<vmem>>, vector<16x19xf32>
    %c0_21 = arith.constant 0 : index
    %c0_22 = arith.constant 0 : index
    %25 = vector.load %arg2[%c0_21, %c0_22] : memref<3x64xf32, #tpu.memory_space<vmem>>, vector<3x64xf32>
    %c0_23 = arith.constant 0 : index
    %c0_24 = arith.constant 0 : index
    %26 = vector.load %arg3[%c0_23, %c0_24] : memref<1x64xf32, #tpu.memory_space<vmem>>, vector<1x64xf32>
    %27 = vector.extract_strided_slice %25 {offsets = [0, 0], sizes = [1, 64], strides = [1, 1]} : vector<3x64xf32> to vector<1x64xf32>
    %28 = vector.extract_strided_slice %25 {offsets = [1, 0], sizes = [1, 64], strides = [1, 1]} : vector<3x64xf32> to vector<1x64xf32>
    %29 = vector.extract_strided_slice %25 {offsets = [2, 0], sizes = [1, 64], strides = [1, 1]} : vector<3x64xf32> to vector<1x64xf32>
    %30 = vector.extract_strided_slice %24 {offsets = [0, 0], sizes = [16, 1], strides = [1, 1]} : vector<16x19xf32> to vector<16x1xf32>
    %31 = vector.broadcast %30 : vector<16x1xf32> to vector<16x64xf32>
    %32 = vector.broadcast %27 : vector<1x64xf32> to vector<16x64xf32>
    %33 = arith.mulf %31, %32 : vector<16x64xf32>
    %34 = vector.extract_strided_slice %24 {offsets = [0, 1], sizes = [16, 1], strides = [1, 1]} : vector<16x19xf32> to vector<16x1xf32>
    %35 = vector.broadcast %34 : vector<16x1xf32> to vector<16x64xf32>
    %36 = vector.broadcast %28 : vector<1x64xf32> to vector<16x64xf32>
    %37 = arith.mulf %35, %36 : vector<16x64xf32>
    %38 = arith.addf %33, %37 : vector<16x64xf32>
    %39 = vector.extract_strided_slice %24 {offsets = [0, 2], sizes = [16, 1], strides = [1, 1]} : vector<16x19xf32> to vector<16x1xf32>
    %40 = vector.broadcast %39 : vector<16x1xf32> to vector<16x64xf32>
    %41 = vector.broadcast %29 : vector<1x64xf32> to vector<16x64xf32>
    %42 = arith.mulf %40, %41 : vector<16x64xf32>
    %43 = arith.addf %38, %42 : vector<16x64xf32>
    %44 = vector.broadcast %26 : vector<1x64xf32> to vector<16x64xf32>
    %45 = arith.addf %43, %44 : vector<16x64xf32>
    %46 = math.tanh %45 : vector<16x64xf32>
    %47 = vector.extract_strided_slice %24 {offsets = [0, 1], sizes = [16, 1], strides = [1, 1]} : vector<16x19xf32> to vector<16x1xf32>
    %48 = vector.broadcast %47 : vector<16x1xf32> to vector<16x64xf32>
    %49 = vector.broadcast %27 : vector<1x64xf32> to vector<16x64xf32>
    %50 = arith.mulf %48, %49 : vector<16x64xf32>
    %51 = vector.extract_strided_slice %24 {offsets = [0, 2], sizes = [16, 1], strides = [1, 1]} : vector<16x19xf32> to vector<16x1xf32>
    %52 = vector.broadcast %51 : vector<16x1xf32> to vector<16x64xf32>
    %53 = vector.broadcast %28 : vector<1x64xf32> to vector<16x64xf32>
    %54 = arith.mulf %52, %53 : vector<16x64xf32>
    %55 = arith.addf %50, %54 : vector<16x64xf32>
    %56 = vector.extract_strided_slice %24 {offsets = [0, 3], sizes = [16, 1], strides = [1, 1]} : vector<16x19xf32> to vector<16x1xf32>
    %57 = vector.broadcast %56 : vector<16x1xf32> to vector<16x64xf32>
    %58 = vector.broadcast %29 : vector<1x64xf32> to vector<16x64xf32>
    %59 = arith.mulf %57, %58 : vector<16x64xf32>
    %60 = arith.addf %55, %59 : vector<16x64xf32>
    %61 = vector.broadcast %26 : vector<1x64xf32> to vector<16x64xf32>
    %62 = arith.addf %60, %61 : vector<16x64xf32>
    %63 = math.tanh %62 : vector<16x64xf32>
    %64 = arith.maximumf %46, %63 : vector<16x64xf32>
    %65 = arith.truncf %64 : vector<16x64xf32> to vector<16x64xbf16>
    %c1 = arith.constant 1 : index
    %c0_25 = arith.constant 0 : index
    %c0_26 = arith.constant 0 : index
    %66 = vector.load %arg19[%c1, %c0_25, %c0_26] : memref<10x16x64xbf16, #tpu.memory_space<vmem>>, vector<1x16x64xbf16>
    %67 = vector.shape_cast %66 : vector<1x16x64xbf16> to vector<16x64xbf16>
    %68 = vector.shape_cast %65 : vector<16x64xbf16> to vector<1x16x64xbf16>
    tpu.vector_store %arg19[%c1, %c0_25, %c0_26], %68 {strides = array<i32>} : memref<10x16x64xbf16, #tpu.memory_space<vmem>>, vector<1x16x64xbf16>,
    %69 = vector.extract_strided_slice %24 {offsets = [0, 2], sizes = [16, 1], strides = [1, 1]} : vector<16x19xf32> to vector<16x1xf32>
    %70 = vector.broadcast %69 : vector<16x1xf32> to vector<16x64xf32>
    %71 = vector.broadcast %27 : vector<1x64xf32> to vector<16x64xf32>
    %72 = arith.mulf %70, %71 : vector<16x64xf32>
    %73 = vector.extract_strided_slice %24 {offsets = [0, 3], sizes = [16, 1], strides = [1, 1]} : vector<16x19xf32> to vector<16x1xf32>
    %74 = vector.broadcast %73 : vector<16x1xf32> to vector<16x64xf32>
    %75 = vector.broadcast %28 : vector<1x64xf32> to vector<16x64xf32>
    %76 = arith.mulf %74, %75 : vector<16x64xf32>
    %77 = arith.addf %72, %76 : vector<16x64xf32>
    %78 = vector.extract_strided_slice %24 {offsets = [0, 4], sizes = [16, 1], strides = [1, 1]} : vector<16x19xf32> to vector<16x1xf32>
    %79 = vector.broadcast %78 : vector<16x1xf32> to vector<16x64xf32>
    %80 = vector.broadcast %29 : vector<1x64xf32> to vector<16x64xf32>
    %81 = arith.mulf %79, %80 : vector<16x64xf32>
    %82 = arith.addf %77, %81 : vector<16x64xf32>
    %83 = vector.broadcast %26 : vector<1x64xf32> to vector<16x64xf32>
    %84 = arith.addf %82, %83 : vector<16x64xf32>
    %85 = math.tanh %84 : vector<16x64xf32>
    %86 = vector.extract_strided_slice %24 {offsets = [0, 3], sizes = [16, 1], strides = [1, 1]} : vector<16x19xf32> to vector<16x1xf32>
    %87 = vector.broadcast %86 : vector<16x1xf32> to vector<16x64xf32>
    %88 = vector.broadcast %27 : vector<1x64xf32> to vector<16x64xf32>
    %89 = arith.mulf %87, %88 : vector<16x64xf32>
    %90 = vector.extract_strided_slice %24 {offsets = [0, 4], sizes = [16, 1], strides = [1, 1]} : vector<16x19xf32> to vector<16x1xf32>
    %91 = vector.broadcast %90 : vector<16x1xf32> to vector<16x64xf32>
    %92 = vector.broadcast %28 : vector<1x64xf32> to vector<16x64xf32>
    %93 = arith.mulf %91, %92 : vector<16x64xf32>
    %94 = arith.addf %89, %93 : vector<16x64xf32>
    %95 = vector.extract_strided_slice %24 {offsets = [0, 5], sizes = [16, 1], strides = [1, 1]} : vector<16x19xf32> to vector<16x1xf32>
    %96 = vector.broadcast %95 : vector<16x1xf32> to vector<16x64xf32>
    %97 = vector.broadcast %29 : vector<1x64xf32> to vector<16x64xf32>
    %98 = arith.mulf %96, %97 : vector<16x64xf32>
    %99 = arith.addf %94, %98 : vector<16x64xf32>
    %100 = vector.broadcast %26 : vector<1x64xf32> to vector<16x64xf32>
    %101 = arith.addf %99, %100 : vector<16x64xf32>
    %102 = math.tanh %101 : vector<16x64xf32>
    %103 = arith.maximumf %85, %102 : vector<16x64xf32>
    %104 = arith.truncf %103 : vector<16x64xf32> to vector<16x64xbf16>
    %c2 = arith.constant 2 : index
    %c0_27 = arith.constant 0 : index
    %c0_28 = arith.constant 0 : index
    %105 = vector.load %arg19[%c2, %c0_27, %c0_28] : memref<10x16x64xbf16, #tpu.memory_space<vmem>>, vector<1x16x64xbf16>
    %106 = vector.shape_cast %105 : vector<1x16x64xbf16> to vector<16x64xbf16>
    %107 = vector.shape_cast %104 : vector<16x64xbf16> to vector<1x16x64xbf16>
    tpu.vector_store %arg19[%c2, %c0_27, %c0_28], %107 {strides = array<i32>} : memref<10x16x64xbf16, #tpu.memory_space<vmem>>, vector<1x16x64xbf16>,
    %108 = vector.extract_strided_slice %24 {offsets = [0, 4], sizes = [16, 1], strides = [1, 1]} : vector<16x19xf32> to vector<16x1xf32>
    %109 = vector.broadcast %108 : vector<16x1xf32> to vector<16x64xf32>
    %110 = vector.broadcast %27 : vector<1x64xf32> to vector<16x64xf32>
    %111 = arith.mulf %109, %110 : vector<16x64xf32>
    %112 = vector.extract_strided_slice %24 {offsets = [0, 5], sizes = [16, 1], strides = [1, 1]} : vector<16x19xf32> to vector<16x1xf32>
    %113 = vector.broadcast %112 : vector<16x1xf32> to vector<16x64xf32>
    %114 = vector.broadcast %28 : vector<1x64xf32> to vector<16x64xf32>
    %115 = arith.mulf %113, %114 : vector<16x64xf32>
    %116 = arith.addf %111, %115 : vector<16x64xf32>
    %117 = vector.extract_strided_slice %24 {offsets = [0, 6], sizes = [16, 1], strides = [1, 1]} : vector<16x19xf32> to vector<16x1xf32>
    %118 = vector.broadcast %117 : vector<16x1xf32> to vector<16x64xf32>
    %119 = vector.broadcast %29 : vector<1x64xf32> to vector<16x64xf32>
    %120 = arith.mulf %118, %119 : vector<16x64xf32>
    %121 = arith.addf %116, %120 : vector<16x64xf32>
    %122 = vector.broadcast %26 : vector<1x64xf32> to vector<16x64xf32>
    %123 = arith.addf %121, %122 : vector<16x64xf32>
    %124 = math.tanh %123 : vector<16x64xf32>
    %125 = vector.extract_strided_slice %24 {offsets = [0, 5], sizes = [16, 1], strides = [1, 1]} : vector<16x19xf32> to vector<16x1xf32>
    %126 = vector.broadcast %125 : vector<16x1xf32> to vector<16x64xf32>
    %127 = vector.broadcast %27 : vector<1x64xf32> to vector<16x64xf32>
    %128 = arith.mulf %126, %127 : vector<16x64xf32>
    %129 = vector.extract_strided_slice %24 {offsets = [0, 6], sizes = [16, 1], strides = [1, 1]} : vector<16x19xf32> to vector<16x1xf32>
    %130 = vector.broadcast %129 : vector<16x1xf32> to vector<16x64xf32>
    %131 = vector.broadcast %28 : vector<1x64xf32> to vector<16x64xf32>
    %132 = arith.mulf %130, %131 : vector<16x64xf32>
    %133 = arith.addf %128, %132 : vector<16x64xf32>
    %134 = vector.extract_strided_slice %24 {offsets = [0, 7], sizes = [16, 1], strides = [1, 1]} : vector<16x19xf32> to vector<16x1xf32>
    %135 = vector.broadcast %134 : vector<16x1xf32> to vector<16x64xf32>
    %136 = vector.broadcast %29 : vector<1x64xf32> to vector<16x64xf32>
    %137 = arith.mulf %135, %136 : vector<16x64xf32>
    %138 = arith.addf %133, %137 : vector<16x64xf32>
    %139 = vector.broadcast %26 : vector<1x64xf32> to vector<16x64xf32>
    %140 = arith.addf %138, %139 : vector<16x64xf32>
    %141 = math.tanh %140 : vector<16x64xf32>
    %142 = arith.maximumf %124, %141 : vector<16x64xf32>
    %143 = arith.truncf %142 : vector<16x64xf32> to vector<16x64xbf16>
    %c3_29 = arith.constant 3 : index
    %c0_30 = arith.constant 0 : index
    %c0_31 = arith.constant 0 : index
    %144 = vector.load %arg19[%c3_29, %c0_30, %c0_31] : memref<10x16x64xbf16, #tpu.memory_space<vmem>>, vector<1x16x64xbf16>
    %145 = vector.shape_cast %144 : vector<1x16x64xbf16> to vector<16x64xbf16>
    %146 = vector.shape_cast %143 : vector<16x64xbf16> to vector<1x16x64xbf16>
    tpu.vector_store %arg19[%c3_29, %c0_30, %c0_31], %146 {strides = array<i32>} : memref<10x16x64xbf16, #tpu.memory_space<vmem>>, vector<1x16x64xbf16>,
    %147 = vector.extract_strided_slice %24 {offsets = [0, 6], sizes = [16, 1], strides = [1, 1]} : vector<16x19xf32> to vector<16x1xf32>
    %148 = vector.broadcast %147 : vector<16x1xf32> to vector<16x64xf32>
    %149 = vector.broadcast %27 : vector<1x64xf32> to vector<16x64xf32>
    %150 = arith.mulf %148, %149 : vector<16x64xf32>
    %151 = vector.extract_strided_slice %24 {offsets = [0, 7], sizes = [16, 1], strides = [1, 1]} : vector<16x19xf32> to vector<16x1xf32>
    %152 = vector.broadcast %151 : vector<16x1xf32> to vector<16x64xf32>
    %153 = vector.broadcast %28 : vector<1x64xf32> to vector<16x64xf32>
    %154 = arith.mulf %152, %153 : vector<16x64xf32>
    %155 = arith.addf %150, %154 : vector<16x64xf32>
    %156 = vector.extract_strided_slice %24 {offsets = [0, 8], sizes = [16, 1], strides = [1, 1]} : vector<16x19xf32> to vector<16x1xf32>
    %157 = vector.broadcast %156 : vector<16x1xf32> to vector<16x64xf32>
    %158 = vector.broadcast %29 : vector<1x64xf32> to vector<16x64xf32>
    %159 = arith.mulf %157, %158 : vector<16x64xf32>
    %160 = arith.addf %155, %159 : vector<16x64xf32>
    %161 = vector.broadcast %26 : vector<1x64xf32> to vector<16x64xf32>
    %162 = arith.addf %160, %161 : vector<16x64xf32>
    %163 = math.tanh %162 : vector<16x64xf32>
    %164 = vector.extract_strided_slice %24 {offsets = [0, 7], sizes = [16, 1], strides = [1, 1]} : vector<16x19xf32> to vector<16x1xf32>
    %165 = vector.broadcast %164 : vector<16x1xf32> to vector<16x64xf32>
    %166 = vector.broadcast %27 : vector<1x64xf32> to vector<16x64xf32>
    %167 = arith.mulf %165, %166 : vector<16x64xf32>
    %168 = vector.extract_strided_slice %24 {offsets = [0, 8], sizes = [16, 1], strides = [1, 1]} : vector<16x19xf32> to vector<16x1xf32>
    %169 = vector.broadcast %168 : vector<16x1xf32> to vector<16x64xf32>
    %170 = vector.broadcast %28 : vector<1x64xf32> to vector<16x64xf32>
    %171 = arith.mulf %169, %170 : vector<16x64xf32>
    %172 = arith.addf %167, %171 : vector<16x64xf32>
    %173 = vector.extract_strided_slice %24 {offsets = [0, 9], sizes = [16, 1], strides = [1, 1]} : vector<16x19xf32> to vector<16x1xf32>
    %174 = vector.broadcast %173 : vector<16x1xf32> to vector<16x64xf32>
    %175 = vector.broadcast %29 : vector<1x64xf32> to vector<16x64xf32>
    %176 = arith.mulf %174, %175 : vector<16x64xf32>
    %177 = arith.addf %172, %176 : vector<16x64xf32>
    %178 = vector.broadcast %26 : vector<1x64xf32> to vector<16x64xf32>
    %179 = arith.addf %177, %178 : vector<16x64xf32>
    %180 = math.tanh %179 : vector<16x64xf32>
    %181 = arith.maximumf %163, %180 : vector<16x64xf32>
    %182 = arith.truncf %181 : vector<16x64xf32> to vector<16x64xbf16>
    %c4 = arith.constant 4 : index
    %c0_32 = arith.constant 0 : index
    %c0_33 = arith.constant 0 : index
    %183 = vector.load %arg19[%c4, %c0_32, %c0_33] : memref<10x16x64xbf16, #tpu.memory_space<vmem>>, vector<1x16x64xbf16>
    %184 = vector.shape_cast %183 : vector<1x16x64xbf16> to vector<16x64xbf16>
    %185 = vector.shape_cast %182 : vector<16x64xbf16> to vector<1x16x64xbf16>
    tpu.vector_store %arg19[%c4, %c0_32, %c0_33], %185 {strides = array<i32>} : memref<10x16x64xbf16, #tpu.memory_space<vmem>>, vector<1x16x64xbf16>,
    %186 = vector.extract_strided_slice %24 {offsets = [0, 8], sizes = [16, 1], strides = [1, 1]} : vector<16x19xf32> to vector<16x1xf32>
    %187 = vector.broadcast %186 : vector<16x1xf32> to vector<16x64xf32>
    %188 = vector.broadcast %27 : vector<1x64xf32> to vector<16x64xf32>
    %189 = arith.mulf %187, %188 : vector<16x64xf32>
    %190 = vector.extract_strided_slice %24 {offsets = [0, 9], sizes = [16, 1], strides = [1, 1]} : vector<16x19xf32> to vector<16x1xf32>
    %191 = vector.broadcast %190 : vector<16x1xf32> to vector<16x64xf32>
    %192 = vector.broadcast %28 : vector<1x64xf32> to vector<16x64xf32>
    %193 = arith.mulf %191, %192 : vector<16x64xf32>
    %194 = arith.addf %189, %193 : vector<16x64xf32>
    %195 = vector.extract_strided_slice %24 {offsets = [0, 10], sizes = [16, 1], strides = [1, 1]} : vector<16x19xf32> to vector<16x1xf32>
    %196 = vector.broadcast %195 : vector<16x1xf32> to vector<16x64xf32>
    %197 = vector.broadcast %29 : vector<1x64xf32> to vector<16x64xf32>
    %198 = arith.mulf %196, %197 : vector<16x64xf32>
    %199 = arith.addf %194, %198 : vector<16x64xf32>
    %200 = vector.broadcast %26 : vector<1x64xf32> to vector<16x64xf32>
    %201 = arith.addf %199, %200 : vector<16x64xf32>
    %202 = math.tanh %201 : vector<16x64xf32>
    %203 = vector.extract_strided_slice %24 {offsets = [0, 9], sizes = [16, 1], strides = [1, 1]} : vector<16x19xf32> to vector<16x1xf32>
    %204 = vector.broadcast %203 : vector<16x1xf32> to vector<16x64xf32>
    %205 = vector.broadcast %27 : vector<1x64xf32> to vector<16x64xf32>
    %206 = arith.mulf %204, %205 : vector<16x64xf32>
    %207 = vector.extract_strided_slice %24 {offsets = [0, 10], sizes = [16, 1], strides = [1, 1]} : vector<16x19xf32> to vector<16x1xf32>
    %208 = vector.broadcast %207 : vector<16x1xf32> to vector<16x64xf32>
    %209 = vector.broadcast %28 : vector<1x64xf32> to vector<16x64xf32>
    %210 = arith.mulf %208, %209 : vector<16x64xf32>
    %211 = arith.addf %206, %210 : vector<16x64xf32>
    %212 = vector.extract_strided_slice %24 {offsets = [0, 11], sizes = [16, 1], strides = [1, 1]} : vector<16x19xf32> to vector<16x1xf32>
    %213 = vector.broadcast %212 : vector<16x1xf32> to vector<16x64xf32>
    %214 = vector.broadcast %29 : vector<1x64xf32> to vector<16x64xf32>
    %215 = arith.mulf %213, %214 : vector<16x64xf32>
    %216 = arith.addf %211, %215 : vector<16x64xf32>
    %217 = vector.broadcast %26 : vector<1x64xf32> to vector<16x64xf32>
    %218 = arith.addf %216, %217 : vector<16x64xf32>
    %219 = math.tanh %218 : vector<16x64xf32>
    %220 = arith.maximumf %202, %219 : vector<16x64xf32>
    %221 = arith.truncf %220 : vector<16x64xf32> to vector<16x64xbf16>
    %c5_34 = arith.constant 5 : index
    %c0_35 = arith.constant 0 : index
    %c0_36 = arith.constant 0 : index
    %222 = vector.load %arg19[%c5_34, %c0_35, %c0_36] : memref<10x16x64xbf16, #tpu.memory_space<vmem>>, vector<1x16x64xbf16>
    %223 = vector.shape_cast %222 : vector<1x16x64xbf16> to vector<16x64xbf16>
    %224 = vector.shape_cast %221 : vector<16x64xbf16> to vector<1x16x64xbf16>
    tpu.vector_store %arg19[%c5_34, %c0_35, %c0_36], %224 {strides = array<i32>} : memref<10x16x64xbf16, #tpu.memory_space<vmem>>, vector<1x16x64xbf16>,
    %225 = vector.extract_strided_slice %24 {offsets = [0, 10], sizes = [16, 1], strides = [1, 1]} : vector<16x19xf32> to vector<16x1xf32>
    %226 = vector.broadcast %225 : vector<16x1xf32> to vector<16x64xf32>
    %227 = vector.broadcast %27 : vector<1x64xf32> to vector<16x64xf32>
    %228 = arith.mulf %226, %227 : vector<16x64xf32>
    %229 = vector.extract_strided_slice %24 {offsets = [0, 11], sizes = [16, 1], strides = [1, 1]} : vector<16x19xf32> to vector<16x1xf32>
    %230 = vector.broadcast %229 : vector<16x1xf32> to vector<16x64xf32>
    %231 = vector.broadcast %28 : vector<1x64xf32> to vector<16x64xf32>
    %232 = arith.mulf %230, %231 : vector<16x64xf32>
    %233 = arith.addf %228, %232 : vector<16x64xf32>
    %234 = vector.extract_strided_slice %24 {offsets = [0, 12], sizes = [16, 1], strides = [1, 1]} : vector<16x19xf32> to vector<16x1xf32>
    %235 = vector.broadcast %234 : vector<16x1xf32> to vector<16x64xf32>
    %236 = vector.broadcast %29 : vector<1x64xf32> to vector<16x64xf32>
    %237 = arith.mulf %235, %236 : vector<16x64xf32>
    %238 = arith.addf %233, %237 : vector<16x64xf32>
    %239 = vector.broadcast %26 : vector<1x64xf32> to vector<16x64xf32>
    %240 = arith.addf %238, %239 : vector<16x64xf32>
    %241 = math.tanh %240 : vector<16x64xf32>
    %242 = vector.extract_strided_slice %24 {offsets = [0, 11], sizes = [16, 1], strides = [1, 1]} : vector<16x19xf32> to vector<16x1xf32>
    %243 = vector.broadcast %242 : vector<16x1xf32> to vector<16x64xf32>
    %244 = vector.broadcast %27 : vector<1x64xf32> to vector<16x64xf32>
    %245 = arith.mulf %243, %244 : vector<16x64xf32>
    %246 = vector.extract_strided_slice %24 {offsets = [0, 12], sizes = [16, 1], strides = [1, 1]} : vector<16x19xf32> to vector<16x1xf32>
    %247 = vector.broadcast %246 : vector<16x1xf32> to vector<16x64xf32>
    %248 = vector.broadcast %28 : vector<1x64xf32> to vector<16x64xf32>
    %249 = arith.mulf %247, %248 : vector<16x64xf32>
    %250 = arith.addf %245, %249 : vector<16x64xf32>
    %251 = vector.extract_strided_slice %24 {offsets = [0, 13], sizes = [16, 1], strides = [1, 1]} : vector<16x19xf32> to vector<16x1xf32>
    %252 = vector.broadcast %251 : vector<16x1xf32> to vector<16x64xf32>
    %253 = vector.broadcast %29 : vector<1x64xf32> to vector<16x64xf32>
    %254 = arith.mulf %252, %253 : vector<16x64xf32>
    %255 = arith.addf %250, %254 : vector<16x64xf32>
    %256 = vector.broadcast %26 : vector<1x64xf32> to vector<16x64xf32>
    %257 = arith.addf %255, %256 : vector<16x64xf32>
    %258 = math.tanh %257 : vector<16x64xf32>
    %259 = arith.maximumf %241, %258 : vector<16x64xf32>
    %260 = arith.truncf %259 : vector<16x64xf32> to vector<16x64xbf16>
    %c6 = arith.constant 6 : index
    %c0_37 = arith.constant 0 : index
    %c0_38 = arith.constant 0 : index
    %261 = vector.load %arg19[%c6, %c0_37, %c0_38] : memref<10x16x64xbf16, #tpu.memory_space<vmem>>, vector<1x16x64xbf16>
    %262 = vector.shape_cast %261 : vector<1x16x64xbf16> to vector<16x64xbf16>
    %263 = vector.shape_cast %260 : vector<16x64xbf16> to vector<1x16x64xbf16>
    tpu.vector_store %arg19[%c6, %c0_37, %c0_38], %263 {strides = array<i32>} : memref<10x16x64xbf16, #tpu.memory_space<vmem>>, vector<1x16x64xbf16>,
    %264 = vector.extract_strided_slice %24 {offsets = [0, 12], sizes = [16, 1], strides = [1, 1]} : vector<16x19xf32> to vector<16x1xf32>
    %265 = vector.broadcast %264 : vector<16x1xf32> to vector<16x64xf32>
    %266 = vector.broadcast %27 : vector<1x64xf32> to vector<16x64xf32>
    %267 = arith.mulf %265, %266 : vector<16x64xf32>
    %268 = vector.extract_strided_slice %24 {offsets = [0, 13], sizes = [16, 1], strides = [1, 1]} : vector<16x19xf32> to vector<16x1xf32>
    %269 = vector.broadcast %268 : vector<16x1xf32> to vector<16x64xf32>
    %270 = vector.broadcast %28 : vector<1x64xf32> to vector<16x64xf32>
    %271 = arith.mulf %269, %270 : vector<16x64xf32>
    %272 = arith.addf %267, %271 : vector<16x64xf32>
    %273 = vector.extract_strided_slice %24 {offsets = [0, 14], sizes = [16, 1], strides = [1, 1]} : vector<16x19xf32> to vector<16x1xf32>
    %274 = vector.broadcast %273 : vector<16x1xf32> to vector<16x64xf32>
    %275 = vector.broadcast %29 : vector<1x64xf32> to vector<16x64xf32>
    %276 = arith.mulf %274, %275 : vector<16x64xf32>
    %277 = arith.addf %272, %276 : vector<16x64xf32>
    %278 = vector.broadcast %26 : vector<1x64xf32> to vector<16x64xf32>
    %279 = arith.addf %277, %278 : vector<16x64xf32>
    %280 = math.tanh %279 : vector<16x64xf32>
    %281 = vector.extract_strided_slice %24 {offsets = [0, 13], sizes = [16, 1], strides = [1, 1]} : vector<16x19xf32> to vector<16x1xf32>
    %282 = vector.broadcast %281 : vector<16x1xf32> to vector<16x64xf32>
    %283 = vector.broadcast %27 : vector<1x64xf32> to vector<16x64xf32>
    %284 = arith.mulf %282, %283 : vector<16x64xf32>
    %285 = vector.extract_strided_slice %24 {offsets = [0, 14], sizes = [16, 1], strides = [1, 1]} : vector<16x19xf32> to vector<16x1xf32>
    %286 = vector.broadcast %285 : vector<16x1xf32> to vector<16x64xf32>
    %287 = vector.broadcast %28 : vector<1x64xf32> to vector<16x64xf32>
    %288 = arith.mulf %286, %287 : vector<16x64xf32>
    %289 = arith.addf %284, %288 : vector<16x64xf32>
    %290 = vector.extract_strided_slice %24 {offsets = [0, 15], sizes = [16, 1], strides = [1, 1]} : vector<16x19xf32> to vector<16x1xf32>
    %291 = vector.broadcast %290 : vector<16x1xf32> to vector<16x64xf32>
    %292 = vector.broadcast %29 : vector<1x64xf32> to vector<16x64xf32>
    %293 = arith.mulf %291, %292 : vector<16x64xf32>
    %294 = arith.addf %289, %293 : vector<16x64xf32>
    %295 = vector.broadcast %26 : vector<1x64xf32> to vector<16x64xf32>
    %296 = arith.addf %294, %295 : vector<16x64xf32>
    %297 = math.tanh %296 : vector<16x64xf32>
    %298 = arith.maximumf %280, %297 : vector<16x64xf32>
    %299 = arith.truncf %298 : vector<16x64xf32> to vector<16x64xbf16>
    %c7 = arith.constant 7 : index
    %c0_39 = arith.constant 0 : index
    %c0_40 = arith.constant 0 : index
    %300 = vector.load %arg19[%c7, %c0_39, %c0_40] : memref<10x16x64xbf16, #tpu.memory_space<vmem>>, vector<1x16x64xbf16>
    %301 = vector.shape_cast %300 : vector<1x16x64xbf16> to vector<16x64xbf16>
    %302 = vector.shape_cast %299 : vector<16x64xbf16> to vector<1x16x64xbf16>
    tpu.vector_store %arg19[%c7, %c0_39, %c0_40], %302 {strides = array<i32>} : memref<10x16x64xbf16, #tpu.memory_space<vmem>>, vector<1x16x64xbf16>,
    %303 = vector.extract_strided_slice %24 {offsets = [0, 14], sizes = [16, 1], strides = [1, 1]} : vector<16x19xf32> to vector<16x1xf32>
    %304 = vector.broadcast %303 : vector<16x1xf32> to vector<16x64xf32>
    %305 = vector.broadcast %27 : vector<1x64xf32> to vector<16x64xf32>
    %306 = arith.mulf %304, %305 : vector<16x64xf32>
    %307 = vector.extract_strided_slice %24 {offsets = [0, 15], sizes = [16, 1], strides = [1, 1]} : vector<16x19xf32> to vector<16x1xf32>
    %308 = vector.broadcast %307 : vector<16x1xf32> to vector<16x64xf32>
    %309 = vector.broadcast %28 : vector<1x64xf32> to vector<16x64xf32>
    %310 = arith.mulf %308, %309 : vector<16x64xf32>
    %311 = arith.addf %306, %310 : vector<16x64xf32>
    %312 = vector.extract_strided_slice %24 {offsets = [0, 16], sizes = [16, 1], strides = [1, 1]} : vector<16x19xf32> to vector<16x1xf32>
    %313 = vector.broadcast %312 : vector<16x1xf32> to vector<16x64xf32>
    %314 = vector.broadcast %29 : vector<1x64xf32> to vector<16x64xf32>
    %315 = arith.mulf %313, %314 : vector<16x64xf32>
    %316 = arith.addf %311, %315 : vector<16x64xf32>
    %317 = vector.broadcast %26 : vector<1x64xf32> to vector<16x64xf32>
    %318 = arith.addf %316, %317 : vector<16x64xf32>
    %319 = math.tanh %318 : vector<16x64xf32>
    %320 = vector.extract_strided_slice %24 {offsets = [0, 15], sizes = [16, 1], strides = [1, 1]} : vector<16x19xf32> to vector<16x1xf32>
    %321 = vector.broadcast %320 : vector<16x1xf32> to vector<16x64xf32>
    %322 = vector.broadcast %27 : vector<1x64xf32> to vector<16x64xf32>
    %323 = arith.mulf %321, %322 : vector<16x64xf32>
    %324 = vector.extract_strided_slice %24 {offsets = [0, 16], sizes = [16, 1], strides = [1, 1]} : vector<16x19xf32> to vector<16x1xf32>
    %325 = vector.broadcast %324 : vector<16x1xf32> to vector<16x64xf32>
    %326 = vector.broadcast %28 : vector<1x64xf32> to vector<16x64xf32>
    %327 = arith.mulf %325, %326 : vector<16x64xf32>
    %328 = arith.addf %323, %327 : vector<16x64xf32>
    %329 = vector.extract_strided_slice %24 {offsets = [0, 17], sizes = [16, 1], strides = [1, 1]} : vector<16x19xf32> to vector<16x1xf32>
    %330 = vector.broadcast %329 : vector<16x1xf32> to vector<16x64xf32>
    %331 = vector.broadcast %29 : vector<1x64xf32> to vector<16x64xf32>
    %332 = arith.mulf %330, %331 : vector<16x64xf32>
    %333 = arith.addf %328, %332 : vector<16x64xf32>
    %334 = vector.broadcast %26 : vector<1x64xf32> to vector<16x64xf32>
    %335 = arith.addf %333, %334 : vector<16x64xf32>
    %336 = math.tanh %335 : vector<16x64xf32>
    %337 = arith.maximumf %319, %336 : vector<16x64xf32>
    %338 = arith.truncf %337 : vector<16x64xf32> to vector<16x64xbf16>
    %c8 = arith.constant 8 : index
    %c0_41 = arith.constant 0 : index
    %c0_42 = arith.constant 0 : index
    %339 = vector.load %arg19[%c8, %c0_41, %c0_42] : memref<10x16x64xbf16, #tpu.memory_space<vmem>>, vector<1x16x64xbf16>
    %340 = vector.shape_cast %339 : vector<1x16x64xbf16> to vector<16x64xbf16>
    %341 = vector.shape_cast %338 : vector<16x64xbf16> to vector<1x16x64xbf16>
    tpu.vector_store %arg19[%c8, %c0_41, %c0_42], %341 {strides = array<i32>} : memref<10x16x64xbf16, #tpu.memory_space<vmem>>, vector<1x16x64xbf16>,
    %c0_43 = arith.constant 0 : index
    %c0_44 = arith.constant 0 : index
    %c0_45 = arith.constant 0 : index
    %342 = vector.load %arg19[%c0_43, %c0_44, %c0_45] : memref<10x16x64xbf16, #tpu.memory_space<vmem>>, vector<8x16x64xbf16>
    %343 = vector.shape_cast %342 : vector<8x16x64xbf16> to vector<128x64xbf16>
    %c0_46 = arith.constant 0 : index
    %c0_47 = arith.constant 0 : index
    %c0_48 = arith.constant 0 : index
    %344 = vector.load %arg4[%c0_46, %c0_47, %c0_48] : memref<3x64x128xbf16, #tpu.memory_space<vmem>>, vector<1x64x128xbf16>
    %345 = vector.shape_cast %344 : vector<1x64x128xbf16> to vector<64x128xbf16>
    %cst_49 = arith.constant dense<0.000000e+00> : vector<128x128xf32>
    %346 = tpu.matmul %343, %345, %cst_49 {dimension_numbers = #tpu.dot_dimension_numbers<[1], [0], [0], [1], [0, 0, 1, 1], [], []>} : vector<128x64xbf16>, vector<64x128xbf16>, vector<128x128xf32> -> vector<128x128xf32>
    %c1_50 = arith.constant 1 : index
    %c0_51 = arith.constant 0 : index
    %c0_52 = arith.constant 0 : index
    %347 = vector.load %arg19[%c1_50, %c0_51, %c0_52] : memref<10x16x64xbf16, #tpu.memory_space<vmem>>, vector<8x16x64xbf16>
    %348 = vector.shape_cast %347 : vector<8x16x64xbf16> to vector<128x64xbf16>
    %c1_53 = arith.constant 1 : index
    %c0_54 = arith.constant 0 : index
    %c0_55 = arith.constant 0 : index
    %349 = vector.load %arg4[%c1_53, %c0_54, %c0_55] : memref<3x64x128xbf16, #tpu.memory_space<vmem>>, vector<1x64x128xbf16>
    %350 = vector.shape_cast %349 : vector<1x64x128xbf16> to vector<64x128xbf16>
    %cst_56 = arith.constant dense<0.000000e+00> : vector<128x128xf32>
    %351 = tpu.matmul %348, %350, %cst_56 {dimension_numbers = #tpu.dot_dimension_numbers<[1], [0], [0], [1], [0, 0, 1, 1], [], []>} : vector<128x64xbf16>, vector<64x128xbf16>, vector<128x128xf32> -> vector<128x128xf32>
    %352 = arith.addf %346, %351 : vector<128x128xf32>
    %c2_57 = arith.constant 2 : index
    %c0_58 = arith.constant 0 : index
    %c0_59 = arith.constant 0 : index
    %353 = vector.load %arg19[%c2_57, %c0_58, %c0_59] : memref<10x16x64xbf16, #tpu.memory_space<vmem>>, vector<8x16x64xbf16>
    %354 = vector.shape_cast %353 : vector<8x16x64xbf16> to vector<128x64xbf16>
    %c2_60 = arith.constant 2 : index
    %c0_61 = arith.constant 0 : index
    %c0_62 = arith.constant 0 : index
    %355 = vector.load %arg4[%c2_60, %c0_61, %c0_62] : memref<3x64x128xbf16, #tpu.memory_space<vmem>>, vector<1x64x128xbf16>
    %356 = vector.shape_cast %355 : vector<1x64x128xbf16> to vector<64x128xbf16>
    %cst_63 = arith.constant dense<0.000000e+00> : vector<128x128xf32>
    %357 = tpu.matmul %354, %356, %cst_63 {dimension_numbers = #tpu.dot_dimension_numbers<[1], [0], [0], [1], [0, 0, 1, 1], [], []>} : vector<128x64xbf16>, vector<64x128xbf16>, vector<128x128xf32> -> vector<128x128xf32>
    %358 = arith.addf %352, %357 : vector<128x128xf32>
    %c0_64 = arith.constant 0 : index
    %c0_65 = arith.constant 0 : index
    %359 = vector.load %arg5[%c0_64, %c0_65] : memref<1x128xf32, #tpu.memory_space<vmem>>, vector<1x128xf32>
    %360 = vector.broadcast %359 : vector<1x128xf32> to vector<128x128xf32>
    %361 = arith.addf %358, %360 : vector<128x128xf32>
    %362 = math.tanh %361 : vector<128x128xf32>
    %363 = vector.shape_cast %362 : vector<128x128xf32> to vector<4x32x128xf32>
    %364 = vector.extract_strided_slice %363 {offsets = [0, 0, 0], sizes = [4, 16, 128], strides = [1, 1, 1]} : vector<4x32x128xf32> to vector<4x16x128xf32>
    %365 = vector.extract_strided_slice %363 {offsets = [0, 16, 0], sizes = [4, 16, 128], strides = [1, 1, 1]} : vector<4x32x128xf32> to vector<4x16x128xf32>
    %366 = arith.maximumf %364, %365 : vector<4x16x128xf32>
    %367 = arith.truncf %366 : vector<4x16x128xf32> to vector<4x16x128xbf16>
    %c1_66 = arith.constant 1 : index
    %c0_67 = arith.constant 0 : index
    %c0_68 = arith.constant 0 : index
    %368 = vector.load %arg20[%c1_66, %c0_67, %c0_68] : memref<6x16x128xbf16, #tpu.memory_space<vmem>>, vector<4x16x128xbf16>
    tpu.vector_store %arg20[%c1_66, %c0_67, %c0_68], %367 {strides = array<i32>} : memref<6x16x128xbf16, #tpu.memory_space<vmem>>, vector<4x16x128xbf16>,
    %c0_69 = arith.constant 0 : index
    %c0_70 = arith.constant 0 : index
    %c0_71 = arith.constant 0 : index
    %369 = vector.load %arg20[%c0_69, %c0_70, %c0_71] : memref<6x16x128xbf16, #tpu.memory_space<vmem>>, vector<4x16x128xbf16>
    %370 = vector.shape_cast %369 : vector<4x16x128xbf16> to vector<64x128xbf16>
    %c0_72 = arith.constant 0 : index
    %c0_73 = arith.constant 0 : index
    %c0_74 = arith.constant 0 : index
    %371 = vector.load %arg6[%c0_72, %c0_73, %c0_74] : memref<3x128x256xbf16, #tpu.memory_space<vmem>>, vector<1x128x256xbf16>
    %372 = vector.shape_cast %371 : vector<1x128x256xbf16> to vector<128x256xbf16>
    %cst_75 = arith.constant dense<0.000000e+00> : vector<64x256xf32>
    %373 = tpu.matmul %370, %372, %cst_75 {dimension_numbers = #tpu.dot_dimension_numbers<[1], [0], [0], [1], [0, 0, 1, 1], [], []>} : vector<64x128xbf16>, vector<128x256xbf16>, vector<64x256xf32> -> vector<64x256xf32>
    %c1_76 = arith.constant 1 : index
    %c0_77 = arith.constant 0 : index
    %c0_78 = arith.constant 0 : index
    %374 = vector.load %arg20[%c1_76, %c0_77, %c0_78] : memref<6x16x128xbf16, #tpu.memory_space<vmem>>, vector<4x16x128xbf16>
    %375 = vector.shape_cast %374 : vector<4x16x128xbf16> to vector<64x128xbf16>
    %c1_79 = arith.constant 1 : index
    %c0_80 = arith.constant 0 : index
    %c0_81 = arith.constant 0 : index
    %376 = vector.load %arg6[%c1_79, %c0_80, %c0_81] : memref<3x128x256xbf16, #tpu.memory_space<vmem>>, vector<1x128x256xbf16>
    %377 = vector.shape_cast %376 : vector<1x128x256xbf16> to vector<128x256xbf16>
    %cst_82 = arith.constant dense<0.000000e+00> : vector<64x256xf32>
    %378 = tpu.matmul %375, %377, %cst_82 {dimension_numbers = #tpu.dot_dimension_numbers<[1], [0], [0], [1], [0, 0, 1, 1], [], []>} : vector<64x128xbf16>, vector<128x256xbf16>, vector<64x256xf32> -> vector<64x256xf32>
    %379 = arith.addf %373, %378 : vector<64x256xf32>
    %c2_83 = arith.constant 2 : index
    %c0_84 = arith.constant 0 : index
    %c0_85 = arith.constant 0 : index
    %380 = vector.load %arg20[%c2_83, %c0_84, %c0_85] : memref<6x16x128xbf16, #tpu.memory_space<vmem>>, vector<4x16x128xbf16>
    %381 = vector.shape_cast %380 : vector<4x16x128xbf16> to vector<64x128xbf16>
    %c2_86 = arith.constant 2 : index
    %c0_87 = arith.constant 0 : index
    %c0_88 = arith.constant 0 : index
    %382 = vector.load %arg6[%c2_86, %c0_87, %c0_88] : memref<3x128x256xbf16, #tpu.memory_space<vmem>>, vector<1x128x256xbf16>
    %383 = vector.shape_cast %382 : vector<1x128x256xbf16> to vector<128x256xbf16>
    %cst_89 = arith.constant dense<0.000000e+00> : vector<64x256xf32>
    %384 = tpu.matmul %381, %383, %cst_89 {dimension_numbers = #tpu.dot_dimension_numbers<[1], [0], [0], [1], [0, 0, 1, 1], [], []>} : vector<64x128xbf16>, vector<128x256xbf16>, vector<64x256xf32> -> vector<64x256xf32>
    %385 = arith.addf %379, %384 : vector<64x256xf32>
    %c0_90 = arith.constant 0 : index
    %c0_91 = arith.constant 0 : index
    %386 = vector.load %arg7[%c0_90, %c0_91] : memref<1x256xf32, #tpu.memory_space<vmem>>, vector<1x256xf32>
    %387 = vector.broadcast %386 : vector<1x256xf32> to vector<64x256xf32>
    %388 = arith.addf %385, %387 : vector<64x256xf32>
    %389 = math.tanh %388 : vector<64x256xf32>
    %390 = vector.shape_cast %389 : vector<64x256xf32> to vector<2x32x256xf32>
    %391 = vector.extract_strided_slice %390 {offsets = [0, 0, 0], sizes = [2, 16, 256], strides = [1, 1, 1]} : vector<2x32x256xf32> to vector<2x16x256xf32>
    %392 = vector.extract_strided_slice %390 {offsets = [0, 16, 0], sizes = [2, 16, 256], strides = [1, 1, 1]} : vector<2x32x256xf32> to vector<2x16x256xf32>
    %393 = arith.maximumf %391, %392 : vector<2x16x256xf32>
    %394 = arith.truncf %393 : vector<2x16x256xf32> to vector<2x16x256xbf16>
    %c1_92 = arith.constant 1 : index
    %c0_93 = arith.constant 0 : index
    %c0_94 = arith.constant 0 : index
    %395 = vector.load %arg21[%c1_92, %c0_93, %c0_94] : memref<4x16x256xbf16, #tpu.memory_space<vmem>>, vector<2x16x256xbf16>
    tpu.vector_store %arg21[%c1_92, %c0_93, %c0_94], %394 {strides = array<i32>} : memref<4x16x256xbf16, #tpu.memory_space<vmem>>, vector<2x16x256xbf16>,
    %c0_95 = arith.constant 0 : index
    %c0_96 = arith.constant 0 : index
    %c0_97 = arith.constant 0 : index
    %396 = vector.load %arg21[%c0_95, %c0_96, %c0_97] : memref<4x16x256xbf16, #tpu.memory_space<vmem>>, vector<2x16x256xbf16>
    %397 = vector.shape_cast %396 : vector<2x16x256xbf16> to vector<32x256xbf16>
    %c0_98 = arith.constant 0 : index
    %c0_99 = arith.constant 0 : index
    %c0_100 = arith.constant 0 : index
    %398 = vector.load %arg8[%c0_98, %c0_99, %c0_100] : memref<3x256x512xbf16, #tpu.memory_space<vmem>>, vector<1x256x512xbf16>
    %399 = vector.shape_cast %398 : vector<1x256x512xbf16> to vector<256x512xbf16>
    %cst_101 = arith.constant dense<0.000000e+00> : vector<32x512xf32>
    %400 = tpu.matmul %397, %399, %cst_101 {dimension_numbers = #tpu.dot_dimension_numbers<[1], [0], [0], [1], [0, 0, 1, 1], [], []>} : vector<32x256xbf16>, vector<256x512xbf16>, vector<32x512xf32> -> vector<32x512xf32>
    %c1_102 = arith.constant 1 : index
    %c0_103 = arith.constant 0 : index
    %c0_104 = arith.constant 0 : index
    %401 = vector.load %arg21[%c1_102, %c0_103, %c0_104] : memref<4x16x256xbf16, #tpu.memory_space<vmem>>, vector<2x16x256xbf16>
    %402 = vector.shape_cast %401 : vector<2x16x256xbf16> to vector<32x256xbf16>
    %c1_105 = arith.constant 1 : index
    %c0_106 = arith.constant 0 : index
    %c0_107 = arith.constant 0 : index
    %403 = vector.load %arg8[%c1_105, %c0_106, %c0_107] : memref<3x256x512xbf16, #tpu.memory_space<vmem>>, vector<1x256x512xbf16>
    %404 = vector.shape_cast %403 : vector<1x256x512xbf16> to vector<256x512xbf16>
    %cst_108 = arith.constant dense<0.000000e+00> : vector<32x512xf32>
    %405 = tpu.matmul %402, %404, %cst_108 {dimension_numbers = #tpu.dot_dimension_numbers<[1], [0], [0], [1], [0, 0, 1, 1], [], []>} : vector<32x256xbf16>, vector<256x512xbf16>, vector<32x512xf32> -> vector<32x512xf32>
    %406 = arith.addf %400, %405 : vector<32x512xf32>
    %c2_109 = arith.constant 2 : index
    %c0_110 = arith.constant 0 : index
    %c0_111 = arith.constant 0 : index
    %407 = vector.load %arg21[%c2_109, %c0_110, %c0_111] : memref<4x16x256xbf16, #tpu.memory_space<vmem>>, vector<2x16x256xbf16>
    %408 = vector.shape_cast %407 : vector<2x16x256xbf16> to vector<32x256xbf16>
    %c2_112 = arith.constant 2 : index
    %c0_113 = arith.constant 0 : index
    %c0_114 = arith.constant 0 : index
    %409 = vector.load %arg8[%c2_112, %c0_113, %c0_114] : memref<3x256x512xbf16, #tpu.memory_space<vmem>>, vector<1x256x512xbf16>
    %410 = vector.shape_cast %409 : vector<1x256x512xbf16> to vector<256x512xbf16>
    %cst_115 = arith.constant dense<0.000000e+00> : vector<32x512xf32>
    %411 = tpu.matmul %408, %410, %cst_115 {dimension_numbers = #tpu.dot_dimension_numbers<[1], [0], [0], [1], [0, 0, 1, 1], [], []>} : vector<32x256xbf16>, vector<256x512xbf16>, vector<32x512xf32> -> vector<32x512xf32>
    %412 = arith.addf %406, %411 : vector<32x512xf32>
    %c0_116 = arith.constant 0 : index
    %c0_117 = arith.constant 0 : index
    %413 = vector.load %arg9[%c0_116, %c0_117] : memref<1x512xf32, #tpu.memory_space<vmem>>, vector<1x512xf32>
    %414 = vector.broadcast %413 : vector<1x512xf32> to vector<32x512xf32>
    %415 = arith.addf %412, %414 : vector<32x512xf32>
    %416 = math.tanh %415 : vector<32x512xf32>
    %417 = vector.extract_strided_slice %416 {offsets = [0, 0], sizes = [16, 512], strides = [1, 1]} : vector<32x512xf32> to vector<16x512xf32>
    %418 = vector.extract_strided_slice %416 {offsets = [16, 0], sizes = [16, 512], strides = [1, 1]} : vector<32x512xf32> to vector<16x512xf32>
    %419 = arith.maximumf %417, %418 : vector<16x512xf32>
    %420 = arith.truncf %419 : vector<16x512xf32> to vector<16x512xbf16>
    %c0_118 = arith.constant 0 : index
    %c0_119 = arith.constant 0 : index
    %421 = vector.load %arg10[%c0_118, %c0_119] : memref<512x1024xbf16, #tpu.memory_space<vmem>>, vector<512x1024xbf16>
    %cst_120 = arith.constant dense<0.000000e+00> : vector<16x1024xf32>
    %422 = tpu.matmul %420, %421, %cst_120 {dimension_numbers = #tpu.dot_dimension_numbers<[1], [0], [0], [1], [0, 0, 1, 1], [], []>} : vector<16x512xbf16>, vector<512x1024xbf16>, vector<16x1024xf32> -> vector<16x1024xf32>
    %c0_121 = arith.constant 0 : index
    %c0_122 = arith.constant 0 : index
    %423 = vector.load %arg11[%c0_121, %c0_122] : memref<1x1024xf32, #tpu.memory_space<vmem>>, vector<1x1024xf32>
    %424 = vector.broadcast %423 : vector<1x1024xf32> to vector<16x1024xf32>
    %425 = arith.addf %422, %424 : vector<16x1024xf32>
    %426 = math.tanh %425 : vector<16x1024xf32>
    %427 = arith.truncf %426 : vector<16x1024xf32> to vector<16x1024xbf16>
    %c0_123 = arith.constant 0 : index
    %c0_124 = arith.constant 0 : index
    %428 = vector.load %arg12[%c0_123, %c0_124] : memref<1024x512xbf16, #tpu.memory_space<vmem>>, vector<1024x512xbf16>
    %cst_125 = arith.constant dense<0.000000e+00> : vector<16x512xf32>
    %429 = tpu.matmul %427, %428, %cst_125 {dimension_numbers = #tpu.dot_dimension_numbers<[1], [0], [0], [1], [0, 0, 1, 1], [], []>} : vector<16x1024xbf16>, vector<1024x512xbf16>, vector<16x512xf32> -> vector<16x512xf32>
    %c0_126 = arith.constant 0 : index
    %c0_127 = arith.constant 0 : index
    %430 = vector.load %arg13[%c0_126, %c0_127] : memref<1x512xf32, #tpu.memory_space<vmem>>, vector<1x512xf32>
    %431 = vector.broadcast %430 : vector<1x512xf32> to vector<16x512xf32>
    %432 = arith.addf %429, %431 : vector<16x512xf32>
    %433 = math.tanh %432 : vector<16x512xf32>
    %434 = arith.truncf %433 : vector<16x512xf32> to vector<16x512xbf16>
    %c0_128 = arith.constant 0 : index
    %c0_129 = arith.constant 0 : index
    %435 = vector.load %arg14[%c0_128, %c0_129] : memref<512x128xbf16, #tpu.memory_space<vmem>>, vector<512x128xbf16>
    %cst_130 = arith.constant dense<0.000000e+00> : vector<16x128xf32>
    %436 = tpu.matmul %434, %435, %cst_130 {dimension_numbers = #tpu.dot_dimension_numbers<[1], [0], [0], [1], [0, 0, 1, 1], [], []>} : vector<16x512xbf16>, vector<512x128xbf16>, vector<16x128xf32> -> vector<16x128xf32>
    %c0_131 = arith.constant 0 : index
    %c0_132 = arith.constant 0 : index
    %437 = vector.load %arg15[%c0_131, %c0_132] : memref<1x128xf32, #tpu.memory_space<vmem>>, vector<1x128xf32>
    %438 = vector.broadcast %437 : vector<1x128xf32> to vector<16x128xf32>
    %439 = arith.addf %436, %438 : vector<16x128xf32>
    %440 = math.tanh %439 : vector<16x128xf32>
    %441 = arith.truncf %440 : vector<16x128xf32> to vector<16x128xbf16>
    %c0_133 = arith.constant 0 : index
    %c0_134 = arith.constant 0 : index
    %442 = vector.load %arg16[%c0_133, %c0_134] : memref<128x128xbf16, #tpu.memory_space<vmem>>, vector<128x128xbf16>
    %cst_135 = arith.constant dense<0.000000e+00> : vector<16x128xf32>
    %443 = tpu.matmul %441, %442, %cst_135 {dimension_numbers = #tpu.dot_dimension_numbers<[1], [0], [0], [1], [0, 0, 1, 1], [], []>} : vector<16x128xbf16>, vector<128x128xbf16>, vector<16x128xf32> -> vector<16x128xf32>
    %c0_136 = arith.constant 0 : index
    %c0_137 = arith.constant 0 : index
    %444 = vector.load %arg17[%c0_136, %c0_137] : memref<1x128xf32, #tpu.memory_space<vmem>>, vector<1x128xf32>
    %445 = vector.broadcast %444 : vector<1x128xf32> to vector<16x128xf32>
    %446 = arith.addf %443, %445 : vector<16x128xf32>
    %c0_138 = arith.constant 0 : index
    %c0_139 = arith.constant 0 : index
    %447 = vector.load %arg18[%c0_138, %c0_139] : memref<16x128xf32, #tpu.memory_space<vmem>>, vector<16x128xf32>
    tpu.vector_store %arg18[%c0_138, %c0_139], %446 {strides = array<i32>} : memref<16x128xf32, #tpu.memory_space<vmem>>, vector<16x128xf32>,
    return
  }
  func.func @transform_0(%arg0: i32) -> (i32, i32) {
    %c0_i32 = arith.constant 0 : i32
    %c0_i32_0 = arith.constant 0 : i32
    return %arg0, %c0_i32 : i32, i32
  }
  func.func @transform_1(%arg0: i32) -> (i32, i32) {
    %c0_i32 = arith.constant 0 : i32
    %c0_i32_0 = arith.constant 0 : i32
    %c0_i32_1 = arith.constant 0 : i32
    return %c0_i32, %c0_i32_0 : i32, i32
  }
  func.func @transform_2(%arg0: i32) -> (i32, i32) {
    %c0_i32 = arith.constant 0 : i32
    %c0_i32_0 = arith.constant 0 : i32
    %c0_i32_1 = arith.constant 0 : i32
    return %c0_i32, %c0_i32_0 : i32, i32
  }
  func.func @transform_3(%arg0: i32) -> (i32, i32, i32) {
    %c0_i32 = arith.constant 0 : i32
    %c0_i32_0 = arith.constant 0 : i32
    %c0_i32_1 = arith.constant 0 : i32
    %c0_i32_2 = arith.constant 0 : i32
    return %c0_i32, %c0_i32_0, %c0_i32_1 : i32, i32, i32
  }
  func.func @transform_4(%arg0: i32) -> (i32, i32) {
    %c0_i32 = arith.constant 0 : i32
    %c0_i32_0 = arith.constant 0 : i32
    %c0_i32_1 = arith.constant 0 : i32
    return %c0_i32, %c0_i32_0 : i32, i32
  }
  func.func @transform_5(%arg0: i32) -> (i32, i32, i32) {
    %c0_i32 = arith.constant 0 : i32
    %c0_i32_0 = arith.constant 0 : i32
    %c0_i32_1 = arith.constant 0 : i32
    %c0_i32_2 = arith.constant 0 : i32
    return %c0_i32, %c0_i32_0, %c0_i32_1 : i32, i32, i32
  }
  func.func @transform_6(%arg0: i32) -> (i32, i32) {
    %c0_i32 = arith.constant 0 : i32
    %c0_i32_0 = arith.constant 0 : i32
    %c0_i32_1 = arith.constant 0 : i32
    return %c0_i32, %c0_i32_0 : i32, i32
  }
  func.func @transform_7(%arg0: i32) -> (i32, i32, i32) {
    %c0_i32 = arith.constant 0 : i32
    %c0_i32_0 = arith.constant 0 : i32
    %c0_i32_1 = arith.constant 0 : i32
    %c0_i32_2 = arith.constant 0 : i32
    return %c0_i32, %c0_i32_0, %c0_i32_1 : i32, i32, i32
  }
  func.func @transform_8(%arg0: i32) -> (i32, i32) {
    %c0_i32 = arith.constant 0 : i32
    %c0_i32_0 = arith.constant 0 : i32
    %c0_i32_1 = arith.constant 0 : i32
    return %c0_i32, %c0_i32_0 : i32, i32
  }
  func.func @transform_9(%arg0: i32) -> (i32, i32) {
    %c0_i32 = arith.constant 0 : i32
    %c0_i32_0 = arith.constant 0 : i32
    %c0_i32_1 = arith.constant 0 : i32
    return %c0_i32, %c0_i32_0 : i32, i32
  }
  func.func @transform_10(%arg0: i32) -> (i32, i32) {
    %c0_i32 = arith.constant 0 : i32
    %c0_i32_0 = arith.constant 0 : i32
    %c0_i32_1 = arith.constant 0 : i32
    return %c0_i32, %c0_i32_0 : i32, i32
  }
  func.func @transform_11(%arg0: i32) -> (i32, i32) {
    %c0_i32 = arith.constant 0 : i32
    %c0_i32_0 = arith.constant 0 : i32
    %c0_i32_1 = arith.constant 0 : i32
    return %c0_i32, %c0_i32_0 : i32, i32
  }
  func.func @transform_12(%arg0: i32) -> (i32, i32) {
    %c0_i32 = arith.constant 0 : i32
    %c0_i32_0 = arith.constant 0 : i32
    %c0_i32_1 = arith.constant 0 : i32
    return %c0_i32, %c0_i32_0 : i32, i32
  }
  func.func @transform_13(%arg0: i32) -> (i32, i32) {
    %c0_i32 = arith.constant 0 : i32
    %c0_i32_0 = arith.constant 0 : i32
    %c0_i32_1 = arith.constant 0 : i32
    return %c0_i32, %c0_i32_0 : i32, i32
  }
  func.func @transform_14(%arg0: i32) -> (i32, i32) {
    %c0_i32 = arith.constant 0 : i32
    %c0_i32_0 = arith.constant 0 : i32
    %c0_i32_1 = arith.constant 0 : i32
    return %c0_i32, %c0_i32_0 : i32, i32
  }
  func.func @transform_15(%arg0: i32) -> (i32, i32) {
    %c0_i32 = arith.constant 0 : i32
    %c0_i32_0 = arith.constant 0 : i32
    %c0_i32_1 = arith.constant 0 : i32
    return %c0_i32, %c0_i32_0 : i32, i32
  }
  func.func @transform_16(%arg0: i32) -> (i32, i32) {
    %c0_i32 = arith.constant 0 : i32
    %c0_i32_0 = arith.constant 0 : i32
    %c0_i32_1 = arith.constant 0 : i32
    return %c0_i32, %c0_i32_0 : i32, i32
  }
  func.func @transform_17(%arg0: i32) -> (i32, i32) {
    %c0_i32 = arith.constant 0 : i32
    %c0_i32_0 = arith.constant 0 : i32
    return %arg0, %c0_i32 : i32, i32
  }
}

</mosaic_0001>

<llo_original>
// kernel: forward.1
$region0: #{forward.1}
  #allocation0 [shape = 'u32[]', space=smem, size = 0x4, offset = 0x4, fixed_abs, tag = 'smem constant byte address 0x4 - core index']
  #allocation1 [shape = 'u32[144,128]{1,0:T(1,128)}', space=vmem, size = 0x12000, scoped, tag = 'internal scratch']
  #allocation2 [shape = 'bf16[10,16,64]{2,1,0:T(16,128)(2,1)}', space=vmem, size = 0xa000, scoped, tag = 'scratch operand']
  #allocation3 [shape = 'bf16[6,16,128]{2,1,0:T(16,128)(2,1)}', space=vmem, size = 0x6000, scoped, tag = 'scratch operand']
  #allocation4 [shape = 'bf16[4,16,256]{2,1,0:T(16,128)(2,1)}', space=vmem, size = 0x8000, scoped, tag = 'scratch operand']
  %s0 = inlined_call_operand.vmem [shape: f32[16,19], index: 0, kind: input, shape index: {}]
  %s1 = inlined_call_operand.hbm [shape: f32[3,64], index: 1, kind: input, shape index: {}]
  %s2 = inlined_call_operand.vmem [shape: f32[1,64], index: 2, kind: input, shape index: {}]
  %s3 = inlined_call_operand.hbm [shape: bf16[3,64,128], index: 3, kind: input, shape index: {}]
  %s4 = inlined_call_operand.hbm [shape: f32[1,128], index: 4, kind: input, shape index: {}]
  %s5 = inlined_call_operand.hbm [shape: bf16[3,128,256], index: 5, kind: input, shape index: {}]
  %s6 = inlined_call_operand.vmem [shape: f32[1,256], index: 6, kind: input, shape index: {}]
  %s7 = inlined_call_operand.hbm [shape: bf16[3,256,512], index: 7, kind: input, shape index: {}]
  %s8 = inlined_call_operand.hbm [shape: f32[1,512], index: 8, kind: input, shape index: {}]
  %s9 = inlined_call_operand.hbm [shape: bf16[512,1024], index: 9, kind: input, shape index: {}]
  %s10 = inlined_call_operand.vmem [shape: f32[1,1024], index: 10, kind: input, shape index: {}]
  %s11 = inlined_call_operand.hbm [shape: bf16[1024,512], index: 11, kind: input, shape index: {}]
  %s12 = inlined_call_operand.hbm [shape: f32[1,512], index: 12, kind: input, shape index: {}]
  %s13 = inlined_call_operand.hbm [shape: bf16[512,128], index: 13, kind: input, shape index: {}]
  %s14 = inlined_call_operand.hbm [shape: f32[1,128], index: 14, kind: input, shape index: {}]
  %s15 = inlined_call_operand.vmem [shape: bf16[128,128], index: 15, kind: input, shape index: {}]
  %s16 = inlined_call_operand.hbm [shape: f32[1,128], index: 16, kind: input, shape index: {}]
  %s17 = inlined_call_operand.vmem [shape: f32[16,128], index: 17, kind: output, shape index: {}]
  %s18 = sld [smem:[#allocation0]]
  $region126: #{forward.1} parent=0
    _
  %s20 = ssub.s32 1, %s18
  %s21 = scalar_select 0, %s20, %s18
  $region1: #{forward.1} parent=0
    #allocation5 [shape = 'u8[2048]{0}', space=vmem, size = 0x800, scoped, tag = 'input window, operand 1, single buffered']
    #allocation6 [shape = 's32[1]{0}', space=sflag, size = 0x4, scoped, tag = 'scoped memory for forward.1']
    #allocation7 [shape = 'u8[49152]{0}', space=vmem, size = 0xc000, scoped, tag = 'input window, operand 3, single buffered']
    #allocation8 [shape = 's32[1]{0}', space=sflag, size = 0x4, scoped, tag = 'scoped memory for forward.1']
    #allocation9 [shape = 'u8[512]{0}', space=vmem, size = 0x400, scoped, tag = 'input window, operand 4, single buffered']
    #allocation10 [shape = 'u8[196608]{0}', space=vmem, size = 0x30000, scoped, tag = 'input window, operand 5, single buffered']
    #allocation11 [shape = 's32[1]{0}', space=sflag, size = 0x4, scoped, tag = 'scoped memory for forward.1']
    #allocation12 [shape = 'u8[786432]{0}', space=vmem, size = 0xc0000, scoped, tag = 'input window, operand 7, single buffered']
    #allocation13 [shape = 'u8[2048]{0}', space=vmem, size = 0x800, scoped, tag = 'input window, operand 8, single buffered']
    #allocation14 [shape = 's32[1]{0}', space=sflag, size = 0x4, scoped, tag = 'scoped memory for forward.1']
    #allocation15 [shape = 'u8[1048576]{0}', space=vmem, size = 0x100000, scoped, tag = 'input window, operand 9, single buffered']
    #allocation16 [shape = 'u8[1048576]{0}', space=vmem, size = 0x100000, scoped, tag = 'input window, operand 11, single buffered']
    #allocation17 [shape = 's32[1]{0}', space=sflag, size = 0x4, scoped, tag = 'scoped memory for forward.1']
    #allocation18 [shape = 'u8[2048]{0}', space=vmem, size = 0x800, scoped, tag = 'input window, operand 12, single buffered']
    #allocation19 [shape = 'u8[131072]{0}', space=vmem, size = 0x20000, scoped, tag = 'input window, operand 13, single buffered']
    #allocation20 [shape = 's32[1]{0}', space=sflag, size = 0x4, scoped, tag = 'scoped memory for forward.1']
    #allocation21 [shape = 'u8[512]{0}', space=vmem, size = 0x400, scoped, tag = 'input window, operand 14, single buffered']
    #allocation22 [shape = 'u8[512]{0}', space=vmem, size = 0x400, scoped, tag = 'input window, operand 16, single buffered']
    #allocation23 [shape = 's32[1]{0}', space=sflag, size = 0x4, scoped, tag = 'scoped memory for forward.1']
    %22 = vsyncpa [#allocation6], 0
    %23 = vsyncpa [#allocation8], 0
    %24 = vsyncpa [#allocation11], 0
    %25 = vsyncpa [#allocation14], 0
    %26 = vsyncpa [#allocation17], 0
    %27 = vsyncpa [#allocation20], 0
    %28 = vsyncpa [#allocation23], 0
    // Predicated region
    $region2: #{forward.1} parent=1 // pred_check
      _
    $region3: #{forward.1} parent=1 // pred_check_branch
      %30 = sbr.rel (0) target = $region5
    $region4: #{forward.1} parent=1 // pred_region
      _
    $region5: #{forward.1} parent=1 // pred_fallthru
      _
    // Predicated region
    $region6: #{forward.1} parent=1 // pred_check
      _
    $region7: #{forward.1} parent=1 // pred_check_branch
      %32 = sbr.rel (0) target = $region9
    $region8: #{forward.1} parent=1 // pred_region
      %s34 = ssub.s32 64, 64
      %35 = vsyncadd [#allocation6], %s34
      %s37 = sshll.u32 [#allocation5], 4
      %s38 = int_to_ptr.vmem [resolvable:$true] %s37
      %40 = dma.hbm_to_vmem [thread:$0]  %s1, 64, %s38, [#allocation6]
    $region9: #{forward.1} parent=1 // pred_fallthru
      _
    // Predicated region
    $region10: #{forward.1} parent=1 // pred_check
      _
    $region11: #{forward.1} parent=1 // pred_check_branch
      %42 = sbr.rel (0) target = $region13
    $region12: #{forward.1} parent=1 // pred_region
      _
    $region13: #{forward.1} parent=1 // pred_fallthru
      _
    // Predicated region
    $region14: #{forward.1} parent=1 // pred_check
      _
    $region15: #{forward.1} parent=1 // pred_check_branch
      %44 = sbr.rel (0) target = $region17
    $region16: #{forward.1} parent=1 // pred_region
      %s46 = ssub.s32 1536, 1536
      %47 = vsyncadd [#allocation8], %s46
      %s48 = sshll.u32 [#allocation7], 4
      %s49 = int_to_ptr.vmem [resolvable:$true] %s48
      %54 = dma.hbm_to_vmem [thread:$0]  %s3, 1536, %s49, [#allocation8], 64, 64, 4
    $region17: #{forward.1} parent=1 // pred_fallthru
      _
    // Predicated region
    $region18: #{forward.1} parent=1 // pred_check
      _
    $region19: #{forward.1} parent=1 // pred_check_branch
      %56 = sbr.rel (0) target = $region21
    $region20: #{forward.1} parent=1 // pred_region
      %s58 = ssub.s32 16, 16
      %59 = vsyncadd [#allocation8], %s58
      %s61 = sshll.u32 [#allocation9], 4
      %s62 = int_to_ptr.vmem [resolvable:$true] %s61
      %64 = dma.hbm_to_vmem [thread:$0]  %s4, 16, %s62, [#allocation8]
    $region21: #{forward.1} parent=1 // pred_fallthru
      _
    // Predicated region
    $region22: #{forward.1} parent=1 // pred_check
      _
    $region23: #{forward.1} parent=1 // pred_check_branch
      %66 = sbr.rel (0) target = $region25
    $region24: #{forward.1} parent=1 // pred_region
      %s68 = ssub.s32 6144, 6144
      %69 = vsyncadd [#allocation11], %s68
      %s70 = sshll.u32 [#allocation10], 4
      %s71 = int_to_ptr.vmem [resolvable:$true] %s70
      %76 = dma.hbm_to_vmem [thread:$0]  %s5, 6144, %s71, [#allocation11], 128, 128, 8
    $region25: #{forward.1} parent=1 // pred_fallthru
      _
    // Predicated region
    $region26: #{forward.1} parent=1 // pred_check
      _
    $region27: #{forward.1} parent=1 // pred_check_branch
      %78 = sbr.rel (0) target = $region29
    $region28: #{forward.1} parent=1 // pred_region
      _
    $region29: #{forward.1} parent=1 // pred_fallthru
      _
    // Predicated region
    $region30: #{forward.1} parent=1 // pred_check
      _
    $region31: #{forward.1} parent=1 // pred_check_branch
      %80 = sbr.rel (0) target = $region33
    $region32: #{forward.1} parent=1 // pred_region
      %s82 = ssub.s32 24576, 24576
      %83 = vsyncadd [#allocation11], %s82
      %s84 = sshll.u32 [#allocation12], 4
      %s85 = int_to_ptr.vmem [resolvable:$true] %s84
      %90 = dma.hbm_to_vmem [thread:$0]  %s7, 24576, %s85, [#allocation11], 256, 256, 16
    $region33: #{forward.1} parent=1 // pred_fallthru
      _
    // Predicated region
    $region34: #{forward.1} parent=1 // pred_check
      _
    $region35: #{forward.1} parent=1 // pred_check_branch
      %92 = sbr.rel (0) target = $region37
    $region36: #{forward.1} parent=1 // pred_region
      %s94 = ssub.s32 64, 64
      %95 = vsyncadd [#allocation14], %s94
      %s97 = sshll.u32 [#allocation13], 4
      %s98 = int_to_ptr.vmem [resolvable:$true] %s97
      %100 = dma.hbm_to_vmem [thread:$0]  %s8, 64, %s98, [#allocation14]
    $region37: #{forward.1} parent=1 // pred_fallthru
      _
    // Predicated region
    $region38: #{forward.1} parent=1 // pred_check
      _
    $region39: #{forward.1} parent=1 // pred_check_branch
      %102 = sbr.rel (0) target = $region41
    $region40: #{forward.1} parent=1 // pred_region
      %s104 = ssub.s32 32768, 32768
      %105 = vsyncadd [#allocation14], %s104
      %s106 = sshll.u32 [#allocation15], 4
      %s107 = int_to_ptr.vmem [resolvable:$true] %s106
      %112 = dma.hbm_to_vmem [thread:$0]  %s9, 32768, %s107, [#allocation14], 512, 512, 32
    $region41: #{forward.1} parent=1 // pred_fallthru
      _
    // Predicated region
    $region42: #{forward.1} parent=1 // pred_check
      _
    $region43: #{forward.1} parent=1 // pred_check_branch
      %114 = sbr.rel (0) target = $region45
    $region44: #{forward.1} parent=1 // pred_region
      _
    $region45: #{forward.1} parent=1 // pred_fallthru
      _
    // Predicated region
    $region46: #{forward.1} parent=1 // pred_check
      _
    $region47: #{forward.1} parent=1 // pred_check_branch
      %116 = sbr.rel (0) target = $region49
    $region48: #{forward.1} parent=1 // pred_region
      %s118 = ssub.s32 32768, 32768
      %119 = vsyncadd [#allocation17], %s118
      %s120 = sshll.u32 [#allocation16], 4
      %s121 = int_to_ptr.vmem [resolvable:$true] %s120
      %126 = dma.hbm_to_vmem [thread:$0]  %s11, 32768, %s121, [#allocation17], 256, 256, 16
    $region49: #{forward.1} parent=1 // pred_fallthru
      _
    // Predicated region
    $region50: #{forward.1} parent=1 // pred_check
      _
    $region51: #{forward.1} parent=1 // pred_check_branch
      %128 = sbr.rel (0) target = $region53
    $region52: #{forward.1} parent=1 // pred_region
      %s130 = ssub.s32 64, 64
      %131 = vsyncadd [#allocation17], %s130
      %s133 = sshll.u32 [#allocation18], 4
      %s134 = int_to_ptr.vmem [resolvable:$true] %s133
      %136 = dma.hbm_to_vmem [thread:$0]  %s12, 64, %s134, [#allocation17]
    $region53: #{forward.1} parent=1 // pred_fallthru
      _
    // Predicated region
    $region54: #{forward.1} parent=1 // pred_check
      _
    $region55: #{forward.1} parent=1 // pred_check_branch
      %138 = sbr.rel (0) target = $region57
    $region56: #{forward.1} parent=1 // pred_region
      %s140 = ssub.s32 4096, 4096
      %141 = vsyncadd [#allocation20], %s140
      %s142 = sshll.u32 [#allocation19], 4
      %s143 = int_to_ptr.vmem [resolvable:$true] %s142
      %148 = dma.hbm_to_vmem [thread:$0]  %s13, 4096, %s143, [#allocation20], 64, 64, 4
    $region57: #{forward.1} parent=1 // pred_fallthru
      _
    // Predicated region
    $region58: #{forward.1} parent=1 // pred_check
      _
    $region59: #{forward.1} parent=1 // pred_check_branch
      %150 = sbr.rel (0) target = $region61
    $region60: #{forward.1} parent=1 // pred_region
      %s152 = ssub.s32 16, 16
      %153 = vsyncadd [#allocation20], %s152
      %s155 = sshll.u32 [#allocation21], 4
      %s156 = int_to_ptr.vmem [resolvable:$true] %s155
      %158 = dma.hbm_to_vmem [thread:$0]  %s14, 16, %s156, [#allocation20]
    $region61: #{forward.1} parent=1 // pred_fallthru
      _
    // Predicated region
    $region62: #{forward.1} parent=1 // pred_check
      _
    $region63: #{forward.1} parent=1 // pred_check_branch
      %160 = sbr.rel (0) target = $region65
    $region64: #{forward.1} parent=1 // pred_region
      _
    $region65: #{forward.1} parent=1 // pred_fallthru
      _
    // Predicated region
    $region66: #{forward.1} parent=1 // pred_check
      _
    $region67: #{forward.1} parent=1 // pred_check_branch
      %162 = sbr.rel (0) target = $region69
    $region68: #{forward.1} parent=1 // pred_region
      %s164 = ssub.s32 16, 16
      %165 = vsyncadd [#allocation23], %s164
      %s167 = sshll.u32 [#allocation22], 4
      %s168 = int_to_ptr.vmem [resolvable:$true] %s167
      %170 = dma.hbm_to_vmem [thread:$0]  %s16, 16, %s168, [#allocation23]
    $region69: #{forward.1} parent=1 // pred_fallthru
      _
    // Predicated region
    $region70: #{forward.1} parent=1 // pred_check
      _
    $region71: #{forward.1} parent=1 // pred_check_branch
      %172 = sbr.rel (0) target = $region73
    $region72: #{forward.1} parent=1 // pred_region
      %173 = dma.done [#allocation6], 64
    $region73: #{forward.1} parent=1 // pred_fallthru
      _
    // Predicated region
    $region74: #{forward.1} parent=1 // pred_check
      _
    $region75: #{forward.1} parent=1 // pred_check_branch
      %175 = sbr.rel (0) target = $region77
    $region76: #{forward.1} parent=1 // pred_region
      %176 = dma.done [#allocation8], 1536
    $region77: #{forward.1} parent=1 // pred_fallthru
      _
    // Predicated region
    $region78: #{forward.1} parent=1 // pred_check
      _
    $region79: #{forward.1} parent=1 // pred_check_branch
      %178 = sbr.rel (0) target = $region81
    $region80: #{forward.1} parent=1 // pred_region
      %179 = dma.done [#allocation8], 16
    $region81: #{forward.1} parent=1 // pred_fallthru
      _
    // Predicated region
    $region82: #{forward.1} parent=1 // pred_check
      _
    $region83: #{forward.1} parent=1 // pred_check_branch
      %181 = sbr.rel (0) target = $region85
    $region84: #{forward.1} parent=1 // pred_region
      %182 = dma.done [#allocation11], 6144
    $region85: #{forward.1} parent=1 // pred_fallthru
      _
    // Predicated region
    $region86: #{forward.1} parent=1 // pred_check
      _
    $region87: #{forward.1} parent=1 // pred_check_branch
      %184 = sbr.rel (0) target = $region89
    $region88: #{forward.1} parent=1 // pred_region
      %185 = dma.done [#allocation11], 24576
    $region89: #{forward.1} parent=1 // pred_fallthru
      _
    // Predicated region
    $region90: #{forward.1} parent=1 // pred_check
      _
    $region91: #{forward.1} parent=1 // pred_check_branch
      %187 = sbr.rel (0) target = $region93
    $region92: #{forward.1} parent=1 // pred_region
      %188 = dma.done [#allocation14], 64
    $region93: #{forward.1} parent=1 // pred_fallthru
      _
    // Predicated region
    $region94: #{forward.1} parent=1 // pred_check
      _
    $region95: #{forward.1} parent=1 // pred_check_branch
      %190 = sbr.rel (0) target = $region97
    $region96: #{forward.1} parent=1 // pred_region
      %191 = dma.done [#allocation14], 32768
    $region97: #{forward.1} parent=1 // pred_fallthru
      _
    // Predicated region
    $region98: #{forward.1} parent=1 // pred_check
      _
    $region99: #{forward.1} parent=1 // pred_check_branch
      %193 = sbr.rel (0) target = $region101
    $region100: #{forward.1} parent=1 // pred_region
      %194 = dma.done [#allocation17], 32768
    $region101: #{forward.1} parent=1 // pred_fallthru
      _
    // Predicated region
    $region102: #{forward.1} parent=1 // pred_check
      _
    $region103: #{forward.1} parent=1 // pred_check_branch
      %196 = sbr.rel (0) target = $region105
    $region104: #{forward.1} parent=1 // pred_region
      %197 = dma.done [#allocation17], 64
    $region105: #{forward.1} parent=1 // pred_fallthru
      _
    // Predicated region
    $region106: #{forward.1} parent=1 // pred_check
      _
    $region107: #{forward.1} parent=1 // pred_check_branch
      %199 = sbr.rel (0) target = $region109
    $region108: #{forward.1} parent=1 // pred_region
      %200 = dma.done [#allocation20], 4096
    $region109: #{forward.1} parent=1 // pred_fallthru
      _
    // Predicated region
    $region110: #{forward.1} parent=1 // pred_check
      _
    $region111: #{forward.1} parent=1 // pred_check_branch
      %202 = sbr.rel (0) target = $region113
    $region112: #{forward.1} parent=1 // pred_region
      %203 = dma.done [#allocation20], 16
    $region113: #{forward.1} parent=1 // pred_fallthru
      _
    // Predicated region
    $region114: #{forward.1} parent=1 // pred_check
      _
    $region115: #{forward.1} parent=1 // pred_check_branch
      %205 = sbr.rel (0) target = $region117
    $region116: #{forward.1} parent=1 // pred_region
      %206 = dma.done [#allocation23], 16
    $region117: #{forward.1} parent=1 // pred_fallthru
      _
    %vm208 = vcmask 523264
    %209 = vst.msk [vmem:[#allocation2] sm:$0xff] %vm208, 0
    %s210 = scalar_lea.vmem [#allocation2], 72
    %211 = vst.msk [vmem:[%s210] sm:$0xff] %vm208, 0
    %212 = vst [vmem:[#allocation3] sm:$0xff] 0
    %s213 = scalar_lea.vmem [#allocation3], 40
    %214 = vst [vmem:[%s213] sm:$0xff] 0
    %215 = vst [vmem:[#allocation4] sm:$0xff] 0
    %216 = vst [vmem:[#allocation4 + $0x8] sm:$0xff] 0
    %s217 = scalar_lea.vmem [#allocation4], 48
    %218 = vst [vmem:[%s217] sm:$0xff] 0
    %219 = vst [vmem:[%s217 + $0x8] sm:$0xff] 0
    %v220 = vld [vmem:[%s0] sm:$0xff]
    %v221 = vld [vmem:[%s0 + $0x8] sm:$0xff]
    %v222 = vld [vmem:[#allocation5] sm:$0x7]
    %v223 = vld [vmem:[%s2] sm:$0x1]
    %225 = vset.pattern.permute.xlu0 0
    %226 = vperm.xlu0 %225, %v220
    %v227 = vpop.permute.xlu0 %226
    %230 = vset.pattern.permute.xlu0 0
    %231 = vperm.xlu0 %230, %v221
    %v232 = vpop.permute.xlu0 %231
    %v234 = vlaneseq
    %v235 = vshrl.u32 %v234, 7
    %v236 = vsub.s32 0, %v235
    %v237 = vrot.slane %v222, %v236
    %v238 = vmul.f32 %v227, %v237
    %v239 = vmul.f32 %v232, %v237
    %240 = vset.pattern.permute.xlu0 1
    %241 = vperm.xlu0 %240, %v220
    %v242 = vpop.permute.xlu0 %241
    %244 = vset.pattern.permute.xlu0 1
    %245 = vperm.xlu0 %244, %v221
    %v246 = vpop.permute.xlu0 %245
    %v248 = vlaneseq
    %v249 = vshrl.u32 %v248, 7
    %v250 = vsub.s32 1, %v249
    %v251 = vrot.slane %v222, %v250
    %v252 = vmul.f32 %v242, %v251
    %v253 = vmul.f32 %v246, %v251
    %v254 = vadd.f32 %v238, %v252
    %v255 = vadd.f32 %v239, %v253
    %256 = vset.pattern.permute.xlu0 2
    %257 = vperm.xlu0 %256, %v220
    %v258 = vpop.permute.xlu0 %257
    %260 = vset.pattern.permute.xlu0 2
    %261 = vperm.xlu0 %260, %v221
    %v262 = vpop.permute.xlu0 %261
    %v264 = vlaneseq
    %v265 = vshrl.u32 %v264, 7
    %v266 = vsub.s32 2, %v265
    %v267 = vrot.slane %v222, %v266
    %v268 = vmul.f32 %v258, %v267
    %v269 = vmul.f32 %v262, %v267
    %v270 = vadd.f32 %v254, %v268
    %v271 = vadd.f32 %v255, %v269
    %v273 = vlaneseq
    %v274 = vshrl.u32 %v273, 7
    %v275 = vsub.s32 0, %v274
    %v276 = vrot.slane %v223, %v275
    %v278 = vadd.f32 %v270, %v276
    %v279 = vadd.f32 %v271, %v276
    %v280 = vtanh.pop %v278
    %v281 = vtanh.pop %v279
    %v282 = vmul.f32 %v242, %v237
    %v283 = vmul.f32 %v246, %v237
    %v284 = vmul.f32 %v258, %v251
    %v285 = vmul.f32 %v262, %v251
    %v286 = vadd.f32 %v282, %v284
    %v287 = vadd.f32 %v283, %v285
    %288 = vset.pattern.permute.xlu0 3
    %289 = vperm.xlu0 %288, %v220
    %v290 = vpop.permute.xlu0 %289
    %292 = vset.pattern.permute.xlu0 3
    %293 = vperm.xlu0 %292, %v221
    %v294 = vpop.permute.xlu0 %293
    %v296 = vmul.f32 %v290, %v267
    %v297 = vmul.f32 %v294, %v267
    %v298 = vadd.f32 %v286, %v296
    %v299 = vadd.f32 %v287, %v297
    %v300 = vadd.f32 %v298, %v276
    %v301 = vadd.f32 %v299, %v276
    %v302 = vtanh.pop %v300
    %v303 = vtanh.pop %v301
    %v304 = vmax.f32 %v280, %v302
    %v305 = vmax.f32 %v281, %v303
    %v306 = vpack.c.bf16 %v305, %v304
    %s307 = scalar_lea.vmem [#allocation2], 8
    %308 = vst.msk [vmem:[%s307] sm:$0xff] %vm208, %v306
    %v309 = vmul.f32 %v258, %v237
    %v310 = vmul.f32 %v262, %v237
    %v311 = vmul.f32 %v290, %v251
    %v312 = vmul.f32 %v294, %v251
    %v313 = vadd.f32 %v309, %v311
    %v314 = vadd.f32 %v310, %v312
    %315 = vset.pattern.permute.xlu0 4
    %316 = vperm.xlu0 %315, %v220
    %v317 = vpop.permute.xlu0 %316
    %319 = vset.pattern.permute.xlu0 4
    %320 = vperm.xlu0 %319, %v221
    %v321 = vpop.permute.xlu0 %320
    %v323 = vmul.f32 %v317, %v267
    %v324 = vmul.f32 %v321, %v267
    %v325 = vadd.f32 %v313, %v323
    %v326 = vadd.f32 %v314, %v324
    %v327 = vadd.f32 %v325, %v276
    %v328 = vadd.f32 %v326, %v276
    %v329 = vtanh.pop %v327
    %v330 = vtanh.pop %v328
    %v331 = vmul.f32 %v290, %v237
    %v332 = vmul.f32 %v294, %v237
    %v333 = vmul.f32 %v317, %v251
    %v334 = vmul.f32 %v321, %v251
    %v335 = vadd.f32 %v331, %v333
    %v336 = vadd.f32 %v332, %v334
    %337 = vset.pattern.permute.xlu0 5
    %338 = vperm.xlu0 %337, %v220
    %v339 = vpop.permute.xlu0 %338
    %341 = vset.pattern.permute.xlu0 5
    %342 = vperm.xlu0 %341, %v221
    %v343 = vpop.permute.xlu0 %342
    %v345 = vmul.f32 %v339, %v267
    %v346 = vmul.f32 %v343, %v267
    %v347 = vadd.f32 %v335, %v345
    %v348 = vadd.f32 %v336, %v346
    %v349 = vadd.f32 %v347, %v276
    %v350 = vadd.f32 %v348, %v276
    %v351 = vtanh.pop %v349
    %v352 = vtanh.pop %v350
    %v353 = vmax.f32 %v329, %v351
    %v354 = vmax.f32 %v330, %v352
    %v355 = vpack.c.bf16 %v354, %v353
    %s356 = scalar_lea.vmem [#allocation2], 16
    %357 = vst.msk [vmem:[%s356] sm:$0xff] %vm208, %v355
    %v358 = vmul.f32 %v317, %v237
    %v359 = vmul.f32 %v321, %v237
    %v360 = vmul.f32 %v339, %v251
    %v361 = vmul.f32 %v343, %v251
    %v362 = vadd.f32 %v358, %v360
    %v363 = vadd.f32 %v359, %v361
    %364 = vset.pattern.permute.xlu0 6
    %365 = vperm.xlu0 %364, %v220
    %v366 = vpop.permute.xlu0 %365
    %368 = vset.pattern.permute.xlu0 6
    %369 = vperm.xlu0 %368, %v221
    %v370 = vpop.permute.xlu0 %369
    %v372 = vmul.f32 %v366, %v267
    %v373 = vmul.f32 %v370, %v267
    %v374 = vadd.f32 %v362, %v372
    %v375 = vadd.f32 %v363, %v373
    %v376 = vadd.f32 %v374, %v276
    %v377 = vadd.f32 %v375, %v276
    %v378 = vtanh.pop %v376
    %v379 = vtanh.pop %v377
    %v380 = vmul.f32 %v339, %v237
    %v381 = vmul.f32 %v343, %v237
    %v382 = vmul.f32 %v366, %v251
    %v383 = vmul.f32 %v370, %v251
    %v384 = vadd.f32 %v380, %v382
    %v385 = vadd.f32 %v381, %v383
    %386 = vset.pattern.permute.xlu0 7
    %387 = vperm.xlu0 %386, %v220
    %v388 = vpop.permute.xlu0 %387
    %390 = vset.pattern.permute.xlu0 7
    %391 = vperm.xlu0 %390, %v221
    %v392 = vpop.permute.xlu0 %391
    %v394 = vmul.f32 %v388, %v267
    %v395 = vmul.f32 %v392, %v267
    %v396 = vadd.f32 %v384, %v394
    %v397 = vadd.f32 %v385, %v395
    %v398 = vadd.f32 %v396, %v276
    %v399 = vadd.f32 %v397, %v276
    %v400 = vtanh.pop %v398
    %v401 = vtanh.pop %v399
    %v402 = vmax.f32 %v378, %v400
    %v403 = vmax.f32 %v379, %v401
    %v404 = vpack.c.bf16 %v403, %v402
    %s405 = scalar_lea.vmem [#allocation2], 24
    %406 = vst.msk [vmem:[%s405] sm:$0xff] %vm208, %v404
    %v407 = vmul.f32 %v366, %v237
    %v408 = vmul.f32 %v370, %v237
    %v409 = vmul.f32 %v388, %v251
    %v410 = vmul.f32 %v392, %v251
    %v411 = vadd.f32 %v407, %v409
    %v412 = vadd.f32 %v408, %v410
    %413 = vset.pattern.permute.xlu0 8
    %414 = vperm.xlu0 %413, %v220
    %v415 = vpop.permute.xlu0 %414
    %417 = vset.pattern.permute.xlu0 8
    %418 = vperm.xlu0 %417, %v221
    %v419 = vpop.permute.xlu0 %418
    %v421 = vmul.f32 %v415, %v267
    %v422 = vmul.f32 %v419, %v267
    %v423 = vadd.f32 %v411, %v421
    %v424 = vadd.f32 %v412, %v422
    %v425 = vadd.f32 %v423, %v276
    %v426 = vadd.f32 %v424, %v276
    %v427 = vtanh.pop %v425
    %v428 = vtanh.pop %v426
    %v429 = vmul.f32 %v388, %v237
    %v430 = vmul.f32 %v392, %v237
    %v431 = vmul.f32 %v415, %v251
    %v432 = vmul.f32 %v419, %v251
    %v433 = vadd.f32 %v429, %v431
    %v434 = vadd.f32 %v430, %v432
    %435 = vset.pattern.permute.xlu0 9
    %436 = vperm.xlu0 %435, %v220
    %v437 = vpop.permute.xlu0 %436
    %439 = vset.pattern.permute.xlu0 9
    %440 = vperm.xlu0 %439, %v221
    %v441 = vpop.permute.xlu0 %440
    %v443 = vmul.f32 %v437, %v267
    %v444 = vmul.f32 %v441, %v267
    %v445 = vadd.f32 %v433, %v443
    %v446 = vadd.f32 %v434, %v444
    %v447 = vadd.f32 %v445, %v276
    %v448 = vadd.f32 %v446, %v276
    %v449 = vtanh.pop %v447
    %v450 = vtanh.pop %v448
    %v451 = vmax.f32 %v427, %v449
    %v452 = vmax.f32 %v428, %v450
    %v453 = vpack.c.bf16 %v452, %v451
    %s454 = scalar_lea.vmem [#allocation2], 32
    %455 = vst.msk [vmem:[%s454] sm:$0xff] %vm208, %v453
    %v456 = vmul.f32 %v415, %v237
    %v457 = vmul.f32 %v419, %v237
    %v458 = vmul.f32 %v437, %v251
    %v459 = vmul.f32 %v441, %v251
    %v460 = vadd.f32 %v456, %v458
    %v461 = vadd.f32 %v457, %v459
    %462 = vset.pattern.permute.xlu0 10
    %463 = vperm.xlu0 %462, %v220
    %v464 = vpop.permute.xlu0 %463
    %466 = vset.pattern.permute.xlu0 10
    %467 = vperm.xlu0 %466, %v221
    %v468 = vpop.permute.xlu0 %467
    %v470 = vmul.f32 %v464, %v267
    %v471 = vmul.f32 %v468, %v267
    %v472 = vadd.f32 %v460, %v470
    %v473 = vadd.f32 %v461, %v471
    %v474 = vadd.f32 %v472, %v276
    %v475 = vadd.f32 %v473, %v276
    %v476 = vtanh.pop %v474
    %v477 = vtanh.pop %v475
    %v478 = vmul.f32 %v437, %v237
    %v479 = vmul.f32 %v441, %v237
    %v480 = vmul.f32 %v464, %v251
    %v481 = vmul.f32 %v468, %v251
    %v482 = vadd.f32 %v478, %v480
    %v483 = vadd.f32 %v479, %v481
    %484 = vset.pattern.permute.xlu0 11
    %485 = vperm.xlu0 %484, %v220
    %v486 = vpop.permute.xlu0 %485
    %488 = vset.pattern.permute.xlu0 11
    %489 = vperm.xlu0 %488, %v221
    %v490 = vpop.permute.xlu0 %489
    %v492 = vmul.f32 %v486, %v267
    %v493 = vmul.f32 %v490, %v267
    %v494 = vadd.f32 %v482, %v492
    %v495 = vadd.f32 %v483, %v493
    %v496 = vadd.f32 %v494, %v276
    %v497 = vadd.f32 %v495, %v276
    %v498 = vtanh.pop %v496
    %v499 = vtanh.pop %v497
    %v500 = vmax.f32 %v476, %v498
    %v501 = vmax.f32 %v477, %v499
    %v502 = vpack.c.bf16 %v501, %v500
    %s503 = scalar_lea.vmem [#allocation2], 40
    %504 = vst.msk [vmem:[%s503] sm:$0xff] %vm208, %v502
    %v505 = vmul.f32 %v464, %v237
    %v506 = vmul.f32 %v468, %v237
    %v507 = vmul.f32 %v486, %v251
    %v508 = vmul.f32 %v490, %v251
    %v509 = vadd.f32 %v505, %v507
    %v510 = vadd.f32 %v506, %v508
    %511 = vset.pattern.permute.xlu0 12
    %512 = vperm.xlu0 %511, %v220
    %v513 = vpop.permute.xlu0 %512
    %515 = vset.pattern.permute.xlu0 12
    %516 = vperm.xlu0 %515, %v221
    %v517 = vpop.permute.xlu0 %516
    %v519 = vmul.f32 %v513, %v267
    %v520 = vmul.f32 %v517, %v267
    %v521 = vadd.f32 %v509, %v519
    %v522 = vadd.f32 %v510, %v520
    %v523 = vadd.f32 %v521, %v276
    %v524 = vadd.f32 %v522, %v276
    %v525 = vtanh.pop %v523
    %v526 = vtanh.pop %v524
    %v527 = vmul.f32 %v486, %v237
    %v528 = vmul.f32 %v490, %v237
    %v529 = vmul.f32 %v513, %v251
    %v530 = vmul.f32 %v517, %v251
    %v531 = vadd.f32 %v527, %v529
    %v532 = vadd.f32 %v528, %v530
    %533 = vset.pattern.permute.xlu0 13
    %534 = vperm.xlu0 %533, %v220
    %v535 = vpop.permute.xlu0 %534
    %537 = vset.pattern.permute.xlu0 13
    %538 = vperm.xlu0 %537, %v221
    %v539 = vpop.permute.xlu0 %538
    %v541 = vmul.f32 %v535, %v267
    %v542 = vmul.f32 %v539, %v267
    %v543 = vadd.f32 %v531, %v541
    %v544 = vadd.f32 %v532, %v542
    %v545 = vadd.f32 %v543, %v276
    %v546 = vadd.f32 %v544, %v276
    %v547 = vtanh.pop %v545
    %v548 = vtanh.pop %v546
    %v549 = vmax.f32 %v525, %v547
    %v550 = vmax.f32 %v526, %v548
    %v551 = vpack.c.bf16 %v550, %v549
    %s552 = scalar_lea.vmem [#allocation2], 48
    %553 = vst.msk [vmem:[%s552] sm:$0xff] %vm208, %v551
    %v554 = vmul.f32 %v513, %v237
    %v555 = vmul.f32 %v517, %v237
    %v556 = vmul.f32 %v535, %v251
    %v557 = vmul.f32 %v539, %v251
    %v558 = vadd.f32 %v554, %v556
    %v559 = vadd.f32 %v555, %v557
    %560 = vset.pattern.permute.xlu0 14
    %561 = vperm.xlu0 %560, %v220
    %v562 = vpop.permute.xlu0 %561
    %564 = vset.pattern.permute.xlu0 14
    %565 = vperm.xlu0 %564, %v221
    %v566 = vpop.permute.xlu0 %565
    %v568 = vmul.f32 %v562, %v267
    %v569 = vmul.f32 %v566, %v267
    %v570 = vadd.f32 %v558, %v568
    %v571 = vadd.f32 %v559, %v569
    %v572 = vadd.f32 %v570, %v276
    %v573 = vadd.f32 %v571, %v276
    %v574 = vtanh.pop %v572
    %v575 = vtanh.pop %v573
    %v576 = vmul.f32 %v535, %v237
    %v577 = vmul.f32 %v539, %v237
    %v578 = vmul.f32 %v562, %v251
    %v579 = vmul.f32 %v566, %v251
    %v580 = vadd.f32 %v576, %v578
    %v581 = vadd.f32 %v577, %v579
    %582 = vset.pattern.permute.xlu0 15
    %583 = vperm.xlu0 %582, %v220
    %v584 = vpop.permute.xlu0 %583
    %586 = vset.pattern.permute.xlu0 15
    %587 = vperm.xlu0 %586, %v221
    %v588 = vpop.permute.xlu0 %587
    %v590 = vmul.f32 %v584, %v267
    %v591 = vmul.f32 %v588, %v267
    %v592 = vadd.f32 %v580, %v590
    %v593 = vadd.f32 %v581, %v591
    %v594 = vadd.f32 %v592, %v276
    %v595 = vadd.f32 %v593, %v276
    %v596 = vtanh.pop %v594
    %v597 = vtanh.pop %v595
    %v598 = vmax.f32 %v574, %v596
    %v599 = vmax.f32 %v575, %v597
    %v600 = vpack.c.bf16 %v599, %v598
    %s601 = scalar_lea.vmem [#allocation2], 56
    %602 = vst.msk [vmem:[%s601] sm:$0xff] %vm208, %v600
    %v603 = vmul.f32 %v562, %v237
    %v604 = vmul.f32 %v566, %v237
    %v605 = vmul.f32 %v584, %v251
    %v606 = vmul.f32 %v588, %v251
    %v607 = vadd.f32 %v603, %v605
    %v608 = vadd.f32 %v604, %v606
    %609 = vset.pattern.permute.xlu0 16
    %610 = vperm.xlu0 %609, %v220
    %v611 = vpop.permute.xlu0 %610
    %613 = vset.pattern.permute.xlu0 16
    %614 = vperm.xlu0 %613, %v221
    %v615 = vpop.permute.xlu0 %614
    %v617 = vmul.f32 %v611, %v267
    %v618 = vmul.f32 %v615, %v267
    %v619 = vadd.f32 %v607, %v617
    %v620 = vadd.f32 %v608, %v618
    %v621 = vadd.f32 %v619, %v276
    %v622 = vadd.f32 %v620, %v276
    %v623 = vtanh.pop %v621
    %v624 = vtanh.pop %v622
    %v625 = vmul.f32 %v584, %v237
    %v626 = vmul.f32 %v588, %v237
    %v627 = vmul.f32 %v611, %v251
    %v628 = vmul.f32 %v615, %v251
    %v629 = vadd.f32 %v625, %v627
    %v630 = vadd.f32 %v626, %v628
    %631 = vset.pattern.permute.xlu0 17
    %632 = vperm.xlu0 %631, %v220
    %v633 = vpop.permute.xlu0 %632
    %635 = vset.pattern.permute.xlu0 17
    %636 = vperm.xlu0 %635, %v221
    %v637 = vpop.permute.xlu0 %636
    %v639 = vmul.f32 %v633, %v267
    %v640 = vmul.f32 %v637, %v267
    %v641 = vadd.f32 %v629, %v639
    %v642 = vadd.f32 %v630, %v640
    %v643 = vadd.f32 %v641, %v276
    %v644 = vadd.f32 %v642, %v276
    %v645 = vtanh.pop %v643
    %v646 = vtanh.pop %v644
    %v647 = vmax.f32 %v623, %v645
    %v648 = vmax.f32 %v624, %v646
    %v649 = vpack.c.bf16 %v648, %v647
    %s650 = scalar_lea.vmem [#allocation2], 64
    %651 = vst.msk [vmem:[%s650] sm:$0xff] %vm208, %v649
    %v652 = vld [vmem:[#allocation2] sm:$0xff]
    %v653 = vld [vmem:[#allocation2 + $0x8] sm:$0xff]
    %v654 = vld [vmem:[#allocation2 + $0x10] sm:$0xff]
    %v655 = vld [vmem:[#allocation2 + $0x18] sm:$0xff]
    %v656 = vld [vmem:[#allocation2 + $0x20] sm:$0xff]
    %v657 = vld [vmem:[#allocation2 + $0x28] sm:$0xff]
    %v658 = vld [vmem:[#allocation2 + $0x30] sm:$0xff]
    %v659 = vld [vmem:[#allocation2 + $0x38] sm:$0xff]
    %v660 = vld [vmem:[#allocation7] sm:$0xf]
    %v661 = vld [vmem:[#allocation7 + $0x4] sm:$0xf]
    %v662 = vld [vmem:[#allocation7 + $0x8] sm:$0xf]
    %v663 = vld [vmem:[#allocation7 + $0xc] sm:$0xf]
    %v664 = vld [vmem:[#allocation7 + $0x10] sm:$0xf]
    %v665 = vld [vmem:[#allocation7 + $0x14] sm:$0xf]
    %v666 = vld [vmem:[#allocation7 + $0x18] sm:$0xf]
    %v667 = vld [vmem:[#allocation7 + $0x1c] sm:$0xf]
    %v668 = vld [vmem:[%s307] sm:$0xff]
    %v669 = vld [vmem:[%s307 + $0x8] sm:$0xff]
    %v670 = vld [vmem:[%s307 + $0x10] sm:$0xff]
    %v671 = vld [vmem:[%s307 + $0x18] sm:$0xff]
    %v672 = vld [vmem:[%s307 + $0x20] sm:$0xff]
    %v673 = vld [vmem:[%s307 + $0x28] sm:$0xff]
    %v674 = vld [vmem:[%s307 + $0x30] sm:$0xff]
    %v675 = vld [vmem:[%s307 + $0x38] sm:$0xff]
    %s676 = scalar_lea.vmem [#allocation7], 32
    %v677 = vld [vmem:[%s676] sm:$0xf]
    %v678 = vld [vmem:[%s676 + $0x4] sm:$0xf]
    %v679 = vld [vmem:[%s676 + $0x8] sm:$0xf]
    %v680 = vld [vmem:[%s676 + $0xc] sm:$0xf]
    %v681 = vld [vmem:[%s676 + $0x10] sm:$0xf]
    %v682 = vld [vmem:[%s676 + $0x14] sm:$0xf]
    %v683 = vld [vmem:[%s676 + $0x18] sm:$0xf]
    %v684 = vld [vmem:[%s676 + $0x1c] sm:$0xf]
    %v693 = vunpack.c.l.b16 %v677
    %v694 = vunpack.c.l.b16 %v678
    %v695 = vunpack.c.l.b16 %v679
    %v696 = vunpack.c.l.b16 %v680
    %v697 = vunpack.c.l.b16 %v681
    %v698 = vunpack.c.l.b16 %v682
    %v699 = vunpack.c.l.b16 %v683
    %v700 = vunpack.c.l.b16 %v684
    %v701 = vpack.c.b16 %v694, %v693
    %v702 = vpack.c.b16 %v696, %v695
    %v703 = vpack.c.b16 %v698, %v697
    %v704 = vpack.c.b16 %v700, %v699
    %v710 = vsel %vm208, %v668, 0
    %v713 = vsel %vm208, %v669, 0
    %v716 = vsel %vm208, %v670, 0
    %v719 = vsel %vm208, %v671, 0
    %v722 = vsel %vm208, %v672, 0
    %v725 = vsel %vm208, %v673, 0
    %v728 = vsel %vm208, %v674, 0
    %v731 = vsel %vm208, %v675, 0
    %733 = vmatprep.subr.bf16.mxu0 0
    %734 = vmatpush1.bf16.msra.mxu0 %v701
    %735 = vmatprep.subr.bf16.mxu0 0
    %736 = vmatpush1.bf16.msra.mxu0 %v702
    %737 = vmatprep.subr.bf16.mxu0 0
    %738 = vmatpush1.bf16.msra.mxu0 %v703
    %739 = vmatprep.subr.bf16.mxu0 0
    %740 = vmatpush1.bf16.msra.mxu0 %v704
    %741 = vmatprep.subr.bf16.mxu0 0
    %742 = vmatpush1.bf16.msra.mxu0 0
    %743 = vmatprep.subr.bf16.mxu0 0
    %744 = vmatpush1.bf16.msra.mxu0 0
    %745 = vmatprep.subr.bf16.mxu0 0
    %746 = vmatpush1.bf16.msra.mxu0 0
    %747 = vmatprep.subr.bf16.mxu0 0
    %748 = vmatpush1.bf16.msra.mxu0 0
    %749 = vmatprep.subr.bf16.mxu0 0
    %750 = vmatpush1.bf16.msra.mxu0 0
    %751 = vmatprep.subr.bf16.mxu0 0
    %752 = vmatpush1.bf16.msra.mxu0 0
    %753 = vmatprep.subr.bf16.mxu0 0
    %754 = vmatpush1.bf16.msra.mxu0 0
    %755 = vmatprep.subr.bf16.mxu0 0
    %756 = vmatpush1.bf16.msra.mxu0 0
    %757 = vmatprep.subr.bf16.mxu0 0
    %758 = vmatpush1.bf16.msra.mxu0 0
    %759 = vmatprep.subr.bf16.mxu0 0
    %760 = vmatpush1.bf16.msra.mxu0 0
    %761 = vmatprep.subr.bf16.mxu0 0
    %762 = vmatpush1.bf16.msra.mxu0 0
    %763 = vmatprep.subr.bf16.mxu0 0
    %764 = vmatpush1.bf16.msra.mxu0 0
    %765 = vmatprep.mubr.bf16.mxu0 0
    %766 = vmatmul.mubr.bf16.gmra.mrb[0].mxu0 %v710
    %v767 = vpop.f32.mrb[0].mxu0
    %v768 = vadd.f32 0.0, %v767
    %v769 = vpop.f32.mrb[0].mxu0
    %v770 = vpop.f32.mrb[0].mxu0
    %v771 = vadd.f32 0.0, %v770
    %v772 = vpop.f32.mrb[0].mxu0
    %773 = vmatprep.mubr.bf16.mxu0 0
    %774 = vmatmul.mubr.bf16.gmra.mrb[0].mxu0 %v713
    %v775 = vpop.f32.mrb[0].mxu0
    %v776 = vadd.f32 0.0, %v775
    %v777 = vpop.f32.mrb[0].mxu0
    %v778 = vpop.f32.mrb[0].mxu0
    %v779 = vadd.f32 0.0, %v778
    %v780 = vpop.f32.mrb[0].mxu0
    %781 = vmatprep.mubr.bf16.mxu0 0
    %782 = vmatmul.mubr.bf16.gmra.mrb[0].mxu0 %v716
    %v783 = vpop.f32.mrb[0].mxu0
    %v784 = vadd.f32 0.0, %v783
    %v785 = vpop.f32.mrb[0].mxu0
    %v786 = vpop.f32.mrb[0].mxu0
    %v787 = vadd.f32 0.0, %v786
    %v788 = vpop.f32.mrb[0].mxu0
    %789 = vmatprep.mubr.bf16.mxu0 0
    %790 = vmatmul.mubr.bf16.gmra.mrb[0].mxu0 %v719
    %v791 = vpop.f32.mrb[0].mxu0
    %v792 = vadd.f32 0.0, %v791
    %v793 = vpop.f32.mrb[0].mxu0
    %v794 = vpop.f32.mrb[0].mxu0
    %v795 = vadd.f32 0.0, %v794
    %v796 = vpop.f32.mrb[0].mxu0
    %797 = vmatprep.mubr.bf16.mxu0 0
    %798 = vmatmul.mubr.bf16.gmra.mrb[0].mxu0 %v722
    %v799 = vpop.f32.mrb[0].mxu0
    %v800 = vadd.f32 0.0, %v799
    %v801 = vpop.f32.mrb[0].mxu0
    %v802 = vpop.f32.mrb[0].mxu0
    %v803 = vadd.f32 0.0, %v802
    %v804 = vpop.f32.mrb[0].mxu0
    %805 = vmatprep.mubr.bf16.mxu0 0
    %806 = vmatmul.mubr.bf16.gmra.mrb[0].mxu0 %v725
    %v807 = vpop.f32.mrb[0].mxu0
    %v808 = vadd.f32 0.0, %v807
    %v809 = vpop.f32.mrb[0].mxu0
    %v810 = vpop.f32.mrb[0].mxu0
    %v811 = vadd.f32 0.0, %v810
    %v812 = vpop.f32.mrb[0].mxu0
    %813 = vmatprep.mubr.bf16.mxu0 0
    %814 = vmatmul.mubr.bf16.gmra.mrb[0].mxu0 %v728
    %v815 = vpop.f32.mrb[0].mxu0
    %v816 = vadd.f32 0.0, %v815
    %v817 = vpop.f32.mrb[0].mxu0
    %v818 = vpop.f32.mrb[0].mxu0
    %v819 = vadd.f32 0.0, %v818
    %v820 = vpop.f32.mrb[0].mxu0
    %821 = vmatprep.mubr.bf16.mxu0 0
    %822 = vmatmul.mubr.bf16.gmra.mrb[0].mxu0 %v731
    %v823 = vpop.f32.mrb[0].mxu0
    %v824 = vadd.f32 0.0, %v823
    %v825 = vpop.f32.mrb[0].mxu0
    %v826 = vpop.f32.mrb[0].mxu0
    %v827 = vadd.f32 0.0, %v826
    %v828 = vpop.f32.mrb[0].mxu0
    %829 = vdwg.mxu0
    %v838 = vunpack.c.l.b16 %v660
    %v839 = vunpack.c.l.b16 %v661
    %v840 = vunpack.c.l.b16 %v662
    %v841 = vunpack.c.l.b16 %v663
    %v842 = vunpack.c.l.b16 %v664
    %v843 = vunpack.c.l.b16 %v665
    %v844 = vunpack.c.l.b16 %v666
    %v845 = vunpack.c.l.b16 %v667
    %v846 = vpack.c.b16 %v839, %v838
    %v847 = vpack.c.b16 %v841, %v840
    %v848 = vpack.c.b16 %v843, %v842
    %v849 = vpack.c.b16 %v845, %v844
    %v855 = vsel %vm208, %v652, 0
    %v858 = vsel %vm208, %v653, 0
    %v861 = vsel %vm208, %v654, 0
    %v864 = vsel %vm208, %v655, 0
    %v867 = vsel %vm208, %v656, 0
    %v870 = vsel %vm208, %v657, 0
    %v873 = vsel %vm208, %v658, 0
    %v876 = vsel %vm208, %v659, 0
    %878 = vmatprep.subr.bf16.mxu0 0
    %879 = vmatpush1.bf16.msra.mxu0 %v846
    %880 = vmatprep.subr.bf16.mxu0 0
    %881 = vmatpush1.bf16.msra.mxu0 %v847
    %882 = vmatprep.subr.bf16.mxu0 0
    %883 = vmatpush1.bf16.msra.mxu0 %v848
    %884 = vmatprep.subr.bf16.mxu0 0
    %885 = vmatpush1.bf16.msra.mxu0 %v849
    %886 = vmatprep.subr.bf16.mxu0 0
    %887 = vmatpush1.bf16.msra.mxu0 0
    %888 = vmatprep.subr.bf16.mxu0 0
    %889 = vmatpush1.bf16.msra.mxu0 0
    %890 = vmatprep.subr.bf16.mxu0 0
    %891 = vmatpush1.bf16.msra.mxu0 0
    %892 = vmatprep.subr.bf16.mxu0 0
    %893 = vmatpush1.bf16.msra.mxu0 0
    %894 = vmatprep.subr.bf16.mxu0 0
    %895 = vmatpush1.bf16.msra.mxu0 0
    %896 = vmatprep.subr.bf16.mxu0 0
    %897 = vmatpush1.bf16.msra.mxu0 0
    %898 = vmatprep.subr.bf16.mxu0 0
    %899 = vmatpush1.bf16.msra.mxu0 0
    %900 = vmatprep.subr.bf16.mxu0 0
    %901 = vmatpush1.bf16.msra.mxu0 0
    %902 = vmatprep.subr.bf16.mxu0 0
    %903 = vmatpush1.bf16.msra.mxu0 0
    %904 = vmatprep.subr.bf16.mxu0 0
    %905 = vmatpush1.bf16.msra.mxu0 0
    %906 = vmatprep.subr.bf16.mxu0 0
    %907 = vmatpush1.bf16.msra.mxu0 0
    %908 = vmatprep.subr.bf16.mxu0 0
    %909 = vmatpush1.bf16.msra.mxu0 0
    %910 = vmatprep.mubr.bf16.mxu0 0
    %911 = vmatmul.mubr.bf16.gmra.mrb[0].mxu0 %v855
    %v912 = vpop.f32.mrb[0].mxu0
    %v913 = vadd.f32 %v768, %v912
    %v914 = vpop.f32.mrb[0].mxu0
    %v915 = vpop.f32.mrb[0].mxu0
    %v916 = vadd.f32 %v771, %v915
    %v917 = vpop.f32.mrb[0].mxu0
    %918 = vmatprep.mubr.bf16.mxu0 0
    %919 = vmatmul.mubr.bf16.gmra.mrb[0].mxu0 %v858
    %v920 = vpop.f32.mrb[0].mxu0
    %v921 = vadd.f32 %v776, %v920
    %v922 = vpop.f32.mrb[0].mxu0
    %v923 = vpop.f32.mrb[0].mxu0
    %v924 = vadd.f32 %v779, %v923
    %v925 = vpop.f32.mrb[0].mxu0
    %926 = vmatprep.mubr.bf16.mxu0 0
    %927 = vmatmul.mubr.bf16.gmra.mrb[0].mxu0 %v861
    %v928 = vpop.f32.mrb[0].mxu0
    %v929 = vadd.f32 %v784, %v928
    %v930 = vpop.f32.mrb[0].mxu0
    %v931 = vpop.f32.mrb[0].mxu0
    %v932 = vadd.f32 %v787, %v931
    %v933 = vpop.f32.mrb[0].mxu0
    %934 = vmatprep.mubr.bf16.mxu0 0
    %935 = vmatmul.mubr.bf16.gmra.mrb[0].mxu0 %v864
    %v936 = vpop.f32.mrb[0].mxu0
    %v937 = vadd.f32 %v792, %v936
    %v938 = vpop.f32.mrb[0].mxu0
    %v939 = vpop.f32.mrb[0].mxu0
    %v940 = vadd.f32 %v795, %v939
    %v941 = vpop.f32.mrb[0].mxu0
    %942 = vmatprep.mubr.bf16.mxu0 0
    %943 = vmatmul.mubr.bf16.gmra.mrb[0].mxu0 %v867
    %v944 = vpop.f32.mrb[0].mxu0
    %v945 = vadd.f32 %v800, %v944
    %v946 = vpop.f32.mrb[0].mxu0
    %v947 = vpop.f32.mrb[0].mxu0
    %v948 = vadd.f32 %v803, %v947
    %v949 = vpop.f32.mrb[0].mxu0
    %950 = vmatprep.mubr.bf16.mxu0 0
    %951 = vmatmul.mubr.bf16.gmra.mrb[0].mxu0 %v870
    %v952 = vpop.f32.mrb[0].mxu0
    %v953 = vadd.f32 %v808, %v952
    %v954 = vpop.f32.mrb[0].mxu0
    %v955 = vpop.f32.mrb[0].mxu0
    %v956 = vadd.f32 %v811, %v955
    %v957 = vpop.f32.mrb[0].mxu0
    %958 = vmatprep.mubr.bf16.mxu0 0
    %959 = vmatmul.mubr.bf16.gmra.mrb[0].mxu0 %v873
    %v960 = vpop.f32.mrb[0].mxu0
    %v961 = vadd.f32 %v816, %v960
    %v962 = vpop.f32.mrb[0].mxu0
    %v963 = vpop.f32.mrb[0].mxu0
    %v964 = vadd.f32 %v819, %v963
    %v965 = vpop.f32.mrb[0].mxu0
    %966 = vmatprep.mubr.bf16.mxu0 0
    %967 = vmatmul.mubr.bf16.gmra.mrb[0].mxu0 %v876
    %v968 = vpop.f32.mrb[0].mxu0
    %v969 = vadd.f32 %v824, %v968
    %v970 = vpop.f32.mrb[0].mxu0
    %v971 = vpop.f32.mrb[0].mxu0
    %v972 = vadd.f32 %v827, %v971
    %v973 = vpop.f32.mrb[0].mxu0
    %974 = vdwg.mxu0
    %v975 = vld [vmem:[%s356] sm:$0xff]
    %v976 = vld [vmem:[%s356 + $0x8] sm:$0xff]
    %v977 = vld [vmem:[%s356 + $0x10] sm:$0xff]
    %v978 = vld [vmem:[%s356 + $0x18] sm:$0xff]
    %v979 = vld [vmem:[%s356 + $0x20] sm:$0xff]
    %v980 = vld [vmem:[%s356 + $0x28] sm:$0xff]
    %v981 = vld [vmem:[%s356 + $0x30] sm:$0xff]
    %v982 = vld [vmem:[%s356 + $0x38] sm:$0xff]
    %s983 = scalar_lea.vmem [#allocation7], 64
    %v984 = vld [vmem:[%s983] sm:$0xf]
    %v985 = vld [vmem:[%s983 + $0x4] sm:$0xf]
    %v986 = vld [vmem:[%s983 + $0x8] sm:$0xf]
    %v987 = vld [vmem:[%s983 + $0xc] sm:$0xf]
    %v988 = vld [vmem:[%s983 + $0x10] sm:$0xf]
    %v989 = vld [vmem:[%s983 + $0x14] sm:$0xf]
    %v990 = vld [vmem:[%s983 + $0x18] sm:$0xf]
    %v991 = vld [vmem:[%s983 + $0x1c] sm:$0xf]
    %v1000 = vunpack.c.l.b16 %v984
    %v1001 = vunpack.c.l.b16 %v985
    %v1002 = vunpack.c.l.b16 %v986
    %v1003 = vunpack.c.l.b16 %v987
    %v1004 = vunpack.c.l.b16 %v988
    %v1005 = vunpack.c.l.b16 %v989
    %v1006 = vunpack.c.l.b16 %v990
    %v1007 = vunpack.c.l.b16 %v991
    %v1008 = vpack.c.b16 %v1001, %v1000
    %v1009 = vpack.c.b16 %v1003, %v1002
    %v1010 = vpack.c.b16 %v1005, %v1004
    %v1011 = vpack.c.b16 %v1007, %v1006
    %v1017 = vsel %vm208, %v975, 0
    %v1020 = vsel %vm208, %v976, 0
    %v1023 = vsel %vm208, %v977, 0
    %v1026 = vsel %vm208, %v978, 0
    %v1029 = vsel %vm208, %v979, 0
    %v1032 = vsel %vm208, %v980, 0
    %v1035 = vsel %vm208, %v981, 0
    %v1038 = vsel %vm208, %v982, 0
    %1040 = vmatprep.subr.bf16.mxu0 0
    %1041 = vmatpush1.bf16.msra.mxu0 %v1008
    %1042 = vmatprep.subr.bf16.mxu0 0
    %1043 = vmatpush1.bf16.msra.mxu0 %v1009
    %1044 = vmatprep.subr.bf16.mxu0 0
    %1045 = vmatpush1.bf16.msra.mxu0 %v1010
    %1046 = vmatprep.subr.bf16.mxu0 0
    %1047 = vmatpush1.bf16.msra.mxu0 %v1011
    %1048 = vmatprep.subr.bf16.mxu0 0
    %1049 = vmatpush1.bf16.msra.mxu0 0
    %1050 = vmatprep.subr.bf16.mxu0 0
    %1051 = vmatpush1.bf16.msra.mxu0 0
    %1052 = vmatprep.subr.bf16.mxu0 0
    %1053 = vmatpush1.bf16.msra.mxu0 0
    %1054 = vmatprep.subr.bf16.mxu0 0
    %1055 = vmatpush1.bf16.msra.mxu0 0
    %1056 = vmatprep.subr.bf16.mxu0 0
    %1057 = vmatpush1.bf16.msra.mxu0 0
    %1058 = vmatprep.subr.bf16.mxu0 0
    %1059 = vmatpush1.bf16.msra.mxu0 0
    %1060 = vmatprep.subr.bf16.mxu0 0
    %1061 = vmatpush1.bf16.msra.mxu0 0
    %1062 = vmatprep.subr.bf16.mxu0 0
    %1063 = vmatpush1.bf16.msra.mxu0 0
    %1064 = vmatprep.subr.bf16.mxu0 0
    %1065 = vmatpush1.bf16.msra.mxu0 0
    %1066 = vmatprep.subr.bf16.mxu0 0
    %1067 = vmatpush1.bf16.msra.mxu0 0
    %1068 = vmatprep.subr.bf16.mxu0 0
    %1069 = vmatpush1.bf16.msra.mxu0 0
    %1070 = vmatprep.subr.bf16.mxu0 0
    %1071 = vmatpush1.bf16.msra.mxu0 0
    %1072 = vmatprep.mubr.bf16.mxu0 0
    %1073 = vmatmul.mubr.bf16.gmra.mrb[0].mxu0 %v1017
    %v1074 = vpop.f32.mrb[0].mxu0
    %v1075 = vadd.f32 0.0, %v1074
    %v1076 = vpop.f32.mrb[0].mxu0
    %v1077 = vpop.f32.mrb[0].mxu0
    %v1078 = vadd.f32 0.0, %v1077
    %v1079 = vpop.f32.mrb[0].mxu0
    %1080 = vmatprep.mubr.bf16.mxu0 0
    %1081 = vmatmul.mubr.bf16.gmra.mrb[0].mxu0 %v1020
    %v1082 = vpop.f32.mrb[0].mxu0
    %v1083 = vadd.f32 0.0, %v1082
    %v1084 = vpop.f32.mrb[0].mxu0
    %v1085 = vpop.f32.mrb[0].mxu0
    %v1086 = vadd.f32 0.0, %v1085
    %v1087 = vpop.f32.mrb[0].mxu0
    %1088 = vmatprep.mubr.bf16.mxu0 0
    %1089 = vmatmul.mubr.bf16.gmra.mrb[0].mxu0 %v1023
    %v1090 = vpop.f32.mrb[0].mxu0
    %v1091 = vadd.f32 0.0, %v1090
    %v1092 = vpop.f32.mrb[0].mxu0
    %v1093 = vpop.f32.mrb[0].mxu0
    %v1094 = vadd.f32 0.0, %v1093
    %v1095 = vpop.f32.mrb[0].mxu0
    %1096 = vmatprep.mubr.bf16.mxu0 0
    %1097 = vmatmul.mubr.bf16.gmra.mrb[0].mxu0 %v1026
    %v1098 = vpop.f32.mrb[0].mxu0
    %v1099 = vadd.f32 0.0, %v1098
    %v1100 = vpop.f32.mrb[0].mxu0
    %v1101 = vpop.f32.mrb[0].mxu0
    %v1102 = vadd.f32 0.0, %v1101
    %v1103 = vpop.f32.mrb[0].mxu0
    %1104 = vmatprep.mubr.bf16.mxu0 0
    %1105 = vmatmul.mubr.bf16.gmra.mrb[0].mxu0 %v1029
    %v1106 = vpop.f32.mrb[0].mxu0
    %v1107 = vadd.f32 0.0, %v1106
    %v1108 = vpop.f32.mrb[0].mxu0
    %v1109 = vpop.f32.mrb[0].mxu0
    %v1110 = vadd.f32 0.0, %v1109
    %v1111 = vpop.f32.mrb[0].mxu0
    %1112 = vmatprep.mubr.bf16.mxu0 0
    %1113 = vmatmul.mubr.bf16.gmra.mrb[0].mxu0 %v1032
    %v1114 = vpop.f32.mrb[0].mxu0
    %v1115 = vadd.f32 0.0, %v1114
    %v1116 = vpop.f32.mrb[0].mxu0
    %v1117 = vpop.f32.mrb[0].mxu0
    %v1118 = vadd.f32 0.0, %v1117
    %v1119 = vpop.f32.mrb[0].mxu0
    %1120 = vmatprep.mubr.bf16.mxu0 0
    %1121 = vmatmul.mubr.bf16.gmra.mrb[0].mxu0 %v1035
    %v1122 = vpop.f32.mrb[0].mxu0
    %v1123 = vadd.f32 0.0, %v1122
    %v1124 = vpop.f32.mrb[0].mxu0
    %v1125 = vpop.f32.mrb[0].mxu0
    %v1126 = vadd.f32 0.0, %v1125
    %v1127 = vpop.f32.mrb[0].mxu0
    %1128 = vmatprep.mubr.bf16.mxu0 0
    %1129 = vmatmul.mubr.bf16.gmra.mrb[0].mxu0 %v1038
    %v1130 = vpop.f32.mrb[0].mxu0
    %v1131 = vadd.f32 0.0, %v1130
    %v1132 = vpop.f32.mrb[0].mxu0
    %v1133 = vpop.f32.mrb[0].mxu0
    %v1134 = vadd.f32 0.0, %v1133
    %v1135 = vpop.f32.mrb[0].mxu0
    %1136 = vdwg.mxu0
    %v1137 = vadd.f32 %v913, %v1075
    %v1138 = vadd.f32 %v916, %v1078
    %v1139 = vadd.f32 %v921, %v1083
    %v1140 = vadd.f32 %v924, %v1086
    %v1141 = vadd.f32 %v929, %v1091
    %v1142 = vadd.f32 %v932, %v1094
    %v1143 = vadd.f32 %v937, %v1099
    %v1144 = vadd.f32 %v940, %v1102
    %v1145 = vadd.f32 %v945, %v1107
    %v1146 = vadd.f32 %v948, %v1110
    %v1147 = vadd.f32 %v953, %v1115
    %v1148 = vadd.f32 %v956, %v1118
    %v1149 = vadd.f32 %v961, %v1123
    %v1150 = vadd.f32 %v964, %v1126
    %v1151 = vadd.f32 %v969, %v1131
    %v1152 = vadd.f32 %v972, %v1134
    %v1153 = vld [vmem:[#allocation9] sm:$0x1]
    %v1155 = vlaneseq
    %v1156 = vshrl.u32 %v1155, 7
    %v1157 = vsub.s32 0, %v1156
    %v1158 = vrot.slane %v1153, %v1157
    %v1160 = vadd.f32 %v1137, %v1158
    %v1161 = vadd.f32 %v1138, %v1158
    %v1162 = vadd.f32 %v1139, %v1158
    %v1163 = vadd.f32 %v1140, %v1158
    %v1164 = vadd.f32 %v1141, %v1158
    %v1165 = vadd.f32 %v1142, %v1158
    %v1166 = vadd.f32 %v1143, %v1158
    %v1167 = vadd.f32 %v1144, %v1158
    %v1168 = vadd.f32 %v1145, %v1158
    %v1169 = vadd.f32 %v1146, %v1158
    %v1170 = vadd.f32 %v1147, %v1158
    %v1171 = vadd.f32 %v1148, %v1158
    %v1172 = vadd.f32 %v1149, %v1158
    %v1173 = vadd.f32 %v1150, %v1158
    %v1174 = vadd.f32 %v1151, %v1158
    %v1175 = vadd.f32 %v1152, %v1158
    %v1176 = vtanh.pop %v1160
    %v1177 = vtanh.pop %v1161
    %v1178 = vtanh.pop %v1162
    %v1179 = vtanh.pop %v1163
    %v1180 = vtanh.pop %v1164
    %v1181 = vtanh.pop %v1165
    %v1182 = vtanh.pop %v1166
    %v1183 = vtanh.pop %v1167
    %v1184 = vtanh.pop %v1168
    %v1185 = vtanh.pop %v1169
    %v1186 = vtanh.pop %v1170
    %v1187 = vtanh.pop %v1171
    %v1188 = vtanh.pop %v1172
    %v1189 = vtanh.pop %v1173
    %v1190 = vtanh.pop %v1174
    %v1191 = vtanh.pop %v1175
    %v1192 = vmax.f32 %v1176, %v1178
    %v1193 = vmax.f32 %v1177, %v1179
    %v1194 = vmax.f32 %v1180, %v1182
    %v1195 = vmax.f32 %v1181, %v1183
    %v1196 = vmax.f32 %v1184, %v1186
    %v1197 = vmax.f32 %v1185, %v1187
    %v1198 = vmax.f32 %v1188, %v1190
    %v1199 = vmax.f32 %v1189, %v1191
    %v1200 = vpack.c.bf16 %v1193, %v1192
    %v1201 = vpack.c.bf16 %v1195, %v1194
    %v1202 = vpack.c.bf16 %v1197, %v1196
    %v1203 = vpack.c.bf16 %v1199, %v1198
    %s1204 = scalar_lea.vmem [#allocation3], 8
    %1205 = vst [vmem:[%s1204] sm:$0xff] %v1200
    %1206 = vst [vmem:[%s1204 + $0x8] sm:$0xff] %v1201
    %1207 = vst [vmem:[%s1204 + $0x10] sm:$0xff] %v1202
    %1208 = vst [vmem:[%s1204 + $0x18] sm:$0xff] %v1203
    %v1209 = vld [vmem:[#allocation3] sm:$0xff]
    %v1210 = vld [vmem:[#allocation3 + $0x8] sm:$0xff]
    %v1211 = vld [vmem:[#allocation3 + $0x10] sm:$0xff]
    %v1212 = vld [vmem:[#allocation3 + $0x18] sm:$0xff]
    %v1213 = vld [vmem:[#allocation10] sm:$0xff]
    %v1214 = vld [vmem:[#allocation10 + $0x8] sm:$0xff]
    %v1215 = vld [vmem:[#allocation10 + $0x10] sm:$0xff]
    %v1216 = vld [vmem:[#allocation10 + $0x18] sm:$0xff]
    %v1217 = vld [vmem:[#allocation10 + $0x20] sm:$0xff]
    %v1218 = vld [vmem:[#allocation10 + $0x28] sm:$0xff]
    %v1219 = vld [vmem:[#allocation10 + $0x30] sm:$0xff]
    %v1220 = vld [vmem:[#allocation10 + $0x38] sm:$0xff]
    %v1221 = vld [vmem:[#allocation10 + $0x40] sm:$0xff]
    %v1222 = vld [vmem:[#allocation10 + $0x48] sm:$0xff]
    %v1223 = vld [vmem:[#allocation10 + $0x50] sm:$0xff]
    %v1224 = vld [vmem:[#allocation10 + $0x58] sm:$0xff]
    %v1225 = vld [vmem:[#allocation10 + $0x60] sm:$0xff]
    %v1226 = vld [vmem:[#allocation10 + $0x68] sm:$0xff]
    %v1227 = vld [vmem:[#allocation10 + $0x70] sm:$0xff]
    %v1228 = vld [vmem:[#allocation10 + $0x78] sm:$0xff]
    %v1229 = vld [vmem:[%s1204] sm:$0xff]
    %v1230 = vld [vmem:[%s1204 + $0x8] sm:$0xff]
    %v1231 = vld [vmem:[%s1204 + $0x10] sm:$0xff]
    %v1232 = vld [vmem:[%s1204 + $0x18] sm:$0xff]
    %s1233 = scalar_lea.vmem [#allocation10], 128
    %v1234 = vld [vmem:[%s1233] sm:$0xff]
    %v1235 = vld [vmem:[%s1233 + $0x8] sm:$0xff]
    %v1236 = vld [vmem:[%s1233 + $0x10] sm:$0xff]
    %v1237 = vld [vmem:[%s1233 + $0x18] sm:$0xff]
    %v1238 = vld [vmem:[%s1233 + $0x20] sm:$0xff]
    %v1239 = vld [vmem:[%s1233 + $0x28] sm:$0xff]
    %v1240 = vld [vmem:[%s1233 + $0x30] sm:$0xff]
    %v1241 = vld [vmem:[%s1233 + $0x38] sm:$0xff]
    %v1242 = vld [vmem:[%s1233 + $0x40] sm:$0xff]
    %v1243 = vld [vmem:[%s1233 + $0x48] sm:$0xff]
    %v1244 = vld [vmem:[%s1233 + $0x50] sm:$0xff]
    %v1245 = vld [vmem:[%s1233 + $0x58] sm:$0xff]
    %v1246 = vld [vmem:[%s1233 + $0x60] sm:$0xff]
    %v1247 = vld [vmem:[%s1233 + $0x68] sm:$0xff]
    %v1248 = vld [vmem:[%s1233 + $0x70] sm:$0xff]
    %v1249 = vld [vmem:[%s1233 + $0x78] sm:$0xff]
    %v1266 = vunpack.c.l.b16 %v1234
    %v1267 = vunpack.c.h.b16 %v1234
    %v1268 = vunpack.c.l.b16 %v1235
    %v1269 = vunpack.c.h.b16 %v1235
    %v1270 = vunpack.c.l.b16 %v1236
    %v1271 = vunpack.c.h.b16 %v1236
    %v1272 = vunpack.c.l.b16 %v1237
    %v1273 = vunpack.c.h.b16 %v1237
    %v1274 = vunpack.c.l.b16 %v1238
    %v1275 = vunpack.c.h.b16 %v1238
    %v1276 = vunpack.c.l.b16 %v1239
    %v1277 = vunpack.c.h.b16 %v1239
    %v1278 = vunpack.c.l.b16 %v1240
    %v1279 = vunpack.c.h.b16 %v1240
    %v1280 = vunpack.c.l.b16 %v1241
    %v1281 = vunpack.c.h.b16 %v1241
    %v1282 = vunpack.c.l.b16 %v1242
    %v1283 = vunpack.c.h.b16 %v1242
    %v1284 = vunpack.c.l.b16 %v1243
    %v1285 = vunpack.c.h.b16 %v1243
    %v1286 = vunpack.c.l.b16 %v1244
    %v1287 = vunpack.c.h.b16 %v1244
    %v1288 = vunpack.c.l.b16 %v1245
    %v1289 = vunpack.c.h.b16 %v1245
    %v1290 = vunpack.c.l.b16 %v1246
    %v1291 = vunpack.c.h.b16 %v1246
    %v1292 = vunpack.c.l.b16 %v1247
    %v1293 = vunpack.c.h.b16 %v1247
    %v1294 = vunpack.c.l.b16 %v1248
    %v1295 = vunpack.c.h.b16 %v1248
    %v1296 = vunpack.c.l.b16 %v1249
    %v1297 = vunpack.c.h.b16 %v1249
    %v1298 = vpack.c.b16 %v1268, %v1266
    %v1299 = vpack.c.b16 %v1269, %v1267
    %v1300 = vpack.c.b16 %v1272, %v1270
    %v1301 = vpack.c.b16 %v1273, %v1271
    %v1302 = vpack.c.b16 %v1276, %v1274
    %v1303 = vpack.c.b16 %v1277, %v1275
    %v1304 = vpack.c.b16 %v1280, %v1278
    %v1305 = vpack.c.b16 %v1281, %v1279
    %v1306 = vpack.c.b16 %v1284, %v1282
    %v1307 = vpack.c.b16 %v1285, %v1283
    %v1308 = vpack.c.b16 %v1288, %v1286
    %v1309 = vpack.c.b16 %v1289, %v1287
    %v1310 = vpack.c.b16 %v1292, %v1290
    %v1311 = vpack.c.b16 %v1293, %v1291
    %v1312 = vpack.c.b16 %v1296, %v1294
    %v1313 = vpack.c.b16 %v1297, %v1295
    %1330 = vmatprep.subr.bf16.mxu0 %v1299
    %1331 = vmatpush1.bf16.msra.mxu0 %v1298
    %1332 = vmatprep.subr.bf16.mxu0 %v1301
    %1333 = vmatpush1.bf16.msra.mxu0 %v1300
    %1334 = vmatprep.subr.bf16.mxu0 %v1303
    %1335 = vmatpush1.bf16.msra.mxu0 %v1302
    %1336 = vmatprep.subr.bf16.mxu0 %v1305
    %1337 = vmatpush1.bf16.msra.mxu0 %v1304
    %1338 = vmatprep.subr.bf16.mxu0 %v1307
    %1339 = vmatpush1.bf16.msra.mxu0 %v1306
    %1340 = vmatprep.subr.bf16.mxu0 %v1309
    %1341 = vmatpush1.bf16.msra.mxu0 %v1308
    %1342 = vmatprep.subr.bf16.mxu0 %v1311
    %1343 = vmatpush1.bf16.msra.mxu0 %v1310
    %1344 = vmatprep.subr.bf16.mxu0 %v1313
    %1345 = vmatpush1.bf16.msra.mxu0 %v1312
    %1346 = vmatprep.subr.bf16.mxu0 0
    %1347 = vmatpush1.bf16.msra.mxu0 0
    %1348 = vmatprep.subr.bf16.mxu0 0
    %1349 = vmatpush1.bf16.msra.mxu0 0
    %1350 = vmatprep.subr.bf16.mxu0 0
    %1351 = vmatpush1.bf16.msra.mxu0 0
    %1352 = vmatprep.subr.bf16.mxu0 0
    %1353 = vmatpush1.bf16.msra.mxu0 0
    %1354 = vmatprep.subr.bf16.mxu0 0
    %1355 = vmatpush1.bf16.msra.mxu0 0
    %1356 = vmatprep.subr.bf16.mxu0 0
    %1357 = vmatpush1.bf16.msra.mxu0 0
    %1358 = vmatprep.subr.bf16.mxu0 0
    %1359 = vmatpush1.bf16.msra.mxu0 0
    %1360 = vmatprep.subr.bf16.mxu0 0
    %1361 = vmatpush1.bf16.msra.mxu0 0
    %1362 = vmatprep.mubr.bf16.mxu0 0
    %1363 = vmatmul.mubr.bf16.gmra.mrb[0].mxu0 %v1229
    %v1364 = vpop.f32.mrb[0].mxu0
    %v1365 = vadd.f32 0.0, %v1364
    %v1366 = vpop.f32.mrb[0].mxu0
    %v1367 = vadd.f32 0.0, %v1366
    %v1368 = vpop.f32.mrb[0].mxu0
    %v1369 = vadd.f32 0.0, %v1368
    %v1370 = vpop.f32.mrb[0].mxu0
    %v1371 = vadd.f32 0.0, %v1370
    %1372 = vmatprep.mubr.bf16.mxu0 0
    %1373 = vmatmul.mubr.bf16.gmra.mrb[0].mxu0 %v1230
    %v1374 = vpop.f32.mrb[0].mxu0
    %v1375 = vadd.f32 0.0, %v1374
    %v1376 = vpop.f32.mrb[0].mxu0
    %v1377 = vadd.f32 0.0, %v1376
    %v1378 = vpop.f32.mrb[0].mxu0
    %v1379 = vadd.f32 0.0, %v1378
    %v1380 = vpop.f32.mrb[0].mxu0
    %v1381 = vadd.f32 0.0, %v1380
    %1382 = vmatprep.mubr.bf16.mxu0 0
    %1383 = vmatmul.mubr.bf16.gmra.mrb[0].mxu0 %v1231
    %v1384 = vpop.f32.mrb[0].mxu0
    %v1385 = vadd.f32 0.0, %v1384
    %v1386 = vpop.f32.mrb[0].mxu0
    %v1387 = vadd.f32 0.0, %v1386
    %v1388 = vpop.f32.mrb[0].mxu0
    %v1389 = vadd.f32 0.0, %v1388
    %v1390 = vpop.f32.mrb[0].mxu0
    %v1391 = vadd.f32 0.0, %v1390
    %1392 = vmatprep.mubr.bf16.mxu0 0
    %1393 = vmatmul.mubr.bf16.gmra.mrb[0].mxu0 %v1232
    %v1394 = vpop.f32.mrb[0].mxu0
    %v1395 = vadd.f32 0.0, %v1394
    %v1396 = vpop.f32.mrb[0].mxu0
    %v1397 = vadd.f32 0.0, %v1396
    %v1398 = vpop.f32.mrb[0].mxu0
    %v1399 = vadd.f32 0.0, %v1398
    %v1400 = vpop.f32.mrb[0].mxu0
    %v1401 = vadd.f32 0.0, %v1400
    %1402 = vdwg.mxu0
    %v1419 = vunpack.c.l.b16 %v1213
    %v1420 = vunpack.c.h.b16 %v1213
    %v1421 = vunpack.c.l.b16 %v1214
    %v1422 = vunpack.c.h.b16 %v1214
    %v1423 = vunpack.c.l.b16 %v1215
    %v1424 = vunpack.c.h.b16 %v1215
    %v1425 = vunpack.c.l.b16 %v1216
    %v1426 = vunpack.c.h.b16 %v1216
    %v1427 = vunpack.c.l.b16 %v1217
    %v1428 = vunpack.c.h.b16 %v1217
    %v1429 = vunpack.c.l.b16 %v1218
    %v1430 = vunpack.c.h.b16 %v1218
    %v1431 = vunpack.c.l.b16 %v1219
    %v1432 = vunpack.c.h.b16 %v1219
    %v1433 = vunpack.c.l.b16 %v1220
    %v1434 = vunpack.c.h.b16 %v1220
    %v1435 = vunpack.c.l.b16 %v1221
    %v1436 = vunpack.c.h.b16 %v1221
    %v1437 = vunpack.c.l.b16 %v1222
    %v1438 = vunpack.c.h.b16 %v1222
    %v1439 = vunpack.c.l.b16 %v1223
    %v1440 = vunpack.c.h.b16 %v1223
    %v1441 = vunpack.c.l.b16 %v1224
    %v1442 = vunpack.c.h.b16 %v1224
    %v1443 = vunpack.c.l.b16 %v1225
    %v1444 = vunpack.c.h.b16 %v1225
    %v1445 = vunpack.c.l.b16 %v1226
    %v1446 = vunpack.c.h.b16 %v1226
    %v1447 = vunpack.c.l.b16 %v1227
    %v1448 = vunpack.c.h.b16 %v1227
    %v1449 = vunpack.c.l.b16 %v1228
    %v1450 = vunpack.c.h.b16 %v1228
    %v1451 = vpack.c.b16 %v1421, %v1419
    %v1452 = vpack.c.b16 %v1422, %v1420
    %v1453 = vpack.c.b16 %v1425, %v1423
    %v1454 = vpack.c.b16 %v1426, %v1424
    %v1455 = vpack.c.b16 %v1429, %v1427
    %v1456 = vpack.c.b16 %v1430, %v1428
    %v1457 = vpack.c.b16 %v1433, %v1431
    %v1458 = vpack.c.b16 %v1434, %v1432
    %v1459 = vpack.c.b16 %v1437, %v1435
    %v1460 = vpack.c.b16 %v1438, %v1436
    %v1461 = vpack.c.b16 %v1441, %v1439
    %v1462 = vpack.c.b16 %v1442, %v1440
    %v1463 = vpack.c.b16 %v1445, %v1443
    %v1464 = vpack.c.b16 %v1446, %v1444
    %v1465 = vpack.c.b16 %v1449, %v1447
    %v1466 = vpack.c.b16 %v1450, %v1448
    %1483 = vmatprep.subr.bf16.mxu0 %v1452
    %1484 = vmatpush1.bf16.msra.mxu0 %v1451
    %1485 = vmatprep.subr.bf16.mxu0 %v1454
    %1486 = vmatpush1.bf16.msra.mxu0 %v1453
    %1487 = vmatprep.subr.bf16.mxu0 %v1456
    %1488 = vmatpush1.bf16.msra.mxu0 %v1455
    %1489 = vmatprep.subr.bf16.mxu0 %v1458
    %1490 = vmatpush1.bf16.msra.mxu0 %v1457
    %1491 = vmatprep.subr.bf16.mxu0 %v1460
    %1492 = vmatpush1.bf16.msra.mxu0 %v1459
    %1493 = vmatprep.subr.bf16.mxu0 %v1462
    %1494 = vmatpush1.bf16.msra.mxu0 %v1461
    %1495 = vmatprep.subr.bf16.mxu0 %v1464
    %1496 = vmatpush1.bf16.msra.mxu0 %v1463
    %1497 = vmatprep.subr.bf16.mxu0 %v1466
    %1498 = vmatpush1.bf16.msra.mxu0 %v1465
    %1499 = vmatprep.subr.bf16.mxu0 0
    %1500 = vmatpush1.bf16.msra.mxu0 0
    %1501 = vmatprep.subr.bf16.mxu0 0
    %1502 = vmatpush1.bf16.msra.mxu0 0
    %1503 = vmatprep.subr.bf16.mxu0 0
    %1504 = vmatpush1.bf16.msra.mxu0 0
    %1505 = vmatprep.subr.bf16.mxu0 0
    %1506 = vmatpush1.bf16.msra.mxu0 0
    %1507 = vmatprep.subr.bf16.mxu0 0
    %1508 = vmatpush1.bf16.msra.mxu0 0
    %1509 = vmatprep.subr.bf16.mxu0 0
    %1510 = vmatpush1.bf16.msra.mxu0 0
    %1511 = vmatprep.subr.bf16.mxu0 0
    %1512 = vmatpush1.bf16.msra.mxu0 0
    %1513 = vmatprep.subr.bf16.mxu0 0
    %1514 = vmatpush1.bf16.msra.mxu0 0
    %1515 = vmatprep.mubr.bf16.mxu0 0
    %1516 = vmatmul.mubr.bf16.gmra.mrb[0].mxu0 %v1209
    %v1517 = vpop.f32.mrb[0].mxu0
    %v1518 = vadd.f32 %v1365, %v1517
    %v1519 = vpop.f32.mrb[0].mxu0
    %v1520 = vadd.f32 %v1367, %v1519
    %v1521 = vpop.f32.mrb[0].mxu0
    %v1522 = vadd.f32 %v1369, %v1521
    %v1523 = vpop.f32.mrb[0].mxu0
    %v1524 = vadd.f32 %v1371, %v1523
    %1525 = vmatprep.mubr.bf16.mxu0 0
    %1526 = vmatmul.mubr.bf16.gmra.mrb[0].mxu0 %v1210
    %v1527 = vpop.f32.mrb[0].mxu0
    %v1528 = vadd.f32 %v1375, %v1527
    %v1529 = vpop.f32.mrb[0].mxu0
    %v1530 = vadd.f32 %v1377, %v1529
    %v1531 = vpop.f32.mrb[0].mxu0
    %v1532 = vadd.f32 %v1379, %v1531
    %v1533 = vpop.f32.mrb[0].mxu0
    %v1534 = vadd.f32 %v1381, %v1533
    %1535 = vmatprep.mubr.bf16.mxu0 0
    %1536 = vmatmul.mubr.bf16.gmra.mrb[0].mxu0 %v1211
    %v1537 = vpop.f32.mrb[0].mxu0
    %v1538 = vadd.f32 %v1385, %v1537
    %v1539 = vpop.f32.mrb[0].mxu0
    %v1540 = vadd.f32 %v1387, %v1539
    %v1541 = vpop.f32.mrb[0].mxu0
    %v1542 = vadd.f32 %v1389, %v1541
    %v1543 = vpop.f32.mrb[0].mxu0
    %v1544 = vadd.f32 %v1391, %v1543
    %1545 = vmatprep.mubr.bf16.mxu0 0
    %1546 = vmatmul.mubr.bf16.gmra.mrb[0].mxu0 %v1212
    %v1547 = vpop.f32.mrb[0].mxu0
    %v1548 = vadd.f32 %v1395, %v1547
    %v1549 = vpop.f32.mrb[0].mxu0
    %v1550 = vadd.f32 %v1397, %v1549
    %v1551 = vpop.f32.mrb[0].mxu0
    %v1552 = vadd.f32 %v1399, %v1551
    %v1553 = vpop.f32.mrb[0].mxu0
    %v1554 = vadd.f32 %v1401, %v1553
    %1555 = vdwg.mxu0
    %s1556 = scalar_lea.vmem [#allocation3], 16
    %v1557 = vld [vmem:[%s1556] sm:$0xff]
    %v1558 = vld [vmem:[%s1556 + $0x8] sm:$0xff]
    %v1559 = vld [vmem:[%s1556 + $0x10] sm:$0xff]
    %v1560 = vld [vmem:[%s1556 + $0x18] sm:$0xff]
    %s1561 = scalar_lea.vmem [#allocation10], 256
    %v1562 = vld [vmem:[%s1561] sm:$0xff]
    %v1563 = vld [vmem:[%s1561 + $0x8] sm:$0xff]
    %v1564 = vld [vmem:[%s1561 + $0x10] sm:$0xff]
    %v1565 = vld [vmem:[%s1561 + $0x18] sm:$0xff]
    %v1566 = vld [vmem:[%s1561 + $0x20] sm:$0xff]
    %v1567 = vld [vmem:[%s1561 + $0x28] sm:$0xff]
    %v1568 = vld [vmem:[%s1561 + $0x30] sm:$0xff]
    %v1569 = vld [vmem:[%s1561 + $0x38] sm:$0xff]
    %v1570 = vld [vmem:[%s1561 + $0x40] sm:$0xff]
    %v1571 = vld [vmem:[%s1561 + $0x48] sm:$0xff]
    %v1572 = vld [vmem:[%s1561 + $0x50] sm:$0xff]
    %v1573 = vld [vmem:[%s1561 + $0x58] sm:$0xff]
    %v1574 = vld [vmem:[%s1561 + $0x60] sm:$0xff]
    %v1575 = vld [vmem:[%s1561 + $0x68] sm:$0xff]
    %v1576 = vld [vmem:[%s1561 + $0x70] sm:$0xff]
    %v1577 = vld [vmem:[%s1561 + $0x78] sm:$0xff]
    %v1594 = vunpack.c.l.b16 %v1562
    %v1595 = vunpack.c.h.b16 %v1562
    %v1596 = vunpack.c.l.b16 %v1563
    %v1597 = vunpack.c.h.b16 %v1563
    %v1598 = vunpack.c.l.b16 %v1564
    %v1599 = vunpack.c.h.b16 %v1564
    %v1600 = vunpack.c.l.b16 %v1565
    %v1601 = vunpack.c.h.b16 %v1565
    %v1602 = vunpack.c.l.b16 %v1566
    %v1603 = vunpack.c.h.b16 %v1566
    %v1604 = vunpack.c.l.b16 %v1567
    %v1605 = vunpack.c.h.b16 %v1567
    %v1606 = vunpack.c.l.b16 %v1568
    %v1607 = vunpack.c.h.b16 %v1568
    %v1608 = vunpack.c.l.b16 %v1569
    %v1609 = vunpack.c.h.b16 %v1569
    %v1610 = vunpack.c.l.b16 %v1570
    %v1611 = vunpack.c.h.b16 %v1570
    %v1612 = vunpack.c.l.b16 %v1571
    %v1613 = vunpack.c.h.b16 %v1571
    %v1614 = vunpack.c.l.b16 %v1572
    %v1615 = vunpack.c.h.b16 %v1572
    %v1616 = vunpack.c.l.b16 %v1573
    %v1617 = vunpack.c.h.b16 %v1573
    %v1618 = vunpack.c.l.b16 %v1574
    %v1619 = vunpack.c.h.b16 %v1574
    %v1620 = vunpack.c.l.b16 %v1575
    %v1621 = vunpack.c.h.b16 %v1575
    %v1622 = vunpack.c.l.b16 %v1576
    %v1623 = vunpack.c.h.b16 %v1576
    %v1624 = vunpack.c.l.b16 %v1577
    %v1625 = vunpack.c.h.b16 %v1577
    %v1626 = vpack.c.b16 %v1596, %v1594
    %v1627 = vpack.c.b16 %v1597, %v1595
    %v1628 = vpack.c.b16 %v1600, %v1598
    %v1629 = vpack.c.b16 %v1601, %v1599
    %v1630 = vpack.c.b16 %v1604, %v1602
    %v1631 = vpack.c.b16 %v1605, %v1603
    %v1632 = vpack.c.b16 %v1608, %v1606
    %v1633 = vpack.c.b16 %v1609, %v1607
    %v1634 = vpack.c.b16 %v1612, %v1610
    %v1635 = vpack.c.b16 %v1613, %v1611
    %v1636 = vpack.c.b16 %v1616, %v1614
    %v1637 = vpack.c.b16 %v1617, %v1615
    %v1638 = vpack.c.b16 %v1620, %v1618
    %v1639 = vpack.c.b16 %v1621, %v1619
    %v1640 = vpack.c.b16 %v1624, %v1622
    %v1641 = vpack.c.b16 %v1625, %v1623
    %1658 = vmatprep.subr.bf16.mxu0 %v1627
    %1659 = vmatpush1.bf16.msra.mxu0 %v1626
    %1660 = vmatprep.subr.bf16.mxu0 %v1629
    %1661 = vmatpush1.bf16.msra.mxu0 %v1628
    %1662 = vmatprep.subr.bf16.mxu0 %v1631
    %1663 = vmatpush1.bf16.msra.mxu0 %v1630
    %1664 = vmatprep.subr.bf16.mxu0 %v1633
    %1665 = vmatpush1.bf16.msra.mxu0 %v1632
    %1666 = vmatprep.subr.bf16.mxu0 %v1635
    %1667 = vmatpush1.bf16.msra.mxu0 %v1634
    %1668 = vmatprep.subr.bf16.mxu0 %v1637
    %1669 = vmatpush1.bf16.msra.mxu0 %v1636
    %1670 = vmatprep.subr.bf16.mxu0 %v1639
    %1671 = vmatpush1.bf16.msra.mxu0 %v1638
    %1672 = vmatprep.subr.bf16.mxu0 %v1641
    %1673 = vmatpush1.bf16.msra.mxu0 %v1640
    %1674 = vmatprep.subr.bf16.mxu0 0
    %1675 = vmatpush1.bf16.msra.mxu0 0
    %1676 = vmatprep.subr.bf16.mxu0 0
    %1677 = vmatpush1.bf16.msra.mxu0 0
    %1678 = vmatprep.subr.bf16.mxu0 0
    %1679 = vmatpush1.bf16.msra.mxu0 0
    %1680 = vmatprep.subr.bf16.mxu0 0
    %1681 = vmatpush1.bf16.msra.mxu0 0
    %1682 = vmatprep.subr.bf16.mxu0 0
    %1683 = vmatpush1.bf16.msra.mxu0 0
    %1684 = vmatprep.subr.bf16.mxu0 0
    %1685 = vmatpush1.bf16.msra.mxu0 0
    %1686 = vmatprep.subr.bf16.mxu0 0
    %1687 = vmatpush1.bf16.msra.mxu0 0
    %1688 = vmatprep.subr.bf16.mxu0 0
    %1689 = vmatpush1.bf16.msra.mxu0 0
    %1690 = vmatprep.mubr.bf16.mxu0 0
    %1691 = vmatmul.mubr.bf16.gmra.mrb[0].mxu0 %v1557
    %v1692 = vpop.f32.mrb[0].mxu0
    %v1693 = vadd.f32 0.0, %v1692
    %v1694 = vpop.f32.mrb[0].mxu0
    %v1695 = vadd.f32 0.0, %v1694
    %v1696 = vpop.f32.mrb[0].mxu0
    %v1697 = vadd.f32 0.0, %v1696
    %v1698 = vpop.f32.mrb[0].mxu0
    %v1699 = vadd.f32 0.0, %v1698
    %1700 = vmatprep.mubr.bf16.mxu0 0
    %1701 = vmatmul.mubr.bf16.gmra.mrb[0].mxu0 %v1558
    %v1702 = vpop.f32.mrb[0].mxu0
    %v1703 = vadd.f32 0.0, %v1702
    %v1704 = vpop.f32.mrb[0].mxu0
    %v1705 = vadd.f32 0.0, %v1704
    %v1706 = vpop.f32.mrb[0].mxu0
    %v1707 = vadd.f32 0.0, %v1706
    %v1708 = vpop.f32.mrb[0].mxu0
    %v1709 = vadd.f32 0.0, %v1708
    %1710 = vmatprep.mubr.bf16.mxu0 0
    %1711 = vmatmul.mubr.bf16.gmra.mrb[0].mxu0 %v1559
    %v1712 = vpop.f32.mrb[0].mxu0
    %v1713 = vadd.f32 0.0, %v1712
    %v1714 = vpop.f32.mrb[0].mxu0
    %v1715 = vadd.f32 0.0, %v1714
    %v1716 = vpop.f32.mrb[0].mxu0
    %v1717 = vadd.f32 0.0, %v1716
    %v1718 = vpop.f32.mrb[0].mxu0
    %v1719 = vadd.f32 0.0, %v1718
    %1720 = vmatprep.mubr.bf16.mxu0 0
    %1721 = vmatmul.mubr.bf16.gmra.mrb[0].mxu0 %v1560
    %v1722 = vpop.f32.mrb[0].mxu0
    %v1723 = vadd.f32 0.0, %v1722
    %v1724 = vpop.f32.mrb[0].mxu0
    %v1725 = vadd.f32 0.0, %v1724
    %v1726 = vpop.f32.mrb[0].mxu0
    %v1727 = vadd.f32 0.0, %v1726
    %v1728 = vpop.f32.mrb[0].mxu0
    %v1729 = vadd.f32 0.0, %v1728
    %1730 = vdwg.mxu0
    %v1731 = vadd.f32 %v1518, %v1693
    %v1732 = vadd.f32 %v1520, %v1695
    %v1733 = vadd.f32 %v1522, %v1697
    %v1734 = vadd.f32 %v1524, %v1699
    %v1735 = vadd.f32 %v1528, %v1703
    %v1736 = vadd.f32 %v1530, %v1705
    %v1737 = vadd.f32 %v1532, %v1707
    %v1738 = vadd.f32 %v1534, %v1709
    %v1739 = vadd.f32 %v1538, %v1713
    %v1740 = vadd.f32 %v1540, %v1715
    %v1741 = vadd.f32 %v1542, %v1717
    %v1742 = vadd.f32 %v1544, %v1719
    %v1743 = vadd.f32 %v1548, %v1723
    %v1744 = vadd.f32 %v1550, %v1725
    %v1745 = vadd.f32 %v1552, %v1727
    %v1746 = vadd.f32 %v1554, %v1729
    %v1747 = vld [vmem:[%s6] sm:$0x3]
    %v1749 = vlaneseq
    %v1750 = vshrl.u32 %v1749, 7
    %v1751 = vsub.s32 0, %v1750
    %v1752 = vrot.slane %v1747, %v1751
    %v1753 = vlaneseq
    %v1754 = vshrl.u32 %v1753, 7
    %v1755 = vsub.s32 1, %v1754
    %v1756 = vrot.slane %v1747, %v1755
    %v1759 = vadd.f32 %v1731, %v1752
    %v1760 = vadd.f32 %v1732, %v1756
    %v1761 = vadd.f32 %v1733, %v1752
    %v1762 = vadd.f32 %v1734, %v1756
    %v1763 = vadd.f32 %v1735, %v1752
    %v1764 = vadd.f32 %v1736, %v1756
    %v1765 = vadd.f32 %v1737, %v1752
    %v1766 = vadd.f32 %v1738, %v1756
    %v1767 = vadd.f32 %v1739, %v1752
    %v1768 = vadd.f32 %v1740, %v1756
    %v1769 = vadd.f32 %v1741, %v1752
    %v1770 = vadd.f32 %v1742, %v1756
    %v1771 = vadd.f32 %v1743, %v1752
    %v1772 = vadd.f32 %v1744, %v1756
    %v1773 = vadd.f32 %v1745, %v1752
    %v1774 = vadd.f32 %v1746, %v1756
    %v1775 = vtanh.pop %v1759
    %v1776 = vtanh.pop %v1760
    %v1777 = vtanh.pop %v1761
    %v1778 = vtanh.pop %v1762
    %v1779 = vtanh.pop %v1763
    %v1780 = vtanh.pop %v1764
    %v1781 = vtanh.pop %v1765
    %v1782 = vtanh.pop %v1766
    %v1783 = vtanh.pop %v1767
    %v1784 = vtanh.pop %v1768
    %v1785 = vtanh.pop %v1769
    %v1786 = vtanh.pop %v1770
    %v1787 = vtanh.pop %v1771
    %v1788 = vtanh.pop %v1772
    %v1789 = vtanh.pop %v1773
    %v1790 = vtanh.pop %v1774
    %v1791 = vmax.f32 %v1775, %v1779
    %v1792 = vmax.f32 %v1776, %v1780
    %v1793 = vmax.f32 %v1777, %v1781
    %v1794 = vmax.f32 %v1778, %v1782
    %v1795 = vmax.f32 %v1783, %v1787
    %v1796 = vmax.f32 %v1784, %v1788
    %v1797 = vmax.f32 %v1785, %v1789
    %v1798 = vmax.f32 %v1786, %v1790
    %v1799 = vpack.c.bf16 %v1793, %v1791
    %v1800 = vpack.c.bf16 %v1794, %v1792
    %v1801 = vpack.c.bf16 %v1797, %v1795
    %v1802 = vpack.c.bf16 %v1798, %v1796
    %s1803 = scalar_lea.vmem [#allocation4], 16
    %1804 = vst [vmem:[%s1803] sm:$0xff] %v1799
    %1805 = vst [vmem:[%s1803 + $0x8] sm:$0xff] %v1800
    %1806 = vst [vmem:[%s1803 + $0x10] sm:$0xff] %v1801
    %1807 = vst [vmem:[%s1803 + $0x18] sm:$0xff] %v1802
    %v1808 = vld [vmem:[#allocation4] sm:$0xff]
    %v1809 = vld [vmem:[#allocation4 + $0x8] sm:$0xff]
    %v1810 = vld [vmem:[#allocation4 + $0x10] sm:$0xff]
    %v1811 = vld [vmem:[#allocation4 + $0x18] sm:$0xff]
    %v1812 = vld [vmem:[#allocation12] sm:$0xff]
    %v1813 = vld [vmem:[#allocation12 + $0x8] sm:$0xff]
    %v1814 = vld [vmem:[#allocation12 + $0x10] sm:$0xff]
    %v1815 = vld [vmem:[#allocation12 + $0x18] sm:$0xff]
    %v1816 = vld [vmem:[#allocation12 + $0x20] sm:$0xff]
    %v1817 = vld [vmem:[#allocation12 + $0x28] sm:$0xff]
    %v1818 = vld [vmem:[#allocation12 + $0x30] sm:$0xff]
    %v1819 = vld [vmem:[#allocation12 + $0x38] sm:$0xff]
    %v1820 = vld [vmem:[#allocation12 + $0x40] sm:$0xff]
    %v1821 = vld [vmem:[#allocation12 + $0x48] sm:$0xff]
    %v1822 = vld [vmem:[#allocation12 + $0x50] sm:$0xff]
    %v1823 = vld [vmem:[#allocation12 + $0x58] sm:$0xff]
    %v1824 = vld [vmem:[#allocation12 + $0x60] sm:$0xff]
    %v1825 = vld [vmem:[#allocation12 + $0x68] sm:$0xff]
    %v1826 = vld [vmem:[#allocation12 + $0x70] sm:$0xff]
    %v1827 = vld [vmem:[#allocation12 + $0x78] sm:$0xff]
    %v1828 = vld [vmem:[#allocation12 + $0x80] sm:$0xff]
    %v1829 = vld [vmem:[#allocation12 + $0x88] sm:$0xff]
    %v1830 = vld [vmem:[#allocation12 + $0x90] sm:$0xff]
    %v1831 = vld [vmem:[#allocation12 + $0x98] sm:$0xff]
    %v1832 = vld [vmem:[#allocation12 + $0xa0] sm:$0xff]
    %v1833 = vld [vmem:[#allocation12 + $0xa8] sm:$0xff]
    %v1834 = vld [vmem:[#allocation12 + $0xb0] sm:$0xff]
    %v1835 = vld [vmem:[#allocation12 + $0xb8] sm:$0xff]
    %v1836 = vld [vmem:[#allocation12 + $0xc0] sm:$0xff]
    %v1837 = vld [vmem:[#allocation12 + $0xc8] sm:$0xff]
    %v1838 = vld [vmem:[#allocation12 + $0xd0] sm:$0xff]
    %v1839 = vld [vmem:[#allocation12 + $0xd8] sm:$0xff]
    %v1840 = vld [vmem:[#allocation12 + $0xe0] sm:$0xff]
    %v1841 = vld [vmem:[#allocation12 + $0xe8] sm:$0xff]
    %v1842 = vld [vmem:[#allocation12 + $0xf0] sm:$0xff]
    %v1843 = vld [vmem:[#allocation12 + $0xf8] sm:$0xff]
    %v1844 = vld [vmem:[#allocation12 + $0x100] sm:$0xff]
    %v1845 = vld [vmem:[#allocation12 + $0x108] sm:$0xff]
    %v1846 = vld [vmem:[#allocation12 + $0x110] sm:$0xff]
    %v1847 = vld [vmem:[#allocation12 + $0x118] sm:$0xff]
    %v1848 = vld [vmem:[#allocation12 + $0x120] sm:$0xff]
    %v1849 = vld [vmem:[#allocation12 + $0x128] sm:$0xff]
    %v1850 = vld [vmem:[#allocation12 + $0x130] sm:$0xff]
    %v1851 = vld [vmem:[#allocation12 + $0x138] sm:$0xff]
    %v1852 = vld [vmem:[#allocation12 + $0x140] sm:$0xff]
    %v1853 = vld [vmem:[#allocation12 + $0x148] sm:$0xff]
    %v1854 = vld [vmem:[#allocation12 + $0x150] sm:$0xff]
    %v1855 = vld [vmem:[#allocation12 + $0x158] sm:$0xff]
    %v1856 = vld [vmem:[#allocation12 + $0x160] sm:$0xff]
    %v1857 = vld [vmem:[#allocation12 + $0x168] sm:$0xff]
    %v1858 = vld [vmem:[#allocation12 + $0x170] sm:$0xff]
    %v1859 = vld [vmem:[#allocation12 + $0x178] sm:$0xff]
    %v1860 = vld [vmem:[#allocation12 + $0x180] sm:$0xff]
    %v1861 = vld [vmem:[#allocation12 + $0x188] sm:$0xff]
    %v1862 = vld [vmem:[#allocation12 + $0x190] sm:$0xff]
    %v1863 = vld [vmem:[#allocation12 + $0x198] sm:$0xff]
    %v1864 = vld [vmem:[#allocation12 + $0x1a0] sm:$0xff]
    %v1865 = vld [vmem:[#allocation12 + $0x1a8] sm:$0xff]
    %v1866 = vld [vmem:[#allocation12 + $0x1b0] sm:$0xff]
    %v1867 = vld [vmem:[#allocation12 + $0x1b8] sm:$0xff]
    %v1868 = vld [vmem:[#allocation12 + $0x1c0] sm:$0xff]
    %v1869 = vld [vmem:[#allocation12 + $0x1c8] sm:$0xff]
    %v1870 = vld [vmem:[#allocation12 + $0x1d0] sm:$0xff]
    %v1871 = vld [vmem:[#allocation12 + $0x1d8] sm:$0xff]
    %v1872 = vld [vmem:[#allocation12 + $0x1e0] sm:$0xff]
    %v1873 = vld [vmem:[#allocation12 + $0x1e8] sm:$0xff]
    %v1874 = vld [vmem:[#allocation12 + $0x1f0] sm:$0xff]
    %v1875 = vld [vmem:[#allocation12 + $0x1f8] sm:$0xff]
    %v1876 = vld [vmem:[%s1803] sm:$0xff]
    %v1877 = vld [vmem:[%s1803 + $0x8] sm:$0xff]
    %v1878 = vld [vmem:[%s1803 + $0x10] sm:$0xff]
    %v1879 = vld [vmem:[%s1803 + $0x18] sm:$0xff]
    %s1880 = scalar_lea.vmem [#allocation12], 512
    %v1881 = vld [vmem:[%s1880] sm:$0xff]
    %v1882 = vld [vmem:[%s1880 + $0x8] sm:$0xff]
    %v1883 = vld [vmem:[%s1880 + $0x10] sm:$0xff]
    %v1884 = vld [vmem:[%s1880 + $0x18] sm:$0xff]
    %v1885 = vld [vmem:[%s1880 + $0x20] sm:$0xff]
    %v1886 = vld [vmem:[%s1880 + $0x28] sm:$0xff]
    %v1887 = vld [vmem:[%s1880 + $0x30] sm:$0xff]
    %v1888 = vld [vmem:[%s1880 + $0x38] sm:$0xff]
    %v1889 = vld [vmem:[%s1880 + $0x40] sm:$0xff]
    %v1890 = vld [vmem:[%s1880 + $0x48] sm:$0xff]
    %v1891 = vld [vmem:[%s1880 + $0x50] sm:$0xff]
    %v1892 = vld [vmem:[%s1880 + $0x58] sm:$0xff]
    %v1893 = vld [vmem:[%s1880 + $0x60] sm:$0xff]
    %v1894 = vld [vmem:[%s1880 + $0x68] sm:$0xff]
    %v1895 = vld [vmem:[%s1880 + $0x70] sm:$0xff]
    %v1896 = vld [vmem:[%s1880 + $0x78] sm:$0xff]
    %v1897 = vld [vmem:[%s1880 + $0x80] sm:$0xff]
    %v1898 = vld [vmem:[%s1880 + $0x88] sm:$0xff]
    %v1899 = vld [vmem:[%s1880 + $0x90] sm:$0xff]
    %v1900 = vld [vmem:[%s1880 + $0x98] sm:$0xff]
    %v1901 = vld [vmem:[%s1880 + $0xa0] sm:$0xff]
    %v1902 = vld [vmem:[%s1880 + $0xa8] sm:$0xff]
    %v1903 = vld [vmem:[%s1880 + $0xb0] sm:$0xff]
    %v1904 = vld [vmem:[%s1880 + $0xb8] sm:$0xff]
    %v1905 = vld [vmem:[%s1880 + $0xc0] sm:$0xff]
    %v1906 = vld [vmem:[%s1880 + $0xc8] sm:$0xff]
    %v1907 = vld [vmem:[%s1880 + $0xd0] sm:$0xff]
    %v1908 = vld [vmem:[%s1880 + $0xd8] sm:$0xff]
    %v1909 = vld [vmem:[%s1880 + $0xe0] sm:$0xff]
    %v1910 = vld [vmem:[%s1880 + $0xe8] sm:$0xff]
    %v1911 = vld [vmem:[%s1880 + $0xf0] sm:$0xff]
    %v1912 = vld [vmem:[%s1880 + $0xf8] sm:$0xff]
    %v1913 = vld [vmem:[%s1880 + $0x100] sm:$0xff]
    %v1914 = vld [vmem:[%s1880 + $0x108] sm:$0xff]
    %v1915 = vld [vmem:[%s1880 + $0x110] sm:$0xff]
    %v1916 = vld [vmem:[%s1880 + $0x118] sm:$0xff]
    %v1917 = vld [vmem:[%s1880 + $0x120] sm:$0xff]
    %v1918 = vld [vmem:[%s1880 + $0x128] sm:$0xff]
    %v1919 = vld [vmem:[%s1880 + $0x130] sm:$0xff]
    %v1920 = vld [vmem:[%s1880 + $0x138] sm:$0xff]
    %v1921 = vld [vmem:[%s1880 + $0x140] sm:$0xff]
    %v1922 = vld [vmem:[%s1880 + $0x148] sm:$0xff]
    %v1923 = vld [vmem:[%s1880 + $0x150] sm:$0xff]
    %v1924 = vld [vmem:[%s1880 + $0x158] sm:$0xff]
    %v1925 = vld [vmem:[%s1880 + $0x160] sm:$0xff]
    %v1926 = vld [vmem:[%s1880 + $0x168] sm:$0xff]
    %v1927 = vld [vmem:[%s1880 + $0x170] sm:$0xff]
    %v1928 = vld [vmem:[%s1880 + $0x178] sm:$0xff]
    %v1929 = vld [vmem:[%s1880 + $0x180] sm:$0xff]
    %v1930 = vld [vmem:[%s1880 + $0x188] sm:$0xff]
    %v1931 = vld [vmem:[%s1880 + $0x190] sm:$0xff]
    %v1932 = vld [vmem:[%s1880 + $0x198] sm:$0xff]
    %v1933 = vld [vmem:[%s1880 + $0x1a0] sm:$0xff]
    %v1934 = vld [vmem:[%s1880 + $0x1a8] sm:$0xff]
    %v1935 = vld [vmem:[%s1880 + $0x1b0] sm:$0xff]
    %v1936 = vld [vmem:[%s1880 + $0x1b8] sm:$0xff]
    %v1937 = vld [vmem:[%s1880 + $0x1c0] sm:$0xff]
    %v1938 = vld [vmem:[%s1880 + $0x1c8] sm:$0xff]
    %v1939 = vld [vmem:[%s1880 + $0x1d0] sm:$0xff]
    %v1940 = vld [vmem:[%s1880 + $0x1d8] sm:$0xff]
    %v1941 = vld [vmem:[%s1880 + $0x1e0] sm:$0xff]
    %v1942 = vld [vmem:[%s1880 + $0x1e8] sm:$0xff]
    %v1943 = vld [vmem:[%s1880 + $0x1f0] sm:$0xff]
    %v1944 = vld [vmem:[%s1880 + $0x1f8] sm:$0xff]
    %v2009 = vunpack.c.l.b16 %v1881
    %v2010 = vunpack.c.h.b16 %v1881
    %v2011 = vunpack.c.l.b16 %v1882
    %v2012 = vunpack.c.h.b16 %v1882
    %v2013 = vunpack.c.l.b16 %v1883
    %v2014 = vunpack.c.h.b16 %v1883
    %v2015 = vunpack.c.l.b16 %v1884
    %v2016 = vunpack.c.h.b16 %v1884
    %v2017 = vunpack.c.l.b16 %v1885
    %v2018 = vunpack.c.h.b16 %v1885
    %v2019 = vunpack.c.l.b16 %v1886
    %v2020 = vunpack.c.h.b16 %v1886
    %v2021 = vunpack.c.l.b16 %v1887
    %v2022 = vunpack.c.h.b16 %v1887
    %v2023 = vunpack.c.l.b16 %v1888
    %v2024 = vunpack.c.h.b16 %v1888
    %v2025 = vunpack.c.l.b16 %v1889
    %v2026 = vunpack.c.h.b16 %v1889
    %v2027 = vunpack.c.l.b16 %v1890
    %v2028 = vunpack.c.h.b16 %v1890
    %v2029 = vunpack.c.l.b16 %v1891
    %v2030 = vunpack.c.h.b16 %v1891
    %v2031 = vunpack.c.l.b16 %v1892
    %v2032 = vunpack.c.h.b16 %v1892
    %v2033 = vunpack.c.l.b16 %v1893
    %v2034 = vunpack.c.h.b16 %v1893
    %v2035 = vunpack.c.l.b16 %v1894
    %v2036 = vunpack.c.h.b16 %v1894
    %v2037 = vunpack.c.l.b16 %v1895
    %v2038 = vunpack.c.h.b16 %v1895
    %v2039 = vunpack.c.l.b16 %v1896
    %v2040 = vunpack.c.h.b16 %v1896
    %v2041 = vunpack.c.l.b16 %v1897
    %v2042 = vunpack.c.h.b16 %v1897
    %v2043 = vunpack.c.l.b16 %v1898
    %v2044 = vunpack.c.h.b16 %v1898
    %v2045 = vunpack.c.l.b16 %v1899
    %v2046 = vunpack.c.h.b16 %v1899
    %v2047 = vunpack.c.l.b16 %v1900
    %v2048 = vunpack.c.h.b16 %v1900
    %v2049 = vunpack.c.l.b16 %v1901
    %v2050 = vunpack.c.h.b16 %v1901
    %v2051 = vunpack.c.l.b16 %v1902
    %v2052 = vunpack.c.h.b16 %v1902
    %v2053 = vunpack.c.l.b16 %v1903
    %v2054 = vunpack.c.h.b16 %v1903
    %v2055 = vunpack.c.l.b16 %v1904
    %v2056 = vunpack.c.h.b16 %v1904
    %v2057 = vunpack.c.l.b16 %v1905
    %v2058 = vunpack.c.h.b16 %v1905
    %v2059 = vunpack.c.l.b16 %v1906
    %v2060 = vunpack.c.h.b16 %v1906
    %v2061 = vunpack.c.l.b16 %v1907
    %v2062 = vunpack.c.h.b16 %v1907
    %v2063 = vunpack.c.l.b16 %v1908
    %v2064 = vunpack.c.h.b16 %v1908
    %v2065 = vunpack.c.l.b16 %v1909
    %v2066 = vunpack.c.h.b16 %v1909
    %v2067 = vunpack.c.l.b16 %v1910
    %v2068 = vunpack.c.h.b16 %v1910
    %v2069 = vunpack.c.l.b16 %v1911
    %v2070 = vunpack.c.h.b16 %v1911
    %v2071 = vunpack.c.l.b16 %v1912
    %v2072 = vunpack.c.h.b16 %v1912
    %v2073 = vunpack.c.l.b16 %v1913
    %v2074 = vunpack.c.h.b16 %v1913
    %v2075 = vunpack.c.l.b16 %v1914
    %v2076 = vunpack.c.h.b16 %v1914
    %v2077 = vunpack.c.l.b16 %v1915
    %v2078 = vunpack.c.h.b16 %v1915
    %v2079 = vunpack.c.l.b16 %v1916
    %v2080 = vunpack.c.h.b16 %v1916
    %v2081 = vunpack.c.l.b16 %v1917
    %v2082 = vunpack.c.h.b16 %v1917
    %v2083 = vunpack.c.l.b16 %v1918
    %v2084 = vunpack.c.h.b16 %v1918
    %v2085 = vunpack.c.l.b16 %v1919
    %v2086 = vunpack.c.h.b16 %v1919
    %v2087 = vunpack.c.l.b16 %v1920
    %v2088 = vunpack.c.h.b16 %v1920
    %v2089 = vunpack.c.l.b16 %v1921
    %v2090 = vunpack.c.h.b16 %v1921
    %v2091 = vunpack.c.l.b16 %v1922
    %v2092 = vunpack.c.h.b16 %v1922
    %v2093 = vunpack.c.l.b16 %v1923
    %v2094 = vunpack.c.h.b16 %v1923
    %v2095 = vunpack.c.l.b16 %v1924
    %v2096 = vunpack.c.h.b16 %v1924
    %v2097 = vunpack.c.l.b16 %v1925
    %v2098 = vunpack.c.h.b16 %v1925
    %v2099 = vunpack.c.l.b16 %v1926
    %v2100 = vunpack.c.h.b16 %v1926
    %v2101 = vunpack.c.l.b16 %v1927
    %v2102 = vunpack.c.h.b16 %v1927
    %v2103 = vunpack.c.l.b16 %v1928
    %v2104 = vunpack.c.h.b16 %v1928
    %v2105 = vunpack.c.l.b16 %v1929
    %v2106 = vunpack.c.h.b16 %v1929
    %v2107 = vunpack.c.l.b16 %v1930
    %v2108 = vunpack.c.h.b16 %v1930
    %v2109 = vunpack.c.l.b16 %v1931
    %v2110 = vunpack.c.h.b16 %v1931
    %v2111 = vunpack.c.l.b16 %v1932
    %v2112 = vunpack.c.h.b16 %v1932
    %v2113 = vunpack.c.l.b16 %v1933
    %v2114 = vunpack.c.h.b16 %v1933
    %v2115 = vunpack.c.l.b16 %v1934
    %v2116 = vunpack.c.h.b16 %v1934
    %v2117 = vunpack.c.l.b16 %v1935
    %v2118 = vunpack.c.h.b16 %v1935
    %v2119 = vunpack.c.l.b16 %v1936
    %v2120 = vunpack.c.h.b16 %v1936
    %v2121 = vunpack.c.l.b16 %v1937
    %v2122 = vunpack.c.h.b16 %v1937
    %v2123 = vunpack.c.l.b16 %v1938
    %v2124 = vunpack.c.h.b16 %v1938
    %v2125 = vunpack.c.l.b16 %v1939
    %v2126 = vunpack.c.h.b16 %v1939
    %v2127 = vunpack.c.l.b16 %v1940
    %v2128 = vunpack.c.h.b16 %v1940
    %v2129 = vunpack.c.l.b16 %v1941
    %v2130 = vunpack.c.h.b16 %v1941
    %v2131 = vunpack.c.l.b16 %v1942
    %v2132 = vunpack.c.h.b16 %v1942
    %v2133 = vunpack.c.l.b16 %v1943
    %v2134 = vunpack.c.h.b16 %v1943
    %v2135 = vunpack.c.l.b16 %v1944
    %v2136 = vunpack.c.h.b16 %v1944
    %v2137 = vpack.c.b16 %v2013, %v2009
    %v2138 = vpack.c.b16 %v2014, %v2010
    %v2139 = vpack.c.b16 %v2015, %v2011
    %v2140 = vpack.c.b16 %v2016, %v2012
    %v2141 = vpack.c.b16 %v2021, %v2017
    %v2142 = vpack.c.b16 %v2022, %v2018
    %v2143 = vpack.c.b16 %v2023, %v2019
    %v2144 = vpack.c.b16 %v2024, %v2020
    %v2145 = vpack.c.b16 %v2029, %v2025
    %v2146 = vpack.c.b16 %v2030, %v2026
    %v2147 = vpack.c.b16 %v2031, %v2027
    %v2148 = vpack.c.b16 %v2032, %v2028
    %v2149 = vpack.c.b16 %v2037, %v2033
    %v2150 = vpack.c.b16 %v2038, %v2034
    %v2151 = vpack.c.b16 %v2039, %v2035
    %v2152 = vpack.c.b16 %v2040, %v2036
    %v2153 = vpack.c.b16 %v2045, %v2041
    %v2154 = vpack.c.b16 %v2046, %v2042
    %v2155 = vpack.c.b16 %v2047, %v2043
    %v2156 = vpack.c.b16 %v2048, %v2044
    %v2157 = vpack.c.b16 %v2053, %v2049
    %v2158 = vpack.c.b16 %v2054, %v2050
    %v2159 = vpack.c.b16 %v2055, %v2051
    %v2160 = vpack.c.b16 %v2056, %v2052
    %v2161 = vpack.c.b16 %v2061, %v2057
    %v2162 = vpack.c.b16 %v2062, %v2058
    %v2163 = vpack.c.b16 %v2063, %v2059
    %v2164 = vpack.c.b16 %v2064, %v2060
    %v2165 = vpack.c.b16 %v2069, %v2065
    %v2166 = vpack.c.b16 %v2070, %v2066
    %v2167 = vpack.c.b16 %v2071, %v2067
    %v2168 = vpack.c.b16 %v2072, %v2068
    %v2169 = vpack.c.b16 %v2077, %v2073
    %v2170 = vpack.c.b16 %v2078, %v2074
    %v2171 = vpack.c.b16 %v2079, %v2075
    %v2172 = vpack.c.b16 %v2080, %v2076
    %v2173 = vpack.c.b16 %v2085, %v2081
    %v2174 = vpack.c.b16 %v2086, %v2082
    %v2175 = vpack.c.b16 %v2087, %v2083
    %v2176 = vpack.c.b16 %v2088, %v2084
    %v2177 = vpack.c.b16 %v2093, %v2089
    %v2178 = vpack.c.b16 %v2094, %v2090
    %v2179 = vpack.c.b16 %v2095, %v2091
    %v2180 = vpack.c.b16 %v2096, %v2092
    %v2181 = vpack.c.b16 %v2101, %v2097
    %v2182 = vpack.c.b16 %v2102, %v2098
    %v2183 = vpack.c.b16 %v2103, %v2099
    %v2184 = vpack.c.b16 %v2104, %v2100
    %v2185 = vpack.c.b16 %v2109, %v2105
    %v2186 = vpack.c.b16 %v2110, %v2106
    %v2187 = vpack.c.b16 %v2111, %v2107
    %v2188 = vpack.c.b16 %v2112, %v2108
    %v2189 = vpack.c.b16 %v2117, %v2113
    %v2190 = vpack.c.b16 %v2118, %v2114
    %v2191 = vpack.c.b16 %v2119, %v2115
    %v2192 = vpack.c.b16 %v2120, %v2116
    %v2193 = vpack.c.b16 %v2125, %v2121
    %v2194 = vpack.c.b16 %v2126, %v2122
    %v2195 = vpack.c.b16 %v2127, %v2123
    %v2196 = vpack.c.b16 %v2128, %v2124
    %v2197 = vpack.c.b16 %v2133, %v2129
    %v2198 = vpack.c.b16 %v2134, %v2130
    %v2199 = vpack.c.b16 %v2135, %v2131
    %v2200 = vpack.c.b16 %v2136, %v2132
    %2265 = vmatprep.subr.bf16.mxu0 %v2138
    %2266 = vmatpush1.bf16.msra.mxu0 %v2137
    %2267 = vmatprep.subr.bf16.mxu0 %v2142
    %2268 = vmatpush1.bf16.msra.mxu0 %v2141
    %2269 = vmatprep.subr.bf16.mxu0 %v2146
    %2270 = vmatpush1.bf16.msra.mxu0 %v2145
    %2271 = vmatprep.subr.bf16.mxu0 %v2150
    %2272 = vmatpush1.bf16.msra.mxu0 %v2149
    %2273 = vmatprep.subr.bf16.mxu0 %v2154
    %2274 = vmatpush1.bf16.msra.mxu0 %v2153
    %2275 = vmatprep.subr.bf16.mxu0 %v2158
    %2276 = vmatpush1.bf16.msra.mxu0 %v2157
    %2277 = vmatprep.subr.bf16.mxu0 %v2162
    %2278 = vmatpush1.bf16.msra.mxu0 %v2161
    %2279 = vmatprep.subr.bf16.mxu0 %v2166
    %2280 = vmatpush1.bf16.msra.mxu0 %v2165
    %2281 = vmatprep.subr.bf16.mxu0 %v2170
    %2282 = vmatpush1.bf16.msra.mxu0 %v2169
    %2283 = vmatprep.subr.bf16.mxu0 %v2174
    %2284 = vmatpush1.bf16.msra.mxu0 %v2173
    %2285 = vmatprep.subr.bf16.mxu0 %v2178
    %2286 = vmatpush1.bf16.msra.mxu0 %v2177
    %2287 = vmatprep.subr.bf16.mxu0 %v2182
    %2288 = vmatpush1.bf16.msra.mxu0 %v2181
    %2289 = vmatprep.subr.bf16.mxu0 %v2186
    %2290 = vmatpush1.bf16.msra.mxu0 %v2185
    %2291 = vmatprep.subr.bf16.mxu0 %v2190
    %2292 = vmatpush1.bf16.msra.mxu0 %v2189
    %2293 = vmatprep.subr.bf16.mxu0 %v2194
    %2294 = vmatpush1.bf16.msra.mxu0 %v2193
    %2295 = vmatprep.subr.bf16.mxu0 %v2198
    %2296 = vmatpush1.bf16.msra.mxu0 %v2197
    %2297 = vmatprep.mubr.bf16.mxu0 %v1877
    %2298 = vmatmul.mubr.bf16.gmra.mrb[0].mxu0 %v1876
    %v2299 = vpop.f32.mrb[0].mxu0
    %v2300 = vadd.f32 0.0, %v2299
    %v2301 = vpop.f32.mrb[0].mxu0
    %v2302 = vadd.f32 0.0, %v2301
    %v2303 = vpop.f32.mrb[0].mxu0
    %v2304 = vadd.f32 0.0, %v2303
    %v2305 = vpop.f32.mrb[0].mxu0
    %v2306 = vadd.f32 0.0, %v2305
    %2307 = vmatprep.mubr.bf16.mxu0 %v1879
    %2308 = vmatmul.mubr.bf16.gmra.mrb[0].mxu0 %v1878
    %v2309 = vpop.f32.mrb[0].mxu0
    %v2310 = vadd.f32 0.0, %v2309
    %v2311 = vpop.f32.mrb[0].mxu0
    %v2312 = vadd.f32 0.0, %v2311
    %v2313 = vpop.f32.mrb[0].mxu0
    %v2314 = vadd.f32 0.0, %v2313
    %v2315 = vpop.f32.mrb[0].mxu0
    %v2316 = vadd.f32 0.0, %v2315
    %2317 = vdwg.mxu0
    %2318 = vmatprep.subr.bf16.mxu0 %v2140
    %2319 = vmatpush1.bf16.msra.mxu0 %v2139
    %2320 = vmatprep.subr.bf16.mxu0 %v2144
    %2321 = vmatpush1.bf16.msra.mxu0 %v2143
    %2322 = vmatprep.subr.bf16.mxu0 %v2148
    %2323 = vmatpush1.bf16.msra.mxu0 %v2147
    %2324 = vmatprep.subr.bf16.mxu0 %v2152
    %2325 = vmatpush1.bf16.msra.mxu0 %v2151
    %2326 = vmatprep.subr.bf16.mxu0 %v2156
    %2327 = vmatpush1.bf16.msra.mxu0 %v2155
    %2328 = vmatprep.subr.bf16.mxu0 %v2160
    %2329 = vmatpush1.bf16.msra.mxu0 %v2159
    %2330 = vmatprep.subr.bf16.mxu0 %v2164
    %2331 = vmatpush1.bf16.msra.mxu0 %v2163
    %2332 = vmatprep.subr.bf16.mxu0 %v2168
    %2333 = vmatpush1.bf16.msra.mxu0 %v2167
    %2334 = vmatprep.subr.bf16.mxu0 %v2172
    %2335 = vmatpush1.bf16.msra.mxu0 %v2171
    %2336 = vmatprep.subr.bf16.mxu0 %v2176
    %2337 = vmatpush1.bf16.msra.mxu0 %v2175
    %2338 = vmatprep.subr.bf16.mxu0 %v2180
    %2339 = vmatpush1.bf16.msra.mxu0 %v2179
    %2340 = vmatprep.subr.bf16.mxu0 %v2184
    %2341 = vmatpush1.bf16.msra.mxu0 %v2183
    %2342 = vmatprep.subr.bf16.mxu0 %v2188
    %2343 = vmatpush1.bf16.msra.mxu0 %v2187
    %2344 = vmatprep.subr.bf16.mxu0 %v2192
    %2345 = vmatpush1.bf16.msra.mxu0 %v2191
    %2346 = vmatprep.subr.bf16.mxu0 %v2196
    %2347 = vmatpush1.bf16.msra.mxu0 %v2195
    %2348 = vmatprep.subr.bf16.mxu0 %v2200
    %2349 = vmatpush1.bf16.msra.mxu0 %v2199
    %2350 = vmatprep.mubr.bf16.mxu0 %v1877
    %2351 = vmatmul.mubr.bf16.gmra.mrb[0].mxu0 %v1876
    %v2352 = vpop.f32.mrb[0].mxu0
    %v2353 = vadd.f32 0.0, %v2352
    %v2354 = vpop.f32.mrb[0].mxu0
    %v2355 = vadd.f32 0.0, %v2354
    %v2356 = vpop.f32.mrb[0].mxu0
    %v2357 = vadd.f32 0.0, %v2356
    %v2358 = vpop.f32.mrb[0].mxu0
    %v2359 = vadd.f32 0.0, %v2358
    %2360 = vmatprep.mubr.bf16.mxu0 %v1879
    %2361 = vmatmul.mubr.bf16.gmra.mrb[0].mxu0 %v1878
    %v2362 = vpop.f32.mrb[0].mxu0
    %v2363 = vadd.f32 0.0, %v2362
    %v2364 = vpop.f32.mrb[0].mxu0
    %v2365 = vadd.f32 0.0, %v2364
    %v2366 = vpop.f32.mrb[0].mxu0
    %v2367 = vadd.f32 0.0, %v2366
    %v2368 = vpop.f32.mrb[0].mxu0
    %v2369 = vadd.f32 0.0, %v2368
    %2370 = vdwg.mxu0
    %v2435 = vunpack.c.l.b16 %v1812
    %v2436 = vunpack.c.h.b16 %v1812
    %v2437 = vunpack.c.l.b16 %v1813
    %v2438 = vunpack.c.h.b16 %v1813
    %v2439 = vunpack.c.l.b16 %v1814
    %v2440 = vunpack.c.h.b16 %v1814
    %v2441 = vunpack.c.l.b16 %v1815
    %v2442 = vunpack.c.h.b16 %v1815
    %v2443 = vunpack.c.l.b16 %v1816
    %v2444 = vunpack.c.h.b16 %v1816
    %v2445 = vunpack.c.l.b16 %v1817
    %v2446 = vunpack.c.h.b16 %v1817
    %v2447 = vunpack.c.l.b16 %v1818
    %v2448 = vunpack.c.h.b16 %v1818
    %v2449 = vunpack.c.l.b16 %v1819
    %v2450 = vunpack.c.h.b16 %v1819
    %v2451 = vunpack.c.l.b16 %v1820
    %v2452 = vunpack.c.h.b16 %v1820
    %v2453 = vunpack.c.l.b16 %v1821
    %v2454 = vunpack.c.h.b16 %v1821
    %v2455 = vunpack.c.l.b16 %v1822
    %v2456 = vunpack.c.h.b16 %v1822
    %v2457 = vunpack.c.l.b16 %v1823
    %v2458 = vunpack.c.h.b16 %v1823
    %v2459 = vunpack.c.l.b16 %v1824
    %v2460 = vunpack.c.h.b16 %v1824
    %v2461 = vunpack.c.l.b16 %v1825
    %v2462 = vunpack.c.h.b16 %v1825
    %v2463 = vunpack.c.l.b16 %v1826
    %v2464 = vunpack.c.h.b16 %v1826
    %v2465 = vunpack.c.l.b16 %v1827
    %v2466 = vunpack.c.h.b16 %v1827
    %v2467 = vunpack.c.l.b16 %v1828
    %v2468 = vunpack.c.h.b16 %v1828
    %v2469 = vunpack.c.l.b16 %v1829
    %v2470 = vunpack.c.h.b16 %v1829
    %v2471 = vunpack.c.l.b16 %v1830
    %v2472 = vunpack.c.h.b16 %v1830
    %v2473 = vunpack.c.l.b16 %v1831
    %v2474 = vunpack.c.h.b16 %v1831
    %v2475 = vunpack.c.l.b16 %v1832
    %v2476 = vunpack.c.h.b16 %v1832
    %v2477 = vunpack.c.l.b16 %v1833
    %v2478 = vunpack.c.h.b16 %v1833
    %v2479 = vunpack.c.l.b16 %v1834
    %v2480 = vunpack.c.h.b16 %v1834
    %v2481 = vunpack.c.l.b16 %v1835
    %v2482 = vunpack.c.h.b16 %v1835
    %v2483 = vunpack.c.l.b16 %v1836
    %v2484 = vunpack.c.h.b16 %v1836
    %v2485 = vunpack.c.l.b16 %v1837
    %v2486 = vunpack.c.h.b16 %v1837
    %v2487 = vunpack.c.l.b16 %v1838
    %v2488 = vunpack.c.h.b16 %v1838
    %v2489 = vunpack.c.l.b16 %v1839
    %v2490 = vunpack.c.h.b16 %v1839
    %v2491 = vunpack.c.l.b16 %v1840
    %v2492 = vunpack.c.h.b16 %v1840
    %v2493 = vunpack.c.l.b16 %v1841
    %v2494 = vunpack.c.h.b16 %v1841
    %v2495 = vunpack.c.l.b16 %v1842
    %v2496 = vunpack.c.h.b16 %v1842
    %v2497 = vunpack.c.l.b16 %v1843
    %v2498 = vunpack.c.h.b16 %v1843
    %v2499 = vunpack.c.l.b16 %v1844
    %v2500 = vunpack.c.h.b16 %v1844
    %v2501 = vunpack.c.l.b16 %v1845
    %v2502 = vunpack.c.h.b16 %v1845
    %v2503 = vunpack.c.l.b16 %v1846
    %v2504 = vunpack.c.h.b16 %v1846
    %v2505 = vunpack.c.l.b16 %v1847
    %v2506 = vunpack.c.h.b16 %v1847
    %v2507 = vunpack.c.l.b16 %v1848
    %v2508 = vunpack.c.h.b16 %v1848
    %v2509 = vunpack.c.l.b16 %v1849
    %v2510 = vunpack.c.h.b16 %v1849
    %v2511 = vunpack.c.l.b16 %v1850
    %v2512 = vunpack.c.h.b16 %v1850
    %v2513 = vunpack.c.l.b16 %v1851
    %v2514 = vunpack.c.h.b16 %v1851
    %v2515 = vunpack.c.l.b16 %v1852
    %v2516 = vunpack.c.h.b16 %v1852
    %v2517 = vunpack.c.l.b16 %v1853
    %v2518 = vunpack.c.h.b16 %v1853
    %v2519 = vunpack.c.l.b16 %v1854
    %v2520 = vunpack.c.h.b16 %v1854
    %v2521 = vunpack.c.l.b16 %v1855
    %v2522 = vunpack.c.h.b16 %v1855
    %v2523 = vunpack.c.l.b16 %v1856
    %v2524 = vunpack.c.h.b16 %v1856
    %v2525 = vunpack.c.l.b16 %v1857
    %v2526 = vunpack.c.h.b16 %v1857
    %v2527 = vunpack.c.l.b16 %v1858
    %v2528 = vunpack.c.h.b16 %v1858
    %v2529 = vunpack.c.l.b16 %v1859
    %v2530 = vunpack.c.h.b16 %v1859
    %v2531 = vunpack.c.l.b16 %v1860
    %v2532 = vunpack.c.h.b16 %v1860
    %v2533 = vunpack.c.l.b16 %v1861
    %v2534 = vunpack.c.h.b16 %v1861
    %v2535 = vunpack.c.l.b16 %v1862
    %v2536 = vunpack.c.h.b16 %v1862
    %v2537 = vunpack.c.l.b16 %v1863
    %v2538 = vunpack.c.h.b16 %v1863
    %v2539 = vunpack.c.l.b16 %v1864
    %v2540 = vunpack.c.h.b16 %v1864
    %v2541 = vunpack.c.l.b16 %v1865
    %v2542 = vunpack.c.h.b16 %v1865
    %v2543 = vunpack.c.l.b16 %v1866
    %v2544 = vunpack.c.h.b16 %v1866
    %v2545 = vunpack.c.l.b16 %v1867
    %v2546 = vunpack.c.h.b16 %v1867
    %v2547 = vunpack.c.l.b16 %v1868
    %v2548 = vunpack.c.h.b16 %v1868
    %v2549 = vunpack.c.l.b16 %v1869
    %v2550 = vunpack.c.h.b16 %v1869
    %v2551 = vunpack.c.l.b16 %v1870
    %v2552 = vunpack.c.h.b16 %v1870
    %v2553 = vunpack.c.l.b16 %v1871
    %v2554 = vunpack.c.h.b16 %v1871
    %v2555 = vunpack.c.l.b16 %v1872
    %v2556 = vunpack.c.h.b16 %v1872
    %v2557 = vunpack.c.l.b16 %v1873
    %v2558 = vunpack.c.h.b16 %v1873
    %v2559 = vunpack.c.l.b16 %v1874
    %v2560 = vunpack.c.h.b16 %v1874
    %v2561 = vunpack.c.l.b16 %v1875
    %v2562 = vunpack.c.h.b16 %v1875
    %v2563 = vpack.c.b16 %v2439, %v2435
    %v2564 = vpack.c.b16 %v2440, %v2436
    %v2565 = vpack.c.b16 %v2441, %v2437
    %v2566 = vpack.c.b16 %v2442, %v2438
    %v2567 = vpack.c.b16 %v2447, %v2443
    %v2568 = vpack.c.b16 %v2448, %v2444
    %v2569 = vpack.c.b16 %v2449, %v2445
    %v2570 = vpack.c.b16 %v2450, %v2446
    %v2571 = vpack.c.b16 %v2455, %v2451
    %v2572 = vpack.c.b16 %v2456, %v2452
    %v2573 = vpack.c.b16 %v2457, %v2453
    %v2574 = vpack.c.b16 %v2458, %v2454
    %v2575 = vpack.c.b16 %v2463, %v2459
    %v2576 = vpack.c.b16 %v2464, %v2460
    %v2577 = vpack.c.b16 %v2465, %v2461
    %v2578 = vpack.c.b16 %v2466, %v2462
    %v2579 = vpack.c.b16 %v2471, %v2467
    %v2580 = vpack.c.b16 %v2472, %v2468
    %v2581 = vpack.c.b16 %v2473, %v2469
    %v2582 = vpack.c.b16 %v2474, %v2470
    %v2583 = vpack.c.b16 %v2479, %v2475
    %v2584 = vpack.c.b16 %v2480, %v2476
    %v2585 = vpack.c.b16 %v2481, %v2477
    %v2586 = vpack.c.b16 %v2482, %v2478
    %v2587 = vpack.c.b16 %v2487, %v2483
    %v2588 = vpack.c.b16 %v2488, %v2484
    %v2589 = vpack.c.b16 %v2489, %v2485
    %v2590 = vpack.c.b16 %v2490, %v2486
    %v2591 = vpack.c.b16 %v2495, %v2491
    %v2592 = vpack.c.b16 %v2496, %v2492
    %v2593 = vpack.c.b16 %v2497, %v2493
    %v2594 = vpack.c.b16 %v2498, %v2494
    %v2595 = vpack.c.b16 %v2503, %v2499
    %v2596 = vpack.c.b16 %v2504, %v2500
    %v2597 = vpack.c.b16 %v2505, %v2501
    %v2598 = vpack.c.b16 %v2506, %v2502
    %v2599 = vpack.c.b16 %v2511, %v2507
    %v2600 = vpack.c.b16 %v2512, %v2508
    %v2601 = vpack.c.b16 %v2513, %v2509
    %v2602 = vpack.c.b16 %v2514, %v2510
    %v2603 = vpack.c.b16 %v2519, %v2515
    %v2604 = vpack.c.b16 %v2520, %v2516
    %v2605 = vpack.c.b16 %v2521, %v2517
    %v2606 = vpack.c.b16 %v2522, %v2518
    %v2607 = vpack.c.b16 %v2527, %v2523
    %v2608 = vpack.c.b16 %v2528, %v2524
    %v2609 = vpack.c.b16 %v2529, %v2525
    %v2610 = vpack.c.b16 %v2530, %v2526
    %v2611 = vpack.c.b16 %v2535, %v2531
    %v2612 = vpack.c.b16 %v2536, %v2532
    %v2613 = vpack.c.b16 %v2537, %v2533
    %v2614 = vpack.c.b16 %v2538, %v2534
    %v2615 = vpack.c.b16 %v2543, %v2539
    %v2616 = vpack.c.b16 %v2544, %v2540
    %v2617 = vpack.c.b16 %v2545, %v2541
    %v2618 = vpack.c.b16 %v2546, %v2542
    %v2619 = vpack.c.b16 %v2551, %v2547
    %v2620 = vpack.c.b16 %v2552, %v2548
    %v2621 = vpack.c.b16 %v2553, %v2549
    %v2622 = vpack.c.b16 %v2554, %v2550
    %v2623 = vpack.c.b16 %v2559, %v2555
    %v2624 = vpack.c.b16 %v2560, %v2556
    %v2625 = vpack.c.b16 %v2561, %v2557
    %v2626 = vpack.c.b16 %v2562, %v2558
    %2691 = vmatprep.subr.bf16.mxu0 %v2564
    %2692 = vmatpush1.bf16.msra.mxu0 %v2563
    %2693 = vmatprep.subr.bf16.mxu0 %v2568
    %2694 = vmatpush1.bf16.msra.mxu0 %v2567
    %2695 = vmatprep.subr.bf16.mxu0 %v2572
    %2696 = vmatpush1.bf16.msra.mxu0 %v2571
    %2697 = vmatprep.subr.bf16.mxu0 %v2576
    %2698 = vmatpush1.bf16.msra.mxu0 %v2575
    %2699 = vmatprep.subr.bf16.mxu0 %v2580
    %2700 = vmatpush1.bf16.msra.mxu0 %v2579
    %2701 = vmatprep.subr.bf16.mxu0 %v2584
    %2702 = vmatpush1.bf16.msra.mxu0 %v2583
    %2703 = vmatprep.subr.bf16.mxu0 %v2588
    %2704 = vmatpush1.bf16.msra.mxu0 %v2587
    %2705 = vmatprep.subr.bf16.mxu0 %v2592
    %2706 = vmatpush1.bf16.msra.mxu0 %v2591
    %2707 = vmatprep.subr.bf16.mxu0 %v2596
    %2708 = vmatpush1.bf16.msra.mxu0 %v2595
    %2709 = vmatprep.subr.bf16.mxu0 %v2600
    %2710 = vmatpush1.bf16.msra.mxu0 %v2599
    %2711 = vmatprep.subr.bf16.mxu0 %v2604
    %2712 = vmatpush1.bf16.msra.mxu0 %v2603
    %2713 = vmatprep.subr.bf16.mxu0 %v2608
    %2714 = vmatpush1.bf16.msra.mxu0 %v2607
    %2715 = vmatprep.subr.bf16.mxu0 %v2612
    %2716 = vmatpush1.bf16.msra.mxu0 %v2611
    %2717 = vmatprep.subr.bf16.mxu0 %v2616
    %2718 = vmatpush1.bf16.msra.mxu0 %v2615
    %2719 = vmatprep.subr.bf16.mxu0 %v2620
    %2720 = vmatpush1.bf16.msra.mxu0 %v2619
    %2721 = vmatprep.subr.bf16.mxu0 %v2624
    %2722 = vmatpush1.bf16.msra.mxu0 %v2623
    %2723 = vmatprep.mubr.bf16.mxu0 %v1809
    %2724 = vmatmul.mubr.bf16.gmra.mrb[0].mxu0 %v1808
    %v2725 = vpop.f32.mrb[0].mxu0
    %v2726 = vadd.f32 %v2300, %v2725
    %v2727 = vpop.f32.mrb[0].mxu0
    %v2728 = vadd.f32 %v2302, %v2727
    %v2729 = vpop.f32.mrb[0].mxu0
    %v2730 = vadd.f32 %v2304, %v2729
    %v2731 = vpop.f32.mrb[0].mxu0
    %v2732 = vadd.f32 %v2306, %v2731
    %2733 = vmatprep.mubr.bf16.mxu0 %v1811
    %2734 = vmatmul.mubr.bf16.gmra.mrb[0].mxu0 %v1810
    %v2735 = vpop.f32.mrb[0].mxu0
    %v2736 = vadd.f32 %v2310, %v2735
    %v2737 = vpop.f32.mrb[0].mxu0
    %v2738 = vadd.f32 %v2312, %v2737
    %v2739 = vpop.f32.mrb[0].mxu0
    %v2740 = vadd.f32 %v2314, %v2739
    %v2741 = vpop.f32.mrb[0].mxu0
    %v2742 = vadd.f32 %v2316, %v2741
    %2743 = vdwg.mxu0
    %2744 = vmatprep.subr.bf16.mxu0 %v2566
    %2745 = vmatpush1.bf16.msra.mxu0 %v2565
    %2746 = vmatprep.subr.bf16.mxu0 %v2570
    %2747 = vmatpush1.bf16.msra.mxu0 %v2569
    %2748 = vmatprep.subr.bf16.mxu0 %v2574
    %2749 = vmatpush1.bf16.msra.mxu0 %v2573
    %2750 = vmatprep.subr.bf16.mxu0 %v2578
    %2751 = vmatpush1.bf16.msra.mxu0 %v2577
    %2752 = vmatprep.subr.bf16.mxu0 %v2582
    %2753 = vmatpush1.bf16.msra.mxu0 %v2581
    %2754 = vmatprep.subr.bf16.mxu0 %v2586
    %2755 = vmatpush1.bf16.msra.mxu0 %v2585
    %2756 = vmatprep.subr.bf16.mxu0 %v2590
    %2757 = vmatpush1.bf16.msra.mxu0 %v2589
    %2758 = vmatprep.subr.bf16.mxu0 %v2594
    %2759 = vmatpush1.bf16.msra.mxu0 %v2593
    %2760 = vmatprep.subr.bf16.mxu0 %v2598
    %2761 = vmatpush1.bf16.msra.mxu0 %v2597
    %2762 = vmatprep.subr.bf16.mxu0 %v2602
    %2763 = vmatpush1.bf16.msra.mxu0 %v2601
    %2764 = vmatprep.subr.bf16.mxu0 %v2606
    %2765 = vmatpush1.bf16.msra.mxu0 %v2605
    %2766 = vmatprep.subr.bf16.mxu0 %v2610
    %2767 = vmatpush1.bf16.msra.mxu0 %v2609
    %2768 = vmatprep.subr.bf16.mxu0 %v2614
    %2769 = vmatpush1.bf16.msra.mxu0 %v2613
    %2770 = vmatprep.subr.bf16.mxu0 %v2618
    %2771 = vmatpush1.bf16.msra.mxu0 %v2617
    %2772 = vmatprep.subr.bf16.mxu0 %v2622
    %2773 = vmatpush1.bf16.msra.mxu0 %v2621
    %2774 = vmatprep.subr.bf16.mxu0 %v2626
    %2775 = vmatpush1.bf16.msra.mxu0 %v2625
    %2776 = vmatprep.mubr.bf16.mxu0 %v1809
    %2777 = vmatmul.mubr.bf16.gmra.mrb[0].mxu0 %v1808
    %v2778 = vpop.f32.mrb[0].mxu0
    %v2779 = vadd.f32 %v2353, %v2778
    %v2780 = vpop.f32.mrb[0].mxu0
    %v2781 = vadd.f32 %v2355, %v2780
    %v2782 = vpop.f32.mrb[0].mxu0
    %v2783 = vadd.f32 %v2357, %v2782
    %v2784 = vpop.f32.mrb[0].mxu0
    %v2785 = vadd.f32 %v2359, %v2784
    %2786 = vmatprep.mubr.bf16.mxu0 %v1811
    %2787 = vmatmul.mubr.bf16.gmra.mrb[0].mxu0 %v1810
    %v2788 = vpop.f32.mrb[0].mxu0
    %v2789 = vadd.f32 %v2363, %v2788
    %v2790 = vpop.f32.mrb[0].mxu0
    %v2791 = vadd.f32 %v2365, %v2790
    %v2792 = vpop.f32.mrb[0].mxu0
    %v2793 = vadd.f32 %v2367, %v2792
    %v2794 = vpop.f32.mrb[0].mxu0
    %v2795 = vadd.f32 %v2369, %v2794
    %2796 = vdwg.mxu0
    %s2797 = scalar_lea.vmem [#allocation4], 32
    %v2798 = vld [vmem:[%s2797] sm:$0xff]
    %v2799 = vld [vmem:[%s2797 + $0x8] sm:$0xff]
    %v2800 = vld [vmem:[%s2797 + $0x10] sm:$0xff]
    %v2801 = vld [vmem:[%s2797 + $0x18] sm:$0xff]
    %s2802 = scalar_lea.vmem [#allocation12], 1024
    %v2803 = vld [vmem:[%s2802] sm:$0xff]
    %v2804 = vld [vmem:[%s2802 + $0x8] sm:$0xff]
    %v2805 = vld [vmem:[%s2802 + $0x10] sm:$0xff]
    %v2806 = vld [vmem:[%s2802 + $0x18] sm:$0xff]
    %v2807 = vld [vmem:[%s2802 + $0x20] sm:$0xff]
    %v2808 = vld [vmem:[%s2802 + $0x28] sm:$0xff]
    %v2809 = vld [vmem:[%s2802 + $0x30] sm:$0xff]
    %v2810 = vld [vmem:[%s2802 + $0x38] sm:$0xff]
    %v2811 = vld [vmem:[%s2802 + $0x40] sm:$0xff]
    %v2812 = vld [vmem:[%s2802 + $0x48] sm:$0xff]
    %v2813 = vld [vmem:[%s2802 + $0x50] sm:$0xff]
    %v2814 = vld [vmem:[%s2802 + $0x58] sm:$0xff]
    %v2815 = vld [vmem:[%s2802 + $0x60] sm:$0xff]
    %v2816 = vld [vmem:[%s2802 + $0x68] sm:$0xff]
    %v2817 = vld [vmem:[%s2802 + $0x70] sm:$0xff]
    %v2818 = vld [vmem:[%s2802 + $0x78] sm:$0xff]
    %v2819 = vld [vmem:[%s2802 + $0x80] sm:$0xff]
    %v2820 = vld [vmem:[%s2802 + $0x88] sm:$0xff]
    %v2821 = vld [vmem:[%s2802 + $0x90] sm:$0xff]
    %v2822 = vld [vmem:[%s2802 + $0x98] sm:$0xff]
    %v2823 = vld [vmem:[%s2802 + $0xa0] sm:$0xff]
    %v2824 = vld [vmem:[%s2802 + $0xa8] sm:$0xff]
    %v2825 = vld [vmem:[%s2802 + $0xb0] sm:$0xff]
    %v2826 = vld [vmem:[%s2802 + $0xb8] sm:$0xff]
    %v2827 = vld [vmem:[%s2802 + $0xc0] sm:$0xff]
    %v2828 = vld [vmem:[%s2802 + $0xc8] sm:$0xff]
    %v2829 = vld [vmem:[%s2802 + $0xd0] sm:$0xff]
    %v2830 = vld [vmem:[%s2802 + $0xd8] sm:$0xff]
    %v2831 = vld [vmem:[%s2802 + $0xe0] sm:$0xff]
    %v2832 = vld [vmem:[%s2802 + $0xe8] sm:$0xff]
    %v2833 = vld [vmem:[%s2802 + $0xf0] sm:$0xff]
    %v2834 = vld [vmem:[%s2802 + $0xf8] sm:$0xff]
    %v2835 = vld [vmem:[%s2802 + $0x100] sm:$0xff]
    %v2836 = vld [vmem:[%s2802 + $0x108] sm:$0xff]
    %v2837 = vld [vmem:[%s2802 + $0x110] sm:$0xff]
    %v2838 = vld [vmem:[%s2802 + $0x118] sm:$0xff]
    %v2839 = vld [vmem:[%s2802 + $0x120] sm:$0xff]
    %v2840 = vld [vmem:[%s2802 + $0x128] sm:$0xff]
    %v2841 = vld [vmem:[%s2802 + $0x130] sm:$0xff]
    %v2842 = vld [vmem:[%s2802 + $0x138] sm:$0xff]
    %v2843 = vld [vmem:[%s2802 + $0x140] sm:$0xff]
    %v2844 = vld [vmem:[%s2802 + $0x148] sm:$0xff]
    %v2845 = vld [vmem:[%s2802 + $0x150] sm:$0xff]
    %v2846 = vld [vmem:[%s2802 + $0x158] sm:$0xff]
    %v2847 = vld [vmem:[%s2802 + $0x160] sm:$0xff]
    %v2848 = vld [vmem:[%s2802 + $0x168] sm:$0xff]
    %v2849 = vld [vmem:[%s2802 + $0x170] sm:$0xff]
    %v2850 = vld [vmem:[%s2802 + $0x178] sm:$0xff]
    %v2851 = vld [vmem:[%s2802 + $0x180] sm:$0xff]
    %v2852 = vld [vmem:[%s2802 + $0x188] sm:$0xff]
    %v2853 = vld [vmem:[%s2802 + $0x190] sm:$0xff]
    %v2854 = vld [vmem:[%s2802 + $0x198] sm:$0xff]
    %v2855 = vld [vmem:[%s2802 + $0x1a0] sm:$0xff]
    %v2856 = vld [vmem:[%s2802 + $0x1a8] sm:$0xff]
    %v2857 = vld [vmem:[%s2802 + $0x1b0] sm:$0xff]
    %v2858 = vld [vmem:[%s2802 + $0x1b8] sm:$0xff]
    %v2859 = vld [vmem:[%s2802 + $0x1c0] sm:$0xff]
    %v2860 = vld [vmem:[%s2802 + $0x1c8] sm:$0xff]
    %v2861 = vld [vmem:[%s2802 + $0x1d0] sm:$0xff]
    %v2862 = vld [vmem:[%s2802 + $0x1d8] sm:$0xff]
    %v2863 = vld [vmem:[%s2802 + $0x1e0] sm:$0xff]
    %v2864 = vld [vmem:[%s2802 + $0x1e8] sm:$0xff]
    %v2865 = vld [vmem:[%s2802 + $0x1f0] sm:$0xff]
    %v2866 = vld [vmem:[%s2802 + $0x1f8] sm:$0xff]
    %v2931 = vunpack.c.l.b16 %v2803
    %v2932 = vunpack.c.h.b16 %v2803
    %v2933 = vunpack.c.l.b16 %v2804
    %v2934 = vunpack.c.h.b16 %v2804
    %v2935 = vunpack.c.l.b16 %v2805
    %v2936 = vunpack.c.h.b16 %v2805
    %v2937 = vunpack.c.l.b16 %v2806
    %v2938 = vunpack.c.h.b16 %v2806
    %v2939 = vunpack.c.l.b16 %v2807
    %v2940 = vunpack.c.h.b16 %v2807
    %v2941 = vunpack.c.l.b16 %v2808
    %v2942 = vunpack.c.h.b16 %v2808
    %v2943 = vunpack.c.l.b16 %v2809
    %v2944 = vunpack.c.h.b16 %v2809
    %v2945 = vunpack.c.l.b16 %v2810
    %v2946 = vunpack.c.h.b16 %v2810
    %v2947 = vunpack.c.l.b16 %v2811
    %v2948 = vunpack.c.h.b16 %v2811
    %v2949 = vunpack.c.l.b16 %v2812
    %v2950 = vunpack.c.h.b16 %v2812
    %v2951 = vunpack.c.l.b16 %v2813
    %v2952 = vunpack.c.h.b16 %v2813
    %v2953 = vunpack.c.l.b16 %v2814
    %v2954 = vunpack.c.h.b16 %v2814
    %v2955 = vunpack.c.l.b16 %v2815
    %v2956 = vunpack.c.h.b16 %v2815
    %v2957 = vunpack.c.l.b16 %v2816
    %v2958 = vunpack.c.h.b16 %v2816
    %v2959 = vunpack.c.l.b16 %v2817
    %v2960 = vunpack.c.h.b16 %v2817
    %v2961 = vunpack.c.l.b16 %v2818
    %v2962 = vunpack.c.h.b16 %v2818
    %v2963 = vunpack.c.l.b16 %v2819
    %v2964 = vunpack.c.h.b16 %v2819
    %v2965 = vunpack.c.l.b16 %v2820
    %v2966 = vunpack.c.h.b16 %v2820
    %v2967 = vunpack.c.l.b16 %v2821
    %v2968 = vunpack.c.h.b16 %v2821
    %v2969 = vunpack.c.l.b16 %v2822
    %v2970 = vunpack.c.h.b16 %v2822
    %v2971 = vunpack.c.l.b16 %v2823
    %v2972 = vunpack.c.h.b16 %v2823
    %v2973 = vunpack.c.l.b16 %v2824
    %v2974 = vunpack.c.h.b16 %v2824
    %v2975 = vunpack.c.l.b16 %v2825
    %v2976 = vunpack.c.h.b16 %v2825
    %v2977 = vunpack.c.l.b16 %v2826
    %v2978 = vunpack.c.h.b16 %v2826
    %v2979 = vunpack.c.l.b16 %v2827
    %v2980 = vunpack.c.h.b16 %v2827
    %v2981 = vunpack.c.l.b16 %v2828
    %v2982 = vunpack.c.h.b16 %v2828
    %v2983 = vunpack.c.l.b16 %v2829
    %v2984 = vunpack.c.h.b16 %v2829
    %v2985 = vunpack.c.l.b16 %v2830
    %v2986 = vunpack.c.h.b16 %v2830
    %v2987 = vunpack.c.l.b16 %v2831
    %v2988 = vunpack.c.h.b16 %v2831
    %v2989 = vunpack.c.l.b16 %v2832
    %v2990 = vunpack.c.h.b16 %v2832
    %v2991 = vunpack.c.l.b16 %v2833
    %v2992 = vunpack.c.h.b16 %v2833
    %v2993 = vunpack.c.l.b16 %v2834
    %v2994 = vunpack.c.h.b16 %v2834
    %v2995 = vunpack.c.l.b16 %v2835
    %v2996 = vunpack.c.h.b16 %v2835
    %v2997 = vunpack.c.l.b16 %v2836
    %v2998 = vunpack.c.h.b16 %v2836
    %v2999 = vunpack.c.l.b16 %v2837
    %v3000 = vunpack.c.h.b16 %v2837
    %v3001 = vunpack.c.l.b16 %v2838
    %v3002 = vunpack.c.h.b16 %v2838
    %v3003 = vunpack.c.l.b16 %v2839
    %v3004 = vunpack.c.h.b16 %v2839
    %v3005 = vunpack.c.l.b16 %v2840
    %v3006 = vunpack.c.h.b16 %v2840
    %v3007 = vunpack.c.l.b16 %v2841
    %v3008 = vunpack.c.h.b16 %v2841
    %v3009 = vunpack.c.l.b16 %v2842
    %v3010 = vunpack.c.h.b16 %v2842
    %v3011 = vunpack.c.l.b16 %v2843
    %v3012 = vunpack.c.h.b16 %v2843
    %v3013 = vunpack.c.l.b16 %v2844
    %v3014 = vunpack.c.h.b16 %v2844
    %v3015 = vunpack.c.l.b16 %v2845
    %v3016 = vunpack.c.h.b16 %v2845
    %v3017 = vunpack.c.l.b16 %v2846
    %v3018 = vunpack.c.h.b16 %v2846
    %v3019 = vunpack.c.l.b16 %v2847
    %v3020 = vunpack.c.h.b16 %v2847
    %v3021 = vunpack.c.l.b16 %v2848
    %v3022 = vunpack.c.h.b16 %v2848
    %v3023 = vunpack.c.l.b16 %v2849
    %v3024 = vunpack.c.h.b16 %v2849
    %v3025 = vunpack.c.l.b16 %v2850
    %v3026 = vunpack.c.h.b16 %v2850
    %v3027 = vunpack.c.l.b16 %v2851
    %v3028 = vunpack.c.h.b16 %v2851
    %v3029 = vunpack.c.l.b16 %v2852
    %v3030 = vunpack.c.h.b16 %v2852
    %v3031 = vunpack.c.l.b16 %v2853
    %v3032 = vunpack.c.h.b16 %v2853
    %v3033 = vunpack.c.l.b16 %v2854
    %v3034 = vunpack.c.h.b16 %v2854
    %v3035 = vunpack.c.l.b16 %v2855
    %v3036 = vunpack.c.h.b16 %v2855
    %v3037 = vunpack.c.l.b16 %v2856
    %v3038 = vunpack.c.h.b16 %v2856
    %v3039 = vunpack.c.l.b16 %v2857
    %v3040 = vunpack.c.h.b16 %v2857
    %v3041 = vunpack.c.l.b16 %v2858
    %v3042 = vunpack.c.h.b16 %v2858
    %v3043 = vunpack.c.l.b16 %v2859
    %v3044 = vunpack.c.h.b16 %v2859
    %v3045 = vunpack.c.l.b16 %v2860
    %v3046 = vunpack.c.h.b16 %v2860
    %v3047 = vunpack.c.l.b16 %v2861
    %v3048 = vunpack.c.h.b16 %v2861
    %v3049 = vunpack.c.l.b16 %v2862
    %v3050 = vunpack.c.h.b16 %v2862
    %v3051 = vunpack.c.l.b16 %v2863
    %v3052 = vunpack.c.h.b16 %v2863
    %v3053 = vunpack.c.l.b16 %v2864
    %v3054 = vunpack.c.h.b16 %v2864
    %v3055 = vunpack.c.l.b16 %v2865
    %v3056 = vunpack.c.h.b16 %v2865
    %v3057 = vunpack.c.l.b16 %v2866
    %v3058 = vunpack.c.h.b16 %v2866
    %v3059 = vpack.c.b16 %v2935, %v2931
    %v3060 = vpack.c.b16 %v2936, %v2932
    %v3061 = vpack.c.b16 %v2937, %v2933
    %v3062 = vpack.c.b16 %v2938, %v2934
    %v3063 = vpack.c.b16 %v2943, %v2939
    %v3064 = vpack.c.b16 %v2944, %v2940
    %v3065 = vpack.c.b16 %v2945, %v2941
    %v3066 = vpack.c.b16 %v2946, %v2942
    %v3067 = vpack.c.b16 %v2951, %v2947
    %v3068 = vpack.c.b16 %v2952, %v2948
    %v3069 = vpack.c.b16 %v2953, %v2949
    %v3070 = vpack.c.b16 %v2954, %v2950
    %v3071 = vpack.c.b16 %v2959, %v2955
    %v3072 = vpack.c.b16 %v2960, %v2956
    %v3073 = vpack.c.b16 %v2961, %v2957
    %v3074 = vpack.c.b16 %v2962, %v2958
    %v3075 = vpack.c.b16 %v2967, %v2963
    %v3076 = vpack.c.b16 %v2968, %v2964
    %v3077 = vpack.c.b16 %v2969, %v2965
    %v3078 = vpack.c.b16 %v2970, %v2966
    %v3079 = vpack.c.b16 %v2975, %v2971
    %v3080 = vpack.c.b16 %v2976, %v2972
    %v3081 = vpack.c.b16 %v2977, %v2973
    %v3082 = vpack.c.b16 %v2978, %v2974
    %v3083 = vpack.c.b16 %v2983, %v2979
    %v3084 = vpack.c.b16 %v2984, %v2980
    %v3085 = vpack.c.b16 %v2985, %v2981
    %v3086 = vpack.c.b16 %v2986, %v2982
    %v3087 = vpack.c.b16 %v2991, %v2987
    %v3088 = vpack.c.b16 %v2992, %v2988
    %v3089 = vpack.c.b16 %v2993, %v2989
    %v3090 = vpack.c.b16 %v2994, %v2990
    %v3091 = vpack.c.b16 %v2999, %v2995
    %v3092 = vpack.c.b16 %v3000, %v2996
    %v3093 = vpack.c.b16 %v3001, %v2997
    %v3094 = vpack.c.b16 %v3002, %v2998
    %v3095 = vpack.c.b16 %v3007, %v3003
    %v3096 = vpack.c.b16 %v3008, %v3004
    %v3097 = vpack.c.b16 %v3009, %v3005
    %v3098 = vpack.c.b16 %v3010, %v3006
    %v3099 = vpack.c.b16 %v3015, %v3011
    %v3100 = vpack.c.b16 %v3016, %v3012
    %v3101 = vpack.c.b16 %v3017, %v3013
    %v3102 = vpack.c.b16 %v3018, %v3014
    %v3103 = vpack.c.b16 %v3023, %v3019
    %v3104 = vpack.c.b16 %v3024, %v3020
    %v3105 = vpack.c.b16 %v3025, %v3021
    %v3106 = vpack.c.b16 %v3026, %v3022
    %v3107 = vpack.c.b16 %v3031, %v3027
    %v3108 = vpack.c.b16 %v3032, %v3028
    %v3109 = vpack.c.b16 %v3033, %v3029
    %v3110 = vpack.c.b16 %v3034, %v3030
    %v3111 = vpack.c.b16 %v3039, %v3035
    %v3112 = vpack.c.b16 %v3040, %v3036
    %v3113 = vpack.c.b16 %v3041, %v3037
    %v3114 = vpack.c.b16 %v3042, %v3038
    %v3115 = vpack.c.b16 %v3047, %v3043
    %v3116 = vpack.c.b16 %v3048, %v3044
    %v3117 = vpack.c.b16 %v3049, %v3045
    %v3118 = vpack.c.b16 %v3050, %v3046
    %v3119 = vpack.c.b16 %v3055, %v3051
    %v3120 = vpack.c.b16 %v3056, %v3052
    %v3121 = vpack.c.b16 %v3057, %v3053
    %v3122 = vpack.c.b16 %v3058, %v3054
    %3187 = vmatprep.subr.bf16.mxu0 %v3060
    %3188 = vmatpush1.bf16.msra.mxu0 %v3059
    %3189 = vmatprep.subr.bf16.mxu0 %v3064
    %3190 = vmatpush1.bf16.msra.mxu0 %v3063
    %3191 = vmatprep.subr.bf16.mxu0 %v3068
    %3192 = vmatpush1.bf16.msra.mxu0 %v3067
    %3193 = vmatprep.subr.bf16.mxu0 %v3072
    %3194 = vmatpush1.bf16.msra.mxu0 %v3071
    %3195 = vmatprep.subr.bf16.mxu0 %v3076
    %3196 = vmatpush1.bf16.msra.mxu0 %v3075
    %3197 = vmatprep.subr.bf16.mxu0 %v3080
    %3198 = vmatpush1.bf16.msra.mxu0 %v3079
    %3199 = vmatprep.subr.bf16.mxu0 %v3084
    %3200 = vmatpush1.bf16.msra.mxu0 %v3083
    %3201 = vmatprep.subr.bf16.mxu0 %v3088
    %3202 = vmatpush1.bf16.msra.mxu0 %v3087
    %3203 = vmatprep.subr.bf16.mxu0 %v3092
    %3204 = vmatpush1.bf16.msra.mxu0 %v3091
    %3205 = vmatprep.subr.bf16.mxu0 %v3096
    %3206 = vmatpush1.bf16.msra.mxu0 %v3095
    %3207 = vmatprep.subr.bf16.mxu0 %v3100
    %3208 = vmatpush1.bf16.msra.mxu0 %v3099
    %3209 = vmatprep.subr.bf16.mxu0 %v3104
    %3210 = vmatpush1.bf16.msra.mxu0 %v3103
    %3211 = vmatprep.subr.bf16.mxu0 %v3108
    %3212 = vmatpush1.bf16.msra.mxu0 %v3107
    %3213 = vmatprep.subr.bf16.mxu0 %v3112
    %3214 = vmatpush1.bf16.msra.mxu0 %v3111
    %3215 = vmatprep.subr.bf16.mxu0 %v3116
    %3216 = vmatpush1.bf16.msra.mxu0 %v3115
    %3217 = vmatprep.subr.bf16.mxu0 %v3120
    %3218 = vmatpush1.bf16.msra.mxu0 %v3119
    %3219 = vmatprep.mubr.bf16.mxu0 %v2799
    %3220 = vmatmul.mubr.bf16.gmra.mrb[0].mxu0 %v2798
    %v3221 = vpop.f32.mrb[0].mxu0
    %v3222 = vadd.f32 0.0, %v3221
    %v3223 = vpop.f32.mrb[0].mxu0
    %v3224 = vadd.f32 0.0, %v3223
    %v3225 = vpop.f32.mrb[0].mxu0
    %v3226 = vadd.f32 0.0, %v3225
    %v3227 = vpop.f32.mrb[0].mxu0
    %v3228 = vadd.f32 0.0, %v3227
    %3229 = vmatprep.mubr.bf16.mxu0 %v2801
    %3230 = vmatmul.mubr.bf16.gmra.mrb[0].mxu0 %v2800
    %v3231 = vpop.f32.mrb[0].mxu0
    %v3232 = vadd.f32 0.0, %v3231
    %v3233 = vpop.f32.mrb[0].mxu0
    %v3234 = vadd.f32 0.0, %v3233
    %v3235 = vpop.f32.mrb[0].mxu0
    %v3236 = vadd.f32 0.0, %v3235
    %v3237 = vpop.f32.mrb[0].mxu0
    %v3238 = vadd.f32 0.0, %v3237
    %3239 = vdwg.mxu0
    %3240 = vmatprep.subr.bf16.mxu0 %v3062
    %3241 = vmatpush1.bf16.msra.mxu0 %v3061
    %3242 = vmatprep.subr.bf16.mxu0 %v3066
    %3243 = vmatpush1.bf16.msra.mxu0 %v3065
    %3244 = vmatprep.subr.bf16.mxu0 %v3070
    %3245 = vmatpush1.bf16.msra.mxu0 %v3069
    %3246 = vmatprep.subr.bf16.mxu0 %v3074
    %3247 = vmatpush1.bf16.msra.mxu0 %v3073
    %3248 = vmatprep.subr.bf16.mxu0 %v3078
    %3249 = vmatpush1.bf16.msra.mxu0 %v3077
    %3250 = vmatprep.subr.bf16.mxu0 %v3082
    %3251 = vmatpush1.bf16.msra.mxu0 %v3081
    %3252 = vmatprep.subr.bf16.mxu0 %v3086
    %3253 = vmatpush1.bf16.msra.mxu0 %v3085
    %3254 = vmatprep.subr.bf16.mxu0 %v3090
    %3255 = vmatpush1.bf16.msra.mxu0 %v3089
    %3256 = vmatprep.subr.bf16.mxu0 %v3094
    %3257 = vmatpush1.bf16.msra.mxu0 %v3093
    %3258 = vmatprep.subr.bf16.mxu0 %v3098
    %3259 = vmatpush1.bf16.msra.mxu0 %v3097
    %3260 = vmatprep.subr.bf16.mxu0 %v3102
    %3261 = vmatpush1.bf16.msra.mxu0 %v3101
    %3262 = vmatprep.subr.bf16.mxu0 %v3106
    %3263 = vmatpush1.bf16.msra.mxu0 %v3105
    %3264 = vmatprep.subr.bf16.mxu0 %v3110
    %3265 = vmatpush1.bf16.msra.mxu0 %v3109
    %3266 = vmatprep.subr.bf16.mxu0 %v3114
    %3267 = vmatpush1.bf16.msra.mxu0 %v3113
    %3268 = vmatprep.subr.bf16.mxu0 %v3118
    %3269 = vmatpush1.bf16.msra.mxu0 %v3117
    %3270 = vmatprep.subr.bf16.mxu0 %v3122
    %3271 = vmatpush1.bf16.msra.mxu0 %v3121
    %3272 = vmatprep.mubr.bf16.mxu0 %v2799
    %3273 = vmatmul.mubr.bf16.gmra.mrb[0].mxu0 %v2798
    %v3274 = vpop.f32.mrb[0].mxu0
    %v3275 = vadd.f32 0.0, %v3274
    %v3276 = vpop.f32.mrb[0].mxu0
    %v3277 = vadd.f32 0.0, %v3276
    %v3278 = vpop.f32.mrb[0].mxu0
    %v3279 = vadd.f32 0.0, %v3278
    %v3280 = vpop.f32.mrb[0].mxu0
    %v3281 = vadd.f32 0.0, %v3280
    %3282 = vmatprep.mubr.bf16.mxu0 %v2801
    %3283 = vmatmul.mubr.bf16.gmra.mrb[0].mxu0 %v2800
    %v3284 = vpop.f32.mrb[0].mxu0
    %v3285 = vadd.f32 0.0, %v3284
    %v3286 = vpop.f32.mrb[0].mxu0
    %v3287 = vadd.f32 0.0, %v3286
    %v3288 = vpop.f32.mrb[0].mxu0
    %v3289 = vadd.f32 0.0, %v3288
    %v3290 = vpop.f32.mrb[0].mxu0
    %v3291 = vadd.f32 0.0, %v3290
    %3292 = vdwg.mxu0
    %v3293 = vadd.f32 %v2726, %v3222
    %v3294 = vadd.f32 %v2728, %v3224
    %v3295 = vadd.f32 %v2779, %v3275
    %v3296 = vadd.f32 %v2781, %v3277
    %v3297 = vadd.f32 %v2730, %v3226
    %v3298 = vadd.f32 %v2732, %v3228
    %v3299 = vadd.f32 %v2783, %v3279
    %v3300 = vadd.f32 %v2785, %v3281
    %v3301 = vadd.f32 %v2736, %v3232
    %v3302 = vadd.f32 %v2738, %v3234
    %v3303 = vadd.f32 %v2789, %v3285
    %v3304 = vadd.f32 %v2791, %v3287
    %v3305 = vadd.f32 %v2740, %v3236
    %v3306 = vadd.f32 %v2742, %v3238
    %v3307 = vadd.f32 %v2793, %v3289
    %v3308 = vadd.f32 %v2795, %v3291
    %v3309 = vld [vmem:[#allocation13] sm:$0xf]
    %v3311 = vlaneseq
    %v3312 = vshrl.u32 %v3311, 7
    %v3313 = vsub.s32 0, %v3312
    %v3314 = vrot.slane %v3309, %v3313
    %v3315 = vlaneseq
    %v3316 = vshrl.u32 %v3315, 7
    %v3317 = vsub.s32 1, %v3316
    %v3318 = vrot.slane %v3309, %v3317
    %v3319 = vlaneseq
    %v3320 = vshrl.u32 %v3319, 7
    %v3321 = vsub.s32 2, %v3320
    %v3322 = vrot.slane %v3309, %v3321
    %v3323 = vlaneseq
    %v3324 = vshrl.u32 %v3323, 7
    %v3325 = vsub.s32 3, %v3324
    %v3326 = vrot.slane %v3309, %v3325
    %v3331 = vadd.f32 %v3293, %v3314
    %v3332 = vadd.f32 %v3294, %v3318
    %v3333 = vadd.f32 %v3295, %v3322
    %v3334 = vadd.f32 %v3296, %v3326
    %v3335 = vadd.f32 %v3297, %v3314
    %v3336 = vadd.f32 %v3298, %v3318
    %v3337 = vadd.f32 %v3299, %v3322
    %v3338 = vadd.f32 %v3300, %v3326
    %v3339 = vadd.f32 %v3301, %v3314
    %v3340 = vadd.f32 %v3302, %v3318
    %v3341 = vadd.f32 %v3303, %v3322
    %v3342 = vadd.f32 %v3304, %v3326
    %v3343 = vadd.f32 %v3305, %v3314
    %v3344 = vadd.f32 %v3306, %v3318
    %v3345 = vadd.f32 %v3307, %v3322
    %v3346 = vadd.f32 %v3308, %v3326
    %v3347 = vtanh.pop %v3331
    %v3348 = vtanh.pop %v3332
    %v3349 = vtanh.pop %v3333
    %v3350 = vtanh.pop %v3334
    %v3351 = vtanh.pop %v3335
    %v3352 = vtanh.pop %v3336
    %v3353 = vtanh.pop %v3337
    %v3354 = vtanh.pop %v3338
    %v3355 = vtanh.pop %v3339
    %v3356 = vtanh.pop %v3340
    %v3357 = vtanh.pop %v3341
    %v3358 = vtanh.pop %v3342
    %v3359 = vtanh.pop %v3343
    %v3360 = vtanh.pop %v3344
    %v3361 = vtanh.pop %v3345
    %v3362 = vtanh.pop %v3346
    %v3363 = vmax.f32 %v3347, %v3355
    %v3364 = vmax.f32 %v3348, %v3356
    %v3365 = vmax.f32 %v3349, %v3357
    %v3366 = vmax.f32 %v3350, %v3358
    %v3367 = vmax.f32 %v3351, %v3359
    %v3368 = vmax.f32 %v3352, %v3360
    %v3369 = vmax.f32 %v3353, %v3361
    %v3370 = vmax.f32 %v3354, %v3362
    %v3371 = vpack.c.bf16 %v3367, %v3363
    %v3372 = vpack.c.bf16 %v3368, %v3364
    %v3373 = vpack.c.bf16 %v3369, %v3365
    %v3374 = vpack.c.bf16 %v3370, %v3366
    %v3375 = vld [vmem:[#allocation15] sm:$0xff]
    %v3376 = vld [vmem:[#allocation15 + $0x8] sm:$0xff]
    %v3377 = vld [vmem:[#allocation15 + $0x10] sm:$0xff]
    %v3378 = vld [vmem:[#allocation15 + $0x18] sm:$0xff]
    %v3379 = vld [vmem:[#allocation15 + $0x20] sm:$0xff]
    %v3380 = vld [vmem:[#allocation15 + $0x28] sm:$0xff]
    %v3381 = vld [vmem:[#allocation15 + $0x30] sm:$0xff]
    %v3382 = vld [vmem:[#allocation15 + $0x38] sm:$0xff]
    %v3383 = vld [vmem:[#allocation15 + $0x40] sm:$0xff]
    %v3384 = vld [vmem:[#allocation15 + $0x48] sm:$0xff]
    %v3385 = vld [vmem:[#allocation15 + $0x50] sm:$0xff]
    %v3386 = vld [vmem:[#allocation15 + $0x58] sm:$0xff]
    %v3387 = vld [vmem:[#allocation15 + $0x60] sm:$0xff]
    %v3388 = vld [vmem:[#allocation15 + $0x68] sm:$0xff]
    %v3389 = vld [vmem:[#allocation15 + $0x70] sm:$0xff]
    %v3390 = vld [vmem:[#allocation15 + $0x78] sm:$0xff]
    %v3391 = vld [vmem:[#allocation15 + $0x80] sm:$0xff]
    %v3392 = vld [vmem:[#allocation15 + $0x88] sm:$0xff]
    %v3393 = vld [vmem:[#allocation15 + $0x90] sm:$0xff]
    %v3394 = vld [vmem:[#allocation15 + $0x98] sm:$0xff]
    %v3395 = vld [vmem:[#allocation15 + $0xa0] sm:$0xff]
    %v3396 = vld [vmem:[#allocation15 + $0xa8] sm:$0xff]
    %v3397 = vld [vmem:[#allocation15 + $0xb0] sm:$0xff]
    %v3398 = vld [vmem:[#allocation15 + $0xb8] sm:$0xff]
    %v3399 = vld [vmem:[#allocation15 + $0xc0] sm:$0xff]
    %v3400 = vld [vmem:[#allocation15 + $0xc8] sm:$0xff]
    %v3401 = vld [vmem:[#allocation15 + $0xd0] sm:$0xff]
    %v3402 = vld [vmem:[#allocation15 + $0xd8] sm:$0xff]
    %v3403 = vld [vmem:[#allocation15 + $0xe0] sm:$0xff]
    %v3404 = vld [vmem:[#allocation15 + $0xe8] sm:$0xff]
    %v3405 = vld [vmem:[#allocation15 + $0xf0] sm:$0xff]
    %v3406 = vld [vmem:[#allocation15 + $0xf8] sm:$0xff]
    %v3407 = vld [vmem:[#allocation15 + $0x100] sm:$0xff]
    %v3408 = vld [vmem:[#allocation15 + $0x108] sm:$0xff]
    %v3409 = vld [vmem:[#allocation15 + $0x110] sm:$0xff]
    %v3410 = vld [vmem:[#allocation15 + $0x118] sm:$0xff]
    %v3411 = vld [vmem:[#allocation15 + $0x120] sm:$0xff]
    %v3412 = vld [vmem:[#allocation15 + $0x128] sm:$0xff]
    %v3413 = vld [vmem:[#allocation15 + $0x130] sm:$0xff]
    %v3414 = vld [vmem:[#allocation15 + $0x138] sm:$0xff]
    %v3415 = vld [vmem:[#allocation15 + $0x140] sm:$0xff]
    %v3416 = vld [vmem:[#allocation15 + $0x148] sm:$0xff]
    %v3417 = vld [vmem:[#allocation15 + $0x150] sm:$0xff]
    %v3418 = vld [vmem:[#allocation15 + $0x158] sm:$0xff]
    %v3419 = vld [vmem:[#allocation15 + $0x160] sm:$0xff]
    %v3420 = vld [vmem:[#allocation15 + $0x168] sm:$0xff]
    %v3421 = vld [vmem:[#allocation15 + $0x170] sm:$0xff]
    %v3422 = vld [vmem:[#allocation15 + $0x178] sm:$0xff]
    %v3423 = vld [vmem:[#allocation15 + $0x180] sm:$0xff]
    %v3424 = vld [vmem:[#allocation15 + $0x188] sm:$0xff]
    %v3425 = vld [vmem:[#allocation15 + $0x190] sm:$0xff]
    %v3426 = vld [vmem:[#allocation15 + $0x198] sm:$0xff]
    %v3427 = vld [vmem:[#allocation15 + $0x1a0] sm:$0xff]
    %v3428 = vld [vmem:[#allocation15 + $0x1a8] sm:$0xff]
    %v3429 = vld [vmem:[#allocation15 + $0x1b0] sm:$0xff]
    %v3430 = vld [vmem:[#allocation15 + $0x1b8] sm:$0xff]
    %v3431 = vld [vmem:[#allocation15 + $0x1c0] sm:$0xff]
    %v3432 = vld [vmem:[#allocation15 + $0x1c8] sm:$0xff]
    %v3433 = vld [vmem:[#allocation15 + $0x1d0] sm:$0xff]
    %v3434 = vld [vmem:[#allocation15 + $0x1d8] sm:$0xff]
    %v3435 = vld [vmem:[#allocation15 + $0x1e0] sm:$0xff]
    %v3436 = vld [vmem:[#allocation15 + $0x1e8] sm:$0xff]
    %v3437 = vld [vmem:[#allocation15 + $0x1f0] sm:$0xff]
    %v3438 = vld [vmem:[#allocation15 + $0x1f8] sm:$0xff]
    %v3439 = vld [vmem:[#allocation15 + $0x200] sm:$0xff]
    %v3440 = vld [vmem:[#allocation15 + $0x208] sm:$0xff]
    %v3441 = vld [vmem:[#allocation15 + $0x210] sm:$0xff]
    %v3442 = vld [vmem:[#allocation15 + $0x218] sm:$0xff]
    %v3443 = vld [vmem:[#allocation15 + $0x220] sm:$0xff]
    %v3444 = vld [vmem:[#allocation15 + $0x228] sm:$0xff]
    %v3445 = vld [vmem:[#allocation15 + $0x230] sm:$0xff]
    %v3446 = vld [vmem:[#allocation15 + $0x238] sm:$0xff]
    %v3447 = vld [vmem:[#allocation15 + $0x240] sm:$0xff]
    %v3448 = vld [vmem:[#allocation15 + $0x248] sm:$0xff]
    %v3449 = vld [vmem:[#allocation15 + $0x250] sm:$0xff]
    %v3450 = vld [vmem:[#allocation15 + $0x258] sm:$0xff]
    %v3451 = vld [vmem:[#allocation15 + $0x260] sm:$0xff]
    %v3452 = vld [vmem:[#allocation15 + $0x268] sm:$0xff]
    %v3453 = vld [vmem:[#allocation15 + $0x270] sm:$0xff]
    %v3454 = vld [vmem:[#allocation15 + $0x278] sm:$0xff]
    %v3455 = vld [vmem:[#allocation15 + $0x280] sm:$0xff]
    %v3456 = vld [vmem:[#allocation15 + $0x288] sm:$0xff]
    %v3457 = vld [vmem:[#allocation15 + $0x290] sm:$0xff]
    %v3458 = vld [vmem:[#allocation15 + $0x298] sm:$0xff]
    %v3459 = vld [vmem:[#allocation15 + $0x2a0] sm:$0xff]
    %v3460 = vld [vmem:[#allocation15 + $0x2a8] sm:$0xff]
    %v3461 = vld [vmem:[#allocation15 + $0x2b0] sm:$0xff]
    %v3462 = vld [vmem:[#allocation15 + $0x2b8] sm:$0xff]
    %v3463 = vld [vmem:[#allocation15 + $0x2c0] sm:$0xff]
    %v3464 = vld [vmem:[#allocation15 + $0x2c8] sm:$0xff]
    %v3465 = vld [vmem:[#allocation15 + $0x2d0] sm:$0xff]
    %v3466 = vld [vmem:[#allocation15 + $0x2d8] sm:$0xff]
    %v3467 = vld [vmem:[#allocation15 + $0x2e0] sm:$0xff]
    %v3468 = vld [vmem:[#allocation15 + $0x2e8] sm:$0xff]
    %v3469 = vld [vmem:[#allocation15 + $0x2f0] sm:$0xff]
    %v3470 = vld [vmem:[#allocation15 + $0x2f8] sm:$0xff]
    %v3471 = vld [vmem:[#allocation15 + $0x300] sm:$0xff]
    %v3472 = vld [vmem:[#allocation15 + $0x308] sm:$0xff]
    %v3473 = vld [vmem:[#allocation15 + $0x310] sm:$0xff]
    %v3474 = vld [vmem:[#allocation15 + $0x318] sm:$0xff]
    %v3475 = vld [vmem:[#allocation15 + $0x320] sm:$0xff]
    %v3476 = vld [vmem:[#allocation15 + $0x328] sm:$0xff]
    %v3477 = vld [vmem:[#allocation15 + $0x330] sm:$0xff]
    %v3478 = vld [vmem:[#allocation15 + $0x338] sm:$0xff]
    %v3479 = vld [vmem:[#allocation15 + $0x340] sm:$0xff]
    %v3480 = vld [vmem:[#allocation15 + $0x348] sm:$0xff]
    %v3481 = vld [vmem:[#allocation15 + $0x350] sm:$0xff]
    %v3482 = vld [vmem:[#allocation15 + $0x358] sm:$0xff]
    %v3483 = vld [vmem:[#allocation15 + $0x360] sm:$0xff]
    %v3484 = vld [vmem:[#allocation15 + $0x368] sm:$0xff]
    %v3485 = vld [vmem:[#allocation15 + $0x370] sm:$0xff]
    %v3486 = vld [vmem:[#allocation15 + $0x378] sm:$0xff]
    %v3487 = vld [vmem:[#allocation15 + $0x380] sm:$0xff]
    %v3488 = vld [vmem:[#allocation15 + $0x388] sm:$0xff]
    %v3489 = vld [vmem:[#allocation15 + $0x390] sm:$0xff]
    %v3490 = vld [vmem:[#allocation15 + $0x398] sm:$0xff]
    %v3491 = vld [vmem:[#allocation15 + $0x3a0] sm:$0xff]
    %v3492 = vld [vmem:[#allocation15 + $0x3a8] sm:$0xff]
    %v3493 = vld [vmem:[#allocation15 + $0x3b0] sm:$0xff]
    %v3494 = vld [vmem:[#allocation15 + $0x3b8] sm:$0xff]
    %v3495 = vld [vmem:[#allocation15 + $0x3c0] sm:$0xff]
    %v3496 = vld [vmem:[#allocation15 + $0x3c8] sm:$0xff]
    %v3497 = vld [vmem:[#allocation15 + $0x3d0] sm:$0xff]
    %v3498 = vld [vmem:[#allocation15 + $0x3d8] sm:$0xff]
    %v3499 = vld [vmem:[#allocation15 + $0x3e0] sm:$0xff]
    %v3500 = vld [vmem:[#allocation15 + $0x3e8] sm:$0xff]
    %v3501 = vld [vmem:[#allocation15 + $0x3f0] sm:$0xff]
    %v3502 = vld [vmem:[#allocation15 + $0x3f8] sm:$0xff]
    %v3503 = vld [vmem:[#allocation15 + $0x400] sm:$0xff]
    %v3504 = vld [vmem:[#allocation15 + $0x408] sm:$0xff]
    %v3505 = vld [vmem:[#allocation15 + $0x410] sm:$0xff]
    %v3506 = vld [vmem:[#allocation15 + $0x418] sm:$0xff]
    %v3507 = vld [vmem:[#allocation15 + $0x420] sm:$0xff]
    %v3508 = vld [vmem:[#allocation15 + $0x428] sm:$0xff]
    %v3509 = vld [vmem:[#allocation15 + $0x430] sm:$0xff]
    %v3510 = vld [vmem:[#allocation15 + $0x438] sm:$0xff]
    %v3511 = vld [vmem:[#allocation15 + $0x440] sm:$0xff]
    %v3512 = vld [vmem:[#allocation15 + $0x448] sm:$0xff]
    %v3513 = vld [vmem:[#allocation15 + $0x450] sm:$0xff]
    %v3514 = vld [vmem:[#allocation15 + $0x458] sm:$0xff]
    %v3515 = vld [vmem:[#allocation15 + $0x460] sm:$0xff]
    %v3516 = vld [vmem:[#allocation15 + $0x468] sm:$0xff]
    %v3517 = vld [vmem:[#allocation15 + $0x470] sm:$0xff]
    %v3518 = vld [vmem:[#allocation15 + $0x478] sm:$0xff]
    %v3519 = vld [vmem:[#allocation15 + $0x480] sm:$0xff]
    %v3520 = vld [vmem:[#allocation15 + $0x488] sm:$0xff]
    %v3521 = vld [vmem:[#allocation15 + $0x490] sm:$0xff]
    %v3522 = vld [vmem:[#allocation15 + $0x498] sm:$0xff]
    %v3523 = vld [vmem:[#allocation15 + $0x4a0] sm:$0xff]
    %v3524 = vld [vmem:[#allocation15 + $0x4a8] sm:$0xff]
    %v3525 = vld [vmem:[#allocation15 + $0x4b0] sm:$0xff]
    %v3526 = vld [vmem:[#allocation15 + $0x4b8] sm:$0xff]
    %v3527 = vld [vmem:[#allocation15 + $0x4c0] sm:$0xff]
    %v3528 = vld [vmem:[#allocation15 + $0x4c8] sm:$0xff]
    %v3529 = vld [vmem:[#allocation15 + $0x4d0] sm:$0xff]
    %v3530 = vld [vmem:[#allocation15 + $0x4d8] sm:$0xff]
    %v3531 = vld [vmem:[#allocation15 + $0x4e0] sm:$0xff]
    %v3532 = vld [vmem:[#allocation15 + $0x4e8] sm:$0xff]
    %v3533 = vld [vmem:[#allocation15 + $0x4f0] sm:$0xff]
    %v3534 = vld [vmem:[#allocation15 + $0x4f8] sm:$0xff]
    %v3535 = vld [vmem:[#allocation15 + $0x500] sm:$0xff]
    %v3536 = vld [vmem:[#allocation15 + $0x508] sm:$0xff]
    %v3537 = vld [vmem:[#allocation15 + $0x510] sm:$0xff]
    %v3538 = vld [vmem:[#allocation15 + $0x518] sm:$0xff]
    %v3539 = vld [vmem:[#allocation15 + $0x520] sm:$0xff]
    %v3540 = vld [vmem:[#allocation15 + $0x528] sm:$0xff]
    %v3541 = vld [vmem:[#allocation15 + $0x530] sm:$0xff]
    %v3542 = vld [vmem:[#allocation15 + $0x538] sm:$0xff]
    %v3543 = vld [vmem:[#allocation15 + $0x540] sm:$0xff]
    %v3544 = vld [vmem:[#allocation15 + $0x548] sm:$0xff]
    %v3545 = vld [vmem:[#allocation15 + $0x550] sm:$0xff]
    %v3546 = vld [vmem:[#allocation15 + $0x558] sm:$0xff]
    %v3547 = vld [vmem:[#allocation15 + $0x560] sm:$0xff]
    %v3548 = vld [vmem:[#allocation15 + $0x568] sm:$0xff]
    %v3549 = vld [vmem:[#allocation15 + $0x570] sm:$0xff]
    %v3550 = vld [vmem:[#allocation15 + $0x578] sm:$0xff]
    %v3551 = vld [vmem:[#allocation15 + $0x580] sm:$0xff]
    %v3552 = vld [vmem:[#allocation15 + $0x588] sm:$0xff]
    %v3553 = vld [vmem:[#allocation15 + $0x590] sm:$0xff]
    %v3554 = vld [vmem:[#allocation15 + $0x598] sm:$0xff]
    %v3555 = vld [vmem:[#allocation15 + $0x5a0] sm:$0xff]
    %v3556 = vld [vmem:[#allocation15 + $0x5a8] sm:$0xff]
    %v3557 = vld [vmem:[#allocation15 + $0x5b0] sm:$0xff]
    %v3558 = vld [vmem:[#allocation15 + $0x5b8] sm:$0xff]
    %v3559 = vld [vmem:[#allocation15 + $0x5c0] sm:$0xff]
    %v3560 = vld [vmem:[#allocation15 + $0x5c8] sm:$0xff]
    %v3561 = vld [vmem:[#allocation15 + $0x5d0] sm:$0xff]
    %v3562 = vld [vmem:[#allocation15 + $0x5d8] sm:$0xff]
    %v3563 = vld [vmem:[#allocation15 + $0x5e0] sm:$0xff]
    %v3564 = vld [vmem:[#allocation15 + $0x5e8] sm:$0xff]
    %v3565 = vld [vmem:[#allocation15 + $0x5f0] sm:$0xff]
    %v3566 = vld [vmem:[#allocation15 + $0x5f8] sm:$0xff]
    %v3567 = vld [vmem:[#allocation15 + $0x600] sm:$0xff]
    %v3568 = vld [vmem:[#allocation15 + $0x608] sm:$0xff]
    %v3569 = vld [vmem:[#allocation15 + $0x610] sm:$0xff]
    %v3570 = vld [vmem:[#allocation15 + $0x618] sm:$0xff]
    %v3571 = vld [vmem:[#allocation15 + $0x620] sm:$0xff]
    %v3572 = vld [vmem:[#allocation15 + $0x628] sm:$0xff]
    %v3573 = vld [vmem:[#allocation15 + $0x630] sm:$0xff]
    %v3574 = vld [vmem:[#allocation15 + $0x638] sm:$0xff]
    %v3575 = vld [vmem:[#allocation15 + $0x640] sm:$0xff]
    %v3576 = vld [vmem:[#allocation15 + $0x648] sm:$0xff]
    %v3577 = vld [vmem:[#allocation15 + $0x650] sm:$0xff]
    %v3578 = vld [vmem:[#allocation15 + $0x658] sm:$0xff]
    %v3579 = vld [vmem:[#allocation15 + $0x660] sm:$0xff]
    %v3580 = vld [vmem:[#allocation15 + $0x668] sm:$0xff]
    %v3581 = vld [vmem:[#allocation15 + $0x670] sm:$0xff]
    %v3582 = vld [vmem:[#allocation15 + $0x678] sm:$0xff]
    %v3583 = vld [vmem:[#allocation15 + $0x680] sm:$0xff]
    %v3584 = vld [vmem:[#allocation15 + $0x688] sm:$0xff]
    %v3585 = vld [vmem:[#allocation15 + $0x690] sm:$0xff]
    %v3586 = vld [vmem:[#allocation15 + $0x698] sm:$0xff]
    %v3587 = vld [vmem:[#allocation15 + $0x6a0] sm:$0xff]
    %v3588 = vld [vmem:[#allocation15 + $0x6a8] sm:$0xff]
    %v3589 = vld [vmem:[#allocation15 + $0x6b0] sm:$0xff]
    %v3590 = vld [vmem:[#allocation15 + $0x6b8] sm:$0xff]
    %v3591 = vld [vmem:[#allocation15 + $0x6c0] sm:$0xff]
    %v3592 = vld [vmem:[#allocation15 + $0x6c8] sm:$0xff]
    %v3593 = vld [vmem:[#allocation15 + $0x6d0] sm:$0xff]
    %v3594 = vld [vmem:[#allocation15 + $0x6d8] sm:$0xff]
    %v3595 = vld [vmem:[#allocation15 + $0x6e0] sm:$0xff]
    %v3596 = vld [vmem:[#allocation15 + $0x6e8] sm:$0xff]
    %v3597 = vld [vmem:[#allocation15 + $0x6f0] sm:$0xff]
    %v3598 = vld [vmem:[#allocation15 + $0x6f8] sm:$0xff]
    %v3599 = vld [vmem:[#allocation15 + $0x700] sm:$0xff]
    %v3600 = vld [vmem:[#allocation15 + $0x708] sm:$0xff]
    %v3601 = vld [vmem:[#allocation15 + $0x710] sm:$0xff]
    %v3602 = vld [vmem:[#allocation15 + $0x718] sm:$0xff]
    %v3603 = vld [vmem:[#allocation15 + $0x720] sm:$0xff]
    %v3604 = vld [vmem:[#allocation15 + $0x728] sm:$0xff]
    %v3605 = vld [vmem:[#allocation15 + $0x730] sm:$0xff]
    %v3606 = vld [vmem:[#allocation15 + $0x738] sm:$0xff]
    %v3607 = vld [vmem:[#allocation15 + $0x740] sm:$0xff]
    %v3608 = vld [vmem:[#allocation15 + $0x748] sm:$0xff]
    %v3609 = vld [vmem:[#allocation15 + $0x750] sm:$0xff]
    %v3610 = vld [vmem:[#allocation15 + $0x758] sm:$0xff]
    %v3611 = vld [vmem:[#allocation15 + $0x760] sm:$0xff]
    %v3612 = vld [vmem:[#allocation15 + $0x768] sm:$0xff]
    %v3613 = vld [vmem:[#allocation15 + $0x770] sm:$0xff]
    %v3614 = vld [vmem:[#allocation15 + $0x778] sm:$0xff]
    %v3615 = vld [vmem:[#allocation15 + $0x780] sm:$0xff]
    %v3616 = vld [vmem:[#allocation15 + $0x788] sm:$0xff]
    %v3617 = vld [vmem:[#allocation15 + $0x790] sm:$0xff]
    %v3618 = vld [vmem:[#allocation15 + $0x798] sm:$0xff]
    %v3619 = vld [vmem:[#allocation15 + $0x7a0] sm:$0xff]
    %v3620 = vld [vmem:[#allocation15 + $0x7a8] sm:$0xff]
    %v3621 = vld [vmem:[#allocation15 + $0x7b0] sm:$0xff]
    %v3622 = vld [vmem:[#allocation15 + $0x7b8] sm:$0xff]
    %v3623 = vld [vmem:[#allocation15 + $0x7c0] sm:$0xff]
    %v3624 = vld [vmem:[#allocation15 + $0x7c8] sm:$0xff]
    %v3625 = vld [vmem:[#allocation15 + $0x7d0] sm:$0xff]
    %v3626 = vld [vmem:[#allocation15 + $0x7d8] sm:$0xff]
    %v3627 = vld [vmem:[#allocation15 + $0x7e0] sm:$0xff]
    %v3628 = vld [vmem:[#allocation15 + $0x7e8] sm:$0xff]
    %v3629 = vld [vmem:[#allocation15 + $0x7f0] sm:$0xff]
    %v3630 = vld [vmem:[#allocation15 + $0x7f8] sm:$0xff]
    %v3631 = vld [vmem:[%s10] sm:$0xff]
    %v3633 = vlaneseq
    %v3634 = vshrl.u32 %v3633, 7
    %v3635 = vsub.s32 0, %v3634
    %v3636 = vrot.slane %v3631, %v3635
    %v3637 = vlaneseq
    %v3638 = vshrl.u32 %v3637, 7
    %v3639 = vsub.s32 1, %v3638
    %v3640 = vrot.slane %v3631, %v3639
    %v3641 = vlaneseq
    %v3642 = vshrl.u32 %v3641, 7
    %v3643 = vsub.s32 2, %v3642
    %v3644 = vrot.slane %v3631, %v3643
    %v3645 = vlaneseq
    %v3646 = vshrl.u32 %v3645, 7
    %v3647 = vsub.s32 3, %v3646
    %v3648 = vrot.slane %v3631, %v3647
    %v3649 = vlaneseq
    %v3650 = vshrl.u32 %v3649, 7
    %v3651 = vsub.s32 4, %v3650
    %v3652 = vrot.slane %v3631, %v3651
    %v3653 = vlaneseq
    %v3654 = vshrl.u32 %v3653, 7
    %v3655 = vsub.s32 5, %v3654
    %v3656 = vrot.slane %v3631, %v3655
    %v3657 = vlaneseq
    %v3658 = vshrl.u32 %v3657, 7
    %v3659 = vsub.s32 6, %v3658
    %v3660 = vrot.slane %v3631, %v3659
    %v3661 = vlaneseq
    %v3662 = vshrl.u32 %v3661, 7
    %v3663 = vsub.s32 7, %v3662
    %v3664 = vrot.slane %v3631, %v3663
    %v3929 = vunpack.c.l.b16 %v3375
    %v3930 = vunpack.c.h.b16 %v3375
    %v3931 = vunpack.c.l.b16 %v3376
    %v3932 = vunpack.c.h.b16 %v3376
    %v3933 = vunpack.c.l.b16 %v3377
    %v3934 = vunpack.c.h.b16 %v3377
    %v3935 = vunpack.c.l.b16 %v3378
    %v3936 = vunpack.c.h.b16 %v3378
    %v3937 = vunpack.c.l.b16 %v3379
    %v3938 = vunpack.c.h.b16 %v3379
    %v3939 = vunpack.c.l.b16 %v3380
    %v3940 = vunpack.c.h.b16 %v3380
    %v3941 = vunpack.c.l.b16 %v3381
    %v3942 = vunpack.c.h.b16 %v3381
    %v3943 = vunpack.c.l.b16 %v3382
    %v3944 = vunpack.c.h.b16 %v3382
    %v3945 = vunpack.c.l.b16 %v3383
    %v3946 = vunpack.c.h.b16 %v3383
    %v3947 = vunpack.c.l.b16 %v3384
    %v3948 = vunpack.c.h.b16 %v3384
    %v3949 = vunpack.c.l.b16 %v3385
    %v3950 = vunpack.c.h.b16 %v3385
    %v3951 = vunpack.c.l.b16 %v3386
    %v3952 = vunpack.c.h.b16 %v3386
    %v3953 = vunpack.c.l.b16 %v3387
    %v3954 = vunpack.c.h.b16 %v3387
    %v3955 = vunpack.c.l.b16 %v3388
    %v3956 = vunpack.c.h.b16 %v3388
    %v3957 = vunpack.c.l.b16 %v3389
    %v3958 = vunpack.c.h.b16 %v3389
    %v3959 = vunpack.c.l.b16 %v3390
    %v3960 = vunpack.c.h.b16 %v3390
    %v3961 = vunpack.c.l.b16 %v3391
    %v3962 = vunpack.c.h.b16 %v3391
    %v3963 = vunpack.c.l.b16 %v3392
    %v3964 = vunpack.c.h.b16 %v3392
    %v3965 = vunpack.c.l.b16 %v3393
    %v3966 = vunpack.c.h.b16 %v3393
    %v3967 = vunpack.c.l.b16 %v3394
    %v3968 = vunpack.c.h.b16 %v3394
    %v3969 = vunpack.c.l.b16 %v3395
    %v3970 = vunpack.c.h.b16 %v3395
    %v3971 = vunpack.c.l.b16 %v3396
    %v3972 = vunpack.c.h.b16 %v3396
    %v3973 = vunpack.c.l.b16 %v3397
    %v3974 = vunpack.c.h.b16 %v3397
    %v3975 = vunpack.c.l.b16 %v3398
    %v3976 = vunpack.c.h.b16 %v3398
    %v3977 = vunpack.c.l.b16 %v3399
    %v3978 = vunpack.c.h.b16 %v3399
    %v3979 = vunpack.c.l.b16 %v3400
    %v3980 = vunpack.c.h.b16 %v3400
    %v3981 = vunpack.c.l.b16 %v3401
    %v3982 = vunpack.c.h.b16 %v3401
    %v3983 = vunpack.c.l.b16 %v3402
    %v3984 = vunpack.c.h.b16 %v3402
    %v3985 = vunpack.c.l.b16 %v3403
    %v3986 = vunpack.c.h.b16 %v3403
    %v3987 = vunpack.c.l.b16 %v3404
    %v3988 = vunpack.c.h.b16 %v3404
    %v3989 = vunpack.c.l.b16 %v3405
    %v3990 = vunpack.c.h.b16 %v3405
    %v3991 = vunpack.c.l.b16 %v3406
    %v3992 = vunpack.c.h.b16 %v3406
    %v3993 = vunpack.c.l.b16 %v3407
    %v3994 = vunpack.c.h.b16 %v3407
    %v3995 = vunpack.c.l.b16 %v3408
    %v3996 = vunpack.c.h.b16 %v3408
    %v3997 = vunpack.c.l.b16 %v3409
    %v3998 = vunpack.c.h.b16 %v3409
    %v3999 = vunpack.c.l.b16 %v3410
    %v4000 = vunpack.c.h.b16 %v3410
    %v4001 = vunpack.c.l.b16 %v3411
    %v4002 = vunpack.c.h.b16 %v3411
    %v4003 = vunpack.c.l.b16 %v3412
    %v4004 = vunpack.c.h.b16 %v3412
    %v4005 = vunpack.c.l.b16 %v3413
    %v4006 = vunpack.c.h.b16 %v3413
    %v4007 = vunpack.c.l.b16 %v3414
    %v4008 = vunpack.c.h.b16 %v3414
    %v4009 = vunpack.c.l.b16 %v3415
    %v4010 = vunpack.c.h.b16 %v3415
    %v4011 = vunpack.c.l.b16 %v3416
    %v4012 = vunpack.c.h.b16 %v3416
    %v4013 = vunpack.c.l.b16 %v3417
    %v4014 = vunpack.c.h.b16 %v3417
    %v4015 = vunpack.c.l.b16 %v3418
    %v4016 = vunpack.c.h.b16 %v3418
    %v4017 = vunpack.c.l.b16 %v3419
    %v4018 = vunpack.c.h.b16 %v3419
    %v4019 = vunpack.c.l.b16 %v3420
    %v4020 = vunpack.c.h.b16 %v3420
    %v4021 = vunpack.c.l.b16 %v3421
    %v4022 = vunpack.c.h.b16 %v3421
    %v4023 = vunpack.c.l.b16 %v3422
    %v4024 = vunpack.c.h.b16 %v3422
    %v4025 = vunpack.c.l.b16 %v3423
    %v4026 = vunpack.c.h.b16 %v3423
    %v4027 = vunpack.c.l.b16 %v3424
    %v4028 = vunpack.c.h.b16 %v3424
    %v4029 = vunpack.c.l.b16 %v3425
    %v4030 = vunpack.c.h.b16 %v3425
    %v4031 = vunpack.c.l.b16 %v3426
    %v4032 = vunpack.c.h.b16 %v3426
    %v4033 = vunpack.c.l.b16 %v3427
    %v4034 = vunpack.c.h.b16 %v3427
    %v4035 = vunpack.c.l.b16 %v3428
    %v4036 = vunpack.c.h.b16 %v3428
    %v4037 = vunpack.c.l.b16 %v3429
    %v4038 = vunpack.c.h.b16 %v3429
    %v4039 = vunpack.c.l.b16 %v3430
    %v4040 = vunpack.c.h.b16 %v3430
    %v4041 = vunpack.c.l.b16 %v3431
    %v4042 = vunpack.c.h.b16 %v3431
    %v4043 = vunpack.c.l.b16 %v3432
    %v4044 = vunpack.c.h.b16 %v3432
    %v4045 = vunpack.c.l.b16 %v3433
    %v4046 = vunpack.c.h.b16 %v3433
    %v4047 = vunpack.c.l.b16 %v3434
    %v4048 = vunpack.c.h.b16 %v3434
    %v4049 = vunpack.c.l.b16 %v3435
    %v4050 = vunpack.c.h.b16 %v3435
    %v4051 = vunpack.c.l.b16 %v3436
    %v4052 = vunpack.c.h.b16 %v3436
    %v4053 = vunpack.c.l.b16 %v3437
    %v4054 = vunpack.c.h.b16 %v3437
    %v4055 = vunpack.c.l.b16 %v3438
    %v4056 = vunpack.c.h.b16 %v3438
    %v4057 = vunpack.c.l.b16 %v3439
    %v4058 = vunpack.c.h.b16 %v3439
    %v4059 = vunpack.c.l.b16 %v3440
    %v4060 = vunpack.c.h.b16 %v3440
    %v4061 = vunpack.c.l.b16 %v3441
    %v4062 = vunpack.c.h.b16 %v3441
    %v4063 = vunpack.c.l.b16 %v3442
    %v4064 = vunpack.c.h.b16 %v3442
    %v4065 = vunpack.c.l.b16 %v3443
    %v4066 = vunpack.c.h.b16 %v3443
    %v4067 = vunpack.c.l.b16 %v3444
    %v4068 = vunpack.c.h.b16 %v3444
    %v4069 = vunpack.c.l.b16 %v3445
    %v4070 = vunpack.c.h.b16 %v3445
    %v4071 = vunpack.c.l.b16 %v3446
    %v4072 = vunpack.c.h.b16 %v3446
    %v4073 = vunpack.c.l.b16 %v3447
    %v4074 = vunpack.c.h.b16 %v3447
    %v4075 = vunpack.c.l.b16 %v3448
    %v4076 = vunpack.c.h.b16 %v3448
    %v4077 = vunpack.c.l.b16 %v3449
    %v4078 = vunpack.c.h.b16 %v3449
    %v4079 = vunpack.c.l.b16 %v3450
    %v4080 = vunpack.c.h.b16 %v3450
    %v4081 = vunpack.c.l.b16 %v3451
    %v4082 = vunpack.c.h.b16 %v3451
    %v4083 = vunpack.c.l.b16 %v3452
    %v4084 = vunpack.c.h.b16 %v3452
    %v4085 = vunpack.c.l.b16 %v3453
    %v4086 = vunpack.c.h.b16 %v3453
    %v4087 = vunpack.c.l.b16 %v3454
    %v4088 = vunpack.c.h.b16 %v3454
    %v4089 = vunpack.c.l.b16 %v3455
    %v4090 = vunpack.c.h.b16 %v3455
    %v4091 = vunpack.c.l.b16 %v3456
    %v4092 = vunpack.c.h.b16 %v3456
    %v4093 = vunpack.c.l.b16 %v3457
    %v4094 = vunpack.c.h.b16 %v3457
    %v4095 = vunpack.c.l.b16 %v3458
    %v4096 = vunpack.c.h.b16 %v3458
    %v4097 = vunpack.c.l.b16 %v3459
    %v4098 = vunpack.c.h.b16 %v3459
    %v4099 = vunpack.c.l.b16 %v3460
    %v4100 = vunpack.c.h.b16 %v3460
    %v4101 = vunpack.c.l.b16 %v3461
    %v4102 = vunpack.c.h.b16 %v3461
    %v4103 = vunpack.c.l.b16 %v3462
    %v4104 = vunpack.c.h.b16 %v3462
    %v4105 = vunpack.c.l.b16 %v3463
    %v4106 = vunpack.c.h.b16 %v3463
    %v4107 = vunpack.c.l.b16 %v3464
    %v4108 = vunpack.c.h.b16 %v3464
    %v4109 = vunpack.c.l.b16 %v3465
    %v4110 = vunpack.c.h.b16 %v3465
    %v4111 = vunpack.c.l.b16 %v3466
    %v4112 = vunpack.c.h.b16 %v3466
    %v4113 = vunpack.c.l.b16 %v3467
    %v4114 = vunpack.c.h.b16 %v3467
    %v4115 = vunpack.c.l.b16 %v3468
    %v4116 = vunpack.c.h.b16 %v3468
    %v4117 = vunpack.c.l.b16 %v3469
    %v4118 = vunpack.c.h.b16 %v3469
    %v4119 = vunpack.c.l.b16 %v3470
    %v4120 = vunpack.c.h.b16 %v3470
    %v4121 = vunpack.c.l.b16 %v3471
    %v4122 = vunpack.c.h.b16 %v3471
    %v4123 = vunpack.c.l.b16 %v3472
    %v4124 = vunpack.c.h.b16 %v3472
    %v4125 = vunpack.c.l.b16 %v3473
    %v4126 = vunpack.c.h.b16 %v3473
    %v4127 = vunpack.c.l.b16 %v3474
    %v4128 = vunpack.c.h.b16 %v3474
    %v4129 = vunpack.c.l.b16 %v3475
    %v4130 = vunpack.c.h.b16 %v3475
    %v4131 = vunpack.c.l.b16 %v3476
    %v4132 = vunpack.c.h.b16 %v3476
    %v4133 = vunpack.c.l.b16 %v3477
    %v4134 = vunpack.c.h.b16 %v3477
    %v4135 = vunpack.c.l.b16 %v3478
    %v4136 = vunpack.c.h.b16 %v3478
    %v4137 = vunpack.c.l.b16 %v3479
    %v4138 = vunpack.c.h.b16 %v3479
    %v4139 = vunpack.c.l.b16 %v3480
    %v4140 = vunpack.c.h.b16 %v3480
    %v4141 = vunpack.c.l.b16 %v3481
    %v4142 = vunpack.c.h.b16 %v3481
    %v4143 = vunpack.c.l.b16 %v3482
    %v4144 = vunpack.c.h.b16 %v3482
    %v4145 = vunpack.c.l.b16 %v3483
    %v4146 = vunpack.c.h.b16 %v3483
    %v4147 = vunpack.c.l.b16 %v3484
    %v4148 = vunpack.c.h.b16 %v3484
    %v4149 = vunpack.c.l.b16 %v3485
    %v4150 = vunpack.c.h.b16 %v3485
    %v4151 = vunpack.c.l.b16 %v3486
    %v4152 = vunpack.c.h.b16 %v3486
    %v4153 = vunpack.c.l.b16 %v3487
    %v4154 = vunpack.c.h.b16 %v3487
    %v4155 = vunpack.c.l.b16 %v3488
    %v4156 = vunpack.c.h.b16 %v3488
    %v4157 = vunpack.c.l.b16 %v3489
    %v4158 = vunpack.c.h.b16 %v3489
    %v4159 = vunpack.c.l.b16 %v3490
    %v4160 = vunpack.c.h.b16 %v3490
    %v4161 = vunpack.c.l.b16 %v3491
    %v4162 = vunpack.c.h.b16 %v3491
    %v4163 = vunpack.c.l.b16 %v3492
    %v4164 = vunpack.c.h.b16 %v3492
    %v4165 = vunpack.c.l.b16 %v3493
    %v4166 = vunpack.c.h.b16 %v3493
    %v4167 = vunpack.c.l.b16 %v3494
    %v4168 = vunpack.c.h.b16 %v3494
    %v4169 = vunpack.c.l.b16 %v3495
    %v4170 = vunpack.c.h.b16 %v3495
    %v4171 = vunpack.c.l.b16 %v3496
    %v4172 = vunpack.c.h.b16 %v3496
    %v4173 = vunpack.c.l.b16 %v3497
    %v4174 = vunpack.c.h.b16 %v3497
    %v4175 = vunpack.c.l.b16 %v3498
    %v4176 = vunpack.c.h.b16 %v3498
    %v4177 = vunpack.c.l.b16 %v3499
    %v4178 = vunpack.c.h.b16 %v3499
    %v4179 = vunpack.c.l.b16 %v3500
    %v4180 = vunpack.c.h.b16 %v3500
    %v4181 = vunpack.c.l.b16 %v3501
    %v4182 = vunpack.c.h.b16 %v3501
    %v4183 = vunpack.c.l.b16 %v3502
    %v4184 = vunpack.c.h.b16 %v3502
    %v4185 = vunpack.c.l.b16 %v3503
    %v4186 = vunpack.c.h.b16 %v3503
    %v4187 = vunpack.c.l.b16 %v3504
    %v4188 = vunpack.c.h.b16 %v3504
    %v4189 = vunpack.c.l.b16 %v3505
    %v4190 = vunpack.c.h.b16 %v3505
    %v4191 = vunpack.c.l.b16 %v3506
    %v4192 = vunpack.c.h.b16 %v3506
    %v4193 = vunpack.c.l.b16 %v3507
    %v4194 = vunpack.c.h.b16 %v3507
    %v4195 = vunpack.c.l.b16 %v3508
    %v4196 = vunpack.c.h.b16 %v3508
    %v4197 = vunpack.c.l.b16 %v3509
    %v4198 = vunpack.c.h.b16 %v3509
    %v4199 = vunpack.c.l.b16 %v3510
    %v4200 = vunpack.c.h.b16 %v3510
    %v4201 = vunpack.c.l.b16 %v3511
    %v4202 = vunpack.c.h.b16 %v3511
    %v4203 = vunpack.c.l.b16 %v3512
    %v4204 = vunpack.c.h.b16 %v3512
    %v4205 = vunpack.c.l.b16 %v3513
    %v4206 = vunpack.c.h.b16 %v3513
    %v4207 = vunpack.c.l.b16 %v3514
    %v4208 = vunpack.c.h.b16 %v3514
    %v4209 = vunpack.c.l.b16 %v3515
    %v4210 = vunpack.c.h.b16 %v3515
    %v4211 = vunpack.c.l.b16 %v3516
    %v4212 = vunpack.c.h.b16 %v3516
    %v4213 = vunpack.c.l.b16 %v3517
    %v4214 = vunpack.c.h.b16 %v3517
    %v4215 = vunpack.c.l.b16 %v3518
    %v4216 = vunpack.c.h.b16 %v3518
    %v4217 = vunpack.c.l.b16 %v3519
    %v4218 = vunpack.c.h.b16 %v3519
    %v4219 = vunpack.c.l.b16 %v3520
    %v4220 = vunpack.c.h.b16 %v3520
    %v4221 = vunpack.c.l.b16 %v3521
    %v4222 = vunpack.c.h.b16 %v3521
    %v4223 = vunpack.c.l.b16 %v3522
    %v4224 = vunpack.c.h.b16 %v3522
    %v4225 = vunpack.c.l.b16 %v3523
    %v4226 = vunpack.c.h.b16 %v3523
    %v4227 = vunpack.c.l.b16 %v3524
    %v4228 = vunpack.c.h.b16 %v3524
    %v4229 = vunpack.c.l.b16 %v3525
    %v4230 = vunpack.c.h.b16 %v3525
    %v4231 = vunpack.c.l.b16 %v3526
    %v4232 = vunpack.c.h.b16 %v3526
    %v4233 = vunpack.c.l.b16 %v3527
    %v4234 = vunpack.c.h.b16 %v3527
    %v4235 = vunpack.c.l.b16 %v3528
    %v4236 = vunpack.c.h.b16 %v3528
    %v4237 = vunpack.c.l.b16 %v3529
    %v4238 = vunpack.c.h.b16 %v3529
    %v4239 = vunpack.c.l.b16 %v3530
    %v4240 = vunpack.c.h.b16 %v3530
    %v4241 = vunpack.c.l.b16 %v3531
    %v4242 = vunpack.c.h.b16 %v3531
    %v4243 = vunpack.c.l.b16 %v3532
    %v4244 = vunpack.c.h.b16 %v3532
    %v4245 = vunpack.c.l.b16 %v3533
    %v4246 = vunpack.c.h.b16 %v3533
    %v4247 = vunpack.c.l.b16 %v3534
    %v4248 = vunpack.c.h.b16 %v3534
    %v4249 = vunpack.c.l.b16 %v3535
    %v4250 = vunpack.c.h.b16 %v3535
    %v4251 = vunpack.c.l.b16 %v3536
    %v4252 = vunpack.c.h.b16 %v3536
    %v4253 = vunpack.c.l.b16 %v3537
    %v4254 = vunpack.c.h.b16 %v3537
    %v4255 = vunpack.c.l.b16 %v3538
    %v4256 = vunpack.c.h.b16 %v3538
    %v4257 = vunpack.c.l.b16 %v3539
    %v4258 = vunpack.c.h.b16 %v3539
    %v4259 = vunpack.c.l.b16 %v3540
    %v4260 = vunpack.c.h.b16 %v3540
    %v4261 = vunpack.c.l.b16 %v3541
    %v4262 = vunpack.c.h.b16 %v3541
    %v4263 = vunpack.c.l.b16 %v3542
    %v4264 = vunpack.c.h.b16 %v3542
    %v4265 = vunpack.c.l.b16 %v3543
    %v4266 = vunpack.c.h.b16 %v3543
    %v4267 = vunpack.c.l.b16 %v3544
    %v4268 = vunpack.c.h.b16 %v3544
    %v4269 = vunpack.c.l.b16 %v3545
    %v4270 = vunpack.c.h.b16 %v3545
    %v4271 = vunpack.c.l.b16 %v3546
    %v4272 = vunpack.c.h.b16 %v3546
    %v4273 = vunpack.c.l.b16 %v3547
    %v4274 = vunpack.c.h.b16 %v3547
    %v4275 = vunpack.c.l.b16 %v3548
    %v4276 = vunpack.c.h.b16 %v3548
    %v4277 = vunpack.c.l.b16 %v3549
    %v4278 = vunpack.c.h.b16 %v3549
    %v4279 = vunpack.c.l.b16 %v3550
    %v4280 = vunpack.c.h.b16 %v3550
    %v4281 = vunpack.c.l.b16 %v3551
    %v4282 = vunpack.c.h.b16 %v3551
    %v4283 = vunpack.c.l.b16 %v3552
    %v4284 = vunpack.c.h.b16 %v3552
    %v4285 = vunpack.c.l.b16 %v3553
    %v4286 = vunpack.c.h.b16 %v3553
    %v4287 = vunpack.c.l.b16 %v3554
    %v4288 = vunpack.c.h.b16 %v3554
    %v4289 = vunpack.c.l.b16 %v3555
    %v4290 = vunpack.c.h.b16 %v3555
    %v4291 = vunpack.c.l.b16 %v3556
    %v4292 = vunpack.c.h.b16 %v3556
    %v4293 = vunpack.c.l.b16 %v3557
    %v4294 = vunpack.c.h.b16 %v3557
    %v4295 = vunpack.c.l.b16 %v3558
    %v4296 = vunpack.c.h.b16 %v3558
    %v4297 = vunpack.c.l.b16 %v3559
    %v4298 = vunpack.c.h.b16 %v3559
    %v4299 = vunpack.c.l.b16 %v3560
    %v4300 = vunpack.c.h.b16 %v3560
    %v4301 = vunpack.c.l.b16 %v3561
    %v4302 = vunpack.c.h.b16 %v3561
    %v4303 = vunpack.c.l.b16 %v3562
    %v4304 = vunpack.c.h.b16 %v3562
    %v4305 = vunpack.c.l.b16 %v3563
    %v4306 = vunpack.c.h.b16 %v3563
    %v4307 = vunpack.c.l.b16 %v3564
    %v4308 = vunpack.c.h.b16 %v3564
    %v4309 = vunpack.c.l.b16 %v3565
    %v4310 = vunpack.c.h.b16 %v3565
    %v4311 = vunpack.c.l.b16 %v3566
    %v4312 = vunpack.c.h.b16 %v3566
    %v4313 = vunpack.c.l.b16 %v3567
    %v4314 = vunpack.c.h.b16 %v3567
    %v4315 = vunpack.c.l.b16 %v3568
    %v4316 = vunpack.c.h.b16 %v3568
    %v4317 = vunpack.c.l.b16 %v3569
    %v4318 = vunpack.c.h.b16 %v3569
    %v4319 = vunpack.c.l.b16 %v3570
    %v4320 = vunpack.c.h.b16 %v3570
    %v4321 = vunpack.c.l.b16 %v3571
    %v4322 = vunpack.c.h.b16 %v3571
    %v4323 = vunpack.c.l.b16 %v3572
    %v4324 = vunpack.c.h.b16 %v3572
    %v4325 = vunpack.c.l.b16 %v3573
    %v4326 = vunpack.c.h.b16 %v3573
    %v4327 = vunpack.c.l.b16 %v3574
    %v4328 = vunpack.c.h.b16 %v3574
    %v4329 = vunpack.c.l.b16 %v3575
    %v4330 = vunpack.c.h.b16 %v3575
    %v4331 = vunpack.c.l.b16 %v3576
    %v4332 = vunpack.c.h.b16 %v3576
    %v4333 = vunpack.c.l.b16 %v3577
    %v4334 = vunpack.c.h.b16 %v3577
    %v4335 = vunpack.c.l.b16 %v3578
    %v4336 = vunpack.c.h.b16 %v3578
    %v4337 = vunpack.c.l.b16 %v3579
    %v4338 = vunpack.c.h.b16 %v3579
    %v4339 = vunpack.c.l.b16 %v3580
    %v4340 = vunpack.c.h.b16 %v3580
    %v4341 = vunpack.c.l.b16 %v3581
    %v4342 = vunpack.c.h.b16 %v3581
    %v4343 = vunpack.c.l.b16 %v3582
    %v4344 = vunpack.c.h.b16 %v3582
    %v4345 = vunpack.c.l.b16 %v3583
    %v4346 = vunpack.c.h.b16 %v3583
    %v4347 = vunpack.c.l.b16 %v3584
    %v4348 = vunpack.c.h.b16 %v3584
    %v4349 = vunpack.c.l.b16 %v3585
    %v4350 = vunpack.c.h.b16 %v3585
    %v4351 = vunpack.c.l.b16 %v3586
    %v4352 = vunpack.c.h.b16 %v3586
    %v4353 = vunpack.c.l.b16 %v3587
    %v4354 = vunpack.c.h.b16 %v3587
    %v4355 = vunpack.c.l.b16 %v3588
    %v4356 = vunpack.c.h.b16 %v3588
    %v4357 = vunpack.c.l.b16 %v3589
    %v4358 = vunpack.c.h.b16 %v3589
    %v4359 = vunpack.c.l.b16 %v3590
    %v4360 = vunpack.c.h.b16 %v3590
    %v4361 = vunpack.c.l.b16 %v3591
    %v4362 = vunpack.c.h.b16 %v3591
    %v4363 = vunpack.c.l.b16 %v3592
    %v4364 = vunpack.c.h.b16 %v3592
    %v4365 = vunpack.c.l.b16 %v3593
    %v4366 = vunpack.c.h.b16 %v3593
    %v4367 = vunpack.c.l.b16 %v3594
    %v4368 = vunpack.c.h.b16 %v3594
    %v4369 = vunpack.c.l.b16 %v3595
    %v4370 = vunpack.c.h.b16 %v3595
    %v4371 = vunpack.c.l.b16 %v3596
    %v4372 = vunpack.c.h.b16 %v3596
    %v4373 = vunpack.c.l.b16 %v3597
    %v4374 = vunpack.c.h.b16 %v3597
    %v4375 = vunpack.c.l.b16 %v3598
    %v4376 = vunpack.c.h.b16 %v3598
    %v4377 = vunpack.c.l.b16 %v3599
    %v4378 = vunpack.c.h.b16 %v3599
    %v4379 = vunpack.c.l.b16 %v3600
    %v4380 = vunpack.c.h.b16 %v3600
    %v4381 = vunpack.c.l.b16 %v3601
    %v4382 = vunpack.c.h.b16 %v3601
    %v4383 = vunpack.c.l.b16 %v3602
    %v4384 = vunpack.c.h.b16 %v3602
    %v4385 = vunpack.c.l.b16 %v3603
    %v4386 = vunpack.c.h.b16 %v3603
    %v4387 = vunpack.c.l.b16 %v3604
    %v4388 = vunpack.c.h.b16 %v3604
    %v4389 = vunpack.c.l.b16 %v3605
    %v4390 = vunpack.c.h.b16 %v3605
    %v4391 = vunpack.c.l.b16 %v3606
    %v4392 = vunpack.c.h.b16 %v3606
    %v4393 = vunpack.c.l.b16 %v3607
    %v4394 = vunpack.c.h.b16 %v3607
    %v4395 = vunpack.c.l.b16 %v3608
    %v4396 = vunpack.c.h.b16 %v3608
    %v4397 = vunpack.c.l.b16 %v3609
    %v4398 = vunpack.c.h.b16 %v3609
    %v4399 = vunpack.c.l.b16 %v3610
    %v4400 = vunpack.c.h.b16 %v3610
    %v4401 = vunpack.c.l.b16 %v3611
    %v4402 = vunpack.c.h.b16 %v3611
    %v4403 = vunpack.c.l.b16 %v3612
    %v4404 = vunpack.c.h.b16 %v3612
    %v4405 = vunpack.c.l.b16 %v3613
    %v4406 = vunpack.c.h.b16 %v3613
    %v4407 = vunpack.c.l.b16 %v3614
    %v4408 = vunpack.c.h.b16 %v3614
    %v4409 = vunpack.c.l.b16 %v3615
    %v4410 = vunpack.c.h.b16 %v3615
    %v4411 = vunpack.c.l.b16 %v3616
    %v4412 = vunpack.c.h.b16 %v3616
    %v4413 = vunpack.c.l.b16 %v3617
    %v4414 = vunpack.c.h.b16 %v3617
    %v4415 = vunpack.c.l.b16 %v3618
    %v4416 = vunpack.c.h.b16 %v3618
    %v4417 = vunpack.c.l.b16 %v3619
    %v4418 = vunpack.c.h.b16 %v3619
    %v4419 = vunpack.c.l.b16 %v3620
    %v4420 = vunpack.c.h.b16 %v3620
    %v4421 = vunpack.c.l.b16 %v3621
    %v4422 = vunpack.c.h.b16 %v3621
    %v4423 = vunpack.c.l.b16 %v3622
    %v4424 = vunpack.c.h.b16 %v3622
    %v4425 = vunpack.c.l.b16 %v3623
    %v4426 = vunpack.c.h.b16 %v3623
    %v4427 = vunpack.c.l.b16 %v3624
    %v4428 = vunpack.c.h.b16 %v3624
    %v4429 = vunpack.c.l.b16 %v3625
    %v4430 = vunpack.c.h.b16 %v3625
    %v4431 = vunpack.c.l.b16 %v3626
    %v4432 = vunpack.c.h.b16 %v3626
    %v4433 = vunpack.c.l.b16 %v3627
    %v4434 = vunpack.c.h.b16 %v3627
    %v4435 = vunpack.c.l.b16 %v3628
    %v4436 = vunpack.c.h.b16 %v3628
    %v4437 = vunpack.c.l.b16 %v3629
    %v4438 = vunpack.c.h.b16 %v3629
    %v4439 = vunpack.c.l.b16 %v3630
    %v4440 = vunpack.c.h.b16 %v3630
    %v4441 = vpack.c.b16 %v3937, %v3929
    %v4442 = vpack.c.b16 %v3938, %v3930
    %v4443 = vpack.c.b16 %v3939, %v3931
    %v4444 = vpack.c.b16 %v3940, %v3932
    %v4445 = vpack.c.b16 %v3941, %v3933
    %v4446 = vpack.c.b16 %v3942, %v3934
    %v4447 = vpack.c.b16 %v3943, %v3935
    %v4448 = vpack.c.b16 %v3944, %v3936
    %v4449 = vpack.c.b16 %v3953, %v3945
    %v4450 = vpack.c.b16 %v3954, %v3946
    %v4451 = vpack.c.b16 %v3955, %v3947
    %v4452 = vpack.c.b16 %v3956, %v3948
    %v4453 = vpack.c.b16 %v3957, %v3949
    %v4454 = vpack.c.b16 %v3958, %v3950
    %v4455 = vpack.c.b16 %v3959, %v3951
    %v4456 = vpack.c.b16 %v3960, %v3952
    %v4457 = vpack.c.b16 %v3969, %v3961
    %v4458 = vpack.c.b16 %v3970, %v3962
    %v4459 = vpack.c.b16 %v3971, %v3963
    %v4460 = vpack.c.b16 %v3972, %v3964
    %v4461 = vpack.c.b16 %v3973, %v3965
    %v4462 = vpack.c.b16 %v3974, %v3966
    %v4463 = vpack.c.b16 %v3975, %v3967
    %v4464 = vpack.c.b16 %v3976, %v3968
    %v4465 = vpack.c.b16 %v3985, %v3977
    %v4466 = vpack.c.b16 %v3986, %v3978
    %v4467 = vpack.c.b16 %v3987, %v3979
    %v4468 = vpack.c.b16 %v3988, %v3980
    %v4469 = vpack.c.b16 %v3989, %v3981
    %v4470 = vpack.c.b16 %v3990, %v3982
    %v4471 = vpack.c.b16 %v3991, %v3983
    %v4472 = vpack.c.b16 %v3992, %v3984
    %v4473 = vpack.c.b16 %v4001, %v3993
    %v4474 = vpack.c.b16 %v4002, %v3994
    %v4475 = vpack.c.b16 %v4003, %v3995
    %v4476 = vpack.c.b16 %v4004, %v3996
    %v4477 = vpack.c.b16 %v4005, %v3997
    %v4478 = vpack.c.b16 %v4006, %v3998
    %v4479 = vpack.c.b16 %v4007, %v3999
    %v4480 = vpack.c.b16 %v4008, %v4000
    %v4481 = vpack.c.b16 %v4017, %v4009
    %v4482 = vpack.c.b16 %v4018, %v4010
    %v4483 = vpack.c.b16 %v4019, %v4011
    %v4484 = vpack.c.b16 %v4020, %v4012
    %v4485 = vpack.c.b16 %v4021, %v4013
    %v4486 = vpack.c.b16 %v4022, %v4014
    %v4487 = vpack.c.b16 %v4023, %v4015
    %v4488 = vpack.c.b16 %v4024, %v4016
    %v4489 = vpack.c.b16 %v4033, %v4025
    %v4490 = vpack.c.b16 %v4034, %v4026
    %v4491 = vpack.c.b16 %v4035, %v4027
    %v4492 = vpack.c.b16 %v4036, %v4028
    %v4493 = vpack.c.b16 %v4037, %v4029
    %v4494 = vpack.c.b16 %v4038, %v4030
    %v4495 = vpack.c.b16 %v4039, %v4031
    %v4496 = vpack.c.b16 %v4040, %v4032
    %v4497 = vpack.c.b16 %v4049, %v4041
    %v4498 = vpack.c.b16 %v4050, %v4042
    %v4499 = vpack.c.b16 %v4051, %v4043
    %v4500 = vpack.c.b16 %v4052, %v4044
    %v4501 = vpack.c.b16 %v4053, %v4045
    %v4502 = vpack.c.b16 %v4054, %v4046
    %v4503 = vpack.c.b16 %v4055, %v4047
    %v4504 = vpack.c.b16 %v4056, %v4048
    %v4505 = vpack.c.b16 %v4065, %v4057
    %v4506 = vpack.c.b16 %v4066, %v4058
    %v4507 = vpack.c.b16 %v4067, %v4059
    %v4508 = vpack.c.b16 %v4068, %v4060
    %v4509 = vpack.c.b16 %v4069, %v4061
    %v4510 = vpack.c.b16 %v4070, %v4062
    %v4511 = vpack.c.b16 %v4071, %v4063
    %v4512 = vpack.c.b16 %v4072, %v4064
    %v4513 = vpack.c.b16 %v4081, %v4073
    %v4514 = vpack.c.b16 %v4082, %v4074
    %v4515 = vpack.c.b16 %v4083, %v4075
    %v4516 = vpack.c.b16 %v4084, %v4076
    %v4517 = vpack.c.b16 %v4085, %v4077
    %v4518 = vpack.c.b16 %v4086, %v4078
    %v4519 = vpack.c.b16 %v4087, %v4079
    %v4520 = vpack.c.b16 %v4088, %v4080
    %v4521 = vpack.c.b16 %v4097, %v4089
    %v4522 = vpack.c.b16 %v4098, %v4090
    %v4523 = vpack.c.b16 %v4099, %v4091
    %v4524 = vpack.c.b16 %v4100, %v4092
    %v4525 = vpack.c.b16 %v4101, %v4093
    %v4526 = vpack.c.b16 %v4102, %v4094
    %v4527 = vpack.c.b16 %v4103, %v4095
    %v4528 = vpack.c.b16 %v4104, %v4096
    %v4529 = vpack.c.b16 %v4113, %v4105
    %v4530 = vpack.c.b16 %v4114, %v4106
    %v4531 = vpack.c.b16 %v4115, %v4107
    %v4532 = vpack.c.b16 %v4116, %v4108
    %v4533 = vpack.c.b16 %v4117, %v4109
    %v4534 = vpack.c.b16 %v4118, %v4110
    %v4535 = vpack.c.b16 %v4119, %v4111
    %v4536 = vpack.c.b16 %v4120, %v4112
    %v4537 = vpack.c.b16 %v4129, %v4121
    %v4538 = vpack.c.b16 %v4130, %v4122
    %v4539 = vpack.c.b16 %v4131, %v4123
    %v4540 = vpack.c.b16 %v4132, %v4124
    %v4541 = vpack.c.b16 %v4133, %v4125
    %v4542 = vpack.c.b16 %v4134, %v4126
    %v4543 = vpack.c.b16 %v4135, %v4127
    %v4544 = vpack.c.b16 %v4136, %v4128
    %v4545 = vpack.c.b16 %v4145, %v4137
    %v4546 = vpack.c.b16 %v4146, %v4138
    %v4547 = vpack.c.b16 %v4147, %v4139
    %v4548 = vpack.c.b16 %v4148, %v4140
    %v4549 = vpack.c.b16 %v4149, %v4141
    %v4550 = vpack.c.b16 %v4150, %v4142
    %v4551 = vpack.c.b16 %v4151, %v4143
    %v4552 = vpack.c.b16 %v4152, %v4144
    %v4553 = vpack.c.b16 %v4161, %v4153
    %v4554 = vpack.c.b16 %v4162, %v4154
    %v4555 = vpack.c.b16 %v4163, %v4155
    %v4556 = vpack.c.b16 %v4164, %v4156
    %v4557 = vpack.c.b16 %v4165, %v4157
    %v4558 = vpack.c.b16 %v4166, %v4158
    %v4559 = vpack.c.b16 %v4167, %v4159
    %v4560 = vpack.c.b16 %v4168, %v4160
    %v4561 = vpack.c.b16 %v4177, %v4169
    %v4562 = vpack.c.b16 %v4178, %v4170
    %v4563 = vpack.c.b16 %v4179, %v4171
    %v4564 = vpack.c.b16 %v4180, %v4172
    %v4565 = vpack.c.b16 %v4181, %v4173
    %v4566 = vpack.c.b16 %v4182, %v4174
    %v4567 = vpack.c.b16 %v4183, %v4175
    %v4568 = vpack.c.b16 %v4184, %v4176
    %v4569 = vpack.c.b16 %v4193, %v4185
    %v4570 = vpack.c.b16 %v4194, %v4186
    %v4571 = vpack.c.b16 %v4195, %v4187
    %v4572 = vpack.c.b16 %v4196, %v4188
    %v4573 = vpack.c.b16 %v4197, %v4189
    %v4574 = vpack.c.b16 %v4198, %v4190
    %v4575 = vpack.c.b16 %v4199, %v4191
    %v4576 = vpack.c.b16 %v4200, %v4192
    %v4577 = vpack.c.b16 %v4209, %v4201
    %v4578 = vpack.c.b16 %v4210, %v4202
    %v4579 = vpack.c.b16 %v4211, %v4203
    %v4580 = vpack.c.b16 %v4212, %v4204
    %v4581 = vpack.c.b16 %v4213, %v4205
    %v4582 = vpack.c.b16 %v4214, %v4206
    %v4583 = vpack.c.b16 %v4215, %v4207
    %v4584 = vpack.c.b16 %v4216, %v4208
    %v4585 = vpack.c.b16 %v4225, %v4217
    %v4586 = vpack.c.b16 %v4226, %v4218
    %v4587 = vpack.c.b16 %v4227, %v4219
    %v4588 = vpack.c.b16 %v4228, %v4220
    %v4589 = vpack.c.b16 %v4229, %v4221
    %v4590 = vpack.c.b16 %v4230, %v4222
    %v4591 = vpack.c.b16 %v4231, %v4223
    %v4592 = vpack.c.b16 %v4232, %v4224
    %v4593 = vpack.c.b16 %v4241, %v4233
    %v4594 = vpack.c.b16 %v4242, %v4234
    %v4595 = vpack.c.b16 %v4243, %v4235
    %v4596 = vpack.c.b16 %v4244, %v4236
    %v4597 = vpack.c.b16 %v4245, %v4237
    %v4598 = vpack.c.b16 %v4246, %v4238
    %v4599 = vpack.c.b16 %v4247, %v4239
    %v4600 = vpack.c.b16 %v4248, %v4240
    %v4601 = vpack.c.b16 %v4257, %v4249
    %v4602 = vpack.c.b16 %v4258, %v4250
    %v4603 = vpack.c.b16 %v4259, %v4251
    %v4604 = vpack.c.b16 %v4260, %v4252
    %v4605 = vpack.c.b16 %v4261, %v4253
    %v4606 = vpack.c.b16 %v4262, %v4254
    %v4607 = vpack.c.b16 %v4263, %v4255
    %v4608 = vpack.c.b16 %v4264, %v4256
    %v4609 = vpack.c.b16 %v4273, %v4265
    %v4610 = vpack.c.b16 %v4274, %v4266
    %v4611 = vpack.c.b16 %v4275, %v4267
    %v4612 = vpack.c.b16 %v4276, %v4268
    %v4613 = vpack.c.b16 %v4277, %v4269
    %v4614 = vpack.c.b16 %v4278, %v4270
    %v4615 = vpack.c.b16 %v4279, %v4271
    %v4616 = vpack.c.b16 %v4280, %v4272
    %v4617 = vpack.c.b16 %v4289, %v4281
    %v4618 = vpack.c.b16 %v4290, %v4282
    %v4619 = vpack.c.b16 %v4291, %v4283
    %v4620 = vpack.c.b16 %v4292, %v4284
    %v4621 = vpack.c.b16 %v4293, %v4285
    %v4622 = vpack.c.b16 %v4294, %v4286
    %v4623 = vpack.c.b16 %v4295, %v4287
    %v4624 = vpack.c.b16 %v4296, %v4288
    %v4625 = vpack.c.b16 %v4305, %v4297
    %v4626 = vpack.c.b16 %v4306, %v4298
    %v4627 = vpack.c.b16 %v4307, %v4299
    %v4628 = vpack.c.b16 %v4308, %v4300
    %v4629 = vpack.c.b16 %v4309, %v4301
    %v4630 = vpack.c.b16 %v4310, %v4302
    %v4631 = vpack.c.b16 %v4311, %v4303
    %v4632 = vpack.c.b16 %v4312, %v4304
    %v4633 = vpack.c.b16 %v4321, %v4313
    %v4634 = vpack.c.b16 %v4322, %v4314
    %v4635 = vpack.c.b16 %v4323, %v4315
    %v4636 = vpack.c.b16 %v4324, %v4316
    %v4637 = vpack.c.b16 %v4325, %v4317
    %v4638 = vpack.c.b16 %v4326, %v4318
    %v4639 = vpack.c.b16 %v4327, %v4319
    %v4640 = vpack.c.b16 %v4328, %v4320
    %v4641 = vpack.c.b16 %v4337, %v4329
    %v4642 = vpack.c.b16 %v4338, %v4330
    %v4643 = vpack.c.b16 %v4339, %v4331
    %v4644 = vpack.c.b16 %v4340, %v4332
    %v4645 = vpack.c.b16 %v4341, %v4333
    %v4646 = vpack.c.b16 %v4342, %v4334
    %v4647 = vpack.c.b16 %v4343, %v4335
    %v4648 = vpack.c.b16 %v4344, %v4336
    %v4649 = vpack.c.b16 %v4353, %v4345
    %v4650 = vpack.c.b16 %v4354, %v4346
    %v4651 = vpack.c.b16 %v4355, %v4347
    %v4652 = vpack.c.b16 %v4356, %v4348
    %v4653 = vpack.c.b16 %v4357, %v4349
    %v4654 = vpack.c.b16 %v4358, %v4350
    %v4655 = vpack.c.b16 %v4359, %v4351
    %v4656 = vpack.c.b16 %v4360, %v4352
    %v4657 = vpack.c.b16 %v4369, %v4361
    %v4658 = vpack.c.b16 %v4370, %v4362
    %v4659 = vpack.c.b16 %v4371, %v4363
    %v4660 = vpack.c.b16 %v4372, %v4364
    %v4661 = vpack.c.b16 %v4373, %v4365
    %v4662 = vpack.c.b16 %v4374, %v4366
    %v4663 = vpack.c.b16 %v4375, %v4367
    %v4664 = vpack.c.b16 %v4376, %v4368
    %v4665 = vpack.c.b16 %v4385, %v4377
    %v4666 = vpack.c.b16 %v4386, %v4378
    %v4667 = vpack.c.b16 %v4387, %v4379
    %v4668 = vpack.c.b16 %v4388, %v4380
    %v4669 = vpack.c.b16 %v4389, %v4381
    %v4670 = vpack.c.b16 %v4390, %v4382
    %v4671 = vpack.c.b16 %v4391, %v4383
    %v4672 = vpack.c.b16 %v4392, %v4384
    %v4673 = vpack.c.b16 %v4401, %v4393
    %v4674 = vpack.c.b16 %v4402, %v4394
    %v4675 = vpack.c.b16 %v4403, %v4395
    %v4676 = vpack.c.b16 %v4404, %v4396
    %v4677 = vpack.c.b16 %v4405, %v4397
    %v4678 = vpack.c.b16 %v4406, %v4398
    %v4679 = vpack.c.b16 %v4407, %v4399
    %v4680 = vpack.c.b16 %v4408, %v4400
    %v4681 = vpack.c.b16 %v4417, %v4409
    %v4682 = vpack.c.b16 %v4418, %v4410
    %v4683 = vpack.c.b16 %v4419, %v4411
    %v4684 = vpack.c.b16 %v4420, %v4412
    %v4685 = vpack.c.b16 %v4421, %v4413
    %v4686 = vpack.c.b16 %v4422, %v4414
    %v4687 = vpack.c.b16 %v4423, %v4415
    %v4688 = vpack.c.b16 %v4424, %v4416
    %v4689 = vpack.c.b16 %v4433, %v4425
    %v4690 = vpack.c.b16 %v4434, %v4426
    %v4691 = vpack.c.b16 %v4435, %v4427
    %v4692 = vpack.c.b16 %v4436, %v4428
    %v4693 = vpack.c.b16 %v4437, %v4429
    %v4694 = vpack.c.b16 %v4438, %v4430
    %v4695 = vpack.c.b16 %v4439, %v4431
    %v4696 = vpack.c.b16 %v4440, %v4432
    %4953 = vmatprep.subr.bf16.mxu0 %v4442
    %4954 = vmatpush1.bf16.msra.mxu0 %v4441
    %4955 = vmatprep.subr.bf16.mxu0 %v4450
    %4956 = vmatpush1.bf16.msra.mxu0 %v4449
    %4957 = vmatprep.subr.bf16.mxu0 %v4458
    %4958 = vmatpush1.bf16.msra.mxu0 %v4457
    %4959 = vmatprep.subr.bf16.mxu0 %v4466
    %4960 = vmatpush1.bf16.msra.mxu0 %v4465
    %4961 = vmatprep.subr.bf16.mxu0 %v4474
    %4962 = vmatpush1.bf16.msra.mxu0 %v4473
    %4963 = vmatprep.subr.bf16.mxu0 %v4482
    %4964 = vmatpush1.bf16.msra.mxu0 %v4481
    %4965 = vmatprep.subr.bf16.mxu0 %v4490
    %4966 = vmatpush1.bf16.msra.mxu0 %v4489
    %4967 = vmatprep.subr.bf16.mxu0 %v4498
    %4968 = vmatpush1.bf16.msra.mxu0 %v4497
    %4969 = vmatprep.subr.bf16.mxu0 %v4506
    %4970 = vmatpush1.bf16.msra.mxu0 %v4505
    %4971 = vmatprep.subr.bf16.mxu0 %v4514
    %4972 = vmatpush1.bf16.msra.mxu0 %v4513
    %4973 = vmatprep.subr.bf16.mxu0 %v4522
    %4974 = vmatpush1.bf16.msra.mxu0 %v4521
    %4975 = vmatprep.subr.bf16.mxu0 %v4530
    %4976 = vmatpush1.bf16.msra.mxu0 %v4529
    %4977 = vmatprep.subr.bf16.mxu0 %v4538
    %4978 = vmatpush1.bf16.msra.mxu0 %v4537
    %4979 = vmatprep.subr.bf16.mxu0 %v4546
    %4980 = vmatpush1.bf16.msra.mxu0 %v4545
    %4981 = vmatprep.subr.bf16.mxu0 %v4554
    %4982 = vmatpush1.bf16.msra.mxu0 %v4553
    %4983 = vmatprep.subr.bf16.mxu0 %v4562
    %4984 = vmatpush1.bf16.msra.mxu0 %v4561
    %4985 = vmatprep.mubr.bf16.mxu0 %v3372
    %4986 = vmatmul.mubr.bf16.gmra.mrb[0].mxu0 %v3371
    %v4987 = vpop.f32.mrb[0].mxu0
    %v4988 = vadd.f32 %v3636, %v4987
    %v4989 = vpop.f32.mrb[0].mxu0
    %v4990 = vadd.f32 %v3640, %v4989
    %v4991 = vpop.f32.mrb[0].mxu0
    %v4992 = vadd.f32 %v3636, %v4991
    %v4993 = vpop.f32.mrb[0].mxu0
    %v4994 = vadd.f32 %v3640, %v4993
    %4995 = vdwg.mxu0
    %4996 = vmatprep.subr.bf16.mxu0 %v4570
    %4997 = vmatpush1.bf16.msra.mxu0 %v4569
    %4998 = vmatprep.subr.bf16.mxu0 %v4578
    %4999 = vmatpush1.bf16.msra.mxu0 %v4577
    %5000 = vmatprep.subr.bf16.mxu0 %v4586
    %5001 = vmatpush1.bf16.msra.mxu0 %v4585
    %5002 = vmatprep.subr.bf16.mxu0 %v4594
    %5003 = vmatpush1.bf16.msra.mxu0 %v4593
    %5004 = vmatprep.subr.bf16.mxu0 %v4602
    %5005 = vmatpush1.bf16.msra.mxu0 %v4601
    %5006 = vmatprep.subr.bf16.mxu0 %v4610
    %5007 = vmatpush1.bf16.msra.mxu0 %v4609
    %5008 = vmatprep.subr.bf16.mxu0 %v4618
    %5009 = vmatpush1.bf16.msra.mxu0 %v4617
    %5010 = vmatprep.subr.bf16.mxu0 %v4626
    %5011 = vmatpush1.bf16.msra.mxu0 %v4625
    %5012 = vmatprep.subr.bf16.mxu0 %v4634
    %5013 = vmatpush1.bf16.msra.mxu0 %v4633
    %5014 = vmatprep.subr.bf16.mxu0 %v4642
    %5015 = vmatpush1.bf16.msra.mxu0 %v4641
    %5016 = vmatprep.subr.bf16.mxu0 %v4650
    %5017 = vmatpush1.bf16.msra.mxu0 %v4649
    %5018 = vmatprep.subr.bf16.mxu0 %v4658
    %5019 = vmatpush1.bf16.msra.mxu0 %v4657
    %5020 = vmatprep.subr.bf16.mxu0 %v4666
    %5021 = vmatpush1.bf16.msra.mxu0 %v4665
    %5022 = vmatprep.subr.bf16.mxu0 %v4674
    %5023 = vmatpush1.bf16.msra.mxu0 %v4673
    %5024 = vmatprep.subr.bf16.mxu0 %v4682
    %5025 = vmatpush1.bf16.msra.mxu0 %v4681
    %5026 = vmatprep.subr.bf16.mxu0 %v4690
    %5027 = vmatpush1.bf16.msra.mxu0 %v4689
    %5028 = vmatprep.mubr.bf16.mxu0 %v3374
    %5029 = vmatmul.mubr.bf16.gmra.mrb[0].mxu0 %v3373
    %v5030 = vpop.f32.mrb[0].mxu0
    %v5031 = vadd.f32 %v4988, %v5030
    %v5032 = vpop.f32.mrb[0].mxu0
    %v5033 = vadd.f32 %v4990, %v5032
    %v5034 = vpop.f32.mrb[0].mxu0
    %v5035 = vadd.f32 %v4992, %v5034
    %v5036 = vpop.f32.mrb[0].mxu0
    %v5037 = vadd.f32 %v4994, %v5036
    %5038 = vdwg.mxu0
    %5039 = vmatprep.subr.bf16.mxu0 %v4444
    %5040 = vmatpush1.bf16.msra.mxu0 %v4443
    %5041 = vmatprep.subr.bf16.mxu0 %v4452
    %5042 = vmatpush1.bf16.msra.mxu0 %v4451
    %5043 = vmatprep.subr.bf16.mxu0 %v4460
    %5044 = vmatpush1.bf16.msra.mxu0 %v4459
    %5045 = vmatprep.subr.bf16.mxu0 %v4468
    %5046 = vmatpush1.bf16.msra.mxu0 %v4467
    %5047 = vmatprep.subr.bf16.mxu0 %v4476
    %5048 = vmatpush1.bf16.msra.mxu0 %v4475
    %5049 = vmatprep.subr.bf16.mxu0 %v4484
    %5050 = vmatpush1.bf16.msra.mxu0 %v4483
    %5051 = vmatprep.subr.bf16.mxu0 %v4492
    %5052 = vmatpush1.bf16.msra.mxu0 %v4491
    %5053 = vmatprep.subr.bf16.mxu0 %v4500
    %5054 = vmatpush1.bf16.msra.mxu0 %v4499
    %5055 = vmatprep.subr.bf16.mxu0 %v4508
    %5056 = vmatpush1.bf16.msra.mxu0 %v4507
    %5057 = vmatprep.subr.bf16.mxu0 %v4516
    %5058 = vmatpush1.bf16.msra.mxu0 %v4515
    %5059 = vmatprep.subr.bf16.mxu0 %v4524
    %5060 = vmatpush1.bf16.msra.mxu0 %v4523
    %5061 = vmatprep.subr.bf16.mxu0 %v4532
    %5062 = vmatpush1.bf16.msra.mxu0 %v4531
    %5063 = vmatprep.subr.bf16.mxu0 %v4540
    %5064 = vmatpush1.bf16.msra.mxu0 %v4539
    %5065 = vmatprep.subr.bf16.mxu0 %v4548
    %5066 = vmatpush1.bf16.msra.mxu0 %v4547
    %5067 = vmatprep.subr.bf16.mxu0 %v4556
    %5068 = vmatpush1.bf16.msra.mxu0 %v4555
    %5069 = vmatprep.subr.bf16.mxu0 %v4564
    %5070 = vmatpush1.bf16.msra.mxu0 %v4563
    %5071 = vmatprep.mubr.bf16.mxu0 %v3372
    %5072 = vmatmul.mubr.bf16.gmra.mrb[0].mxu0 %v3371
    %v5073 = vpop.f32.mrb[0].mxu0
    %v5074 = vadd.f32 %v3644, %v5073
    %v5075 = vpop.f32.mrb[0].mxu0
    %v5076 = vadd.f32 %v3648, %v5075
    %v5077 = vpop.f32.mrb[0].mxu0
    %v5078 = vadd.f32 %v3644, %v5077
    %v5079 = vpop.f32.mrb[0].mxu0
    %v5080 = vadd.f32 %v3648, %v5079
    %5081 = vdwg.mxu0
    %5082 = vmatprep.subr.bf16.mxu0 %v4572
    %5083 = vmatpush1.bf16.msra.mxu0 %v4571
    %5084 = vmatprep.subr.bf16.mxu0 %v4580
    %5085 = vmatpush1.bf16.msra.mxu0 %v4579
    %5086 = vmatprep.subr.bf16.mxu0 %v4588
    %5087 = vmatpush1.bf16.msra.mxu0 %v4587
    %5088 = vmatprep.subr.bf16.mxu0 %v4596
    %5089 = vmatpush1.bf16.msra.mxu0 %v4595
    %5090 = vmatprep.subr.bf16.mxu0 %v4604
    %5091 = vmatpush1.bf16.msra.mxu0 %v4603
    %5092 = vmatprep.subr.bf16.mxu0 %v4612
    %5093 = vmatpush1.bf16.msra.mxu0 %v4611
    %5094 = vmatprep.subr.bf16.mxu0 %v4620
    %5095 = vmatpush1.bf16.msra.mxu0 %v4619
    %5096 = vmatprep.subr.bf16.mxu0 %v4628
    %5097 = vmatpush1.bf16.msra.mxu0 %v4627
    %5098 = vmatprep.subr.bf16.mxu0 %v4636
    %5099 = vmatpush1.bf16.msra.mxu0 %v4635
    %5100 = vmatprep.subr.bf16.mxu0 %v4644
    %5101 = vmatpush1.bf16.msra.mxu0 %v4643
    %5102 = vmatprep.subr.bf16.mxu0 %v4652
    %5103 = vmatpush1.bf16.msra.mxu0 %v4651
    %5104 = vmatprep.subr.bf16.mxu0 %v4660
    %5105 = vmatpush1.bf16.msra.mxu0 %v4659
    %5106 = vmatprep.subr.bf16.mxu0 %v4668
    %5107 = vmatpush1.bf16.msra.mxu0 %v4667
    %5108 = vmatprep.subr.bf16.mxu0 %v4676
    %5109 = vmatpush1.bf16.msra.mxu0 %v4675
    %5110 = vmatprep.subr.bf16.mxu0 %v4684
    %5111 = vmatpush1.bf16.msra.mxu0 %v4683
    %5112 = vmatprep.subr.bf16.mxu0 %v4692
    %5113 = vmatpush1.bf16.msra.mxu0 %v4691
    %5114 = vmatprep.mubr.bf16.mxu0 %v3374
    %5115 = vmatmul.mubr.bf16.gmra.mrb[0].mxu0 %v3373
    %v5116 = vpop.f32.mrb[0].mxu0
    %v5117 = vadd.f32 %v5074, %v5116
    %v5118 = vpop.f32.mrb[0].mxu0
    %v5119 = vadd.f32 %v5076, %v5118
    %v5120 = vpop.f32.mrb[0].mxu0
    %v5121 = vadd.f32 %v5078, %v5120
    %v5122 = vpop.f32.mrb[0].mxu0
    %v5123 = vadd.f32 %v5080, %v5122
    %5124 = vdwg.mxu0
    %5125 = vmatprep.subr.bf16.mxu0 %v4446
    %5126 = vmatpush1.bf16.msra.mxu0 %v4445
    %5127 = vmatprep.subr.bf16.mxu0 %v4454
    %5128 = vmatpush1.bf16.msra.mxu0 %v4453
    %5129 = vmatprep.subr.bf16.mxu0 %v4462
    %5130 = vmatpush1.bf16.msra.mxu0 %v4461
    %5131 = vmatprep.subr.bf16.mxu0 %v4470
    %5132 = vmatpush1.bf16.msra.mxu0 %v4469
    %5133 = vmatprep.subr.bf16.mxu0 %v4478
    %5134 = vmatpush1.bf16.msra.mxu0 %v4477
    %5135 = vmatprep.subr.bf16.mxu0 %v4486
    %5136 = vmatpush1.bf16.msra.mxu0 %v4485
    %5137 = vmatprep.subr.bf16.mxu0 %v4494
    %5138 = vmatpush1.bf16.msra.mxu0 %v4493
    %5139 = vmatprep.subr.bf16.mxu0 %v4502
    %5140 = vmatpush1.bf16.msra.mxu0 %v4501
    %5141 = vmatprep.subr.bf16.mxu0 %v4510
    %5142 = vmatpush1.bf16.msra.mxu0 %v4509
    %5143 = vmatprep.subr.bf16.mxu0 %v4518
    %5144 = vmatpush1.bf16.msra.mxu0 %v4517
    %5145 = vmatprep.subr.bf16.mxu0 %v4526
    %5146 = vmatpush1.bf16.msra.mxu0 %v4525
    %5147 = vmatprep.subr.bf16.mxu0 %v4534
    %5148 = vmatpush1.bf16.msra.mxu0 %v4533
    %5149 = vmatprep.subr.bf16.mxu0 %v4542
    %5150 = vmatpush1.bf16.msra.mxu0 %v4541
    %5151 = vmatprep.subr.bf16.mxu0 %v4550
    %5152 = vmatpush1.bf16.msra.mxu0 %v4549
    %5153 = vmatprep.subr.bf16.mxu0 %v4558
    %5154 = vmatpush1.bf16.msra.mxu0 %v4557
    %5155 = vmatprep.subr.bf16.mxu0 %v4566
    %5156 = vmatpush1.bf16.msra.mxu0 %v4565
    %5157 = vmatprep.mubr.bf16.mxu0 %v3372
    %5158 = vmatmul.mubr.bf16.gmra.mrb[0].mxu0 %v3371
    %v5159 = vpop.f32.mrb[0].mxu0
    %v5160 = vadd.f32 %v3652, %v5159
    %v5161 = vpop.f32.mrb[0].mxu0
    %v5162 = vadd.f32 %v3656, %v5161
    %v5163 = vpop.f32.mrb[0].mxu0
    %v5164 = vadd.f32 %v3652, %v5163
    %v5165 = vpop.f32.mrb[0].mxu0
    %v5166 = vadd.f32 %v3656, %v5165
    %5167 = vdwg.mxu0
    %5168 = vmatprep.subr.bf16.mxu0 %v4574
    %5169 = vmatpush1.bf16.msra.mxu0 %v4573
    %5170 = vmatprep.subr.bf16.mxu0 %v4582
    %5171 = vmatpush1.bf16.msra.mxu0 %v4581
    %5172 = vmatprep.subr.bf16.mxu0 %v4590
    %5173 = vmatpush1.bf16.msra.mxu0 %v4589
    %5174 = vmatprep.subr.bf16.mxu0 %v4598
    %5175 = vmatpush1.bf16.msra.mxu0 %v4597
    %5176 = vmatprep.subr.bf16.mxu0 %v4606
    %5177 = vmatpush1.bf16.msra.mxu0 %v4605
    %5178 = vmatprep.subr.bf16.mxu0 %v4614
    %5179 = vmatpush1.bf16.msra.mxu0 %v4613
    %5180 = vmatprep.subr.bf16.mxu0 %v4622
    %5181 = vmatpush1.bf16.msra.mxu0 %v4621
    %5182 = vmatprep.subr.bf16.mxu0 %v4630
    %5183 = vmatpush1.bf16.msra.mxu0 %v4629
    %5184 = vmatprep.subr.bf16.mxu0 %v4638
    %5185 = vmatpush1.bf16.msra.mxu0 %v4637
    %5186 = vmatprep.subr.bf16.mxu0 %v4646
    %5187 = vmatpush1.bf16.msra.mxu0 %v4645
    %5188 = vmatprep.subr.bf16.mxu0 %v4654
    %5189 = vmatpush1.bf16.msra.mxu0 %v4653
    %5190 = vmatprep.subr.bf16.mxu0 %v4662
    %5191 = vmatpush1.bf16.msra.mxu0 %v4661
    %5192 = vmatprep.subr.bf16.mxu0 %v4670
    %5193 = vmatpush1.bf16.msra.mxu0 %v4669
    %5194 = vmatprep.subr.bf16.mxu0 %v4678
    %5195 = vmatpush1.bf16.msra.mxu0 %v4677
    %5196 = vmatprep.subr.bf16.mxu0 %v4686
    %5197 = vmatpush1.bf16.msra.mxu0 %v4685
    %5198 = vmatprep.subr.bf16.mxu0 %v4694
    %5199 = vmatpush1.bf16.msra.mxu0 %v4693
    %5200 = vmatprep.mubr.bf16.mxu0 %v3374
    %5201 = vmatmul.mubr.bf16.gmra.mrb[0].mxu0 %v3373
    %v5202 = vpop.f32.mrb[0].mxu0
    %v5203 = vadd.f32 %v5160, %v5202
    %v5204 = vpop.f32.mrb[0].mxu0
    %v5205 = vadd.f32 %v5162, %v5204
    %v5206 = vpop.f32.mrb[0].mxu0
    %v5207 = vadd.f32 %v5164, %v5206
    %v5208 = vpop.f32.mrb[0].mxu0
    %v5209 = vadd.f32 %v5166, %v5208
    %5210 = vdwg.mxu0
    %5211 = vmatprep.subr.bf16.mxu0 %v4448
    %5212 = vmatpush1.bf16.msra.mxu0 %v4447
    %5213 = vmatprep.subr.bf16.mxu0 %v4456
    %5214 = vmatpush1.bf16.msra.mxu0 %v4455
    %5215 = vmatprep.subr.bf16.mxu0 %v4464
    %5216 = vmatpush1.bf16.msra.mxu0 %v4463
    %5217 = vmatprep.subr.bf16.mxu0 %v4472
    %5218 = vmatpush1.bf16.msra.mxu0 %v4471
    %5219 = vmatprep.subr.bf16.mxu0 %v4480
    %5220 = vmatpush1.bf16.msra.mxu0 %v4479
    %5221 = vmatprep.subr.bf16.mxu0 %v4488
    %5222 = vmatpush1.bf16.msra.mxu0 %v4487
    %5223 = vmatprep.subr.bf16.mxu0 %v4496
    %5224 = vmatpush1.bf16.msra.mxu0 %v4495
    %5225 = vmatprep.subr.bf16.mxu0 %v4504
    %5226 = vmatpush1.bf16.msra.mxu0 %v4503
    %5227 = vmatprep.subr.bf16.mxu0 %v4512
    %5228 = vmatpush1.bf16.msra.mxu0 %v4511
    %5229 = vmatprep.subr.bf16.mxu0 %v4520
    %5230 = vmatpush1.bf16.msra.mxu0 %v4519
    %5231 = vmatprep.subr.bf16.mxu0 %v4528
    %5232 = vmatpush1.bf16.msra.mxu0 %v4527
    %5233 = vmatprep.subr.bf16.mxu0 %v4536
    %5234 = vmatpush1.bf16.msra.mxu0 %v4535
    %5235 = vmatprep.subr.bf16.mxu0 %v4544
    %5236 = vmatpush1.bf16.msra.mxu0 %v4543
    %5237 = vmatprep.subr.bf16.mxu0 %v4552
    %5238 = vmatpush1.bf16.msra.mxu0 %v4551
    %5239 = vmatprep.subr.bf16.mxu0 %v4560
    %5240 = vmatpush1.bf16.msra.mxu0 %v4559
    %5241 = vmatprep.subr.bf16.mxu0 %v4568
    %5242 = vmatpush1.bf16.msra.mxu0 %v4567
    %5243 = vmatprep.mubr.bf16.mxu0 %v3372
    %5244 = vmatmul.mubr.bf16.gmra.mrb[0].mxu0 %v3371
    %v5245 = vpop.f32.mrb[0].mxu0
    %v5246 = vadd.f32 %v3660, %v5245
    %v5247 = vpop.f32.mrb[0].mxu0
    %v5248 = vadd.f32 %v3664, %v5247
    %v5249 = vpop.f32.mrb[0].mxu0
    %v5250 = vadd.f32 %v3660, %v5249
    %v5251 = vpop.f32.mrb[0].mxu0
    %v5252 = vadd.f32 %v3664, %v5251
    %5253 = vdwg.mxu0
    %5254 = vmatprep.subr.bf16.mxu0 %v4576
    %5255 = vmatpush1.bf16.msra.mxu0 %v4575
    %5256 = vmatprep.subr.bf16.mxu0 %v4584
    %5257 = vmatpush1.bf16.msra.mxu0 %v4583
    %5258 = vmatprep.subr.bf16.mxu0 %v4592
    %5259 = vmatpush1.bf16.msra.mxu0 %v4591
    %5260 = vmatprep.subr.bf16.mxu0 %v4600
    %5261 = vmatpush1.bf16.msra.mxu0 %v4599
    %5262 = vmatprep.subr.bf16.mxu0 %v4608
    %5263 = vmatpush1.bf16.msra.mxu0 %v4607
    %5264 = vmatprep.subr.bf16.mxu0 %v4616
    %5265 = vmatpush1.bf16.msra.mxu0 %v4615
    %5266 = vmatprep.subr.bf16.mxu0 %v4624
    %5267 = vmatpush1.bf16.msra.mxu0 %v4623
    %5268 = vmatprep.subr.bf16.mxu0 %v4632
    %5269 = vmatpush1.bf16.msra.mxu0 %v4631
    %5270 = vmatprep.subr.bf16.mxu0 %v4640
    %5271 = vmatpush1.bf16.msra.mxu0 %v4639
    %5272 = vmatprep.subr.bf16.mxu0 %v4648
    %5273 = vmatpush1.bf16.msra.mxu0 %v4647
    %5274 = vmatprep.subr.bf16.mxu0 %v4656
    %5275 = vmatpush1.bf16.msra.mxu0 %v4655
    %5276 = vmatprep.subr.bf16.mxu0 %v4664
    %5277 = vmatpush1.bf16.msra.mxu0 %v4663
    %5278 = vmatprep.subr.bf16.mxu0 %v4672
    %5279 = vmatpush1.bf16.msra.mxu0 %v4671
    %5280 = vmatprep.subr.bf16.mxu0 %v4680
    %5281 = vmatpush1.bf16.msra.mxu0 %v4679
    %5282 = vmatprep.subr.bf16.mxu0 %v4688
    %5283 = vmatpush1.bf16.msra.mxu0 %v4687
    %5284 = vmatprep.subr.bf16.mxu0 %v4696
    %5285 = vmatpush1.bf16.msra.mxu0 %v4695
    %5286 = vmatprep.mubr.bf16.mxu0 %v3374
    %5287 = vmatmul.mubr.bf16.gmra.mrb[0].mxu0 %v3373
    %v5288 = vpop.f32.mrb[0].mxu0
    %v5289 = vadd.f32 %v5246, %v5288
    %v5290 = vpop.f32.mrb[0].mxu0
    %v5291 = vadd.f32 %v5248, %v5290
    %v5292 = vpop.f32.mrb[0].mxu0
    %v5293 = vadd.f32 %v5250, %v5292
    %v5294 = vpop.f32.mrb[0].mxu0
    %v5295 = vadd.f32 %v5252, %v5294
    %5296 = vdwg.mxu0
    %v5297 = vtanh.pop %v5031
    %v5298 = vtanh.pop %v5033
    %v5299 = vtanh.pop %v5117
    %v5300 = vtanh.pop %v5119
    %v5301 = vtanh.pop %v5203
    %v5302 = vtanh.pop %v5205
    %v5303 = vtanh.pop %v5289
    %v5304 = vtanh.pop %v5291
    %v5305 = vtanh.pop %v5035
    %v5306 = vtanh.pop %v5037
    %v5307 = vtanh.pop %v5121
    %v5308 = vtanh.pop %v5123
    %v5309 = vtanh.pop %v5207
    %v5310 = vtanh.pop %v5209
    %v5311 = vtanh.pop %v5293
    %v5312 = vtanh.pop %v5295
    %v5313 = vpack.c.bf16 %v5305, %v5297
    %v5314 = vpack.c.bf16 %v5306, %v5298
    %v5315 = vpack.c.bf16 %v5307, %v5299
    %v5316 = vpack.c.bf16 %v5308, %v5300
    %v5317 = vpack.c.bf16 %v5309, %v5301
    %v5318 = vpack.c.bf16 %v5310, %v5302
    %v5319 = vpack.c.bf16 %v5311, %v5303
    %v5320 = vpack.c.bf16 %v5312, %v5304
    %v5321 = vld [vmem:[#allocation16] sm:$0xff]
    %v5322 = vld [vmem:[#allocation16 + $0x8] sm:$0xff]
    %v5323 = vld [vmem:[#allocation16 + $0x10] sm:$0xff]
    %v5324 = vld [vmem:[#allocation16 + $0x18] sm:$0xff]
    %v5325 = vld [vmem:[#allocation16 + $0x20] sm:$0xff]
    %v5326 = vld [vmem:[#allocation16 + $0x28] sm:$0xff]
    %v5327 = vld [vmem:[#allocation16 + $0x30] sm:$0xff]
    %v5328 = vld [vmem:[#allocation16 + $0x38] sm:$0xff]
    %v5329 = vld [vmem:[#allocation16 + $0x40] sm:$0xff]
    %v5330 = vld [vmem:[#allocation16 + $0x48] sm:$0xff]
    %v5331 = vld [vmem:[#allocation16 + $0x50] sm:$0xff]
    %v5332 = vld [vmem:[#allocation16 + $0x58] sm:$0xff]
    %v5333 = vld [vmem:[#allocation16 + $0x60] sm:$0xff]
    %v5334 = vld [vmem:[#allocation16 + $0x68] sm:$0xff]
    %v5335 = vld [vmem:[#allocation16 + $0x70] sm:$0xff]
    %v5336 = vld [vmem:[#allocation16 + $0x78] sm:$0xff]
    %v5337 = vld [vmem:[#allocation16 + $0x80] sm:$0xff]
    %v5338 = vld [vmem:[#allocation16 + $0x88] sm:$0xff]
    %v5339 = vld [vmem:[#allocation16 + $0x90] sm:$0xff]
    %v5340 = vld [vmem:[#allocation16 + $0x98] sm:$0xff]
    %v5341 = vld [vmem:[#allocation16 + $0xa0] sm:$0xff]
    %v5342 = vld [vmem:[#allocation16 + $0xa8] sm:$0xff]
    %v5343 = vld [vmem:[#allocation16 + $0xb0] sm:$0xff]
    %v5344 = vld [vmem:[#allocation16 + $0xb8] sm:$0xff]
    %v5345 = vld [vmem:[#allocation16 + $0xc0] sm:$0xff]
    %v5346 = vld [vmem:[#allocation16 + $0xc8] sm:$0xff]
    %v5347 = vld [vmem:[#allocation16 + $0xd0] sm:$0xff]
    %v5348 = vld [vmem:[#allocation16 + $0xd8] sm:$0xff]
    %v5349 = vld [vmem:[#allocation16 + $0xe0] sm:$0xff]
    %v5350 = vld [vmem:[#allocation16 + $0xe8] sm:$0xff]
    %v5351 = vld [vmem:[#allocation16 + $0xf0] sm:$0xff]
    %v5352 = vld [vmem:[#allocation16 + $0xf8] sm:$0xff]
    %v5353 = vld [vmem:[#allocation16 + $0x100] sm:$0xff]
    %v5354 = vld [vmem:[#allocation16 + $0x108] sm:$0xff]
    %v5355 = vld [vmem:[#allocation16 + $0x110] sm:$0xff]
    %v5356 = vld [vmem:[#allocation16 + $0x118] sm:$0xff]
    %v5357 = vld [vmem:[#allocation16 + $0x120] sm:$0xff]
    %v5358 = vld [vmem:[#allocation16 + $0x128] sm:$0xff]
    %v5359 = vld [vmem:[#allocation16 + $0x130] sm:$0xff]
    %v5360 = vld [vmem:[#allocation16 + $0x138] sm:$0xff]
    %v5361 = vld [vmem:[#allocation16 + $0x140] sm:$0xff]
    %v5362 = vld [vmem:[#allocation16 + $0x148] sm:$0xff]
    %v5363 = vld [vmem:[#allocation16 + $0x150] sm:$0xff]
    %v5364 = vld [vmem:[#allocation16 + $0x158] sm:$0xff]
    %v5365 = vld [vmem:[#allocation16 + $0x160] sm:$0xff]
    %v5366 = vld [vmem:[#allocation16 + $0x168] sm:$0xff]
    %v5367 = vld [vmem:[#allocation16 + $0x170] sm:$0xff]
    %v5368 = vld [vmem:[#allocation16 + $0x178] sm:$0xff]
    %v5369 = vld [vmem:[#allocation16 + $0x180] sm:$0xff]
    %v5370 = vld [vmem:[#allocation16 + $0x188] sm:$0xff]
    %v5371 = vld [vmem:[#allocation16 + $0x190] sm:$0xff]
    %v5372 = vld [vmem:[#allocation16 + $0x198] sm:$0xff]
    %v5373 = vld [vmem:[#allocation16 + $0x1a0] sm:$0xff]
    %v5374 = vld [vmem:[#allocation16 + $0x1a8] sm:$0xff]
    %v5375 = vld [vmem:[#allocation16 + $0x1b0] sm:$0xff]
    %v5376 = vld [vmem:[#allocation16 + $0x1b8] sm:$0xff]
    %v5377 = vld [vmem:[#allocation16 + $0x1c0] sm:$0xff]
    %v5378 = vld [vmem:[#allocation16 + $0x1c8] sm:$0xff]
    %v5379 = vld [vmem:[#allocation16 + $0x1d0] sm:$0xff]
    %v5380 = vld [vmem:[#allocation16 + $0x1d8] sm:$0xff]
    %v5381 = vld [vmem:[#allocation16 + $0x1e0] sm:$0xff]
    %v5382 = vld [vmem:[#allocation16 + $0x1e8] sm:$0xff]
    %v5383 = vld [vmem:[#allocation16 + $0x1f0] sm:$0xff]
    %v5384 = vld [vmem:[#allocation16 + $0x1f8] sm:$0xff]
    %v5385 = vld [vmem:[#allocation16 + $0x200] sm:$0xff]
    %v5386 = vld [vmem:[#allocation16 + $0x208] sm:$0xff]
    %v5387 = vld [vmem:[#allocation16 + $0x210] sm:$0xff]
    %v5388 = vld [vmem:[#allocation16 + $0x218] sm:$0xff]
    %v5389 = vld [vmem:[#allocation16 + $0x220] sm:$0xff]
    %v5390 = vld [vmem:[#allocation16 + $0x228] sm:$0xff]
    %v5391 = vld [vmem:[#allocation16 + $0x230] sm:$0xff]
    %v5392 = vld [vmem:[#allocation16 + $0x238] sm:$0xff]
    %v5393 = vld [vmem:[#allocation16 + $0x240] sm:$0xff]
    %v5394 = vld [vmem:[#allocation16 + $0x248] sm:$0xff]
    %v5395 = vld [vmem:[#allocation16 + $0x250] sm:$0xff]
    %v5396 = vld [vmem:[#allocation16 + $0x258] sm:$0xff]
    %v5397 = vld [vmem:[#allocation16 + $0x260] sm:$0xff]
    %v5398 = vld [vmem:[#allocation16 + $0x268] sm:$0xff]
    %v5399 = vld [vmem:[#allocation16 + $0x270] sm:$0xff]
    %v5400 = vld [vmem:[#allocation16 + $0x278] sm:$0xff]
    %v5401 = vld [vmem:[#allocation16 + $0x280] sm:$0xff]
    %v5402 = vld [vmem:[#allocation16 + $0x288] sm:$0xff]
    %v5403 = vld [vmem:[#allocation16 + $0x290] sm:$0xff]
    %v5404 = vld [vmem:[#allocation16 + $0x298] sm:$0xff]
    %v5405 = vld [vmem:[#allocation16 + $0x2a0] sm:$0xff]
    %v5406 = vld [vmem:[#allocation16 + $0x2a8] sm:$0xff]
    %v5407 = vld [vmem:[#allocation16 + $0x2b0] sm:$0xff]
    %v5408 = vld [vmem:[#allocation16 + $0x2b8] sm:$0xff]
    %v5409 = vld [vmem:[#allocation16 + $0x2c0] sm:$0xff]
    %v5410 = vld [vmem:[#allocation16 + $0x2c8] sm:$0xff]
    %v5411 = vld [vmem:[#allocation16 + $0x2d0] sm:$0xff]
    %v5412 = vld [vmem:[#allocation16 + $0x2d8] sm:$0xff]
    %v5413 = vld [vmem:[#allocation16 + $0x2e0] sm:$0xff]
    %v5414 = vld [vmem:[#allocation16 + $0x2e8] sm:$0xff]
    %v5415 = vld [vmem:[#allocation16 + $0x2f0] sm:$0xff]
    %v5416 = vld [vmem:[#allocation16 + $0x2f8] sm:$0xff]
    %v5417 = vld [vmem:[#allocation16 + $0x300] sm:$0xff]
    %v5418 = vld [vmem:[#allocation16 + $0x308] sm:$0xff]
    %v5419 = vld [vmem:[#allocation16 + $0x310] sm:$0xff]
    %v5420 = vld [vmem:[#allocation16 + $0x318] sm:$0xff]
    %v5421 = vld [vmem:[#allocation16 + $0x320] sm:$0xff]
    %v5422 = vld [vmem:[#allocation16 + $0x328] sm:$0xff]
    %v5423 = vld [vmem:[#allocation16 + $0x330] sm:$0xff]
    %v5424 = vld [vmem:[#allocation16 + $0x338] sm:$0xff]
    %v5425 = vld [vmem:[#allocation16 + $0x340] sm:$0xff]
    %v5426 = vld [vmem:[#allocation16 + $0x348] sm:$0xff]
    %v5427 = vld [vmem:[#allocation16 + $0x350] sm:$0xff]
    %v5428 = vld [vmem:[#allocation16 + $0x358] sm:$0xff]
    %v5429 = vld [vmem:[#allocation16 + $0x360] sm:$0xff]
    %v5430 = vld [vmem:[#allocation16 + $0x368] sm:$0xff]
    %v5431 = vld [vmem:[#allocation16 + $0x370] sm:$0xff]
    %v5432 = vld [vmem:[#allocation16 + $0x378] sm:$0xff]
    %v5433 = vld [vmem:[#allocation16 + $0x380] sm:$0xff]
    %v5434 = vld [vmem:[#allocation16 + $0x388] sm:$0xff]
    %v5435 = vld [vmem:[#allocation16 + $0x390] sm:$0xff]
    %v5436 = vld [vmem:[#allocation16 + $0x398] sm:$0xff]
    %v5437 = vld [vmem:[#allocation16 + $0x3a0] sm:$0xff]
    %v5438 = vld [vmem:[#allocation16 + $0x3a8] sm:$0xff]
    %v5439 = vld [vmem:[#allocation16 + $0x3b0] sm:$0xff]
    %v5440 = vld [vmem:[#allocation16 + $0x3b8] sm:$0xff]
    %v5441 = vld [vmem:[#allocation16 + $0x3c0] sm:$0xff]
    %v5442 = vld [vmem:[#allocation16 + $0x3c8] sm:$0xff]
    %v5443 = vld [vmem:[#allocation16 + $0x3d0] sm:$0xff]
    %v5444 = vld [vmem:[#allocation16 + $0x3d8] sm:$0xff]
    %v5445 = vld [vmem:[#allocation16 + $0x3e0] sm:$0xff]
    %v5446 = vld [vmem:[#allocation16 + $0x3e8] sm:$0xff]
    %v5447 = vld [vmem:[#allocation16 + $0x3f0] sm:$0xff]
    %v5448 = vld [vmem:[#allocation16 + $0x3f8] sm:$0xff]
    %v5449 = vld [vmem:[#allocation16 + $0x400] sm:$0xff]
    %v5450 = vld [vmem:[#allocation16 + $0x408] sm:$0xff]
    %v5451 = vld [vmem:[#allocation16 + $0x410] sm:$0xff]
    %v5452 = vld [vmem:[#allocation16 + $0x418] sm:$0xff]
    %v5453 = vld [vmem:[#allocation16 + $0x420] sm:$0xff]
    %v5454 = vld [vmem:[#allocation16 + $0x428] sm:$0xff]
    %v5455 = vld [vmem:[#allocation16 + $0x430] sm:$0xff]
    %v5456 = vld [vmem:[#allocation16 + $0x438] sm:$0xff]
    %v5457 = vld [vmem:[#allocation16 + $0x440] sm:$0xff]
    %v5458 = vld [vmem:[#allocation16 + $0x448] sm:$0xff]
    %v5459 = vld [vmem:[#allocation16 + $0x450] sm:$0xff]
    %v5460 = vld [vmem:[#allocation16 + $0x458] sm:$0xff]
    %v5461 = vld [vmem:[#allocation16 + $0x460] sm:$0xff]
    %v5462 = vld [vmem:[#allocation16 + $0x468] sm:$0xff]
    %v5463 = vld [vmem:[#allocation16 + $0x470] sm:$0xff]
    %v5464 = vld [vmem:[#allocation16 + $0x478] sm:$0xff]
    %v5465 = vld [vmem:[#allocation16 + $0x480] sm:$0xff]
    %v5466 = vld [vmem:[#allocation16 + $0x488] sm:$0xff]
    %v5467 = vld [vmem:[#allocation16 + $0x490] sm:$0xff]
    %v5468 = vld [vmem:[#allocation16 + $0x498] sm:$0xff]
    %v5469 = vld [vmem:[#allocation16 + $0x4a0] sm:$0xff]
    %v5470 = vld [vmem:[#allocation16 + $0x4a8] sm:$0xff]
    %v5471 = vld [vmem:[#allocation16 + $0x4b0] sm:$0xff]
    %v5472 = vld [vmem:[#allocation16 + $0x4b8] sm:$0xff]
    %v5473 = vld [vmem:[#allocation16 + $0x4c0] sm:$0xff]
    %v5474 = vld [vmem:[#allocation16 + $0x4c8] sm:$0xff]
    %v5475 = vld [vmem:[#allocation16 + $0x4d0] sm:$0xff]
    %v5476 = vld [vmem:[#allocation16 + $0x4d8] sm:$0xff]
    %v5477 = vld [vmem:[#allocation16 + $0x4e0] sm:$0xff]
    %v5478 = vld [vmem:[#allocation16 + $0x4e8] sm:$0xff]
    %v5479 = vld [vmem:[#allocation16 + $0x4f0] sm:$0xff]
    %v5480 = vld [vmem:[#allocation16 + $0x4f8] sm:$0xff]
    %v5481 = vld [vmem:[#allocation16 + $0x500] sm:$0xff]
    %v5482 = vld [vmem:[#allocation16 + $0x508] sm:$0xff]
    %v5483 = vld [vmem:[#allocation16 + $0x510] sm:$0xff]
    %v5484 = vld [vmem:[#allocation16 + $0x518] sm:$0xff]
    %v5485 = vld [vmem:[#allocation16 + $0x520] sm:$0xff]
    %v5486 = vld [vmem:[#allocation16 + $0x528] sm:$0xff]
    %v5487 = vld [vmem:[#allocation16 + $0x530] sm:$0xff]
    %v5488 = vld [vmem:[#allocation16 + $0x538] sm:$0xff]
    %v5489 = vld [vmem:[#allocation16 + $0x540] sm:$0xff]
    %v5490 = vld [vmem:[#allocation16 + $0x548] sm:$0xff]
    %v5491 = vld [vmem:[#allocation16 + $0x550] sm:$0xff]
    %v5492 = vld [vmem:[#allocation16 + $0x558] sm:$0xff]
    %v5493 = vld [vmem:[#allocation16 + $0x560] sm:$0xff]
    %v5494 = vld [vmem:[#allocation16 + $0x568] sm:$0xff]
    %v5495 = vld [vmem:[#allocation16 + $0x570] sm:$0xff]
    %v5496 = vld [vmem:[#allocation16 + $0x578] sm:$0xff]
    %v5497 = vld [vmem:[#allocation16 + $0x580] sm:$0xff]
    %v5498 = vld [vmem:[#allocation16 + $0x588] sm:$0xff]
    %v5499 = vld [vmem:[#allocation16 + $0x590] sm:$0xff]
    %v5500 = vld [vmem:[#allocation16 + $0x598] sm:$0xff]
    %v5501 = vld [vmem:[#allocation16 + $0x5a0] sm:$0xff]
    %v5502 = vld [vmem:[#allocation16 + $0x5a8] sm:$0xff]
    %v5503 = vld [vmem:[#allocation16 + $0x5b0] sm:$0xff]
    %v5504 = vld [vmem:[#allocation16 + $0x5b8] sm:$0xff]
    %v5505 = vld [vmem:[#allocation16 + $0x5c0] sm:$0xff]
    %v5506 = vld [vmem:[#allocation16 + $0x5c8] sm:$0xff]
    %v5507 = vld [vmem:[#allocation16 + $0x5d0] sm:$0xff]
    %v5508 = vld [vmem:[#allocation16 + $0x5d8] sm:$0xff]
    %v5509 = vld [vmem:[#allocation16 + $0x5e0] sm:$0xff]
    %v5510 = vld [vmem:[#allocation16 + $0x5e8] sm:$0xff]
    %v5511 = vld [vmem:[#allocation16 + $0x5f0] sm:$0xff]
    %v5512 = vld [vmem:[#allocation16 + $0x5f8] sm:$0xff]
    %v5513 = vld [vmem:[#allocation16 + $0x600] sm:$0xff]
    %v5514 = vld [vmem:[#allocation16 + $0x608] sm:$0xff]
    %v5515 = vld [vmem:[#allocation16 + $0x610] sm:$0xff]
    %v5516 = vld [vmem:[#allocation16 + $0x618] sm:$0xff]
    %v5517 = vld [vmem:[#allocation16 + $0x620] sm:$0xff]
    %v5518 = vld [vmem:[#allocation16 + $0x628] sm:$0xff]
    %v5519 = vld [vmem:[#allocation16 + $0x630] sm:$0xff]
    %v5520 = vld [vmem:[#allocation16 + $0x638] sm:$0xff]
    %v5521 = vld [vmem:[#allocation16 + $0x640] sm:$0xff]
    %v5522 = vld [vmem:[#allocation16 + $0x648] sm:$0xff]
    %v5523 = vld [vmem:[#allocation16 + $0x650] sm:$0xff]
    %v5524 = vld [vmem:[#allocation16 + $0x658] sm:$0xff]
    %v5525 = vld [vmem:[#allocation16 + $0x660] sm:$0xff]
    %v5526 = vld [vmem:[#allocation16 + $0x668] sm:$0xff]
    %v5527 = vld [vmem:[#allocation16 + $0x670] sm:$0xff]
    %v5528 = vld [vmem:[#allocation16 + $0x678] sm:$0xff]
    %v5529 = vld [vmem:[#allocation16 + $0x680] sm:$0xff]
    %v5530 = vld [vmem:[#allocation16 + $0x688] sm:$0xff]
    %v5531 = vld [vmem:[#allocation16 + $0x690] sm:$0xff]
    %v5532 = vld [vmem:[#allocation16 + $0x698] sm:$0xff]
    %v5533 = vld [vmem:[#allocation16 + $0x6a0] sm:$0xff]
    %v5534 = vld [vmem:[#allocation16 + $0x6a8] sm:$0xff]
    %v5535 = vld [vmem:[#allocation16 + $0x6b0] sm:$0xff]
    %v5536 = vld [vmem:[#allocation16 + $0x6b8] sm:$0xff]
    %v5537 = vld [vmem:[#allocation16 + $0x6c0] sm:$0xff]
    %v5538 = vld [vmem:[#allocation16 + $0x6c8] sm:$0xff]
    %v5539 = vld [vmem:[#allocation16 + $0x6d0] sm:$0xff]
    %v5540 = vld [vmem:[#allocation16 + $0x6d8] sm:$0xff]
    %v5541 = vld [vmem:[#allocation16 + $0x6e0] sm:$0xff]
    %v5542 = vld [vmem:[#allocation16 + $0x6e8] sm:$0xff]
    %v5543 = vld [vmem:[#allocation16 + $0x6f0] sm:$0xff]
    %v5544 = vld [vmem:[#allocation16 + $0x6f8] sm:$0xff]
    %v5545 = vld [vmem:[#allocation16 + $0x700] sm:$0xff]
    %v5546 = vld [vmem:[#allocation16 + $0x708] sm:$0xff]
    %v5547 = vld [vmem:[#allocation16 + $0x710] sm:$0xff]
    %v5548 = vld [vmem:[#allocation16 + $0x718] sm:$0xff]
    %v5549 = vld [vmem:[#allocation16 + $0x720] sm:$0xff]
    %v5550 = vld [vmem:[#allocation16 + $0x728] sm:$0xff]
    %v5551 = vld [vmem:[#allocation16 + $0x730] sm:$0xff]
    %v5552 = vld [vmem:[#allocation16 + $0x738] sm:$0xff]
    %v5553 = vld [vmem:[#allocation16 + $0x740] sm:$0xff]
    %v5554 = vld [vmem:[#allocation16 + $0x748] sm:$0xff]
    %v5555 = vld [vmem:[#allocation16 + $0x750] sm:$0xff]
    %v5556 = vld [vmem:[#allocation16 + $0x758] sm:$0xff]
    %v5557 = vld [vmem:[#allocation16 + $0x760] sm:$0xff]
    %v5558 = vld [vmem:[#allocation16 + $0x768] sm:$0xff]
    %v5559 = vld [vmem:[#allocation16 + $0x770] sm:$0xff]
    %v5560 = vld [vmem:[#allocation16 + $0x778] sm:$0xff]
    %v5561 = vld [vmem:[#allocation16 + $0x780] sm:$0xff]
    %v5562 = vld [vmem:[#allocation16 + $0x788] sm:$0xff]
    %v5563 = vld [vmem:[#allocation16 + $0x790] sm:$0xff]
    %v5564 = vld [vmem:[#allocation16 + $0x798] sm:$0xff]
    %v5565 = vld [vmem:[#allocation16 + $0x7a0] sm:$0xff]
    %v5566 = vld [vmem:[#allocation16 + $0x7a8] sm:$0xff]
    %v5567 = vld [vmem:[#allocation16 + $0x7b0] sm:$0xff]
    %v5568 = vld [vmem:[#allocation16 + $0x7b8] sm:$0xff]
    %v5569 = vld [vmem:[#allocation16 + $0x7c0] sm:$0xff]
    %v5570 = vld [vmem:[#allocation16 + $0x7c8] sm:$0xff]
    %v5571 = vld [vmem:[#allocation16 + $0x7d0] sm:$0xff]
    %v5572 = vld [vmem:[#allocation16 + $0x7d8] sm:$0xff]
    %v5573 = vld [vmem:[#allocation16 + $0x7e0] sm:$0xff]
    %v5574 = vld [vmem:[#allocation16 + $0x7e8] sm:$0xff]
    %v5575 = vld [vmem:[#allocation16 + $0x7f0] sm:$0xff]
    %v5576 = vld [vmem:[#allocation16 + $0x7f8] sm:$0xff]
    %v5577 = vld [vmem:[#allocation18] sm:$0xf]
    %v5579 = vlaneseq
    %v5580 = vshrl.u32 %v5579, 7
    %v5581 = vsub.s32 0, %v5580
    %v5582 = vrot.slane %v5577, %v5581
    %v5583 = vlaneseq
    %v5584 = vshrl.u32 %v5583, 7
    %v5585 = vsub.s32 1, %v5584
    %v5586 = vrot.slane %v5577, %v5585
    %v5587 = vlaneseq
    %v5588 = vshrl.u32 %v5587, 7
    %v5589 = vsub.s32 2, %v5588
    %v5590 = vrot.slane %v5577, %v5589
    %v5591 = vlaneseq
    %v5592 = vshrl.u32 %v5591, 7
    %v5593 = vsub.s32 3, %v5592
    %v5594 = vrot.slane %v5577, %v5593
    %v5855 = vunpack.c.l.b16 %v5321
    %v5856 = vunpack.c.h.b16 %v5321
    %v5857 = vunpack.c.l.b16 %v5322
    %v5858 = vunpack.c.h.b16 %v5322
    %v5859 = vunpack.c.l.b16 %v5323
    %v5860 = vunpack.c.h.b16 %v5323
    %v5861 = vunpack.c.l.b16 %v5324
    %v5862 = vunpack.c.h.b16 %v5324
    %v5863 = vunpack.c.l.b16 %v5325
    %v5864 = vunpack.c.h.b16 %v5325
    %v5865 = vunpack.c.l.b16 %v5326
    %v5866 = vunpack.c.h.b16 %v5326
    %v5867 = vunpack.c.l.b16 %v5327
    %v5868 = vunpack.c.h.b16 %v5327
    %v5869 = vunpack.c.l.b16 %v5328
    %v5870 = vunpack.c.h.b16 %v5328
    %v5871 = vunpack.c.l.b16 %v5329
    %v5872 = vunpack.c.h.b16 %v5329
    %v5873 = vunpack.c.l.b16 %v5330
    %v5874 = vunpack.c.h.b16 %v5330
    %v5875 = vunpack.c.l.b16 %v5331
    %v5876 = vunpack.c.h.b16 %v5331
    %v5877 = vunpack.c.l.b16 %v5332
    %v5878 = vunpack.c.h.b16 %v5332
    %v5879 = vunpack.c.l.b16 %v5333
    %v5880 = vunpack.c.h.b16 %v5333
    %v5881 = vunpack.c.l.b16 %v5334
    %v5882 = vunpack.c.h.b16 %v5334
    %v5883 = vunpack.c.l.b16 %v5335
    %v5884 = vunpack.c.h.b16 %v5335
    %v5885 = vunpack.c.l.b16 %v5336
    %v5886 = vunpack.c.h.b16 %v5336
    %v5887 = vunpack.c.l.b16 %v5337
    %v5888 = vunpack.c.h.b16 %v5337
    %v5889 = vunpack.c.l.b16 %v5338
    %v5890 = vunpack.c.h.b16 %v5338
    %v5891 = vunpack.c.l.b16 %v5339
    %v5892 = vunpack.c.h.b16 %v5339
    %v5893 = vunpack.c.l.b16 %v5340
    %v5894 = vunpack.c.h.b16 %v5340
    %v5895 = vunpack.c.l.b16 %v5341
    %v5896 = vunpack.c.h.b16 %v5341
    %v5897 = vunpack.c.l.b16 %v5342
    %v5898 = vunpack.c.h.b16 %v5342
    %v5899 = vunpack.c.l.b16 %v5343
    %v5900 = vunpack.c.h.b16 %v5343
    %v5901 = vunpack.c.l.b16 %v5344
    %v5902 = vunpack.c.h.b16 %v5344
    %v5903 = vunpack.c.l.b16 %v5345
    %v5904 = vunpack.c.h.b16 %v5345
    %v5905 = vunpack.c.l.b16 %v5346
    %v5906 = vunpack.c.h.b16 %v5346
    %v5907 = vunpack.c.l.b16 %v5347
    %v5908 = vunpack.c.h.b16 %v5347
    %v5909 = vunpack.c.l.b16 %v5348
    %v5910 = vunpack.c.h.b16 %v5348
    %v5911 = vunpack.c.l.b16 %v5349
    %v5912 = vunpack.c.h.b16 %v5349
    %v5913 = vunpack.c.l.b16 %v5350
    %v5914 = vunpack.c.h.b16 %v5350
    %v5915 = vunpack.c.l.b16 %v5351
    %v5916 = vunpack.c.h.b16 %v5351
    %v5917 = vunpack.c.l.b16 %v5352
    %v5918 = vunpack.c.h.b16 %v5352
    %v5919 = vunpack.c.l.b16 %v5353
    %v5920 = vunpack.c.h.b16 %v5353
    %v5921 = vunpack.c.l.b16 %v5354
    %v5922 = vunpack.c.h.b16 %v5354
    %v5923 = vunpack.c.l.b16 %v5355
    %v5924 = vunpack.c.h.b16 %v5355
    %v5925 = vunpack.c.l.b16 %v5356
    %v5926 = vunpack.c.h.b16 %v5356
    %v5927 = vunpack.c.l.b16 %v5357
    %v5928 = vunpack.c.h.b16 %v5357
    %v5929 = vunpack.c.l.b16 %v5358
    %v5930 = vunpack.c.h.b16 %v5358
    %v5931 = vunpack.c.l.b16 %v5359
    %v5932 = vunpack.c.h.b16 %v5359
    %v5933 = vunpack.c.l.b16 %v5360
    %v5934 = vunpack.c.h.b16 %v5360
    %v5935 = vunpack.c.l.b16 %v5361
    %v5936 = vunpack.c.h.b16 %v5361
    %v5937 = vunpack.c.l.b16 %v5362
    %v5938 = vunpack.c.h.b16 %v5362
    %v5939 = vunpack.c.l.b16 %v5363
    %v5940 = vunpack.c.h.b16 %v5363
    %v5941 = vunpack.c.l.b16 %v5364
    %v5942 = vunpack.c.h.b16 %v5364
    %v5943 = vunpack.c.l.b16 %v5365
    %v5944 = vunpack.c.h.b16 %v5365
    %v5945 = vunpack.c.l.b16 %v5366
    %v5946 = vunpack.c.h.b16 %v5366
    %v5947 = vunpack.c.l.b16 %v5367
    %v5948 = vunpack.c.h.b16 %v5367
    %v5949 = vunpack.c.l.b16 %v5368
    %v5950 = vunpack.c.h.b16 %v5368
    %v5951 = vunpack.c.l.b16 %v5369
    %v5952 = vunpack.c.h.b16 %v5369
    %v5953 = vunpack.c.l.b16 %v5370
    %v5954 = vunpack.c.h.b16 %v5370
    %v5955 = vunpack.c.l.b16 %v5371
    %v5956 = vunpack.c.h.b16 %v5371
    %v5957 = vunpack.c.l.b16 %v5372
    %v5958 = vunpack.c.h.b16 %v5372
    %v5959 = vunpack.c.l.b16 %v5373
    %v5960 = vunpack.c.h.b16 %v5373
    %v5961 = vunpack.c.l.b16 %v5374
    %v5962 = vunpack.c.h.b16 %v5374
    %v5963 = vunpack.c.l.b16 %v5375
    %v5964 = vunpack.c.h.b16 %v5375
    %v5965 = vunpack.c.l.b16 %v5376
    %v5966 = vunpack.c.h.b16 %v5376
    %v5967 = vunpack.c.l.b16 %v5377
    %v5968 = vunpack.c.h.b16 %v5377
    %v5969 = vunpack.c.l.b16 %v5378
    %v5970 = vunpack.c.h.b16 %v5378
    %v5971 = vunpack.c.l.b16 %v5379
    %v5972 = vunpack.c.h.b16 %v5379
    %v5973 = vunpack.c.l.b16 %v5380
    %v5974 = vunpack.c.h.b16 %v5380
    %v5975 = vunpack.c.l.b16 %v5381
    %v5976 = vunpack.c.h.b16 %v5381
    %v5977 = vunpack.c.l.b16 %v5382
    %v5978 = vunpack.c.h.b16 %v5382
    %v5979 = vunpack.c.l.b16 %v5383
    %v5980 = vunpack.c.h.b16 %v5383
    %v5981 = vunpack.c.l.b16 %v5384
    %v5982 = vunpack.c.h.b16 %v5384
    %v5983 = vunpack.c.l.b16 %v5385
    %v5984 = vunpack.c.h.b16 %v5385
    %v5985 = vunpack.c.l.b16 %v5386
    %v5986 = vunpack.c.h.b16 %v5386
    %v5987 = vunpack.c.l.b16 %v5387
    %v5988 = vunpack.c.h.b16 %v5387
    %v5989 = vunpack.c.l.b16 %v5388
    %v5990 = vunpack.c.h.b16 %v5388
    %v5991 = vunpack.c.l.b16 %v5389
    %v5992 = vunpack.c.h.b16 %v5389
    %v5993 = vunpack.c.l.b16 %v5390
    %v5994 = vunpack.c.h.b16 %v5390
    %v5995 = vunpack.c.l.b16 %v5391
    %v5996 = vunpack.c.h.b16 %v5391
    %v5997 = vunpack.c.l.b16 %v5392
    %v5998 = vunpack.c.h.b16 %v5392
    %v5999 = vunpack.c.l.b16 %v5393
    %v6000 = vunpack.c.h.b16 %v5393
    %v6001 = vunpack.c.l.b16 %v5394
    %v6002 = vunpack.c.h.b16 %v5394
    %v6003 = vunpack.c.l.b16 %v5395
    %v6004 = vunpack.c.h.b16 %v5395
    %v6005 = vunpack.c.l.b16 %v5396
    %v6006 = vunpack.c.h.b16 %v5396
    %v6007 = vunpack.c.l.b16 %v5397
    %v6008 = vunpack.c.h.b16 %v5397
    %v6009 = vunpack.c.l.b16 %v5398
    %v6010 = vunpack.c.h.b16 %v5398
    %v6011 = vunpack.c.l.b16 %v5399
    %v6012 = vunpack.c.h.b16 %v5399
    %v6013 = vunpack.c.l.b16 %v5400
    %v6014 = vunpack.c.h.b16 %v5400
    %v6015 = vunpack.c.l.b16 %v5401
    %v6016 = vunpack.c.h.b16 %v5401
    %v6017 = vunpack.c.l.b16 %v5402
    %v6018 = vunpack.c.h.b16 %v5402
    %v6019 = vunpack.c.l.b16 %v5403
    %v6020 = vunpack.c.h.b16 %v5403
    %v6021 = vunpack.c.l.b16 %v5404
    %v6022 = vunpack.c.h.b16 %v5404
    %v6023 = vunpack.c.l.b16 %v5405
    %v6024 = vunpack.c.h.b16 %v5405
    %v6025 = vunpack.c.l.b16 %v5406
    %v6026 = vunpack.c.h.b16 %v5406
    %v6027 = vunpack.c.l.b16 %v5407
    %v6028 = vunpack.c.h.b16 %v5407
    %v6029 = vunpack.c.l.b16 %v5408
    %v6030 = vunpack.c.h.b16 %v5408
    %v6031 = vunpack.c.l.b16 %v5409
    %v6032 = vunpack.c.h.b16 %v5409
    %v6033 = vunpack.c.l.b16 %v5410
    %v6034 = vunpack.c.h.b16 %v5410
    %v6035 = vunpack.c.l.b16 %v5411
    %v6036 = vunpack.c.h.b16 %v5411
    %v6037 = vunpack.c.l.b16 %v5412
    %v6038 = vunpack.c.h.b16 %v5412
    %v6039 = vunpack.c.l.b16 %v5413
    %v6040 = vunpack.c.h.b16 %v5413
    %v6041 = vunpack.c.l.b16 %v5414
    %v6042 = vunpack.c.h.b16 %v5414
    %v6043 = vunpack.c.l.b16 %v5415
    %v6044 = vunpack.c.h.b16 %v5415
    %v6045 = vunpack.c.l.b16 %v5416
    %v6046 = vunpack.c.h.b16 %v5416
    %v6047 = vunpack.c.l.b16 %v5417
    %v6048 = vunpack.c.h.b16 %v5417
    %v6049 = vunpack.c.l.b16 %v5418
    %v6050 = vunpack.c.h.b16 %v5418
    %v6051 = vunpack.c.l.b16 %v5419
    %v6052 = vunpack.c.h.b16 %v5419
    %v6053 = vunpack.c.l.b16 %v5420
    %v6054 = vunpack.c.h.b16 %v5420
    %v6055 = vunpack.c.l.b16 %v5421
    %v6056 = vunpack.c.h.b16 %v5421
    %v6057 = vunpack.c.l.b16 %v5422
    %v6058 = vunpack.c.h.b16 %v5422
    %v6059 = vunpack.c.l.b16 %v5423
    %v6060 = vunpack.c.h.b16 %v5423
    %v6061 = vunpack.c.l.b16 %v5424
    %v6062 = vunpack.c.h.b16 %v5424
    %v6063 = vunpack.c.l.b16 %v5425
    %v6064 = vunpack.c.h.b16 %v5425
    %v6065 = vunpack.c.l.b16 %v5426
    %v6066 = vunpack.c.h.b16 %v5426
    %v6067 = vunpack.c.l.b16 %v5427
    %v6068 = vunpack.c.h.b16 %v5427
    %v6069 = vunpack.c.l.b16 %v5428
    %v6070 = vunpack.c.h.b16 %v5428
    %v6071 = vunpack.c.l.b16 %v5429
    %v6072 = vunpack.c.h.b16 %v5429
    %v6073 = vunpack.c.l.b16 %v5430
    %v6074 = vunpack.c.h.b16 %v5430
    %v6075 = vunpack.c.l.b16 %v5431
    %v6076 = vunpack.c.h.b16 %v5431
    %v6077 = vunpack.c.l.b16 %v5432
    %v6078 = vunpack.c.h.b16 %v5432
    %v6079 = vunpack.c.l.b16 %v5433
    %v6080 = vunpack.c.h.b16 %v5433
    %v6081 = vunpack.c.l.b16 %v5434
    %v6082 = vunpack.c.h.b16 %v5434
    %v6083 = vunpack.c.l.b16 %v5435
    %v6084 = vunpack.c.h.b16 %v5435
    %v6085 = vunpack.c.l.b16 %v5436
    %v6086 = vunpack.c.h.b16 %v5436
    %v6087 = vunpack.c.l.b16 %v5437
    %v6088 = vunpack.c.h.b16 %v5437
    %v6089 = vunpack.c.l.b16 %v5438
    %v6090 = vunpack.c.h.b16 %v5438
    %v6091 = vunpack.c.l.b16 %v5439
    %v6092 = vunpack.c.h.b16 %v5439
    %v6093 = vunpack.c.l.b16 %v5440
    %v6094 = vunpack.c.h.b16 %v5440
    %v6095 = vunpack.c.l.b16 %v5441
    %v6096 = vunpack.c.h.b16 %v5441
    %v6097 = vunpack.c.l.b16 %v5442
    %v6098 = vunpack.c.h.b16 %v5442
    %v6099 = vunpack.c.l.b16 %v5443
    %v6100 = vunpack.c.h.b16 %v5443
    %v6101 = vunpack.c.l.b16 %v5444
    %v6102 = vunpack.c.h.b16 %v5444
    %v6103 = vunpack.c.l.b16 %v5445
    %v6104 = vunpack.c.h.b16 %v5445
    %v6105 = vunpack.c.l.b16 %v5446
    %v6106 = vunpack.c.h.b16 %v5446
    %v6107 = vunpack.c.l.b16 %v5447
    %v6108 = vunpack.c.h.b16 %v5447
    %v6109 = vunpack.c.l.b16 %v5448
    %v6110 = vunpack.c.h.b16 %v5448
    %v6111 = vunpack.c.l.b16 %v5449
    %v6112 = vunpack.c.h.b16 %v5449
    %v6113 = vunpack.c.l.b16 %v5450
    %v6114 = vunpack.c.h.b16 %v5450
    %v6115 = vunpack.c.l.b16 %v5451
    %v6116 = vunpack.c.h.b16 %v5451
    %v6117 = vunpack.c.l.b16 %v5452
    %v6118 = vunpack.c.h.b16 %v5452
    %v6119 = vunpack.c.l.b16 %v5453
    %v6120 = vunpack.c.h.b16 %v5453
    %v6121 = vunpack.c.l.b16 %v5454
    %v6122 = vunpack.c.h.b16 %v5454
    %v6123 = vunpack.c.l.b16 %v5455
    %v6124 = vunpack.c.h.b16 %v5455
    %v6125 = vunpack.c.l.b16 %v5456
    %v6126 = vunpack.c.h.b16 %v5456
    %v6127 = vunpack.c.l.b16 %v5457
    %v6128 = vunpack.c.h.b16 %v5457
    %v6129 = vunpack.c.l.b16 %v5458
    %v6130 = vunpack.c.h.b16 %v5458
    %v6131 = vunpack.c.l.b16 %v5459
    %v6132 = vunpack.c.h.b16 %v5459
    %v6133 = vunpack.c.l.b16 %v5460
    %v6134 = vunpack.c.h.b16 %v5460
    %v6135 = vunpack.c.l.b16 %v5461
    %v6136 = vunpack.c.h.b16 %v5461
    %v6137 = vunpack.c.l.b16 %v5462
    %v6138 = vunpack.c.h.b16 %v5462
    %v6139 = vunpack.c.l.b16 %v5463
    %v6140 = vunpack.c.h.b16 %v5463
    %v6141 = vunpack.c.l.b16 %v5464
    %v6142 = vunpack.c.h.b16 %v5464
    %v6143 = vunpack.c.l.b16 %v5465
    %v6144 = vunpack.c.h.b16 %v5465
    %v6145 = vunpack.c.l.b16 %v5466
    %v6146 = vunpack.c.h.b16 %v5466
    %v6147 = vunpack.c.l.b16 %v5467
    %v6148 = vunpack.c.h.b16 %v5467
    %v6149 = vunpack.c.l.b16 %v5468
    %v6150 = vunpack.c.h.b16 %v5468
    %v6151 = vunpack.c.l.b16 %v5469
    %v6152 = vunpack.c.h.b16 %v5469
    %v6153 = vunpack.c.l.b16 %v5470
    %v6154 = vunpack.c.h.b16 %v5470
    %v6155 = vunpack.c.l.b16 %v5471
    %v6156 = vunpack.c.h.b16 %v5471
    %v6157 = vunpack.c.l.b16 %v5472
    %v6158 = vunpack.c.h.b16 %v5472
    %v6159 = vunpack.c.l.b16 %v5473
    %v6160 = vunpack.c.h.b16 %v5473
    %v6161 = vunpack.c.l.b16 %v5474
    %v6162 = vunpack.c.h.b16 %v5474
    %v6163 = vunpack.c.l.b16 %v5475
    %v6164 = vunpack.c.h.b16 %v5475
    %v6165 = vunpack.c.l.b16 %v5476
    %v6166 = vunpack.c.h.b16 %v5476
    %v6167 = vunpack.c.l.b16 %v5477
    %v6168 = vunpack.c.h.b16 %v5477
    %v6169 = vunpack.c.l.b16 %v5478
    %v6170 = vunpack.c.h.b16 %v5478
    %v6171 = vunpack.c.l.b16 %v5479
    %v6172 = vunpack.c.h.b16 %v5479
    %v6173 = vunpack.c.l.b16 %v5480
    %v6174 = vunpack.c.h.b16 %v5480
    %v6175 = vunpack.c.l.b16 %v5481
    %v6176 = vunpack.c.h.b16 %v5481
    %v6177 = vunpack.c.l.b16 %v5482
    %v6178 = vunpack.c.h.b16 %v5482
    %v6179 = vunpack.c.l.b16 %v5483
    %v6180 = vunpack.c.h.b16 %v5483
    %v6181 = vunpack.c.l.b16 %v5484
    %v6182 = vunpack.c.h.b16 %v5484
    %v6183 = vunpack.c.l.b16 %v5485
    %v6184 = vunpack.c.h.b16 %v5485
    %v6185 = vunpack.c.l.b16 %v5486
    %v6186 = vunpack.c.h.b16 %v5486
    %v6187 = vunpack.c.l.b16 %v5487
    %v6188 = vunpack.c.h.b16 %v5487
    %v6189 = vunpack.c.l.b16 %v5488
    %v6190 = vunpack.c.h.b16 %v5488
    %v6191 = vunpack.c.l.b16 %v5489
    %v6192 = vunpack.c.h.b16 %v5489
    %v6193 = vunpack.c.l.b16 %v5490
    %v6194 = vunpack.c.h.b16 %v5490
    %v6195 = vunpack.c.l.b16 %v5491
    %v6196 = vunpack.c.h.b16 %v5491
    %v6197 = vunpack.c.l.b16 %v5492
    %v6198 = vunpack.c.h.b16 %v5492
    %v6199 = vunpack.c.l.b16 %v5493
    %v6200 = vunpack.c.h.b16 %v5493
    %v6201 = vunpack.c.l.b16 %v5494
    %v6202 = vunpack.c.h.b16 %v5494
    %v6203 = vunpack.c.l.b16 %v5495
    %v6204 = vunpack.c.h.b16 %v5495
    %v6205 = vunpack.c.l.b16 %v5496
    %v6206 = vunpack.c.h.b16 %v5496
    %v6207 = vunpack.c.l.b16 %v5497
    %v6208 = vunpack.c.h.b16 %v5497
    %v6209 = vunpack.c.l.b16 %v5498
    %v6210 = vunpack.c.h.b16 %v5498
    %v6211 = vunpack.c.l.b16 %v5499
    %v6212 = vunpack.c.h.b16 %v5499
    %v6213 = vunpack.c.l.b16 %v5500
    %v6214 = vunpack.c.h.b16 %v5500
    %v6215 = vunpack.c.l.b16 %v5501
    %v6216 = vunpack.c.h.b16 %v5501
    %v6217 = vunpack.c.l.b16 %v5502
    %v6218 = vunpack.c.h.b16 %v5502
    %v6219 = vunpack.c.l.b16 %v5503
    %v6220 = vunpack.c.h.b16 %v5503
    %v6221 = vunpack.c.l.b16 %v5504
    %v6222 = vunpack.c.h.b16 %v5504
    %v6223 = vunpack.c.l.b16 %v5505
    %v6224 = vunpack.c.h.b16 %v5505
    %v6225 = vunpack.c.l.b16 %v5506
    %v6226 = vunpack.c.h.b16 %v5506
    %v6227 = vunpack.c.l.b16 %v5507
    %v6228 = vunpack.c.h.b16 %v5507
    %v6229 = vunpack.c.l.b16 %v5508
    %v6230 = vunpack.c.h.b16 %v5508
    %v6231 = vunpack.c.l.b16 %v5509
    %v6232 = vunpack.c.h.b16 %v5509
    %v6233 = vunpack.c.l.b16 %v5510
    %v6234 = vunpack.c.h.b16 %v5510
    %v6235 = vunpack.c.l.b16 %v5511
    %v6236 = vunpack.c.h.b16 %v5511
    %v6237 = vunpack.c.l.b16 %v5512
    %v6238 = vunpack.c.h.b16 %v5512
    %v6239 = vunpack.c.l.b16 %v5513
    %v6240 = vunpack.c.h.b16 %v5513
    %v6241 = vunpack.c.l.b16 %v5514
    %v6242 = vunpack.c.h.b16 %v5514
    %v6243 = vunpack.c.l.b16 %v5515
    %v6244 = vunpack.c.h.b16 %v5515
    %v6245 = vunpack.c.l.b16 %v5516
    %v6246 = vunpack.c.h.b16 %v5516
    %v6247 = vunpack.c.l.b16 %v5517
    %v6248 = vunpack.c.h.b16 %v5517
    %v6249 = vunpack.c.l.b16 %v5518
    %v6250 = vunpack.c.h.b16 %v5518
    %v6251 = vunpack.c.l.b16 %v5519
    %v6252 = vunpack.c.h.b16 %v5519
    %v6253 = vunpack.c.l.b16 %v5520
    %v6254 = vunpack.c.h.b16 %v5520
    %v6255 = vunpack.c.l.b16 %v5521
    %v6256 = vunpack.c.h.b16 %v5521
    %v6257 = vunpack.c.l.b16 %v5522
    %v6258 = vunpack.c.h.b16 %v5522
    %v6259 = vunpack.c.l.b16 %v5523
    %v6260 = vunpack.c.h.b16 %v5523
    %v6261 = vunpack.c.l.b16 %v5524
    %v6262 = vunpack.c.h.b16 %v5524
    %v6263 = vunpack.c.l.b16 %v5525
    %v6264 = vunpack.c.h.b16 %v5525
    %v6265 = vunpack.c.l.b16 %v5526
    %v6266 = vunpack.c.h.b16 %v5526
    %v6267 = vunpack.c.l.b16 %v5527
    %v6268 = vunpack.c.h.b16 %v5527
    %v6269 = vunpack.c.l.b16 %v5528
    %v6270 = vunpack.c.h.b16 %v5528
    %v6271 = vunpack.c.l.b16 %v5529
    %v6272 = vunpack.c.h.b16 %v5529
    %v6273 = vunpack.c.l.b16 %v5530
    %v6274 = vunpack.c.h.b16 %v5530
    %v6275 = vunpack.c.l.b16 %v5531
    %v6276 = vunpack.c.h.b16 %v5531
    %v6277 = vunpack.c.l.b16 %v5532
    %v6278 = vunpack.c.h.b16 %v5532
    %v6279 = vunpack.c.l.b16 %v5533
    %v6280 = vunpack.c.h.b16 %v5533
    %v6281 = vunpack.c.l.b16 %v5534
    %v6282 = vunpack.c.h.b16 %v5534
    %v6283 = vunpack.c.l.b16 %v5535
    %v6284 = vunpack.c.h.b16 %v5535
    %v6285 = vunpack.c.l.b16 %v5536
    %v6286 = vunpack.c.h.b16 %v5536
    %v6287 = vunpack.c.l.b16 %v5537
    %v6288 = vunpack.c.h.b16 %v5537
    %v6289 = vunpack.c.l.b16 %v5538
    %v6290 = vunpack.c.h.b16 %v5538
    %v6291 = vunpack.c.l.b16 %v5539
    %v6292 = vunpack.c.h.b16 %v5539
    %v6293 = vunpack.c.l.b16 %v5540
    %v6294 = vunpack.c.h.b16 %v5540
    %v6295 = vunpack.c.l.b16 %v5541
    %v6296 = vunpack.c.h.b16 %v5541
    %v6297 = vunpack.c.l.b16 %v5542
    %v6298 = vunpack.c.h.b16 %v5542
    %v6299 = vunpack.c.l.b16 %v5543
    %v6300 = vunpack.c.h.b16 %v5543
    %v6301 = vunpack.c.l.b16 %v5544
    %v6302 = vunpack.c.h.b16 %v5544
    %v6303 = vunpack.c.l.b16 %v5545
    %v6304 = vunpack.c.h.b16 %v5545
    %v6305 = vunpack.c.l.b16 %v5546
    %v6306 = vunpack.c.h.b16 %v5546
    %v6307 = vunpack.c.l.b16 %v5547
    %v6308 = vunpack.c.h.b16 %v5547
    %v6309 = vunpack.c.l.b16 %v5548
    %v6310 = vunpack.c.h.b16 %v5548
    %v6311 = vunpack.c.l.b16 %v5549
    %v6312 = vunpack.c.h.b16 %v5549
    %v6313 = vunpack.c.l.b16 %v5550
    %v6314 = vunpack.c.h.b16 %v5550
    %v6315 = vunpack.c.l.b16 %v5551
    %v6316 = vunpack.c.h.b16 %v5551
    %v6317 = vunpack.c.l.b16 %v5552
    %v6318 = vunpack.c.h.b16 %v5552
    %v6319 = vunpack.c.l.b16 %v5553
    %v6320 = vunpack.c.h.b16 %v5553
    %v6321 = vunpack.c.l.b16 %v5554
    %v6322 = vunpack.c.h.b16 %v5554
    %v6323 = vunpack.c.l.b16 %v5555
    %v6324 = vunpack.c.h.b16 %v5555
    %v6325 = vunpack.c.l.b16 %v5556
    %v6326 = vunpack.c.h.b16 %v5556
    %v6327 = vunpack.c.l.b16 %v5557
    %v6328 = vunpack.c.h.b16 %v5557
    %v6329 = vunpack.c.l.b16 %v5558
    %v6330 = vunpack.c.h.b16 %v5558
    %v6331 = vunpack.c.l.b16 %v5559
    %v6332 = vunpack.c.h.b16 %v5559
    %v6333 = vunpack.c.l.b16 %v5560
    %v6334 = vunpack.c.h.b16 %v5560
    %v6335 = vunpack.c.l.b16 %v5561
    %v6336 = vunpack.c.h.b16 %v5561
    %v6337 = vunpack.c.l.b16 %v5562
    %v6338 = vunpack.c.h.b16 %v5562
    %v6339 = vunpack.c.l.b16 %v5563
    %v6340 = vunpack.c.h.b16 %v5563
    %v6341 = vunpack.c.l.b16 %v5564
    %v6342 = vunpack.c.h.b16 %v5564
    %v6343 = vunpack.c.l.b16 %v5565
    %v6344 = vunpack.c.h.b16 %v5565
    %v6345 = vunpack.c.l.b16 %v5566
    %v6346 = vunpack.c.h.b16 %v5566
    %v6347 = vunpack.c.l.b16 %v5567
    %v6348 = vunpack.c.h.b16 %v5567
    %v6349 = vunpack.c.l.b16 %v5568
    %v6350 = vunpack.c.h.b16 %v5568
    %v6351 = vunpack.c.l.b16 %v5569
    %v6352 = vunpack.c.h.b16 %v5569
    %v6353 = vunpack.c.l.b16 %v5570
    %v6354 = vunpack.c.h.b16 %v5570
    %v6355 = vunpack.c.l.b16 %v5571
    %v6356 = vunpack.c.h.b16 %v5571
    %v6357 = vunpack.c.l.b16 %v5572
    %v6358 = vunpack.c.h.b16 %v5572
    %v6359 = vunpack.c.l.b16 %v5573
    %v6360 = vunpack.c.h.b16 %v5573
    %v6361 = vunpack.c.l.b16 %v5574
    %v6362 = vunpack.c.h.b16 %v5574
    %v6363 = vunpack.c.l.b16 %v5575
    %v6364 = vunpack.c.h.b16 %v5575
    %v6365 = vunpack.c.l.b16 %v5576
    %v6366 = vunpack.c.h.b16 %v5576
    %v6367 = vpack.c.b16 %v5859, %v5855
    %v6368 = vpack.c.b16 %v5860, %v5856
    %v6369 = vpack.c.b16 %v5861, %v5857
    %v6370 = vpack.c.b16 %v5862, %v5858
    %v6371 = vpack.c.b16 %v5867, %v5863
    %v6372 = vpack.c.b16 %v5868, %v5864
    %v6373 = vpack.c.b16 %v5869, %v5865
    %v6374 = vpack.c.b16 %v5870, %v5866
    %v6375 = vpack.c.b16 %v5875, %v5871
    %v6376 = vpack.c.b16 %v5876, %v5872
    %v6377 = vpack.c.b16 %v5877, %v5873
    %v6378 = vpack.c.b16 %v5878, %v5874
    %v6379 = vpack.c.b16 %v5883, %v5879
    %v6380 = vpack.c.b16 %v5884, %v5880
    %v6381 = vpack.c.b16 %v5885, %v5881
    %v6382 = vpack.c.b16 %v5886, %v5882
    %v6383 = vpack.c.b16 %v5891, %v5887
    %v6384 = vpack.c.b16 %v5892, %v5888
    %v6385 = vpack.c.b16 %v5893, %v5889
    %v6386 = vpack.c.b16 %v5894, %v5890
    %v6387 = vpack.c.b16 %v5899, %v5895
    %v6388 = vpack.c.b16 %v5900, %v5896
    %v6389 = vpack.c.b16 %v5901, %v5897
    %v6390 = vpack.c.b16 %v5902, %v5898
    %v6391 = vpack.c.b16 %v5907, %v5903
    %v6392 = vpack.c.b16 %v5908, %v5904
    %v6393 = vpack.c.b16 %v5909, %v5905
    %v6394 = vpack.c.b16 %v5910, %v5906
    %v6395 = vpack.c.b16 %v5915, %v5911
    %v6396 = vpack.c.b16 %v5916, %v5912
    %v6397 = vpack.c.b16 %v5917, %v5913
    %v6398 = vpack.c.b16 %v5918, %v5914
    %v6399 = vpack.c.b16 %v5923, %v5919
    %v6400 = vpack.c.b16 %v5924, %v5920
    %v6401 = vpack.c.b16 %v5925, %v5921
    %v6402 = vpack.c.b16 %v5926, %v5922
    %v6403 = vpack.c.b16 %v5931, %v5927
    %v6404 = vpack.c.b16 %v5932, %v5928
    %v6405 = vpack.c.b16 %v5933, %v5929
    %v6406 = vpack.c.b16 %v5934, %v5930
    %v6407 = vpack.c.b16 %v5939, %v5935
    %v6408 = vpack.c.b16 %v5940, %v5936
    %v6409 = vpack.c.b16 %v5941, %v5937
    %v6410 = vpack.c.b16 %v5942, %v5938
    %v6411 = vpack.c.b16 %v5947, %v5943
    %v6412 = vpack.c.b16 %v5948, %v5944
    %v6413 = vpack.c.b16 %v5949, %v5945
    %v6414 = vpack.c.b16 %v5950, %v5946
    %v6415 = vpack.c.b16 %v5955, %v5951
    %v6416 = vpack.c.b16 %v5956, %v5952
    %v6417 = vpack.c.b16 %v5957, %v5953
    %v6418 = vpack.c.b16 %v5958, %v5954
    %v6419 = vpack.c.b16 %v5963, %v5959
    %v6420 = vpack.c.b16 %v5964, %v5960
    %v6421 = vpack.c.b16 %v5965, %v5961
    %v6422 = vpack.c.b16 %v5966, %v5962
    %v6423 = vpack.c.b16 %v5971, %v5967
    %v6424 = vpack.c.b16 %v5972, %v5968
    %v6425 = vpack.c.b16 %v5973, %v5969
    %v6426 = vpack.c.b16 %v5974, %v5970
    %v6427 = vpack.c.b16 %v5979, %v5975
    %v6428 = vpack.c.b16 %v5980, %v5976
    %v6429 = vpack.c.b16 %v5981, %v5977
    %v6430 = vpack.c.b16 %v5982, %v5978
    %v6431 = vpack.c.b16 %v5987, %v5983
    %v6432 = vpack.c.b16 %v5988, %v5984
    %v6433 = vpack.c.b16 %v5989, %v5985
    %v6434 = vpack.c.b16 %v5990, %v5986
    %v6435 = vpack.c.b16 %v5995, %v5991
    %v6436 = vpack.c.b16 %v5996, %v5992
    %v6437 = vpack.c.b16 %v5997, %v5993
    %v6438 = vpack.c.b16 %v5998, %v5994
    %v6439 = vpack.c.b16 %v6003, %v5999
    %v6440 = vpack.c.b16 %v6004, %v6000
    %v6441 = vpack.c.b16 %v6005, %v6001
    %v6442 = vpack.c.b16 %v6006, %v6002
    %v6443 = vpack.c.b16 %v6011, %v6007
    %v6444 = vpack.c.b16 %v6012, %v6008
    %v6445 = vpack.c.b16 %v6013, %v6009
    %v6446 = vpack.c.b16 %v6014, %v6010
    %v6447 = vpack.c.b16 %v6019, %v6015
    %v6448 = vpack.c.b16 %v6020, %v6016
    %v6449 = vpack.c.b16 %v6021, %v6017
    %v6450 = vpack.c.b16 %v6022, %v6018
    %v6451 = vpack.c.b16 %v6027, %v6023
    %v6452 = vpack.c.b16 %v6028, %v6024
    %v6453 = vpack.c.b16 %v6029, %v6025
    %v6454 = vpack.c.b16 %v6030, %v6026
    %v6455 = vpack.c.b16 %v6035, %v6031
    %v6456 = vpack.c.b16 %v6036, %v6032
    %v6457 = vpack.c.b16 %v6037, %v6033
    %v6458 = vpack.c.b16 %v6038, %v6034
    %v6459 = vpack.c.b16 %v6043, %v6039
    %v6460 = vpack.c.b16 %v6044, %v6040
    %v6461 = vpack.c.b16 %v6045, %v6041
    %v6462 = vpack.c.b16 %v6046, %v6042
    %v6463 = vpack.c.b16 %v6051, %v6047
    %v6464 = vpack.c.b16 %v6052, %v6048
    %v6465 = vpack.c.b16 %v6053, %v6049
    %v6466 = vpack.c.b16 %v6054, %v6050
    %v6467 = vpack.c.b16 %v6059, %v6055
    %v6468 = vpack.c.b16 %v6060, %v6056
    %v6469 = vpack.c.b16 %v6061, %v6057
    %v6470 = vpack.c.b16 %v6062, %v6058
    %v6471 = vpack.c.b16 %v6067, %v6063
    %v6472 = vpack.c.b16 %v6068, %v6064
    %v6473 = vpack.c.b16 %v6069, %v6065
    %v6474 = vpack.c.b16 %v6070, %v6066
    %v6475 = vpack.c.b16 %v6075, %v6071
    %v6476 = vpack.c.b16 %v6076, %v6072
    %v6477 = vpack.c.b16 %v6077, %v6073
    %v6478 = vpack.c.b16 %v6078, %v6074
    %v6479 = vpack.c.b16 %v6083, %v6079
    %v6480 = vpack.c.b16 %v6084, %v6080
    %v6481 = vpack.c.b16 %v6085, %v6081
    %v6482 = vpack.c.b16 %v6086, %v6082
    %v6483 = vpack.c.b16 %v6091, %v6087
    %v6484 = vpack.c.b16 %v6092, %v6088
    %v6485 = vpack.c.b16 %v6093, %v6089
    %v6486 = vpack.c.b16 %v6094, %v6090
    %v6487 = vpack.c.b16 %v6099, %v6095
    %v6488 = vpack.c.b16 %v6100, %v6096
    %v6489 = vpack.c.b16 %v6101, %v6097
    %v6490 = vpack.c.b16 %v6102, %v6098
    %v6491 = vpack.c.b16 %v6107, %v6103
    %v6492 = vpack.c.b16 %v6108, %v6104
    %v6493 = vpack.c.b16 %v6109, %v6105
    %v6494 = vpack.c.b16 %v6110, %v6106
    %v6495 = vpack.c.b16 %v6115, %v6111
    %v6496 = vpack.c.b16 %v6116, %v6112
    %v6497 = vpack.c.b16 %v6117, %v6113
    %v6498 = vpack.c.b16 %v6118, %v6114
    %v6499 = vpack.c.b16 %v6123, %v6119
    %v6500 = vpack.c.b16 %v6124, %v6120
    %v6501 = vpack.c.b16 %v6125, %v6121
    %v6502 = vpack.c.b16 %v6126, %v6122
    %v6503 = vpack.c.b16 %v6131, %v6127
    %v6504 = vpack.c.b16 %v6132, %v6128
    %v6505 = vpack.c.b16 %v6133, %v6129
    %v6506 = vpack.c.b16 %v6134, %v6130
    %v6507 = vpack.c.b16 %v6139, %v6135
    %v6508 = vpack.c.b16 %v6140, %v6136
    %v6509 = vpack.c.b16 %v6141, %v6137
    %v6510 = vpack.c.b16 %v6142, %v6138
    %v6511 = vpack.c.b16 %v6147, %v6143
    %v6512 = vpack.c.b16 %v6148, %v6144
    %v6513 = vpack.c.b16 %v6149, %v6145
    %v6514 = vpack.c.b16 %v6150, %v6146
    %v6515 = vpack.c.b16 %v6155, %v6151
    %v6516 = vpack.c.b16 %v6156, %v6152
    %v6517 = vpack.c.b16 %v6157, %v6153
    %v6518 = vpack.c.b16 %v6158, %v6154
    %v6519 = vpack.c.b16 %v6163, %v6159
    %v6520 = vpack.c.b16 %v6164, %v6160
    %v6521 = vpack.c.b16 %v6165, %v6161
    %v6522 = vpack.c.b16 %v6166, %v6162
    %v6523 = vpack.c.b16 %v6171, %v6167
    %v6524 = vpack.c.b16 %v6172, %v6168
    %v6525 = vpack.c.b16 %v6173, %v6169
    %v6526 = vpack.c.b16 %v6174, %v6170
    %v6527 = vpack.c.b16 %v6179, %v6175
    %v6528 = vpack.c.b16 %v6180, %v6176
    %v6529 = vpack.c.b16 %v6181, %v6177
    %v6530 = vpack.c.b16 %v6182, %v6178
    %v6531 = vpack.c.b16 %v6187, %v6183
    %v6532 = vpack.c.b16 %v6188, %v6184
    %v6533 = vpack.c.b16 %v6189, %v6185
    %v6534 = vpack.c.b16 %v6190, %v6186
    %v6535 = vpack.c.b16 %v6195, %v6191
    %v6536 = vpack.c.b16 %v6196, %v6192
    %v6537 = vpack.c.b16 %v6197, %v6193
    %v6538 = vpack.c.b16 %v6198, %v6194
    %v6539 = vpack.c.b16 %v6203, %v6199
    %v6540 = vpack.c.b16 %v6204, %v6200
    %v6541 = vpack.c.b16 %v6205, %v6201
    %v6542 = vpack.c.b16 %v6206, %v6202
    %v6543 = vpack.c.b16 %v6211, %v6207
    %v6544 = vpack.c.b16 %v6212, %v6208
    %v6545 = vpack.c.b16 %v6213, %v6209
    %v6546 = vpack.c.b16 %v6214, %v6210
    %v6547 = vpack.c.b16 %v6219, %v6215
    %v6548 = vpack.c.b16 %v6220, %v6216
    %v6549 = vpack.c.b16 %v6221, %v6217
    %v6550 = vpack.c.b16 %v6222, %v6218
    %v6551 = vpack.c.b16 %v6227, %v6223
    %v6552 = vpack.c.b16 %v6228, %v6224
    %v6553 = vpack.c.b16 %v6229, %v6225
    %v6554 = vpack.c.b16 %v6230, %v6226
    %v6555 = vpack.c.b16 %v6235, %v6231
    %v6556 = vpack.c.b16 %v6236, %v6232
    %v6557 = vpack.c.b16 %v6237, %v6233
    %v6558 = vpack.c.b16 %v6238, %v6234
    %v6559 = vpack.c.b16 %v6243, %v6239
    %v6560 = vpack.c.b16 %v6244, %v6240
    %v6561 = vpack.c.b16 %v6245, %v6241
    %v6562 = vpack.c.b16 %v6246, %v6242
    %v6563 = vpack.c.b16 %v6251, %v6247
    %v6564 = vpack.c.b16 %v6252, %v6248
    %v6565 = vpack.c.b16 %v6253, %v6249
    %v6566 = vpack.c.b16 %v6254, %v6250
    %v6567 = vpack.c.b16 %v6259, %v6255
    %v6568 = vpack.c.b16 %v6260, %v6256
    %v6569 = vpack.c.b16 %v6261, %v6257
    %v6570 = vpack.c.b16 %v6262, %v6258
    %v6571 = vpack.c.b16 %v6267, %v6263
    %v6572 = vpack.c.b16 %v6268, %v6264
    %v6573 = vpack.c.b16 %v6269, %v6265
    %v6574 = vpack.c.b16 %v6270, %v6266
    %v6575 = vpack.c.b16 %v6275, %v6271
    %v6576 = vpack.c.b16 %v6276, %v6272
    %v6577 = vpack.c.b16 %v6277, %v6273
    %v6578 = vpack.c.b16 %v6278, %v6274
    %v6579 = vpack.c.b16 %v6283, %v6279
    %v6580 = vpack.c.b16 %v6284, %v6280
    %v6581 = vpack.c.b16 %v6285, %v6281
    %v6582 = vpack.c.b16 %v6286, %v6282
    %v6583 = vpack.c.b16 %v6291, %v6287
    %v6584 = vpack.c.b16 %v6292, %v6288
    %v6585 = vpack.c.b16 %v6293, %v6289
    %v6586 = vpack.c.b16 %v6294, %v6290
    %v6587 = vpack.c.b16 %v6299, %v6295
    %v6588 = vpack.c.b16 %v6300, %v6296
    %v6589 = vpack.c.b16 %v6301, %v6297
    %v6590 = vpack.c.b16 %v6302, %v6298
    %v6591 = vpack.c.b16 %v6307, %v6303
    %v6592 = vpack.c.b16 %v6308, %v6304
    %v6593 = vpack.c.b16 %v6309, %v6305
    %v6594 = vpack.c.b16 %v6310, %v6306
    %v6595 = vpack.c.b16 %v6315, %v6311
    %v6596 = vpack.c.b16 %v6316, %v6312
    %v6597 = vpack.c.b16 %v6317, %v6313
    %v6598 = vpack.c.b16 %v6318, %v6314
    %v6599 = vpack.c.b16 %v6323, %v6319
    %v6600 = vpack.c.b16 %v6324, %v6320
    %v6601 = vpack.c.b16 %v6325, %v6321
    %v6602 = vpack.c.b16 %v6326, %v6322
    %v6603 = vpack.c.b16 %v6331, %v6327
    %v6604 = vpack.c.b16 %v6332, %v6328
    %v6605 = vpack.c.b16 %v6333, %v6329
    %v6606 = vpack.c.b16 %v6334, %v6330
    %v6607 = vpack.c.b16 %v6339, %v6335
    %v6608 = vpack.c.b16 %v6340, %v6336
    %v6609 = vpack.c.b16 %v6341, %v6337
    %v6610 = vpack.c.b16 %v6342, %v6338
    %v6611 = vpack.c.b16 %v6347, %v6343
    %v6612 = vpack.c.b16 %v6348, %v6344
    %v6613 = vpack.c.b16 %v6349, %v6345
    %v6614 = vpack.c.b16 %v6350, %v6346
    %v6615 = vpack.c.b16 %v6355, %v6351
    %v6616 = vpack.c.b16 %v6356, %v6352
    %v6617 = vpack.c.b16 %v6357, %v6353
    %v6618 = vpack.c.b16 %v6358, %v6354
    %v6619 = vpack.c.b16 %v6363, %v6359
    %v6620 = vpack.c.b16 %v6364, %v6360
    %v6621 = vpack.c.b16 %v6365, %v6361
    %v6622 = vpack.c.b16 %v6366, %v6362
    %6879 = vmatprep.subr.bf16.mxu0 %v6368
    %6880 = vmatpush1.bf16.msra.mxu0 %v6367
    %6881 = vmatprep.subr.bf16.mxu0 %v6372
    %6882 = vmatpush1.bf16.msra.mxu0 %v6371
    %6883 = vmatprep.subr.bf16.mxu0 %v6376
    %6884 = vmatpush1.bf16.msra.mxu0 %v6375
    %6885 = vmatprep.subr.bf16.mxu0 %v6380
    %6886 = vmatpush1.bf16.msra.mxu0 %v6379
    %6887 = vmatprep.subr.bf16.mxu0 %v6384
    %6888 = vmatpush1.bf16.msra.mxu0 %v6383
    %6889 = vmatprep.subr.bf16.mxu0 %v6388
    %6890 = vmatpush1.bf16.msra.mxu0 %v6387
    %6891 = vmatprep.subr.bf16.mxu0 %v6392
    %6892 = vmatpush1.bf16.msra.mxu0 %v6391
    %6893 = vmatprep.subr.bf16.mxu0 %v6396
    %6894 = vmatpush1.bf16.msra.mxu0 %v6395
    %6895 = vmatprep.subr.bf16.mxu0 %v6400
    %6896 = vmatpush1.bf16.msra.mxu0 %v6399
    %6897 = vmatprep.subr.bf16.mxu0 %v6404
    %6898 = vmatpush1.bf16.msra.mxu0 %v6403
    %6899 = vmatprep.subr.bf16.mxu0 %v6408
    %6900 = vmatpush1.bf16.msra.mxu0 %v6407
    %6901 = vmatprep.subr.bf16.mxu0 %v6412
    %6902 = vmatpush1.bf16.msra.mxu0 %v6411
    %6903 = vmatprep.subr.bf16.mxu0 %v6416
    %6904 = vmatpush1.bf16.msra.mxu0 %v6415
    %6905 = vmatprep.subr.bf16.mxu0 %v6420
    %6906 = vmatpush1.bf16.msra.mxu0 %v6419
    %6907 = vmatprep.subr.bf16.mxu0 %v6424
    %6908 = vmatpush1.bf16.msra.mxu0 %v6423
    %6909 = vmatprep.subr.bf16.mxu0 %v6428
    %6910 = vmatpush1.bf16.msra.mxu0 %v6427
    %6911 = vmatprep.mubr.bf16.mxu0 %v5314
    %6912 = vmatmul.mubr.bf16.gmra.mrb[0].mxu0 %v5313
    %v6913 = vpop.f32.mrb[0].mxu0
    %v6914 = vadd.f32 %v5582, %v6913
    %v6915 = vpop.f32.mrb[0].mxu0
    %v6916 = vadd.f32 %v5586, %v6915
    %v6917 = vpop.f32.mrb[0].mxu0
    %v6918 = vadd.f32 %v5582, %v6917
    %v6919 = vpop.f32.mrb[0].mxu0
    %v6920 = vadd.f32 %v5586, %v6919
    %6921 = vdwg.mxu0
    %6922 = vmatprep.subr.bf16.mxu0 %v6432
    %6923 = vmatpush1.bf16.msra.mxu0 %v6431
    %6924 = vmatprep.subr.bf16.mxu0 %v6436
    %6925 = vmatpush1.bf16.msra.mxu0 %v6435
    %6926 = vmatprep.subr.bf16.mxu0 %v6440
    %6927 = vmatpush1.bf16.msra.mxu0 %v6439
    %6928 = vmatprep.subr.bf16.mxu0 %v6444
    %6929 = vmatpush1.bf16.msra.mxu0 %v6443
    %6930 = vmatprep.subr.bf16.mxu0 %v6448
    %6931 = vmatpush1.bf16.msra.mxu0 %v6447
    %6932 = vmatprep.subr.bf16.mxu0 %v6452
    %6933 = vmatpush1.bf16.msra.mxu0 %v6451
    %6934 = vmatprep.subr.bf16.mxu0 %v6456
    %6935 = vmatpush1.bf16.msra.mxu0 %v6455
    %6936 = vmatprep.subr.bf16.mxu0 %v6460
    %6937 = vmatpush1.bf16.msra.mxu0 %v6459
    %6938 = vmatprep.subr.bf16.mxu0 %v6464
    %6939 = vmatpush1.bf16.msra.mxu0 %v6463
    %6940 = vmatprep.subr.bf16.mxu0 %v6468
    %6941 = vmatpush1.bf16.msra.mxu0 %v6467
    %6942 = vmatprep.subr.bf16.mxu0 %v6472
    %6943 = vmatpush1.bf16.msra.mxu0 %v6471
    %6944 = vmatprep.subr.bf16.mxu0 %v6476
    %6945 = vmatpush1.bf16.msra.mxu0 %v6475
    %6946 = vmatprep.subr.bf16.mxu0 %v6480
    %6947 = vmatpush1.bf16.msra.mxu0 %v6479
    %6948 = vmatprep.subr.bf16.mxu0 %v6484
    %6949 = vmatpush1.bf16.msra.mxu0 %v6483
    %6950 = vmatprep.subr.bf16.mxu0 %v6488
    %6951 = vmatpush1.bf16.msra.mxu0 %v6487
    %6952 = vmatprep.subr.bf16.mxu0 %v6492
    %6953 = vmatpush1.bf16.msra.mxu0 %v6491
    %6954 = vmatprep.mubr.bf16.mxu0 %v5316
    %6955 = vmatmul.mubr.bf16.gmra.mrb[0].mxu0 %v5315
    %v6956 = vpop.f32.mrb[0].mxu0
    %v6957 = vadd.f32 %v6914, %v6956
    %v6958 = vpop.f32.mrb[0].mxu0
    %v6959 = vadd.f32 %v6916, %v6958
    %v6960 = vpop.f32.mrb[0].mxu0
    %v6961 = vadd.f32 %v6918, %v6960
    %v6962 = vpop.f32.mrb[0].mxu0
    %v6963 = vadd.f32 %v6920, %v6962
    %6964 = vdwg.mxu0
    %6965 = vmatprep.subr.bf16.mxu0 %v6496
    %6966 = vmatpush1.bf16.msra.mxu0 %v6495
    %6967 = vmatprep.subr.bf16.mxu0 %v6500
    %6968 = vmatpush1.bf16.msra.mxu0 %v6499
    %6969 = vmatprep.subr.bf16.mxu0 %v6504
    %6970 = vmatpush1.bf16.msra.mxu0 %v6503
    %6971 = vmatprep.subr.bf16.mxu0 %v6508
    %6972 = vmatpush1.bf16.msra.mxu0 %v6507
    %6973 = vmatprep.subr.bf16.mxu0 %v6512
    %6974 = vmatpush1.bf16.msra.mxu0 %v6511
    %6975 = vmatprep.subr.bf16.mxu0 %v6516
    %6976 = vmatpush1.bf16.msra.mxu0 %v6515
    %6977 = vmatprep.subr.bf16.mxu0 %v6520
    %6978 = vmatpush1.bf16.msra.mxu0 %v6519
    %6979 = vmatprep.subr.bf16.mxu0 %v6524
    %6980 = vmatpush1.bf16.msra.mxu0 %v6523
    %6981 = vmatprep.subr.bf16.mxu0 %v6528
    %6982 = vmatpush1.bf16.msra.mxu0 %v6527
    %6983 = vmatprep.subr.bf16.mxu0 %v6532
    %6984 = vmatpush1.bf16.msra.mxu0 %v6531
    %6985 = vmatprep.subr.bf16.mxu0 %v6536
    %6986 = vmatpush1.bf16.msra.mxu0 %v6535
    %6987 = vmatprep.subr.bf16.mxu0 %v6540
    %6988 = vmatpush1.bf16.msra.mxu0 %v6539
    %6989 = vmatprep.subr.bf16.mxu0 %v6544
    %6990 = vmatpush1.bf16.msra.mxu0 %v6543
    %6991 = vmatprep.subr.bf16.mxu0 %v6548
    %6992 = vmatpush1.bf16.msra.mxu0 %v6547
    %6993 = vmatprep.subr.bf16.mxu0 %v6552
    %6994 = vmatpush1.bf16.msra.mxu0 %v6551
    %6995 = vmatprep.subr.bf16.mxu0 %v6556
    %6996 = vmatpush1.bf16.msra.mxu0 %v6555
    %6997 = vmatprep.mubr.bf16.mxu0 %v5318
    %6998 = vmatmul.mubr.bf16.gmra.mrb[0].mxu0 %v5317
    %v6999 = vpop.f32.mrb[0].mxu0
    %v7000 = vadd.f32 %v6957, %v6999
    %v7001 = vpop.f32.mrb[0].mxu0
    %v7002 = vadd.f32 %v6959, %v7001
    %v7003 = vpop.f32.mrb[0].mxu0
    %v7004 = vadd.f32 %v6961, %v7003
    %v7005 = vpop.f32.mrb[0].mxu0
    %v7006 = vadd.f32 %v6963, %v7005
    %7007 = vdwg.mxu0
    %7008 = vmatprep.subr.bf16.mxu0 %v6560
    %7009 = vmatpush1.bf16.msra.mxu0 %v6559
    %7010 = vmatprep.subr.bf16.mxu0 %v6564
    %7011 = vmatpush1.bf16.msra.mxu0 %v6563
    %7012 = vmatprep.subr.bf16.mxu0 %v6568
    %7013 = vmatpush1.bf16.msra.mxu0 %v6567
    %7014 = vmatprep.subr.bf16.mxu0 %v6572
    %7015 = vmatpush1.bf16.msra.mxu0 %v6571
    %7016 = vmatprep.subr.bf16.mxu0 %v6576
    %7017 = vmatpush1.bf16.msra.mxu0 %v6575
    %7018 = vmatprep.subr.bf16.mxu0 %v6580
    %7019 = vmatpush1.bf16.msra.mxu0 %v6579
    %7020 = vmatprep.subr.bf16.mxu0 %v6584
    %7021 = vmatpush1.bf16.msra.mxu0 %v6583
    %7022 = vmatprep.subr.bf16.mxu0 %v6588
    %7023 = vmatpush1.bf16.msra.mxu0 %v6587
    %7024 = vmatprep.subr.bf16.mxu0 %v6592
    %7025 = vmatpush1.bf16.msra.mxu0 %v6591
    %7026 = vmatprep.subr.bf16.mxu0 %v6596
    %7027 = vmatpush1.bf16.msra.mxu0 %v6595
    %7028 = vmatprep.subr.bf16.mxu0 %v6600
    %7029 = vmatpush1.bf16.msra.mxu0 %v6599
    %7030 = vmatprep.subr.bf16.mxu0 %v6604
    %7031 = vmatpush1.bf16.msra.mxu0 %v6603
    %7032 = vmatprep.subr.bf16.mxu0 %v6608
    %7033 = vmatpush1.bf16.msra.mxu0 %v6607
    %7034 = vmatprep.subr.bf16.mxu0 %v6612
    %7035 = vmatpush1.bf16.msra.mxu0 %v6611
    %7036 = vmatprep.subr.bf16.mxu0 %v6616
    %7037 = vmatpush1.bf16.msra.mxu0 %v6615
    %7038 = vmatprep.subr.bf16.mxu0 %v6620
    %7039 = vmatpush1.bf16.msra.mxu0 %v6619
    %7040 = vmatprep.mubr.bf16.mxu0 %v5320
    %7041 = vmatmul.mubr.bf16.gmra.mrb[0].mxu0 %v5319
    %v7042 = vpop.f32.mrb[0].mxu0
    %v7043 = vadd.f32 %v7000, %v7042
    %v7044 = vpop.f32.mrb[0].mxu0
    %v7045 = vadd.f32 %v7002, %v7044
    %v7046 = vpop.f32.mrb[0].mxu0
    %v7047 = vadd.f32 %v7004, %v7046
    %v7048 = vpop.f32.mrb[0].mxu0
    %v7049 = vadd.f32 %v7006, %v7048
    %7050 = vdwg.mxu0
    %7051 = vmatprep.subr.bf16.mxu0 %v6370
    %7052 = vmatpush1.bf16.msra.mxu0 %v6369
    %7053 = vmatprep.subr.bf16.mxu0 %v6374
    %7054 = vmatpush1.bf16.msra.mxu0 %v6373
    %7055 = vmatprep.subr.bf16.mxu0 %v6378
    %7056 = vmatpush1.bf16.msra.mxu0 %v6377
    %7057 = vmatprep.subr.bf16.mxu0 %v6382
    %7058 = vmatpush1.bf16.msra.mxu0 %v6381
    %7059 = vmatprep.subr.bf16.mxu0 %v6386
    %7060 = vmatpush1.bf16.msra.mxu0 %v6385
    %7061 = vmatprep.subr.bf16.mxu0 %v6390
    %7062 = vmatpush1.bf16.msra.mxu0 %v6389
    %7063 = vmatprep.subr.bf16.mxu0 %v6394
    %7064 = vmatpush1.bf16.msra.mxu0 %v6393
    %7065 = vmatprep.subr.bf16.mxu0 %v6398
    %7066 = vmatpush1.bf16.msra.mxu0 %v6397
    %7067 = vmatprep.subr.bf16.mxu0 %v6402
    %7068 = vmatpush1.bf16.msra.mxu0 %v6401
    %7069 = vmatprep.subr.bf16.mxu0 %v6406
    %7070 = vmatpush1.bf16.msra.mxu0 %v6405
    %7071 = vmatprep.subr.bf16.mxu0 %v6410
    %7072 = vmatpush1.bf16.msra.mxu0 %v6409
    %7073 = vmatprep.subr.bf16.mxu0 %v6414
    %7074 = vmatpush1.bf16.msra.mxu0 %v6413
    %7075 = vmatprep.subr.bf16.mxu0 %v6418
    %7076 = vmatpush1.bf16.msra.mxu0 %v6417
    %7077 = vmatprep.subr.bf16.mxu0 %v6422
    %7078 = vmatpush1.bf16.msra.mxu0 %v6421
    %7079 = vmatprep.subr.bf16.mxu0 %v6426
    %7080 = vmatpush1.bf16.msra.mxu0 %v6425
    %7081 = vmatprep.subr.bf16.mxu0 %v6430
    %7082 = vmatpush1.bf16.msra.mxu0 %v6429
    %7083 = vmatprep.mubr.bf16.mxu0 %v5314
    %7084 = vmatmul.mubr.bf16.gmra.mrb[0].mxu0 %v5313
    %v7085 = vpop.f32.mrb[0].mxu0
    %v7086 = vadd.f32 %v5590, %v7085
    %v7087 = vpop.f32.mrb[0].mxu0
    %v7088 = vadd.f32 %v5594, %v7087
    %v7089 = vpop.f32.mrb[0].mxu0
    %v7090 = vadd.f32 %v5590, %v7089
    %v7091 = vpop.f32.mrb[0].mxu0
    %v7092 = vadd.f32 %v5594, %v7091
    %7093 = vdwg.mxu0
    %7094 = vmatprep.subr.bf16.mxu0 %v6434
    %7095 = vmatpush1.bf16.msra.mxu0 %v6433
    %7096 = vmatprep.subr.bf16.mxu0 %v6438
    %7097 = vmatpush1.bf16.msra.mxu0 %v6437
    %7098 = vmatprep.subr.bf16.mxu0 %v6442
    %7099 = vmatpush1.bf16.msra.mxu0 %v6441
    %7100 = vmatprep.subr.bf16.mxu0 %v6446
    %7101 = vmatpush1.bf16.msra.mxu0 %v6445
    %7102 = vmatprep.subr.bf16.mxu0 %v6450
    %7103 = vmatpush1.bf16.msra.mxu0 %v6449
    %7104 = vmatprep.subr.bf16.mxu0 %v6454
    %7105 = vmatpush1.bf16.msra.mxu0 %v6453
    %7106 = vmatprep.subr.bf16.mxu0 %v6458
    %7107 = vmatpush1.bf16.msra.mxu0 %v6457
    %7108 = vmatprep.subr.bf16.mxu0 %v6462
    %7109 = vmatpush1.bf16.msra.mxu0 %v6461
    %7110 = vmatprep.subr.bf16.mxu0 %v6466
    %7111 = vmatpush1.bf16.msra.mxu0 %v6465
    %7112 = vmatprep.subr.bf16.mxu0 %v6470
    %7113 = vmatpush1.bf16.msra.mxu0 %v6469
    %7114 = vmatprep.subr.bf16.mxu0 %v6474
    %7115 = vmatpush1.bf16.msra.mxu0 %v6473
    %7116 = vmatprep.subr.bf16.mxu0 %v6478
    %7117 = vmatpush1.bf16.msra.mxu0 %v6477
    %7118 = vmatprep.subr.bf16.mxu0 %v6482
    %7119 = vmatpush1.bf16.msra.mxu0 %v6481
    %7120 = vmatprep.subr.bf16.mxu0 %v6486
    %7121 = vmatpush1.bf16.msra.mxu0 %v6485
    %7122 = vmatprep.subr.bf16.mxu0 %v6490
    %7123 = vmatpush1.bf16.msra.mxu0 %v6489
    %7124 = vmatprep.subr.bf16.mxu0 %v6494
    %7125 = vmatpush1.bf16.msra.mxu0 %v6493
    %7126 = vmatprep.mubr.bf16.mxu0 %v5316
    %7127 = vmatmul.mubr.bf16.gmra.mrb[0].mxu0 %v5315
    %v7128 = vpop.f32.mrb[0].mxu0
    %v7129 = vadd.f32 %v7086, %v7128
    %v7130 = vpop.f32.mrb[0].mxu0
    %v7131 = vadd.f32 %v7088, %v7130
    %v7132 = vpop.f32.mrb[0].mxu0
    %v7133 = vadd.f32 %v7090, %v7132
    %v7134 = vpop.f32.mrb[0].mxu0
    %v7135 = vadd.f32 %v7092, %v7134
    %7136 = vdwg.mxu0
    %7137 = vmatprep.subr.bf16.mxu0 %v6498
    %7138 = vmatpush1.bf16.msra.mxu0 %v6497
    %7139 = vmatprep.subr.bf16.mxu0 %v6502
    %7140 = vmatpush1.bf16.msra.mxu0 %v6501
    %7141 = vmatprep.subr.bf16.mxu0 %v6506
    %7142 = vmatpush1.bf16.msra.mxu0 %v6505
    %7143 = vmatprep.subr.bf16.mxu0 %v6510
    %7144 = vmatpush1.bf16.msra.mxu0 %v6509
    %7145 = vmatprep.subr.bf16.mxu0 %v6514
    %7146 = vmatpush1.bf16.msra.mxu0 %v6513
    %7147 = vmatprep.subr.bf16.mxu0 %v6518
    %7148 = vmatpush1.bf16.msra.mxu0 %v6517
    %7149 = vmatprep.subr.bf16.mxu0 %v6522
    %7150 = vmatpush1.bf16.msra.mxu0 %v6521
    %7151 = vmatprep.subr.bf16.mxu0 %v6526
    %7152 = vmatpush1.bf16.msra.mxu0 %v6525
    %7153 = vmatprep.subr.bf16.mxu0 %v6530
    %7154 = vmatpush1.bf16.msra.mxu0 %v6529
    %7155 = vmatprep.subr.bf16.mxu0 %v6534
    %7156 = vmatpush1.bf16.msra.mxu0 %v6533
    %7157 = vmatprep.subr.bf16.mxu0 %v6538
    %7158 = vmatpush1.bf16.msra.mxu0 %v6537
    %7159 = vmatprep.subr.bf16.mxu0 %v6542
    %7160 = vmatpush1.bf16.msra.mxu0 %v6541
    %7161 = vmatprep.subr.bf16.mxu0 %v6546
    %7162 = vmatpush1.bf16.msra.mxu0 %v6545
    %7163 = vmatprep.subr.bf16.mxu0 %v6550
    %7164 = vmatpush1.bf16.msra.mxu0 %v6549
    %7165 = vmatprep.subr.bf16.mxu0 %v6554
    %7166 = vmatpush1.bf16.msra.mxu0 %v6553
    %7167 = vmatprep.subr.bf16.mxu0 %v6558
    %7168 = vmatpush1.bf16.msra.mxu0 %v6557
    %7169 = vmatprep.mubr.bf16.mxu0 %v5318
    %7170 = vmatmul.mubr.bf16.gmra.mrb[0].mxu0 %v5317
    %v7171 = vpop.f32.mrb[0].mxu0
    %v7172 = vadd.f32 %v7129, %v7171
    %v7173 = vpop.f32.mrb[0].mxu0
    %v7174 = vadd.f32 %v7131, %v7173
    %v7175 = vpop.f32.mrb[0].mxu0
    %v7176 = vadd.f32 %v7133, %v7175
    %v7177 = vpop.f32.mrb[0].mxu0
    %v7178 = vadd.f32 %v7135, %v7177
    %7179 = vdwg.mxu0
    %7180 = vmatprep.subr.bf16.mxu0 %v6562
    %7181 = vmatpush1.bf16.msra.mxu0 %v6561
    %7182 = vmatprep.subr.bf16.mxu0 %v6566
    %7183 = vmatpush1.bf16.msra.mxu0 %v6565
    %7184 = vmatprep.subr.bf16.mxu0 %v6570
    %7185 = vmatpush1.bf16.msra.mxu0 %v6569
    %7186 = vmatprep.subr.bf16.mxu0 %v6574
    %7187 = vmatpush1.bf16.msra.mxu0 %v6573
    %7188 = vmatprep.subr.bf16.mxu0 %v6578
    %7189 = vmatpush1.bf16.msra.mxu0 %v6577
    %7190 = vmatprep.subr.bf16.mxu0 %v6582
    %7191 = vmatpush1.bf16.msra.mxu0 %v6581
    %7192 = vmatprep.subr.bf16.mxu0 %v6586
    %7193 = vmatpush1.bf16.msra.mxu0 %v6585
    %7194 = vmatprep.subr.bf16.mxu0 %v6590
    %7195 = vmatpush1.bf16.msra.mxu0 %v6589
    %7196 = vmatprep.subr.bf16.mxu0 %v6594
    %7197 = vmatpush1.bf16.msra.mxu0 %v6593
    %7198 = vmatprep.subr.bf16.mxu0 %v6598
    %7199 = vmatpush1.bf16.msra.mxu0 %v6597
    %7200 = vmatprep.subr.bf16.mxu0 %v6602
    %7201 = vmatpush1.bf16.msra.mxu0 %v6601
    %7202 = vmatprep.subr.bf16.mxu0 %v6606
    %7203 = vmatpush1.bf16.msra.mxu0 %v6605
    %7204 = vmatprep.subr.bf16.mxu0 %v6610
    %7205 = vmatpush1.bf16.msra.mxu0 %v6609
    %7206 = vmatprep.subr.bf16.mxu0 %v6614
    %7207 = vmatpush1.bf16.msra.mxu0 %v6613
    %7208 = vmatprep.subr.bf16.mxu0 %v6618
    %7209 = vmatpush1.bf16.msra.mxu0 %v6617
    %7210 = vmatprep.subr.bf16.mxu0 %v6622
    %7211 = vmatpush1.bf16.msra.mxu0 %v6621
    %7212 = vmatprep.mubr.bf16.mxu0 %v5320
    %7213 = vmatmul.mubr.bf16.gmra.mrb[0].mxu0 %v5319
    %v7214 = vpop.f32.mrb[0].mxu0
    %v7215 = vadd.f32 %v7172, %v7214
    %v7216 = vpop.f32.mrb[0].mxu0
    %v7217 = vadd.f32 %v7174, %v7216
    %v7218 = vpop.f32.mrb[0].mxu0
    %v7219 = vadd.f32 %v7176, %v7218
    %v7220 = vpop.f32.mrb[0].mxu0
    %v7221 = vadd.f32 %v7178, %v7220
    %7222 = vdwg.mxu0
    %v7223 = vtanh.pop %v7043
    %v7224 = vtanh.pop %v7045
    %v7225 = vtanh.pop %v7215
    %v7226 = vtanh.pop %v7217
    %v7227 = vtanh.pop %v7047
    %v7228 = vtanh.pop %v7049
    %v7229 = vtanh.pop %v7219
    %v7230 = vtanh.pop %v7221
    %v7231 = vpack.c.bf16 %v7227, %v7223
    %v7232 = vpack.c.bf16 %v7228, %v7224
    %v7233 = vpack.c.bf16 %v7229, %v7225
    %v7234 = vpack.c.bf16 %v7230, %v7226
    %v7235 = vld [vmem:[#allocation19] sm:$0xf]
    %v7236 = vld [vmem:[#allocation19 + $0x4] sm:$0xf]
    %v7237 = vld [vmem:[#allocation19 + $0x8] sm:$0xf]
    %v7238 = vld [vmem:[#allocation19 + $0xc] sm:$0xf]
    %v7239 = vld [vmem:[#allocation19 + $0x10] sm:$0xf]
    %v7240 = vld [vmem:[#allocation19 + $0x14] sm:$0xf]
    %v7241 = vld [vmem:[#allocation19 + $0x18] sm:$0xf]
    %v7242 = vld [vmem:[#allocation19 + $0x1c] sm:$0xf]
    %v7243 = vld [vmem:[#allocation19 + $0x20] sm:$0xf]
    %v7244 = vld [vmem:[#allocation19 + $0x24] sm:$0xf]
    %v7245 = vld [vmem:[#allocation19 + $0x28] sm:$0xf]
    %v7246 = vld [vmem:[#allocation19 + $0x2c] sm:$0xf]
    %v7247 = vld [vmem:[#allocation19 + $0x30] sm:$0xf]
    %v7248 = vld [vmem:[#allocation19 + $0x34] sm:$0xf]
    %v7249 = vld [vmem:[#allocation19 + $0x38] sm:$0xf]
    %v7250 = vld [vmem:[#allocation19 + $0x3c] sm:$0xf]
    %v7251 = vld [vmem:[#allocation19 + $0x40] sm:$0xf]
    %v7252 = vld [vmem:[#allocation19 + $0x44] sm:$0xf]
    %v7253 = vld [vmem:[#allocation19 + $0x48] sm:$0xf]
    %v7254 = vld [vmem:[#allocation19 + $0x4c] sm:$0xf]
    %v7255 = vld [vmem:[#allocation19 + $0x50] sm:$0xf]
    %v7256 = vld [vmem:[#allocation19 + $0x54] sm:$0xf]
    %v7257 = vld [vmem:[#allocation19 + $0x58] sm:$0xf]
    %v7258 = vld [vmem:[#allocation19 + $0x5c] sm:$0xf]
    %v7259 = vld [vmem:[#allocation19 + $0x60] sm:$0xf]
    %v7260 = vld [vmem:[#allocation19 + $0x64] sm:$0xf]
    %v7261 = vld [vmem:[#allocation19 + $0x68] sm:$0xf]
    %v7262 = vld [vmem:[#allocation19 + $0x6c] sm:$0xf]
    %v7263 = vld [vmem:[#allocation19 + $0x70] sm:$0xf]
    %v7264 = vld [vmem:[#allocation19 + $0x74] sm:$0xf]
    %v7265 = vld [vmem:[#allocation19 + $0x78] sm:$0xf]
    %v7266 = vld [vmem:[#allocation19 + $0x7c] sm:$0xf]
    %v7267 = vld [vmem:[#allocation19 + $0x80] sm:$0xf]
    %v7268 = vld [vmem:[#allocation19 + $0x84] sm:$0xf]
    %v7269 = vld [vmem:[#allocation19 + $0x88] sm:$0xf]
    %v7270 = vld [vmem:[#allocation19 + $0x8c] sm:$0xf]
    %v7271 = vld [vmem:[#allocation19 + $0x90] sm:$0xf]
    %v7272 = vld [vmem:[#allocation19 + $0x94] sm:$0xf]
    %v7273 = vld [vmem:[#allocation19 + $0x98] sm:$0xf]
    %v7274 = vld [vmem:[#allocation19 + $0x9c] sm:$0xf]
    %v7275 = vld [vmem:[#allocation19 + $0xa0] sm:$0xf]
    %v7276 = vld [vmem:[#allocation19 + $0xa4] sm:$0xf]
    %v7277 = vld [vmem:[#allocation19 + $0xa8] sm:$0xf]
    %v7278 = vld [vmem:[#allocation19 + $0xac] sm:$0xf]
    %v7279 = vld [vmem:[#allocation19 + $0xb0] sm:$0xf]
    %v7280 = vld [vmem:[#allocation19 + $0xb4] sm:$0xf]
    %v7281 = vld [vmem:[#allocation19 + $0xb8] sm:$0xf]
    %v7282 = vld [vmem:[#allocation19 + $0xbc] sm:$0xf]
    %v7283 = vld [vmem:[#allocation19 + $0xc0] sm:$0xf]
    %v7284 = vld [vmem:[#allocation19 + $0xc4] sm:$0xf]
    %v7285 = vld [vmem:[#allocation19 + $0xc8] sm:$0xf]
    %v7286 = vld [vmem:[#allocation19 + $0xcc] sm:$0xf]
    %v7287 = vld [vmem:[#allocation19 + $0xd0] sm:$0xf]
    %v7288 = vld [vmem:[#allocation19 + $0xd4] sm:$0xf]
    %v7289 = vld [vmem:[#allocation19 + $0xd8] sm:$0xf]
    %v7290 = vld [vmem:[#allocation19 + $0xdc] sm:$0xf]
    %v7291 = vld [vmem:[#allocation19 + $0xe0] sm:$0xf]
    %v7292 = vld [vmem:[#allocation19 + $0xe4] sm:$0xf]
    %v7293 = vld [vmem:[#allocation19 + $0xe8] sm:$0xf]
    %v7294 = vld [vmem:[#allocation19 + $0xec] sm:$0xf]
    %v7295 = vld [vmem:[#allocation19 + $0xf0] sm:$0xf]
    %v7296 = vld [vmem:[#allocation19 + $0xf4] sm:$0xf]
    %v7297 = vld [vmem:[#allocation19 + $0xf8] sm:$0xf]
    %v7298 = vld [vmem:[#allocation19 + $0xfc] sm:$0xf]
    %v7299 = vld [vmem:[#allocation21] sm:$0x1]
    %v7301 = vlaneseq
    %v7302 = vshrl.u32 %v7301, 7
    %v7303 = vsub.s32 0, %v7302
    %v7304 = vrot.slane %v7299, %v7303
    %v7370 = vunpack.c.l.b16 %v7235
    %v7371 = vunpack.c.l.b16 %v7236
    %v7372 = vunpack.c.l.b16 %v7237
    %v7373 = vunpack.c.l.b16 %v7238
    %v7374 = vunpack.c.l.b16 %v7239
    %v7375 = vunpack.c.l.b16 %v7240
    %v7376 = vunpack.c.l.b16 %v7241
    %v7377 = vunpack.c.l.b16 %v7242
    %v7378 = vunpack.c.l.b16 %v7243
    %v7379 = vunpack.c.l.b16 %v7244
    %v7380 = vunpack.c.l.b16 %v7245
    %v7381 = vunpack.c.l.b16 %v7246
    %v7382 = vunpack.c.l.b16 %v7247
    %v7383 = vunpack.c.l.b16 %v7248
    %v7384 = vunpack.c.l.b16 %v7249
    %v7385 = vunpack.c.l.b16 %v7250
    %v7386 = vunpack.c.l.b16 %v7251
    %v7387 = vunpack.c.l.b16 %v7252
    %v7388 = vunpack.c.l.b16 %v7253
    %v7389 = vunpack.c.l.b16 %v7254
    %v7390 = vunpack.c.l.b16 %v7255
    %v7391 = vunpack.c.l.b16 %v7256
    %v7392 = vunpack.c.l.b16 %v7257
    %v7393 = vunpack.c.l.b16 %v7258
    %v7394 = vunpack.c.l.b16 %v7259
    %v7395 = vunpack.c.l.b16 %v7260
    %v7396 = vunpack.c.l.b16 %v7261
    %v7397 = vunpack.c.l.b16 %v7262
    %v7398 = vunpack.c.l.b16 %v7263
    %v7399 = vunpack.c.l.b16 %v7264
    %v7400 = vunpack.c.l.b16 %v7265
    %v7401 = vunpack.c.l.b16 %v7266
    %v7402 = vunpack.c.l.b16 %v7267
    %v7403 = vunpack.c.l.b16 %v7268
    %v7404 = vunpack.c.l.b16 %v7269
    %v7405 = vunpack.c.l.b16 %v7270
    %v7406 = vunpack.c.l.b16 %v7271
    %v7407 = vunpack.c.l.b16 %v7272
    %v7408 = vunpack.c.l.b16 %v7273
    %v7409 = vunpack.c.l.b16 %v7274
    %v7410 = vunpack.c.l.b16 %v7275
    %v7411 = vunpack.c.l.b16 %v7276
    %v7412 = vunpack.c.l.b16 %v7277
    %v7413 = vunpack.c.l.b16 %v7278
    %v7414 = vunpack.c.l.b16 %v7279
    %v7415 = vunpack.c.l.b16 %v7280
    %v7416 = vunpack.c.l.b16 %v7281
    %v7417 = vunpack.c.l.b16 %v7282
    %v7418 = vunpack.c.l.b16 %v7283
    %v7419 = vunpack.c.l.b16 %v7284
    %v7420 = vunpack.c.l.b16 %v7285
    %v7421 = vunpack.c.l.b16 %v7286
    %v7422 = vunpack.c.l.b16 %v7287
    %v7423 = vunpack.c.l.b16 %v7288
    %v7424 = vunpack.c.l.b16 %v7289
    %v7425 = vunpack.c.l.b16 %v7290
    %v7426 = vunpack.c.l.b16 %v7291
    %v7427 = vunpack.c.l.b16 %v7292
    %v7428 = vunpack.c.l.b16 %v7293
    %v7429 = vunpack.c.l.b16 %v7294
    %v7430 = vunpack.c.l.b16 %v7295
    %v7431 = vunpack.c.l.b16 %v7296
    %v7432 = vunpack.c.l.b16 %v7297
    %v7433 = vunpack.c.l.b16 %v7298
    %v7434 = vpack.c.b16 %v7371, %v7370
    %v7435 = vpack.c.b16 %v7373, %v7372
    %v7436 = vpack.c.b16 %v7375, %v7374
    %v7437 = vpack.c.b16 %v7377, %v7376
    %v7438 = vpack.c.b16 %v7379, %v7378
    %v7439 = vpack.c.b16 %v7381, %v7380
    %v7440 = vpack.c.b16 %v7383, %v7382
    %v7441 = vpack.c.b16 %v7385, %v7384
    %v7442 = vpack.c.b16 %v7387, %v7386
    %v7443 = vpack.c.b16 %v7389, %v7388
    %v7444 = vpack.c.b16 %v7391, %v7390
    %v7445 = vpack.c.b16 %v7393, %v7392
    %v7446 = vpack.c.b16 %v7395, %v7394
    %v7447 = vpack.c.b16 %v7397, %v7396
    %v7448 = vpack.c.b16 %v7399, %v7398
    %v7449 = vpack.c.b16 %v7401, %v7400
    %v7450 = vpack.c.b16 %v7403, %v7402
    %v7451 = vpack.c.b16 %v7405, %v7404
    %v7452 = vpack.c.b16 %v7407, %v7406
    %v7453 = vpack.c.b16 %v7409, %v7408
    %v7454 = vpack.c.b16 %v7411, %v7410
    %v7455 = vpack.c.b16 %v7413, %v7412
    %v7456 = vpack.c.b16 %v7415, %v7414
    %v7457 = vpack.c.b16 %v7417, %v7416
    %v7458 = vpack.c.b16 %v7419, %v7418
    %v7459 = vpack.c.b16 %v7421, %v7420
    %v7460 = vpack.c.b16 %v7423, %v7422
    %v7461 = vpack.c.b16 %v7425, %v7424
    %v7462 = vpack.c.b16 %v7427, %v7426
    %v7463 = vpack.c.b16 %v7429, %v7428
    %v7464 = vpack.c.b16 %v7431, %v7430
    %v7465 = vpack.c.b16 %v7433, %v7432
    %7498 = vmatprep.subr.bf16.mxu0 0
    %7499 = vmatpush1.bf16.msra.mxu0 %v7434
    %7500 = vmatprep.subr.bf16.mxu0 0
    %7501 = vmatpush1.bf16.msra.mxu0 %v7435
    %7502 = vmatprep.subr.bf16.mxu0 0
    %7503 = vmatpush1.bf16.msra.mxu0 %v7436
    %7504 = vmatprep.subr.bf16.mxu0 0
    %7505 = vmatpush1.bf16.msra.mxu0 %v7437
    %7506 = vmatprep.subr.bf16.mxu0 0
    %7507 = vmatpush1.bf16.msra.mxu0 %v7438
    %7508 = vmatprep.subr.bf16.mxu0 0
    %7509 = vmatpush1.bf16.msra.mxu0 %v7439
    %7510 = vmatprep.subr.bf16.mxu0 0
    %7511 = vmatpush1.bf16.msra.mxu0 %v7440
    %7512 = vmatprep.subr.bf16.mxu0 0
    %7513 = vmatpush1.bf16.msra.mxu0 %v7441
    %7514 = vmatprep.subr.bf16.mxu0 0
    %7515 = vmatpush1.bf16.msra.mxu0 %v7442
    %7516 = vmatprep.subr.bf16.mxu0 0
    %7517 = vmatpush1.bf16.msra.mxu0 %v7443
    %7518 = vmatprep.subr.bf16.mxu0 0
    %7519 = vmatpush1.bf16.msra.mxu0 %v7444
    %7520 = vmatprep.subr.bf16.mxu0 0
    %7521 = vmatpush1.bf16.msra.mxu0 %v7445
    %7522 = vmatprep.subr.bf16.mxu0 0
    %7523 = vmatpush1.bf16.msra.mxu0 %v7446
    %7524 = vmatprep.subr.bf16.mxu0 0
    %7525 = vmatpush1.bf16.msra.mxu0 %v7447
    %7526 = vmatprep.subr.bf16.mxu0 0
    %7527 = vmatpush1.bf16.msra.mxu0 %v7448
    %7528 = vmatprep.subr.bf16.mxu0 0
    %7529 = vmatpush1.bf16.msra.mxu0 %v7449
    %7530 = vmatprep.mubr.bf16.mxu0 %v7232
    %7531 = vmatmul.mubr.bf16.gmra.mrb[0].mxu0 %v7231
    %v7532 = vpop.f32.mrb[0].mxu0
    %v7533 = vadd.f32 %v7304, %v7532
    %v7534 = vpop.f32.mrb[0].mxu0
    %v7535 = vpop.f32.mrb[0].mxu0
    %v7536 = vadd.f32 %v7304, %v7535
    %v7537 = vpop.f32.mrb[0].mxu0
    %7538 = vdwg.mxu0
    %7539 = vmatprep.subr.bf16.mxu0 0
    %7540 = vmatpush1.bf16.msra.mxu0 %v7450
    %7541 = vmatprep.subr.bf16.mxu0 0
    %7542 = vmatpush1.bf16.msra.mxu0 %v7451
    %7543 = vmatprep.subr.bf16.mxu0 0
    %7544 = vmatpush1.bf16.msra.mxu0 %v7452
    %7545 = vmatprep.subr.bf16.mxu0 0
    %7546 = vmatpush1.bf16.msra.mxu0 %v7453
    %7547 = vmatprep.subr.bf16.mxu0 0
    %7548 = vmatpush1.bf16.msra.mxu0 %v7454
    %7549 = vmatprep.subr.bf16.mxu0 0
    %7550 = vmatpush1.bf16.msra.mxu0 %v7455
    %7551 = vmatprep.subr.bf16.mxu0 0
    %7552 = vmatpush1.bf16.msra.mxu0 %v7456
    %7553 = vmatprep.subr.bf16.mxu0 0
    %7554 = vmatpush1.bf16.msra.mxu0 %v7457
    %7555 = vmatprep.subr.bf16.mxu0 0
    %7556 = vmatpush1.bf16.msra.mxu0 %v7458
    %7557 = vmatprep.subr.bf16.mxu0 0
    %7558 = vmatpush1.bf16.msra.mxu0 %v7459
    %7559 = vmatprep.subr.bf16.mxu0 0
    %7560 = vmatpush1.bf16.msra.mxu0 %v7460
    %7561 = vmatprep.subr.bf16.mxu0 0
    %7562 = vmatpush1.bf16.msra.mxu0 %v7461
    %7563 = vmatprep.subr.bf16.mxu0 0
    %7564 = vmatpush1.bf16.msra.mxu0 %v7462
    %7565 = vmatprep.subr.bf16.mxu0 0
    %7566 = vmatpush1.bf16.msra.mxu0 %v7463
    %7567 = vmatprep.subr.bf16.mxu0 0
    %7568 = vmatpush1.bf16.msra.mxu0 %v7464
    %7569 = vmatprep.subr.bf16.mxu0 0
    %7570 = vmatpush1.bf16.msra.mxu0 %v7465
    %7571 = vmatprep.mubr.bf16.mxu0 %v7234
    %7572 = vmatmul.mubr.bf16.gmra.mrb[0].mxu0 %v7233
    %v7573 = vpop.f32.mrb[0].mxu0
    %v7574 = vadd.f32 %v7533, %v7573
    %v7575 = vpop.f32.mrb[0].mxu0
    %v7576 = vpop.f32.mrb[0].mxu0
    %v7577 = vadd.f32 %v7536, %v7576
    %v7578 = vpop.f32.mrb[0].mxu0
    %7579 = vdwg.mxu0
    %v7580 = vtanh.pop %v7574
    %v7581 = vtanh.pop %v7577
    %v7582 = vpack.c.bf16 %v7581, %v7580
    %v7583 = vld [vmem:[%s15] sm:$0xf]
    %v7584 = vld [vmem:[%s15 + $0x4] sm:$0xf]
    %v7585 = vld [vmem:[%s15 + $0x8] sm:$0xf]
    %v7586 = vld [vmem:[%s15 + $0xc] sm:$0xf]
    %v7587 = vld [vmem:[%s15 + $0x10] sm:$0xf]
    %v7588 = vld [vmem:[%s15 + $0x14] sm:$0xf]
    %v7589 = vld [vmem:[%s15 + $0x18] sm:$0xf]
    %v7590 = vld [vmem:[%s15 + $0x1c] sm:$0xf]
    %v7591 = vld [vmem:[%s15 + $0x20] sm:$0xf]
    %v7592 = vld [vmem:[%s15 + $0x24] sm:$0xf]
    %v7593 = vld [vmem:[%s15 + $0x28] sm:$0xf]
    %v7594 = vld [vmem:[%s15 + $0x2c] sm:$0xf]
    %v7595 = vld [vmem:[%s15 + $0x30] sm:$0xf]
    %v7596 = vld [vmem:[%s15 + $0x34] sm:$0xf]
    %v7597 = vld [vmem:[%s15 + $0x38] sm:$0xf]
    %v7598 = vld [vmem:[%s15 + $0x3c] sm:$0xf]
    %v7599 = vld [vmem:[#allocation22] sm:$0x1]
    %v7601 = vlaneseq
    %v7602 = vshrl.u32 %v7601, 7
    %v7603 = vsub.s32 0, %v7602
    %v7604 = vrot.slane %v7599, %v7603
    %v7622 = vunpack.c.l.b16 %v7583
    %v7623 = vunpack.c.l.b16 %v7584
    %v7624 = vunpack.c.l.b16 %v7585
    %v7625 = vunpack.c.l.b16 %v7586
    %v7626 = vunpack.c.l.b16 %v7587
    %v7627 = vunpack.c.l.b16 %v7588
    %v7628 = vunpack.c.l.b16 %v7589
    %v7629 = vunpack.c.l.b16 %v7590
    %v7630 = vunpack.c.l.b16 %v7591
    %v7631 = vunpack.c.l.b16 %v7592
    %v7632 = vunpack.c.l.b16 %v7593
    %v7633 = vunpack.c.l.b16 %v7594
    %v7634 = vunpack.c.l.b16 %v7595
    %v7635 = vunpack.c.l.b16 %v7596
    %v7636 = vunpack.c.l.b16 %v7597
    %v7637 = vunpack.c.l.b16 %v7598
    %v7638 = vpack.c.b16 %v7623, %v7622
    %v7639 = vpack.c.b16 %v7625, %v7624
    %v7640 = vpack.c.b16 %v7627, %v7626
    %v7641 = vpack.c.b16 %v7629, %v7628
    %v7642 = vpack.c.b16 %v7631, %v7630
    %v7643 = vpack.c.b16 %v7633, %v7632
    %v7644 = vpack.c.b16 %v7635, %v7634
    %v7645 = vpack.c.b16 %v7637, %v7636
    %7654 = vmatprep.subr.bf16.mxu0 0
    %7655 = vmatpush1.bf16.msra.mxu0 %v7638
    %7656 = vmatprep.subr.bf16.mxu0 0
    %7657 = vmatpush1.bf16.msra.mxu0 %v7639
    %7658 = vmatprep.subr.bf16.mxu0 0
    %7659 = vmatpush1.bf16.msra.mxu0 %v7640
    %7660 = vmatprep.subr.bf16.mxu0 0
    %7661 = vmatpush1.bf16.msra.mxu0 %v7641
    %7662 = vmatprep.subr.bf16.mxu0 0
    %7663 = vmatpush1.bf16.msra.mxu0 %v7642
    %7664 = vmatprep.subr.bf16.mxu0 0
    %7665 = vmatpush1.bf16.msra.mxu0 %v7643
    %7666 = vmatprep.subr.bf16.mxu0 0
    %7667 = vmatpush1.bf16.msra.mxu0 %v7644
    %7668 = vmatprep.subr.bf16.mxu0 0
    %7669 = vmatpush1.bf16.msra.mxu0 %v7645
    %7670 = vmatprep.subr.bf16.mxu0 0
    %7671 = vmatpush1.bf16.msra.mxu0 0
    %7672 = vmatprep.subr.bf16.mxu0 0
    %7673 = vmatpush1.bf16.msra.mxu0 0
    %7674 = vmatprep.subr.bf16.mxu0 0
    %7675 = vmatpush1.bf16.msra.mxu0 0
    %7676 = vmatprep.subr.bf16.mxu0 0
    %7677 = vmatpush1.bf16.msra.mxu0 0
    %7678 = vmatprep.subr.bf16.mxu0 0
    %7679 = vmatpush1.bf16.msra.mxu0 0
    %7680 = vmatprep.subr.bf16.mxu0 0
    %7681 = vmatpush1.bf16.msra.mxu0 0
    %7682 = vmatprep.subr.bf16.mxu0 0
    %7683 = vmatpush1.bf16.msra.mxu0 0
    %7684 = vmatprep.subr.bf16.mxu0 0
    %7685 = vmatpush1.bf16.msra.mxu0 0
    %7686 = vmatprep.mubr.bf16.mxu0 0
    %7687 = vmatmul.mubr.bf16.gmra.mrb[0].mxu0 %v7582
    %v7688 = vpop.f32.mrb[0].mxu0
    %v7689 = vadd.f32 %v7604, %v7688
    %v7690 = vpop.f32.mrb[0].mxu0
    %v7691 = vpop.f32.mrb[0].mxu0
    %v7692 = vadd.f32 %v7604, %v7691
    %v7693 = vpop.f32.mrb[0].mxu0
    %7694 = vdwg.mxu0
    %7695 = vst [vmem:[%s17] sm:$0xff] %v7689
    %7696 = vst [vmem:[%s17 + $0x8] sm:$0xff] %v7692
    // Predicated region
    $region118: #{forward.1} parent=1 // pred_check
      _
    $region119: #{forward.1} parent=1 // pred_check_branch
      %7698 = sbr.rel (0) target = $region121
    $region120: #{forward.1} parent=1 // pred_region
      _
    $region121: #{forward.1} parent=1 // pred_fallthru
      _
    // Predicated region
    $region122: #{forward.1} parent=1 // pred_check
      _
    $region123: #{forward.1} parent=1 // pred_check_branch
      %7700 = sbr.rel (0) target = $region125
    $region124: #{forward.1} parent=1 // pred_region
      _
    $region125: #{forward.1} parent=1 // pred_fallthru
      _
    %7701 = vsyncpa [#allocation6], 1
    %7702 = vsyncpa [#allocation8], 1
    %7703 = vsyncpa [#allocation11], 1
    %7704 = vsyncpa [#allocation14], 1
    %7705 = vsyncpa [#allocation17], 1
    %7706 = vsyncpa [#allocation20], 1
    %7707 = vsyncpa [#allocation23], 1

</llo_original>
